<compile_context>
chip_gen: v7x
topology: tpu7x:2x2x1
jax: 0.10.0
libtpu: 0.0.40
codegen_flags: <defaults>
</compile_context>

<pallas_src>
import jax
import jax.numpy as jnp
from jax import lax
from jax.experimental import pallas as pl
from jax.experimental.pallas import tpu as pltpu


def _round_up(x, m):
    return (x + m - 1) // m * m


# ----------------------------- fused kernel -------------------------------- #

def _lenet_kernel(x_ref, w1_ref, b1_ref, w2_ref, b2_ref,
                  f1_ref, bf1_ref, f2_ref, bf2_ref, f3_ref, bf3_ref, o_ref):
    """Whole CNN forward for a tile of TB images (one grid step).

    Every dot is 2-D with the batch tile on the M axis.  conv+pool stages use 4
    per-phase matrices; the 2x2 maxpool becomes an elementwise max (VPU) and the
    pooling selection/compaction is folded into the weights at zero extra cost.
    """
    f32 = jnp.float32
    xb = x_ref[...].astype(jnp.bfloat16)                          # (TB, 784)

    # conv1 (1->6, k=5) + bias + ReLU + 2x2/2 maxpool -> (TB, 6*12*12)
    z = jnp.dot(xb, w1_ref[0], preferred_element_type=f32)
    for ph in range(1, 4):
        z = jnp.maximum(z, jnp.dot(xb, w1_ref[ph], preferred_element_type=f32))
    p1 = jnp.maximum(z + b1_ref[...], 0.0).astype(jnp.bfloat16)   # (TB, 864)

    # conv2 (6->16, k=5) + bias + ReLU + 2x2/2 maxpool -> (TB, 16*4*4)
    z = jnp.dot(p1, w2_ref[0], preferred_element_type=f32)
    for ph in range(1, 4):
        z = jnp.maximum(z, jnp.dot(p1, w2_ref[ph], preferred_element_type=f32))
    p2 = jnp.maximum(z + b2_ref[...], 0.0).astype(jnp.bfloat16)   # (TB, 256)

    # fc1 / fc2 / fc3 (+ReLU); fc3 output padded to 128 lanes, pad bias = -1e30.
    h = jnp.maximum(jnp.dot(p2, f1_ref[...], preferred_element_type=f32)
                    + bf1_ref[...], 0.0).astype(jnp.bfloat16)     # (TB, 120)
    h = jnp.maximum(jnp.dot(h, f2_ref[...], preferred_element_type=f32)
                    + bf2_ref[...], 0.0).astype(jnp.bfloat16)     # (TB, 84)
    logits = (jnp.dot(h, f3_ref[...], preferred_element_type=f32)
              + bf3_ref[...])                                     # (TB, 128)

    # Stable softmax over classes; padded lanes hold -1e30 -> exp underflows to 0.
    m = jnp.max(logits, axis=-1, keepdims=True)
    e = jnp.exp(logits - m)
    o_ref[...] = e / jnp.sum(e, axis=-1, keepdims=True)           # (TB, 128)


# ----------------------- one-time weight re-layout -------------------------- #

def _conv_pool_phase_mats(w, in_h, in_w):
    """Fold conv(k, stride 1, valid) + 2x2/2 maxpool selection into 4 matrices.

    w: (Cout, Cin, K, K).
    Input lane layout:  ci*in_h*in_w + a*in_w + t        (channel-major image)
    Output lane layout: co*ph*pw + r*pw + s              (pooled, channel-major)
    Phase (dr, ds) computes the conv output at (2r+dr, 2s+ds); the maxpool is
    then an elementwise max over the 4 phases.
    Returns (4, Cin*in_h*in_w, Cout*ph*pw) float32.
    """
    cout, cin, k, _ = w.shape
    out_h, out_w = in_h - k + 1, in_w - k + 1
    ph, pw = out_h // 2, out_w // 2
    wf = w.astype(jnp.float32)
    a = jnp.arange(in_h)
    t = jnp.arange(in_w)
    r = jnp.arange(ph)
    s = jnp.arange(pw)
    mats = []
    for dr in (0, 1):
        for ds in (0, 1):
            di = a[:, None] - (2 * r[None, :] + dr)                # (in_h, ph)
            dj = t[:, None] - (2 * s[None, :] + ds)                # (in_w, pw)
            vi = ((di >= 0) & (di < k)).astype(jnp.float32)
            vj = ((dj >= 0) & (dj < k)).astype(jnp.float32)
            g = wf[:, :, jnp.clip(di, 0, k - 1), :]                # (co,ci,a,r,k)
            g = g[:, :, :, :, jnp.clip(dj, 0, k - 1)]              # (co,ci,a,r,t,s)
            g = (g * vi[None, None, :, :, None, None]
                   * vj[None, None, None, None, :, :])
            m = jnp.transpose(g, (1, 2, 4, 0, 3, 5))               # (ci,a,t,co,r,s)
            mats.append(m.reshape(cin * in_h * in_w, cout * ph * pw))
    return jnp.stack(mats)


def preprocess_params(p):
    """Re-layout PyTorch-convention params into batched-matmul operands."""
    f32, bf16 = jnp.float32, jnp.bfloat16
    f3 = p["fc3_w"].astype(f32).T                                    # (84, 10)
    f3p = jnp.concatenate([f3, jnp.zeros((84, 118), f32)], axis=1)   # (84, 128)
    bf3p = jnp.concatenate([p["fc3_b"].astype(f32),
                            jnp.full((118,), -1e30, f32)])[None]     # (1, 128)
    return {
        "w1": _conv_pool_phase_mats(p["conv1_w"], 28, 28).astype(bf16),  # (4,784,864)
        "b1": jnp.repeat(p["conv1_b"].astype(f32), 144)[None],           # (1,864)
        "w2": _conv_pool_phase_mats(p["conv2_w"], 12, 12).astype(bf16),  # (4,864,256)
        "b2": jnp.repeat(p["conv2_b"].astype(f32), 16)[None],            # (1,256)
        # pool2 compact layout == PyTorch (C,H,W) flatten order -> fc1_w.T direct.
        "f1": p["fc1_w"].astype(f32).T.astype(bf16),                     # (256,120)
        "bf1": p["fc1_b"].astype(f32)[None],                             # (1,120)
        "f2": p["fc2_w"].astype(f32).T.astype(bf16),                     # (120,84)
        "bf2": p["fc2_b"].astype(f32)[None],                             # (1,84)
        "f3": f3p.astype(bf16),                                          # (84,128)
        "bf3": bf3p,                                                     # (1,128)
    }


_WEIGHT_ORDER = ("w1", "b1", "w2", "b2", "f1", "bf1", "f2", "bf2", "f3", "bf3")


# ------------------------------ forward wrapper ----------------------------- #

def cnn_forward(params, x, *, tile_b=128):
    """x: (B, 1, 28, 28) float -> class probabilities (B, 10)."""
    B = x.shape[0]
    assert x.shape[1:] == (1, 28, 28), "CNN requires (B, 1, 28, 28) input"
    prep = preprocess_params(params)

    # Batch tile per grid step: as big as possible, multiple of 8, but keep
    # >=2 grid steps once B > 8 so v7x megacore can shard the parallel axis.
    tb = max(8, min(tile_b, _round_up((B + 1) // 2, 8)))
    b_pad = _round_up(B, tb)

    xf = x.reshape(B, 28 * 28).astype(jnp.float32)
    if b_pad != B:
        xf = jnp.concatenate(
            [xf, jnp.zeros((b_pad - B, 28 * 28), jnp.float32)], axis=0)

    def _resident_spec(arr):
        nd = arr.ndim
        return pl.BlockSpec(arr.shape, lambda b, _nd=nd: (0,) * _nd)

    in_specs = [pl.BlockSpec((tb, 28 * 28), lambda b: (b, 0))]
    in_specs += [_resident_spec(prep[k]) for k in _WEIGHT_ORDER]

    macs = (4 * 784 * 864 + 4 * 864 * 256 + 256 * 120 + 120 * 84 + 84 * 128)
    cost = pl.CostEstimate(
        flops=2 * macs * b_pad,
        transcendentals=128 * b_pad,
        bytes_accessed=b_pad * (784 + 128) * 4 + 8 * 1024 * 1024)

    out = pl.pallas_call(
        _lenet_kernel,
        grid=(b_pad // tb,),
        in_specs=in_specs,
        out_specs=pl.BlockSpec((tb, 128), lambda b: (b, 0)),
        out_shape=jax.ShapeDtypeStruct((b_pad, 128), jnp.float32),
        compiler_params=pltpu.CompilerParams(
            dimension_semantics=("parallel",),
            vmem_limit_bytes=48 * 1024 * 1024),
        cost_estimate=cost,
    )(xf, *[prep[k] for k in _WEIGHT_ORDER])
    return out[:B, :10]


# ------------------------ reference & initialization ------------------------ #

def reference_forward(params, x):
    """Pure-JAX (XLA) reference with the same semantics as the PyTorch module."""
    dn = ("NCHW", "OIHW", "NCHW")
    h = lax.conv_general_dilated(x, params["conv1_w"], (1, 1), "VALID",
                                 dimension_numbers=dn)
    h = jax.nn.relu(h + params["conv1_b"][None, :, None, None])
    h = lax.reduce_window(h, -jnp.inf, lax.max, (1, 1, 2, 2), (1, 1, 2, 2), "VALID")
    h = lax.conv_general_dilated(h, params["conv2_w"], (1, 1), "VALID",
                                 dimension_numbers=dn)
    h = jax.nn.relu(h + params["conv2_b"][None, :, None, None])
    h = lax.reduce_window(h, -jnp.inf, lax.max, (1, 1, 2, 2), (1, 1, 2, 2), "VALID")
    h = h.reshape(h.shape[0], -1)
    h = jax.nn.relu(h @ params["fc1_w"].T + params["fc1_b"])
    h = jax.nn.relu(h @ params["fc2_w"].T + params["fc2_b"])
    logits = h @ params["fc3_w"].T + params["fc3_b"]
    return jax.nn.softmax(logits, axis=1)


def init_params(key):
    """Deterministic init mimicking PyTorch default U(-1/sqrt(fan_in), ...)."""
    def uni(k, shape, fan_in):
        bound = 1.0 / jnp.sqrt(float(fan_in))
        return jax.random.uniform(k, shape, jnp.float32, -bound, bound)

    ks = jax.random.split(key, 10)
    p = {}
    p["conv1_w"] = uni(ks[0], (6, 1, 5, 5), 1 * 5 * 5)
    p["conv1_b"] = uni(ks[1], (6,), 1 * 5 * 5)
    p["conv2_w"] = uni(ks[2], (16, 6, 5, 5), 6 * 5 * 5)
    p["conv2_b"] = uni(ks[3], (16,), 6 * 5 * 5)
    p["fc1_w"] = uni(ks[4], (120, 16 * 4 * 4), 16 * 4 * 4)
    p["fc1_b"] = uni(ks[5], (120,), 16 * 4 * 4)
    p["fc2_w"] = uni(ks[6], (84, 120), 120)
    p["fc2_b"] = uni(ks[7], (84,), 120)
    p["fc3_w"] = uni(ks[8], (10, 84), 84)
    p["fc3_b"] = uni(ks[9], (10,), 84)
    return p


if __name__ == "__main__":
    key = jax.random.PRNGKey(0)
    k_param, k_x = jax.random.split(key)
    params = init_params(k_param)

    fwd = jax.jit(cnn_forward)

    # Small batch (pads to one 8-image tile, grid = 1).
    x = jax.random.normal(k_x, (2, 1, 28, 28), dtype=jnp.float32)
    probs = jax.block_until_ready(fwd(params, x))
    assert probs.shape == (2, 10)
    assert bool(jnp.all(jnp.isfinite(probs)))
    assert jnp.allclose(jnp.sum(probs, axis=1), 1.0, atol=1e-5)
    ref = reference_forward(params, x)
    max_err = float(jnp.max(jnp.abs(probs - ref)))
    assert max_err < 2e-2, f"kernel deviates from reference: {max_err}"

    # Larger batch exercising multiple grid steps + batch padding.
    x2 = jax.random.normal(jax.random.PRNGKey(1), (24, 1, 28, 28), jnp.float32)
    probs2 = jax.block_until_ready(fwd(params, x2))
    assert probs2.shape == (24, 10)
    assert jnp.allclose(jnp.sum(probs2, axis=1), 1.0, atol=1e-5)
    ref2 = reference_forward(params, x2)
    max_err2 = float(jnp.max(jnp.abs(probs2 - ref2)))
    assert max_err2 < 2e-2, f"kernel deviates from reference: {max_err2}"

    print("KERNEL_OK")
</pallas_src>

<mosaic_0001>
module attributes {stable_mosaic.version = 11 : i64} {
  func.func @_lenet_kernel(%arg0: i32, %arg1: memref<8x784xf32, #tpu.memory_space<vmem>>, %arg2: memref<4x784x864xbf16, #tpu.memory_space<vmem>>, %arg3: memref<1x864xf32, #tpu.memory_space<vmem>>, %arg4: memref<4x864x256xbf16, #tpu.memory_space<vmem>>, %arg5: memref<1x256xf32, #tpu.memory_space<vmem>>, %arg6: memref<256x120xbf16, #tpu.memory_space<vmem>>, %arg7: memref<1x120xf32, #tpu.memory_space<vmem>>, %arg8: memref<120x84xbf16, #tpu.memory_space<vmem>>, %arg9: memref<1x84xf32, #tpu.memory_space<vmem>>, %arg10: memref<84x128xbf16, #tpu.memory_space<vmem>>, %arg11: memref<1x128xf32, #tpu.memory_space<vmem>>, %arg12: memref<8x128xf32, #tpu.memory_space<vmem>>) attributes {dimension_semantics = [#tpu.dimension_semantics<parallel>], iteration_bounds = array<i64: 1>, scalar_prefetch = 0 : i64, scratch_operands = 0 : i64, tpu.core_type = #tpu.core_type<tc>, window_params = [{transform_indices = @transform_0, window_bounds = array<i64: 8, 784>}, {pipeline_mode = #tpu.pipeline_mode<synchronous>, transform_indices = @transform_1, window_bounds = array<i64: 4, 784, 864>}, {pipeline_mode = #tpu.pipeline_mode<synchronous>, transform_indices = @transform_2, window_bounds = array<i64: 1, 864>}, {pipeline_mode = #tpu.pipeline_mode<synchronous>, transform_indices = @transform_3, window_bounds = array<i64: 4, 864, 256>}, {pipeline_mode = #tpu.pipeline_mode<synchronous>, transform_indices = @transform_4, window_bounds = array<i64: 1, 256>}, {pipeline_mode = #tpu.pipeline_mode<synchronous>, transform_indices = @transform_5, window_bounds = array<i64: 256, 120>}, {pipeline_mode = #tpu.pipeline_mode<synchronous>, transform_indices = @transform_6, window_bounds = array<i64: 1, 120>}, {pipeline_mode = #tpu.pipeline_mode<synchronous>, transform_indices = @transform_7, window_bounds = array<i64: 120, 84>}, {pipeline_mode = #tpu.pipeline_mode<synchronous>, transform_indices = @transform_8, window_bounds = array<i64: 1, 84>}, {pipeline_mode = #tpu.pipeline_mode<synchronous>, transform_indices = @transform_9, window_bounds = array<i64: 84, 128>}, {pipeline_mode = #tpu.pipeline_mode<synchronous>, transform_indices = @transform_10, window_bounds = array<i64: 1, 128>}, {transform_indices = @transform_11, window_bounds = array<i64: 8, 128>}]} {
    %c0 = arith.constant 0 : index
    %c0_0 = arith.constant 0 : index
    %0 = vector.load %arg1[%c0, %c0_0] : memref<8x784xf32, #tpu.memory_space<vmem>>, vector<8x784xf32>
    %1 = arith.truncf %0 : vector<8x784xf32> to vector<8x784xbf16>
    %c0_1 = arith.constant 0 : index
    %c0_2 = arith.constant 0 : index
    %c0_3 = arith.constant 0 : index
    %2 = vector.load %arg2[%c0_1, %c0_2, %c0_3] : memref<4x784x864xbf16, #tpu.memory_space<vmem>>, vector<1x784x864xbf16>
    %3 = vector.shape_cast %2 : vector<1x784x864xbf16> to vector<784x864xbf16>
    %cst = arith.constant dense<0.000000e+00> : vector<8x864xf32>
    %4 = tpu.matmul %1, %3, %cst {dimension_numbers = #tpu.dot_dimension_numbers<[1], [0], [0], [1], [0, 0, 1, 1], [], []>} : vector<8x784xbf16>, vector<784x864xbf16>, vector<8x864xf32> -> vector<8x864xf32>
    %c1 = arith.constant 1 : index
    %c0_4 = arith.constant 0 : index
    %c0_5 = arith.constant 0 : index
    %5 = vector.load %arg2[%c1, %c0_4, %c0_5] : memref<4x784x864xbf16, #tpu.memory_space<vmem>>, vector<1x784x864xbf16>
    %6 = vector.shape_cast %5 : vector<1x784x864xbf16> to vector<784x864xbf16>
    %cst_6 = arith.constant dense<0.000000e+00> : vector<8x864xf32>
    %7 = tpu.matmul %1, %6, %cst_6 {dimension_numbers = #tpu.dot_dimension_numbers<[1], [0], [0], [1], [0, 0, 1, 1], [], []>} : vector<8x784xbf16>, vector<784x864xbf16>, vector<8x864xf32> -> vector<8x864xf32>
    %8 = arith.maximumf %4, %7 : vector<8x864xf32>
    %c2 = arith.constant 2 : index
    %c0_7 = arith.constant 0 : index
    %c0_8 = arith.constant 0 : index
    %9 = vector.load %arg2[%c2, %c0_7, %c0_8] : memref<4x784x864xbf16, #tpu.memory_space<vmem>>, vector<1x784x864xbf16>
    %10 = vector.shape_cast %9 : vector<1x784x864xbf16> to vector<784x864xbf16>
    %cst_9 = arith.constant dense<0.000000e+00> : vector<8x864xf32>
    %11 = tpu.matmul %1, %10, %cst_9 {dimension_numbers = #tpu.dot_dimension_numbers<[1], [0], [0], [1], [0, 0, 1, 1], [], []>} : vector<8x784xbf16>, vector<784x864xbf16>, vector<8x864xf32> -> vector<8x864xf32>
    %12 = arith.maximumf %8, %11 : vector<8x864xf32>
    %c3 = arith.constant 3 : index
    %c0_10 = arith.constant 0 : index
    %c0_11 = arith.constant 0 : index
    %13 = vector.load %arg2[%c3, %c0_10, %c0_11] : memref<4x784x864xbf16, #tpu.memory_space<vmem>>, vector<1x784x864xbf16>
    %14 = vector.shape_cast %13 : vector<1x784x864xbf16> to vector<784x864xbf16>
    %cst_12 = arith.constant dense<0.000000e+00> : vector<8x864xf32>
    %15 = tpu.matmul %1, %14, %cst_12 {dimension_numbers = #tpu.dot_dimension_numbers<[1], [0], [0], [1], [0, 0, 1, 1], [], []>} : vector<8x784xbf16>, vector<784x864xbf16>, vector<8x864xf32> -> vector<8x864xf32>
    %16 = arith.maximumf %12, %15 : vector<8x864xf32>
    %c0_13 = arith.constant 0 : index
    %c0_14 = arith.constant 0 : index
    %17 = vector.load %arg3[%c0_13, %c0_14] : memref<1x864xf32, #tpu.memory_space<vmem>>, vector<1x864xf32>
    %18 = vector.broadcast %17 : vector<1x864xf32> to vector<8x864xf32>
    %19 = arith.addf %16, %18 : vector<8x864xf32>
    %cst_15 = arith.constant 0.000000e+00 : f32
    %20 = vector.broadcast %cst_15 : f32 to vector<8x864xf32>
    %21 = arith.maximumf %19, %20 : vector<8x864xf32>
    %22 = arith.truncf %21 : vector<8x864xf32> to vector<8x864xbf16>
    %c0_16 = arith.constant 0 : index
    %c0_17 = arith.constant 0 : index
    %c0_18 = arith.constant 0 : index
    %23 = vector.load %arg4[%c0_16, %c0_17, %c0_18] : memref<4x864x256xbf16, #tpu.memory_space<vmem>>, vector<1x864x256xbf16>
    %24 = vector.shape_cast %23 : vector<1x864x256xbf16> to vector<864x256xbf16>
    %cst_19 = arith.constant dense<0.000000e+00> : vector<8x256xf32>
    %25 = tpu.matmul %22, %24, %cst_19 {dimension_numbers = #tpu.dot_dimension_numbers<[1], [0], [0], [1], [0, 0, 1, 1], [], []>} : vector<8x864xbf16>, vector<864x256xbf16>, vector<8x256xf32> -> vector<8x256xf32>
    %c1_20 = arith.constant 1 : index
    %c0_21 = arith.constant 0 : index
    %c0_22 = arith.constant 0 : index
    %26 = vector.load %arg4[%c1_20, %c0_21, %c0_22] : memref<4x864x256xbf16, #tpu.memory_space<vmem>>, vector<1x864x256xbf16>
    %27 = vector.shape_cast %26 : vector<1x864x256xbf16> to vector<864x256xbf16>
    %cst_23 = arith.constant dense<0.000000e+00> : vector<8x256xf32>
    %28 = tpu.matmul %22, %27, %cst_23 {dimension_numbers = #tpu.dot_dimension_numbers<[1], [0], [0], [1], [0, 0, 1, 1], [], []>} : vector<8x864xbf16>, vector<864x256xbf16>, vector<8x256xf32> -> vector<8x256xf32>
    %29 = arith.maximumf %25, %28 : vector<8x256xf32>
    %c2_24 = arith.constant 2 : index
    %c0_25 = arith.constant 0 : index
    %c0_26 = arith.constant 0 : index
    %30 = vector.load %arg4[%c2_24, %c0_25, %c0_26] : memref<4x864x256xbf16, #tpu.memory_space<vmem>>, vector<1x864x256xbf16>
    %31 = vector.shape_cast %30 : vector<1x864x256xbf16> to vector<864x256xbf16>
    %cst_27 = arith.constant dense<0.000000e+00> : vector<8x256xf32>
    %32 = tpu.matmul %22, %31, %cst_27 {dimension_numbers = #tpu.dot_dimension_numbers<[1], [0], [0], [1], [0, 0, 1, 1], [], []>} : vector<8x864xbf16>, vector<864x256xbf16>, vector<8x256xf32> -> vector<8x256xf32>
    %33 = arith.maximumf %29, %32 : vector<8x256xf32>
    %c3_28 = arith.constant 3 : index
    %c0_29 = arith.constant 0 : index
    %c0_30 = arith.constant 0 : index
    %34 = vector.load %arg4[%c3_28, %c0_29, %c0_30] : memref<4x864x256xbf16, #tpu.memory_space<vmem>>, vector<1x864x256xbf16>
    %35 = vector.shape_cast %34 : vector<1x864x256xbf16> to vector<864x256xbf16>
    %cst_31 = arith.constant dense<0.000000e+00> : vector<8x256xf32>
    %36 = tpu.matmul %22, %35, %cst_31 {dimension_numbers = #tpu.dot_dimension_numbers<[1], [0], [0], [1], [0, 0, 1, 1], [], []>} : vector<8x864xbf16>, vector<864x256xbf16>, vector<8x256xf32> -> vector<8x256xf32>
    %37 = arith.maximumf %33, %36 : vector<8x256xf32>
    %c0_32 = arith.constant 0 : index
    %c0_33 = arith.constant 0 : index
    %38 = vector.load %arg5[%c0_32, %c0_33] : memref<1x256xf32, #tpu.memory_space<vmem>>, vector<1x256xf32>
    %39 = vector.broadcast %38 : vector<1x256xf32> to vector<8x256xf32>
    %40 = arith.addf %37, %39 : vector<8x256xf32>
    %cst_34 = arith.constant 0.000000e+00 : f32
    %41 = vector.broadcast %cst_34 : f32 to vector<8x256xf32>
    %42 = arith.maximumf %40, %41 : vector<8x256xf32>
    %43 = arith.truncf %42 : vector<8x256xf32> to vector<8x256xbf16>
    %c0_35 = arith.constant 0 : index
    %c0_36 = arith.constant 0 : index
    %44 = vector.load %arg6[%c0_35, %c0_36] : memref<256x120xbf16, #tpu.memory_space<vmem>>, vector<256x120xbf16>
    %cst_37 = arith.constant dense<0.000000e+00> : vector<8x120xf32>
    %45 = tpu.matmul %43, %44, %cst_37 {dimension_numbers = #tpu.dot_dimension_numbers<[1], [0], [0], [1], [0, 0, 1, 1], [], []>} : vector<8x256xbf16>, vector<256x120xbf16>, vector<8x120xf32> -> vector<8x120xf32>
    %c0_38 = arith.constant 0 : index
    %c0_39 = arith.constant 0 : index
    %46 = vector.load %arg7[%c0_38, %c0_39] : memref<1x120xf32, #tpu.memory_space<vmem>>, vector<1x120xf32>
    %47 = vector.broadcast %46 : vector<1x120xf32> to vector<8x120xf32>
    %48 = arith.addf %45, %47 : vector<8x120xf32>
    %cst_40 = arith.constant 0.000000e+00 : f32
    %49 = vector.broadcast %cst_40 : f32 to vector<8x120xf32>
    %50 = arith.maximumf %48, %49 : vector<8x120xf32>
    %51 = arith.truncf %50 : vector<8x120xf32> to vector<8x120xbf16>
    %c0_41 = arith.constant 0 : index
    %c0_42 = arith.constant 0 : index
    %52 = vector.load %arg8[%c0_41, %c0_42] : memref<120x84xbf16, #tpu.memory_space<vmem>>, vector<120x84xbf16>
    %cst_43 = arith.constant dense<0.000000e+00> : vector<8x84xf32>
    %53 = tpu.matmul %51, %52, %cst_43 {dimension_numbers = #tpu.dot_dimension_numbers<[1], [0], [0], [1], [0, 0, 1, 1], [], []>} : vector<8x120xbf16>, vector<120x84xbf16>, vector<8x84xf32> -> vector<8x84xf32>
    %c0_44 = arith.constant 0 : index
    %c0_45 = arith.constant 0 : index
    %54 = vector.load %arg9[%c0_44, %c0_45] : memref<1x84xf32, #tpu.memory_space<vmem>>, vector<1x84xf32>
    %55 = vector.broadcast %54 : vector<1x84xf32> to vector<8x84xf32>
    %56 = arith.addf %53, %55 : vector<8x84xf32>
    %cst_46 = arith.constant 0.000000e+00 : f32
    %57 = vector.broadcast %cst_46 : f32 to vector<8x84xf32>
    %58 = arith.maximumf %56, %57 : vector<8x84xf32>
    %59 = arith.truncf %58 : vector<8x84xf32> to vector<8x84xbf16>
    %c0_47 = arith.constant 0 : index
    %c0_48 = arith.constant 0 : index
    %60 = vector.load %arg10[%c0_47, %c0_48] : memref<84x128xbf16, #tpu.memory_space<vmem>>, vector<84x128xbf16>
    %cst_49 = arith.constant dense<0.000000e+00> : vector<8x128xf32>
    %61 = tpu.matmul %59, %60, %cst_49 {dimension_numbers = #tpu.dot_dimension_numbers<[1], [0], [0], [1], [0, 0, 1, 1], [], []>} : vector<8x84xbf16>, vector<84x128xbf16>, vector<8x128xf32> -> vector<8x128xf32>
    %c0_50 = arith.constant 0 : index
    %c0_51 = arith.constant 0 : index
    %62 = vector.load %arg11[%c0_50, %c0_51] : memref<1x128xf32, #tpu.memory_space<vmem>>, vector<1x128xf32>
    %63 = vector.broadcast %62 : vector<1x128xf32> to vector<8x128xf32>
    %64 = arith.addf %61, %63 : vector<8x128xf32>
    %cst_52 = arith.constant dense<0xFF800000> : vector<8xf32>
    %65 = vector.multi_reduction <maximumf>, %64, %cst_52 [1] : vector<8x128xf32> to vector<8xf32>
    %66 = vector.shape_cast %65 : vector<8xf32> to vector<8x1xf32>
    %67 = vector.broadcast %66 : vector<8x1xf32> to vector<8x128xf32>
    %68 = arith.subf %64, %67 : vector<8x128xf32>
    %69 = math.exp %68 : vector<8x128xf32>
    %cst_53 = arith.constant dense<0.000000e+00> : vector<8xf32>
    %70 = vector.multi_reduction <add>, %69, %cst_53 [1] : vector<8x128xf32> to vector<8xf32>
    %71 = vector.shape_cast %70 : vector<8xf32> to vector<8x1xf32>
    %72 = vector.broadcast %71 : vector<8x1xf32> to vector<8x128xf32>
    %73 = arith.divf %69, %72 : vector<8x128xf32>
    %c0_54 = arith.constant 0 : index
    %c0_55 = arith.constant 0 : index
    %74 = vector.load %arg12[%c0_54, %c0_55] : memref<8x128xf32, #tpu.memory_space<vmem>>, vector<8x128xf32>
    tpu.vector_store %arg12[%c0_54, %c0_55], %73 {strides = array<i32>} : memref<8x128xf32, #tpu.memory_space<vmem>>, vector<8x128xf32>,
    return
  }
  func.func @transform_0(%arg0: i32) -> (i32, i32) {
    %c0_i32 = arith.constant 0 : i32
    %c0_i32_0 = arith.constant 0 : i32
    return %arg0, %c0_i32 : i32, i32
  }
  func.func @transform_1(%arg0: i32) -> (i32, i32, i32) {
    %c0_i32 = arith.constant 0 : i32
    %c0_i32_0 = arith.constant 0 : i32
    %c0_i32_1 = arith.constant 0 : i32
    %c0_i32_2 = arith.constant 0 : i32
    return %c0_i32, %c0_i32_0, %c0_i32_1 : i32, i32, i32
  }
  func.func @transform_2(%arg0: i32) -> (i32, i32) {
    %c0_i32 = arith.constant 0 : i32
    %c0_i32_0 = arith.constant 0 : i32
    %c0_i32_1 = arith.constant 0 : i32
    return %c0_i32, %c0_i32_0 : i32, i32
  }
  func.func @transform_3(%arg0: i32) -> (i32, i32, i32) {
    %c0_i32 = arith.constant 0 : i32
    %c0_i32_0 = arith.constant 0 : i32
    %c0_i32_1 = arith.constant 0 : i32
    %c0_i32_2 = arith.constant 0 : i32
    return %c0_i32, %c0_i32_0, %c0_i32_1 : i32, i32, i32
  }
  func.func @transform_4(%arg0: i32) -> (i32, i32) {
    %c0_i32 = arith.constant 0 : i32
    %c0_i32_0 = arith.constant 0 : i32
    %c0_i32_1 = arith.constant 0 : i32
    return %c0_i32, %c0_i32_0 : i32, i32
  }
  func.func @transform_5(%arg0: i32) -> (i32, i32) {
    %c0_i32 = arith.constant 0 : i32
    %c0_i32_0 = arith.constant 0 : i32
    %c0_i32_1 = arith.constant 0 : i32
    return %c0_i32, %c0_i32_0 : i32, i32
  }
  func.func @transform_6(%arg0: i32) -> (i32, i32) {
    %c0_i32 = arith.constant 0 : i32
    %c0_i32_0 = arith.constant 0 : i32
    %c0_i32_1 = arith.constant 0 : i32
    return %c0_i32, %c0_i32_0 : i32, i32
  }
  func.func @transform_7(%arg0: i32) -> (i32, i32) {
    %c0_i32 = arith.constant 0 : i32
    %c0_i32_0 = arith.constant 0 : i32
    %c0_i32_1 = arith.constant 0 : i32
    return %c0_i32, %c0_i32_0 : i32, i32
  }
  func.func @transform_8(%arg0: i32) -> (i32, i32) {
    %c0_i32 = arith.constant 0 : i32
    %c0_i32_0 = arith.constant 0 : i32
    %c0_i32_1 = arith.constant 0 : i32
    return %c0_i32, %c0_i32_0 : i32, i32
  }
  func.func @transform_9(%arg0: i32) -> (i32, i32) {
    %c0_i32 = arith.constant 0 : i32
    %c0_i32_0 = arith.constant 0 : i32
    %c0_i32_1 = arith.constant 0 : i32
    return %c0_i32, %c0_i32_0 : i32, i32
  }
  func.func @transform_10(%arg0: i32) -> (i32, i32) {
    %c0_i32 = arith.constant 0 : i32
    %c0_i32_0 = arith.constant 0 : i32
    %c0_i32_1 = arith.constant 0 : i32
    return %c0_i32, %c0_i32_0 : i32, i32
  }
  func.func @transform_11(%arg0: i32) -> (i32, i32) {
    %c0_i32 = arith.constant 0 : i32
    %c0_i32_0 = arith.constant 0 : i32
    return %arg0, %c0_i32 : i32, i32
  }
}

</mosaic_0001>

<llo_original>
// kernel: cnn_forward.1
$region0: #{cnn_forward.1}
  #allocation0 [shape = 'u32[]', space=smem, size = 0x4, offset = 0x4, fixed_abs, tag = 'smem constant byte address 0x4 - core index']
  #allocation1 [shape = 'u32[144,128]{1,0:T(1,128)}', space=vmem, size = 0x12000, scoped, tag = 'internal scratch']
  %s0 = inlined_call_operand.vmem [shape: f32[8,784], index: 0, kind: input, shape index: {}]
  %s1 = inlined_call_operand.vmem [shape: bf16[4,784,864], index: 1, kind: input, shape index: {}]
  %s2 = inlined_call_operand.vmem [shape: f32[1,864], index: 2, kind: input, shape index: {}]
  %s3 = inlined_call_operand.vmem [shape: bf16[4,864,256], index: 3, kind: input, shape index: {}]
  %s4 = inlined_call_operand.vmem [shape: f32[1,256], index: 4, kind: input, shape index: {}]
  %s5 = inlined_call_operand.vmem [shape: bf16[256,120], index: 5, kind: input, shape index: {}]
  %s6 = inlined_call_operand.vmem [shape: f32[1,120], index: 6, kind: input, shape index: {}]
  %s7 = inlined_call_operand.vmem [shape: bf16[120,84], index: 7, kind: input, shape index: {}]
  %s8 = inlined_call_operand.vmem [shape: f32[1,84], index: 8, kind: input, shape index: {}]
  %s9 = inlined_call_operand.vmem [shape: bf16[84,128], index: 9, kind: input, shape index: {}]
  %s10 = inlined_call_operand.vmem [shape: f32[1,128], index: 10, kind: input, shape index: {}]
  %s11 = inlined_call_operand.vmem [shape: f32[8,128], index: 11, kind: output, shape index: {}]
  %s12 = sld [smem:[#allocation0]]
  $region54: #{cnn_forward.1} parent=0
    _
  %s14 = ssub.s32 1, %s12
  %s15 = scalar_select 0, %s14, %s12
  // Predicated region
  $region2: #{cnn_forward.1} parent=0 // pred_check
    _
  $region3: #{cnn_forward.1} parent=0 // pred_check_branch
    %17 = sbr.rel (0) target = $region5
  $region4: #{cnn_forward.1} parent=0 // pred_region
    _
  $region5: #{cnn_forward.1} parent=0 // pred_fallthru
    _
  // Predicated region
  $region6: #{cnn_forward.1} parent=0 // pred_check
    _
  $region7: #{cnn_forward.1} parent=0 // pred_check_branch
    %19 = sbr.rel (0) target = $region9
  $region8: #{cnn_forward.1} parent=0 // pred_region
    _
  $region9: #{cnn_forward.1} parent=0 // pred_fallthru
    _
  // Predicated region
  $region10: #{cnn_forward.1} parent=0 // pred_check
    _
  $region11: #{cnn_forward.1} parent=0 // pred_check_branch
    %21 = sbr.rel (0) target = $region13
  $region12: #{cnn_forward.1} parent=0 // pred_region
    _
  $region13: #{cnn_forward.1} parent=0 // pred_fallthru
    _
  // Predicated region
  $region14: #{cnn_forward.1} parent=0 // pred_check
    _
  $region15: #{cnn_forward.1} parent=0 // pred_check_branch
    %23 = sbr.rel (0) target = $region17
  $region16: #{cnn_forward.1} parent=0 // pred_region
    _
  $region17: #{cnn_forward.1} parent=0 // pred_fallthru
    _
  // Predicated region
  $region18: #{cnn_forward.1} parent=0 // pred_check
    _
  $region19: #{cnn_forward.1} parent=0 // pred_check_branch
    %25 = sbr.rel (0) target = $region21
  $region20: #{cnn_forward.1} parent=0 // pred_region
    _
  $region21: #{cnn_forward.1} parent=0 // pred_fallthru
    _
  // Predicated region
  $region22: #{cnn_forward.1} parent=0 // pred_check
    _
  $region23: #{cnn_forward.1} parent=0 // pred_check_branch
    %27 = sbr.rel (0) target = $region25
  $region24: #{cnn_forward.1} parent=0 // pred_region
    _
  $region25: #{cnn_forward.1} parent=0 // pred_fallthru
    _
  // Predicated region
  $region26: #{cnn_forward.1} parent=0 // pred_check
    _
  $region27: #{cnn_forward.1} parent=0 // pred_check_branch
    %29 = sbr.rel (0) target = $region29
  $region28: #{cnn_forward.1} parent=0 // pred_region
    _
  $region29: #{cnn_forward.1} parent=0 // pred_fallthru
    _
  // Predicated region
  $region30: #{cnn_forward.1} parent=0 // pred_check
    _
  $region31: #{cnn_forward.1} parent=0 // pred_check_branch
    %31 = sbr.rel (0) target = $region33
  $region32: #{cnn_forward.1} parent=0 // pred_region
    _
  $region33: #{cnn_forward.1} parent=0 // pred_fallthru
    _
  // Predicated region
  $region34: #{cnn_forward.1} parent=0 // pred_check
    _
  $region35: #{cnn_forward.1} parent=0 // pred_check_branch
    %33 = sbr.rel (0) target = $region37
  $region36: #{cnn_forward.1} parent=0 // pred_region
    _
  $region37: #{cnn_forward.1} parent=0 // pred_fallthru
    _
  // Predicated region
  $region38: #{cnn_forward.1} parent=0 // pred_check
    _
  $region39: #{cnn_forward.1} parent=0 // pred_check_branch
    %35 = sbr.rel (0) target = $region41
  $region40: #{cnn_forward.1} parent=0 // pred_region
    _
  $region41: #{cnn_forward.1} parent=0 // pred_fallthru
    _
  // Predicated region
  $region42: #{cnn_forward.1} parent=0 // pred_check
    _
  $region43: #{cnn_forward.1} parent=0 // pred_check_branch
    %37 = sbr.rel (0) target = $region45
  $region44: #{cnn_forward.1} parent=0 // pred_region
    _
  $region45: #{cnn_forward.1} parent=0 // pred_fallthru
    _
  %v39 = vld [vmem:[%s0] sm:$0xff]
  %v40 = vld [vmem:[%s0 + $0x8] sm:$0xff]
  %v41 = vld [vmem:[%s0 + $0x10] sm:$0xff]
  %v42 = vld [vmem:[%s0 + $0x18] sm:$0xff]
  %v43 = vld [vmem:[%s0 + $0x20] sm:$0xff]
  %v44 = vld [vmem:[%s0 + $0x28] sm:$0xff]
  %v45 = vld [vmem:[%s0 + $0x30] sm:$0xff]
  %v46 = vpack.c.bf16 %v39, %v39
  %v47 = vpack.c.bf16 %v40, %v40
  %v48 = vpack.c.bf16 %v41, %v41
  %v49 = vpack.c.bf16 %v42, %v42
  %v50 = vpack.c.bf16 %v43, %v43
  %v51 = vpack.c.bf16 %v44, %v44
  %v52 = vpack.c.bf16 %v45, %v45
  %v53 = vld [vmem:[%s1] sm:$0xff]
  %v54 = vld [vmem:[%s1 + $0x8] sm:$0xff]
  %v55 = vld [vmem:[%s1 + $0x10] sm:$0xff]
  %v56 = vld [vmem:[%s1 + $0x18] sm:$0xf]
  %v57 = vld [vmem:[%s1 + $0x1c] sm:$0xff]
  %v58 = vld [vmem:[%s1 + $0x24] sm:$0xff]
  %v59 = vld [vmem:[%s1 + $0x2c] sm:$0xff]
  %v60 = vld [vmem:[%s1 + $0x34] sm:$0xf]
  %v61 = vld [vmem:[%s1 + $0x38] sm:$0xff]
  %v62 = vld [vmem:[%s1 + $0x40] sm:$0xff]
  %v63 = vld [vmem:[%s1 + $0x48] sm:$0xff]
  %v64 = vld [vmem:[%s1 + $0x50] sm:$0xf]
  %v65 = vld [vmem:[%s1 + $0x54] sm:$0xff]
  %v66 = vld [vmem:[%s1 + $0x5c] sm:$0xff]
  %v67 = vld [vmem:[%s1 + $0x64] sm:$0xff]
  %v68 = vld [vmem:[%s1 + $0x6c] sm:$0xf]
  %v69 = vld [vmem:[%s1 + $0x70] sm:$0xff]
  %v70 = vld [vmem:[%s1 + $0x78] sm:$0xff]
  %v71 = vld [vmem:[%s1 + $0x80] sm:$0xff]
  %v72 = vld [vmem:[%s1 + $0x88] sm:$0xf]
  %v73 = vld [vmem:[%s1 + $0x8c] sm:$0xff]
  %v74 = vld [vmem:[%s1 + $0x94] sm:$0xff]
  %v75 = vld [vmem:[%s1 + $0x9c] sm:$0xff]
  %v76 = vld [vmem:[%s1 + $0xa4] sm:$0xf]
  %v77 = vld [vmem:[%s1 + $0xa8] sm:$0xff]
  %v78 = vld [vmem:[%s1 + $0xb0] sm:$0xff]
  %v79 = vld [vmem:[%s1 + $0xb8] sm:$0xff]
  %v80 = vld [vmem:[%s1 + $0xc0] sm:$0xf]
  %v81 = vld [vmem:[%s1 + $0xc4] sm:$0xff]
  %v82 = vld [vmem:[%s1 + $0xcc] sm:$0xff]
  %v83 = vld [vmem:[%s1 + $0xd4] sm:$0xff]
  %v84 = vld [vmem:[%s1 + $0xdc] sm:$0xf]
  %v85 = vld [vmem:[%s1 + $0xe0] sm:$0xff]
  %v86 = vld [vmem:[%s1 + $0xe8] sm:$0xff]
  %v87 = vld [vmem:[%s1 + $0xf0] sm:$0xff]
  %v88 = vld [vmem:[%s1 + $0xf8] sm:$0xf]
  %v89 = vld [vmem:[%s1 + $0xfc] sm:$0xff]
  %v90 = vld [vmem:[%s1 + $0x104] sm:$0xff]
  %v91 = vld [vmem:[%s1 + $0x10c] sm:$0xff]
  %v92 = vld [vmem:[%s1 + $0x114] sm:$0xf]
  %v93 = vld [vmem:[%s1 + $0x118] sm:$0xff]
  %v94 = vld [vmem:[%s1 + $0x120] sm:$0xff]
  %v95 = vld [vmem:[%s1 + $0x128] sm:$0xff]
  %v96 = vld [vmem:[%s1 + $0x130] sm:$0xf]
  %v97 = vld [vmem:[%s1 + $0x134] sm:$0xff]
  %v98 = vld [vmem:[%s1 + $0x13c] sm:$0xff]
  %v99 = vld [vmem:[%s1 + $0x144] sm:$0xff]
  %v100 = vld [vmem:[%s1 + $0x14c] sm:$0xf]
  %v101 = vld [vmem:[%s1 + $0x150] sm:$0xff]
  %v102 = vld [vmem:[%s1 + $0x158] sm:$0xff]
  %v103 = vld [vmem:[%s1 + $0x160] sm:$0xff]
  %v104 = vld [vmem:[%s1 + $0x168] sm:$0xf]
  %v105 = vld [vmem:[%s1 + $0x16c] sm:$0xff]
  %v106 = vld [vmem:[%s1 + $0x174] sm:$0xff]
  %v107 = vld [vmem:[%s1 + $0x17c] sm:$0xff]
  %v108 = vld [vmem:[%s1 + $0x184] sm:$0xf]
  %v109 = vld [vmem:[%s1 + $0x188] sm:$0xff]
  %v110 = vld [vmem:[%s1 + $0x190] sm:$0xff]
  %v111 = vld [vmem:[%s1 + $0x198] sm:$0xff]
  %v112 = vld [vmem:[%s1 + $0x1a0] sm:$0xf]
  %v113 = vld [vmem:[%s1 + $0x1a4] sm:$0xff]
  %v114 = vld [vmem:[%s1 + $0x1ac] sm:$0xff]
  %v115 = vld [vmem:[%s1 + $0x1b4] sm:$0xff]
  %v116 = vld [vmem:[%s1 + $0x1bc] sm:$0xf]
  %v117 = vld [vmem:[%s1 + $0x1c0] sm:$0xff]
  %v118 = vld [vmem:[%s1 + $0x1c8] sm:$0xff]
  %v119 = vld [vmem:[%s1 + $0x1d0] sm:$0xff]
  %v120 = vld [vmem:[%s1 + $0x1d8] sm:$0xf]
  %v121 = vld [vmem:[%s1 + $0x1dc] sm:$0xff]
  %v122 = vld [vmem:[%s1 + $0x1e4] sm:$0xff]
  %v123 = vld [vmem:[%s1 + $0x1ec] sm:$0xff]
  %v124 = vld [vmem:[%s1 + $0x1f4] sm:$0xf]
  %v125 = vld [vmem:[%s1 + $0x1f8] sm:$0xff]
  %v126 = vld [vmem:[%s1 + $0x200] sm:$0xff]
  %v127 = vld [vmem:[%s1 + $0x208] sm:$0xff]
  %v128 = vld [vmem:[%s1 + $0x210] sm:$0xf]
  %v129 = vld [vmem:[%s1 + $0x214] sm:$0xff]
  %v130 = vld [vmem:[%s1 + $0x21c] sm:$0xff]
  %v131 = vld [vmem:[%s1 + $0x224] sm:$0xff]
  %v132 = vld [vmem:[%s1 + $0x22c] sm:$0xf]
  %v133 = vld [vmem:[%s1 + $0x230] sm:$0xff]
  %v134 = vld [vmem:[%s1 + $0x238] sm:$0xff]
  %v135 = vld [vmem:[%s1 + $0x240] sm:$0xff]
  %v136 = vld [vmem:[%s1 + $0x248] sm:$0xf]
  %v137 = vld [vmem:[%s1 + $0x24c] sm:$0xff]
  %v138 = vld [vmem:[%s1 + $0x254] sm:$0xff]
  %v139 = vld [vmem:[%s1 + $0x25c] sm:$0xff]
  %v140 = vld [vmem:[%s1 + $0x264] sm:$0xf]
  %v141 = vld [vmem:[%s1 + $0x268] sm:$0xff]
  %v142 = vld [vmem:[%s1 + $0x270] sm:$0xff]
  %v143 = vld [vmem:[%s1 + $0x278] sm:$0xff]
  %v144 = vld [vmem:[%s1 + $0x280] sm:$0xf]
  %v145 = vld [vmem:[%s1 + $0x284] sm:$0xff]
  %v146 = vld [vmem:[%s1 + $0x28c] sm:$0xff]
  %v147 = vld [vmem:[%s1 + $0x294] sm:$0xff]
  %v148 = vld [vmem:[%s1 + $0x29c] sm:$0xf]
  %v149 = vld [vmem:[%s1 + $0x2a0] sm:$0xff]
  %v150 = vld [vmem:[%s1 + $0x2a8] sm:$0xff]
  %v151 = vld [vmem:[%s1 + $0x2b0] sm:$0xff]
  %v152 = vld [vmem:[%s1 + $0x2b8] sm:$0xf]
  %v153 = vld [vmem:[%s1 + $0x2bc] sm:$0xff]
  %v154 = vld [vmem:[%s1 + $0x2c4] sm:$0xff]
  %v155 = vld [vmem:[%s1 + $0x2cc] sm:$0xff]
  %v156 = vld [vmem:[%s1 + $0x2d4] sm:$0xf]
  %v157 = vld [vmem:[%s1 + $0x2d8] sm:$0xff]
  %v158 = vld [vmem:[%s1 + $0x2e0] sm:$0xff]
  %v159 = vld [vmem:[%s1 + $0x2e8] sm:$0xff]
  %v160 = vld [vmem:[%s1 + $0x2f0] sm:$0xf]
  %v161 = vld [vmem:[%s1 + $0x2f4] sm:$0xff]
  %v162 = vld [vmem:[%s1 + $0x2fc] sm:$0xff]
  %v163 = vld [vmem:[%s1 + $0x304] sm:$0xff]
  %v164 = vld [vmem:[%s1 + $0x30c] sm:$0xf]
  %v165 = vld [vmem:[%s1 + $0x310] sm:$0xff]
  %v166 = vld [vmem:[%s1 + $0x318] sm:$0xff]
  %v167 = vld [vmem:[%s1 + $0x320] sm:$0xff]
  %v168 = vld [vmem:[%s1 + $0x328] sm:$0xf]
  %v169 = vld [vmem:[%s1 + $0x32c] sm:$0xff]
  %v170 = vld [vmem:[%s1 + $0x334] sm:$0xff]
  %v171 = vld [vmem:[%s1 + $0x33c] sm:$0xff]
  %v172 = vld [vmem:[%s1 + $0x344] sm:$0xf]
  %v173 = vld [vmem:[%s1 + $0x348] sm:$0xff]
  %v174 = vld [vmem:[%s1 + $0x350] sm:$0xff]
  %v175 = vld [vmem:[%s1 + $0x358] sm:$0xff]
  %v176 = vld [vmem:[%s1 + $0x360] sm:$0xf]
  %v177 = vld [vmem:[%s1 + $0x364] sm:$0xff]
  %v178 = vld [vmem:[%s1 + $0x36c] sm:$0xff]
  %v179 = vld [vmem:[%s1 + $0x374] sm:$0xff]
  %v180 = vld [vmem:[%s1 + $0x37c] sm:$0xf]
  %v181 = vld [vmem:[%s1 + $0x380] sm:$0xff]
  %v182 = vld [vmem:[%s1 + $0x388] sm:$0xff]
  %v183 = vld [vmem:[%s1 + $0x390] sm:$0xff]
  %v184 = vld [vmem:[%s1 + $0x398] sm:$0xf]
  %v185 = vld [vmem:[%s1 + $0x39c] sm:$0xff]
  %v186 = vld [vmem:[%s1 + $0x3a4] sm:$0xff]
  %v187 = vld [vmem:[%s1 + $0x3ac] sm:$0xff]
  %v188 = vld [vmem:[%s1 + $0x3b4] sm:$0xf]
  %v189 = vld [vmem:[%s1 + $0x3b8] sm:$0xff]
  %v190 = vld [vmem:[%s1 + $0x3c0] sm:$0xff]
  %v191 = vld [vmem:[%s1 + $0x3c8] sm:$0xff]
  %v192 = vld [vmem:[%s1 + $0x3d0] sm:$0xf]
  %v193 = vld [vmem:[%s1 + $0x3d4] sm:$0xff]
  %v194 = vld [vmem:[%s1 + $0x3dc] sm:$0xff]
  %v195 = vld [vmem:[%s1 + $0x3e4] sm:$0xff]
  %v196 = vld [vmem:[%s1 + $0x3ec] sm:$0xf]
  %v197 = vld [vmem:[%s1 + $0x3f0] sm:$0xff]
  %v198 = vld [vmem:[%s1 + $0x3f8] sm:$0xff]
  %v199 = vld [vmem:[%s1 + $0x400] sm:$0xff]
  %v200 = vld [vmem:[%s1 + $0x408] sm:$0xf]
  %v201 = vld [vmem:[%s1 + $0x40c] sm:$0xff]
  %v202 = vld [vmem:[%s1 + $0x414] sm:$0xff]
  %v203 = vld [vmem:[%s1 + $0x41c] sm:$0xff]
  %v204 = vld [vmem:[%s1 + $0x424] sm:$0xf]
  %v205 = vld [vmem:[%s1 + $0x428] sm:$0xff]
  %v206 = vld [vmem:[%s1 + $0x430] sm:$0xff]
  %v207 = vld [vmem:[%s1 + $0x438] sm:$0xff]
  %v208 = vld [vmem:[%s1 + $0x440] sm:$0xf]
  %v209 = vld [vmem:[%s1 + $0x444] sm:$0xff]
  %v210 = vld [vmem:[%s1 + $0x44c] sm:$0xff]
  %v211 = vld [vmem:[%s1 + $0x454] sm:$0xff]
  %v212 = vld [vmem:[%s1 + $0x45c] sm:$0xf]
  %v213 = vld [vmem:[%s1 + $0x460] sm:$0xff]
  %v214 = vld [vmem:[%s1 + $0x468] sm:$0xff]
  %v215 = vld [vmem:[%s1 + $0x470] sm:$0xff]
  %v216 = vld [vmem:[%s1 + $0x478] sm:$0xf]
  %v217 = vld [vmem:[%s1 + $0x47c] sm:$0xff]
  %v218 = vld [vmem:[%s1 + $0x484] sm:$0xff]
  %v219 = vld [vmem:[%s1 + $0x48c] sm:$0xff]
  %v220 = vld [vmem:[%s1 + $0x494] sm:$0xf]
  %v221 = vld [vmem:[%s1 + $0x498] sm:$0xff]
  %v222 = vld [vmem:[%s1 + $0x4a0] sm:$0xff]
  %v223 = vld [vmem:[%s1 + $0x4a8] sm:$0xff]
  %v224 = vld [vmem:[%s1 + $0x4b0] sm:$0xf]
  %v225 = vld [vmem:[%s1 + $0x4b4] sm:$0xff]
  %v226 = vld [vmem:[%s1 + $0x4bc] sm:$0xff]
  %v227 = vld [vmem:[%s1 + $0x4c4] sm:$0xff]
  %v228 = vld [vmem:[%s1 + $0x4cc] sm:$0xf]
  %v229 = vld [vmem:[%s1 + $0x4d0] sm:$0xff]
  %v230 = vld [vmem:[%s1 + $0x4d8] sm:$0xff]
  %v231 = vld [vmem:[%s1 + $0x4e0] sm:$0xff]
  %v232 = vld [vmem:[%s1 + $0x4e8] sm:$0xf]
  %v233 = vld [vmem:[%s1 + $0x4ec] sm:$0xff]
  %v234 = vld [vmem:[%s1 + $0x4f4] sm:$0xff]
  %v235 = vld [vmem:[%s1 + $0x4fc] sm:$0xff]
  %v236 = vld [vmem:[%s1 + $0x504] sm:$0xf]
  %v237 = vld [vmem:[%s1 + $0x508] sm:$0xff]
  %v238 = vld [vmem:[%s1 + $0x510] sm:$0xff]
  %v239 = vld [vmem:[%s1 + $0x518] sm:$0xff]
  %v240 = vld [vmem:[%s1 + $0x520] sm:$0xf]
  %v241 = vld [vmem:[%s1 + $0x524] sm:$0xff]
  %v242 = vld [vmem:[%s1 + $0x52c] sm:$0xff]
  %v243 = vld [vmem:[%s1 + $0x534] sm:$0xff]
  %v244 = vld [vmem:[%s1 + $0x53c] sm:$0xf]
  %v245 = vld [vmem:[%s1 + $0x540] sm:$0xff]
  %v246 = vld [vmem:[%s1 + $0x548] sm:$0xff]
  %v247 = vld [vmem:[%s1 + $0x550] sm:$0xff]
  %v248 = vld [vmem:[%s1 + $0x558] sm:$0xf]
  %v249 = vld [vmem:[%s1 + $0x55c] sm:$0xff]
  %v250 = vld [vmem:[%s1 + $0x564] sm:$0xff]
  %v251 = vld [vmem:[%s1 + $0x56c] sm:$0xff]
  %v252 = vld [vmem:[%s1 + $0x574] sm:$0xf]
  %v253 = vld [vmem:[%s1 + $0x578] sm:$0xff]
  %v254 = vld [vmem:[%s1 + $0x580] sm:$0xff]
  %v255 = vld [vmem:[%s1 + $0x588] sm:$0xff]
  %v256 = vld [vmem:[%s1 + $0x590] sm:$0xf]
  %v257 = vld [vmem:[%s1 + $0x594] sm:$0xff]
  %v258 = vld [vmem:[%s1 + $0x59c] sm:$0xff]
  %v259 = vld [vmem:[%s1 + $0x5a4] sm:$0xff]
  %v260 = vld [vmem:[%s1 + $0x5ac] sm:$0xf]
  %v261 = vld [vmem:[%s1 + $0x5b0] sm:$0xff]
  %v262 = vld [vmem:[%s1 + $0x5b8] sm:$0xff]
  %v263 = vld [vmem:[%s1 + $0x5c0] sm:$0xff]
  %v264 = vld [vmem:[%s1 + $0x5c8] sm:$0xf]
  %v265 = vld [vmem:[%s1 + $0x5cc] sm:$0xff]
  %v266 = vld [vmem:[%s1 + $0x5d4] sm:$0xff]
  %v267 = vld [vmem:[%s1 + $0x5dc] sm:$0xff]
  %v268 = vld [vmem:[%s1 + $0x5e4] sm:$0xf]
  %v269 = vld [vmem:[%s1 + $0x5e8] sm:$0xff]
  %v270 = vld [vmem:[%s1 + $0x5f0] sm:$0xff]
  %v271 = vld [vmem:[%s1 + $0x5f8] sm:$0xff]
  %v272 = vld [vmem:[%s1 + $0x600] sm:$0xf]
  %v273 = vld [vmem:[%s1 + $0x604] sm:$0xff]
  %v274 = vld [vmem:[%s1 + $0x60c] sm:$0xff]
  %v275 = vld [vmem:[%s1 + $0x614] sm:$0xff]
  %v276 = vld [vmem:[%s1 + $0x61c] sm:$0xf]
  %v277 = vld [vmem:[%s1 + $0x620] sm:$0xff]
  %v278 = vld [vmem:[%s1 + $0x628] sm:$0xff]
  %v279 = vld [vmem:[%s1 + $0x630] sm:$0xff]
  %v280 = vld [vmem:[%s1 + $0x638] sm:$0xf]
  %v281 = vld [vmem:[%s1 + $0x63c] sm:$0xff]
  %v282 = vld [vmem:[%s1 + $0x644] sm:$0xff]
  %v283 = vld [vmem:[%s1 + $0x64c] sm:$0xff]
  %v284 = vld [vmem:[%s1 + $0x654] sm:$0xf]
  %v285 = vld [vmem:[%s1 + $0x658] sm:$0xff]
  %v286 = vld [vmem:[%s1 + $0x660] sm:$0xff]
  %v287 = vld [vmem:[%s1 + $0x668] sm:$0xff]
  %v288 = vld [vmem:[%s1 + $0x670] sm:$0xf]
  %v289 = vld [vmem:[%s1 + $0x674] sm:$0xff]
  %v290 = vld [vmem:[%s1 + $0x67c] sm:$0xff]
  %v291 = vld [vmem:[%s1 + $0x684] sm:$0xff]
  %v292 = vld [vmem:[%s1 + $0x68c] sm:$0xf]
  %v293 = vld [vmem:[%s1 + $0x690] sm:$0xff]
  %v294 = vld [vmem:[%s1 + $0x698] sm:$0xff]
  %v295 = vld [vmem:[%s1 + $0x6a0] sm:$0xff]
  %v296 = vld [vmem:[%s1 + $0x6a8] sm:$0xf]
  %v297 = vld [vmem:[%s1 + $0x6ac] sm:$0xff]
  %v298 = vld [vmem:[%s1 + $0x6b4] sm:$0xff]
  %v299 = vld [vmem:[%s1 + $0x6bc] sm:$0xff]
  %v300 = vld [vmem:[%s1 + $0x6c4] sm:$0xf]
  %v301 = vld [vmem:[%s1 + $0x6c8] sm:$0xff]
  %v302 = vld [vmem:[%s1 + $0x6d0] sm:$0xff]
  %v303 = vld [vmem:[%s1 + $0x6d8] sm:$0xff]
  %v304 = vld [vmem:[%s1 + $0x6e0] sm:$0xf]
  %v305 = vld [vmem:[%s1 + $0x6e4] sm:$0xff]
  %v306 = vld [vmem:[%s1 + $0x6ec] sm:$0xff]
  %v307 = vld [vmem:[%s1 + $0x6f4] sm:$0xff]
  %v308 = vld [vmem:[%s1 + $0x6fc] sm:$0xf]
  %v309 = vld [vmem:[%s1 + $0x700] sm:$0xff]
  %v310 = vld [vmem:[%s1 + $0x708] sm:$0xff]
  %v311 = vld [vmem:[%s1 + $0x710] sm:$0xff]
  %v312 = vld [vmem:[%s1 + $0x718] sm:$0xf]
  %v313 = vld [vmem:[%s1 + $0x71c] sm:$0xff]
  %v314 = vld [vmem:[%s1 + $0x724] sm:$0xff]
  %v315 = vld [vmem:[%s1 + $0x72c] sm:$0xff]
  %v316 = vld [vmem:[%s1 + $0x734] sm:$0xf]
  %v317 = vld [vmem:[%s1 + $0x738] sm:$0xff]
  %v318 = vld [vmem:[%s1 + $0x740] sm:$0xff]
  %v319 = vld [vmem:[%s1 + $0x748] sm:$0xff]
  %v320 = vld [vmem:[%s1 + $0x750] sm:$0xf]
  %v321 = vld [vmem:[%s1 + $0x754] sm:$0xff]
  %v322 = vld [vmem:[%s1 + $0x75c] sm:$0xff]
  %v323 = vld [vmem:[%s1 + $0x764] sm:$0xff]
  %v324 = vld [vmem:[%s1 + $0x76c] sm:$0xf]
  %v325 = vld [vmem:[%s1 + $0x770] sm:$0xff]
  %v326 = vld [vmem:[%s1 + $0x778] sm:$0xff]
  %v327 = vld [vmem:[%s1 + $0x780] sm:$0xff]
  %v328 = vld [vmem:[%s1 + $0x788] sm:$0xf]
  %v329 = vld [vmem:[%s1 + $0x78c] sm:$0xff]
  %v330 = vld [vmem:[%s1 + $0x794] sm:$0xff]
  %v331 = vld [vmem:[%s1 + $0x79c] sm:$0xff]
  %v332 = vld [vmem:[%s1 + $0x7a4] sm:$0xf]
  %v333 = vld [vmem:[%s1 + $0x7a8] sm:$0xff]
  %v334 = vld [vmem:[%s1 + $0x7b0] sm:$0xff]
  %v335 = vld [vmem:[%s1 + $0x7b8] sm:$0xff]
  %v336 = vld [vmem:[%s1 + $0x7c0] sm:$0xf]
  %v337 = vld [vmem:[%s1 + $0x7c4] sm:$0xff]
  %v338 = vld [vmem:[%s1 + $0x7cc] sm:$0xff]
  %v339 = vld [vmem:[%s1 + $0x7d4] sm:$0xff]
  %v340 = vld [vmem:[%s1 + $0x7dc] sm:$0xf]
  %v341 = vld [vmem:[%s1 + $0x7e0] sm:$0xff]
  %v342 = vld [vmem:[%s1 + $0x7e8] sm:$0xff]
  %v343 = vld [vmem:[%s1 + $0x7f0] sm:$0xff]
  %v344 = vld [vmem:[%s1 + $0x7f8] sm:$0xf]
  %v345 = vld [vmem:[%s1 + $0x7fc] sm:$0xff]
  %v346 = vld [vmem:[%s1 + $0x804] sm:$0xff]
  %v347 = vld [vmem:[%s1 + $0x80c] sm:$0xff]
  %v348 = vld [vmem:[%s1 + $0x814] sm:$0xf]
  %v349 = vld [vmem:[%s1 + $0x818] sm:$0xff]
  %v350 = vld [vmem:[%s1 + $0x820] sm:$0xff]
  %v351 = vld [vmem:[%s1 + $0x828] sm:$0xff]
  %v352 = vld [vmem:[%s1 + $0x830] sm:$0xf]
  %v353 = vld [vmem:[%s1 + $0x834] sm:$0xff]
  %v354 = vld [vmem:[%s1 + $0x83c] sm:$0xff]
  %v355 = vld [vmem:[%s1 + $0x844] sm:$0xff]
  %v356 = vld [vmem:[%s1 + $0x84c] sm:$0xf]
  %v357 = vld [vmem:[%s1 + $0x850] sm:$0xff]
  %v358 = vld [vmem:[%s1 + $0x858] sm:$0xff]
  %v359 = vld [vmem:[%s1 + $0x860] sm:$0xff]
  %v360 = vld [vmem:[%s1 + $0x868] sm:$0xf]
  %v361 = vld [vmem:[%s1 + $0x86c] sm:$0xff]
  %v362 = vld [vmem:[%s1 + $0x874] sm:$0xff]
  %v363 = vld [vmem:[%s1 + $0x87c] sm:$0xff]
  %v364 = vld [vmem:[%s1 + $0x884] sm:$0xf]
  %v365 = vld [vmem:[%s1 + $0x888] sm:$0xff]
  %v366 = vld [vmem:[%s1 + $0x890] sm:$0xff]
  %v367 = vld [vmem:[%s1 + $0x898] sm:$0xff]
  %v368 = vld [vmem:[%s1 + $0x8a0] sm:$0xf]
  %v369 = vld [vmem:[%s1 + $0x8a4] sm:$0xff]
  %v370 = vld [vmem:[%s1 + $0x8ac] sm:$0xff]
  %v371 = vld [vmem:[%s1 + $0x8b4] sm:$0xff]
  %v372 = vld [vmem:[%s1 + $0x8bc] sm:$0xf]
  %v373 = vld [vmem:[%s1 + $0x8c0] sm:$0xff]
  %v374 = vld [vmem:[%s1 + $0x8c8] sm:$0xff]
  %v375 = vld [vmem:[%s1 + $0x8d0] sm:$0xff]
  %v376 = vld [vmem:[%s1 + $0x8d8] sm:$0xf]
  %v377 = vld [vmem:[%s1 + $0x8dc] sm:$0xff]
  %v378 = vld [vmem:[%s1 + $0x8e4] sm:$0xff]
  %v379 = vld [vmem:[%s1 + $0x8ec] sm:$0xff]
  %v380 = vld [vmem:[%s1 + $0x8f4] sm:$0xf]
  %v381 = vld [vmem:[%s1 + $0x8f8] sm:$0xff]
  %v382 = vld [vmem:[%s1 + $0x900] sm:$0xff]
  %v383 = vld [vmem:[%s1 + $0x908] sm:$0xff]
  %v384 = vld [vmem:[%s1 + $0x910] sm:$0xf]
  %v385 = vld [vmem:[%s1 + $0x914] sm:$0xff]
  %v386 = vld [vmem:[%s1 + $0x91c] sm:$0xff]
  %v387 = vld [vmem:[%s1 + $0x924] sm:$0xff]
  %v388 = vld [vmem:[%s1 + $0x92c] sm:$0xf]
  %v389 = vld [vmem:[%s1 + $0x930] sm:$0xff]
  %v390 = vld [vmem:[%s1 + $0x938] sm:$0xff]
  %v391 = vld [vmem:[%s1 + $0x940] sm:$0xff]
  %v392 = vld [vmem:[%s1 + $0x948] sm:$0xf]
  %v393 = vld [vmem:[%s1 + $0x94c] sm:$0xff]
  %v394 = vld [vmem:[%s1 + $0x954] sm:$0xff]
  %v395 = vld [vmem:[%s1 + $0x95c] sm:$0xff]
  %v396 = vld [vmem:[%s1 + $0x964] sm:$0xf]
  %v397 = vld [vmem:[%s1 + $0x968] sm:$0xff]
  %v398 = vld [vmem:[%s1 + $0x970] sm:$0xff]
  %v399 = vld [vmem:[%s1 + $0x978] sm:$0xff]
  %v400 = vld [vmem:[%s1 + $0x980] sm:$0xf]
  %v401 = vld [vmem:[%s1 + $0x984] sm:$0xff]
  %v402 = vld [vmem:[%s1 + $0x98c] sm:$0xff]
  %v403 = vld [vmem:[%s1 + $0x994] sm:$0xff]
  %v404 = vld [vmem:[%s1 + $0x99c] sm:$0xf]
  %v405 = vld [vmem:[%s1 + $0x9a0] sm:$0xff]
  %v406 = vld [vmem:[%s1 + $0x9a8] sm:$0xff]
  %v407 = vld [vmem:[%s1 + $0x9b0] sm:$0xff]
  %v408 = vld [vmem:[%s1 + $0x9b8] sm:$0xf]
  %v409 = vld [vmem:[%s1 + $0x9bc] sm:$0xff]
  %v410 = vld [vmem:[%s1 + $0x9c4] sm:$0xff]
  %v411 = vld [vmem:[%s1 + $0x9cc] sm:$0xff]
  %v412 = vld [vmem:[%s1 + $0x9d4] sm:$0xf]
  %v413 = vld [vmem:[%s1 + $0x9d8] sm:$0xff]
  %v414 = vld [vmem:[%s1 + $0x9e0] sm:$0xff]
  %v415 = vld [vmem:[%s1 + $0x9e8] sm:$0xff]
  %v416 = vld [vmem:[%s1 + $0x9f0] sm:$0xf]
  %v417 = vld [vmem:[%s1 + $0x9f4] sm:$0xff]
  %v418 = vld [vmem:[%s1 + $0x9fc] sm:$0xff]
  %v419 = vld [vmem:[%s1 + $0xa04] sm:$0xff]
  %v420 = vld [vmem:[%s1 + $0xa0c] sm:$0xf]
  %v421 = vld [vmem:[%s1 + $0xa10] sm:$0xff]
  %v422 = vld [vmem:[%s1 + $0xa18] sm:$0xff]
  %v423 = vld [vmem:[%s1 + $0xa20] sm:$0xff]
  %v424 = vld [vmem:[%s1 + $0xa28] sm:$0xf]
  %v425 = vld [vmem:[%s1 + $0xa2c] sm:$0xff]
  %v426 = vld [vmem:[%s1 + $0xa34] sm:$0xff]
  %v427 = vld [vmem:[%s1 + $0xa3c] sm:$0xff]
  %v428 = vld [vmem:[%s1 + $0xa44] sm:$0xf]
  %v429 = vld [vmem:[%s1 + $0xa48] sm:$0xff]
  %v430 = vld [vmem:[%s1 + $0xa50] sm:$0xff]
  %v431 = vld [vmem:[%s1 + $0xa58] sm:$0xff]
  %v432 = vld [vmem:[%s1 + $0xa60] sm:$0xf]
  %v433 = vld [vmem:[%s1 + $0xa64] sm:$0xff]
  %v434 = vld [vmem:[%s1 + $0xa6c] sm:$0xff]
  %v435 = vld [vmem:[%s1 + $0xa74] sm:$0xff]
  %v436 = vld [vmem:[%s1 + $0xa7c] sm:$0xf]
  %v437 = vld [vmem:[%s1 + $0xa80] sm:$0xff]
  %v438 = vld [vmem:[%s1 + $0xa88] sm:$0xff]
  %v439 = vld [vmem:[%s1 + $0xa90] sm:$0xff]
  %v440 = vld [vmem:[%s1 + $0xa98] sm:$0xf]
  %v441 = vld [vmem:[%s1 + $0xa9c] sm:$0xff]
  %v442 = vld [vmem:[%s1 + $0xaa4] sm:$0xff]
  %v443 = vld [vmem:[%s1 + $0xaac] sm:$0xff]
  %v444 = vld [vmem:[%s1 + $0xab4] sm:$0xf]
  %v837 = vunpack.c.l.b16 %v53
  %v838 = vunpack.c.h.b16 %v53
  %v839 = vunpack.c.l.b16 %v54
  %v840 = vunpack.c.h.b16 %v54
  %v841 = vunpack.c.l.b16 %v55
  %v842 = vunpack.c.h.b16 %v55
  %v843 = vunpack.c.l.b16 %v56
  %v844 = vunpack.c.l.b16 %v57
  %v845 = vunpack.c.h.b16 %v57
  %v846 = vunpack.c.l.b16 %v58
  %v847 = vunpack.c.h.b16 %v58
  %v848 = vunpack.c.l.b16 %v59
  %v849 = vunpack.c.h.b16 %v59
  %v850 = vunpack.c.l.b16 %v60
  %v851 = vunpack.c.l.b16 %v61
  %v852 = vunpack.c.h.b16 %v61
  %v853 = vunpack.c.l.b16 %v62
  %v854 = vunpack.c.h.b16 %v62
  %v855 = vunpack.c.l.b16 %v63
  %v856 = vunpack.c.h.b16 %v63
  %v857 = vunpack.c.l.b16 %v64
  %v858 = vunpack.c.l.b16 %v65
  %v859 = vunpack.c.h.b16 %v65
  %v860 = vunpack.c.l.b16 %v66
  %v861 = vunpack.c.h.b16 %v66
  %v862 = vunpack.c.l.b16 %v67
  %v863 = vunpack.c.h.b16 %v67
  %v864 = vunpack.c.l.b16 %v68
  %v865 = vunpack.c.l.b16 %v69
  %v866 = vunpack.c.h.b16 %v69
  %v867 = vunpack.c.l.b16 %v70
  %v868 = vunpack.c.h.b16 %v70
  %v869 = vunpack.c.l.b16 %v71
  %v870 = vunpack.c.h.b16 %v71
  %v871 = vunpack.c.l.b16 %v72
  %v872 = vunpack.c.l.b16 %v73
  %v873 = vunpack.c.h.b16 %v73
  %v874 = vunpack.c.l.b16 %v74
  %v875 = vunpack.c.h.b16 %v74
  %v876 = vunpack.c.l.b16 %v75
  %v877 = vunpack.c.h.b16 %v75
  %v878 = vunpack.c.l.b16 %v76
  %v879 = vunpack.c.l.b16 %v77
  %v880 = vunpack.c.h.b16 %v77
  %v881 = vunpack.c.l.b16 %v78
  %v882 = vunpack.c.h.b16 %v78
  %v883 = vunpack.c.l.b16 %v79
  %v884 = vunpack.c.h.b16 %v79
  %v885 = vunpack.c.l.b16 %v80
  %v886 = vunpack.c.l.b16 %v81
  %v887 = vunpack.c.h.b16 %v81
  %v888 = vunpack.c.l.b16 %v82
  %v889 = vunpack.c.h.b16 %v82
  %v890 = vunpack.c.l.b16 %v83
  %v891 = vunpack.c.h.b16 %v83
  %v892 = vunpack.c.l.b16 %v84
  %v893 = vunpack.c.l.b16 %v85
  %v894 = vunpack.c.h.b16 %v85
  %v895 = vunpack.c.l.b16 %v86
  %v896 = vunpack.c.h.b16 %v86
  %v897 = vunpack.c.l.b16 %v87
  %v898 = vunpack.c.h.b16 %v87
  %v899 = vunpack.c.l.b16 %v88
  %v900 = vunpack.c.l.b16 %v89
  %v901 = vunpack.c.h.b16 %v89
  %v902 = vunpack.c.l.b16 %v90
  %v903 = vunpack.c.h.b16 %v90
  %v904 = vunpack.c.l.b16 %v91
  %v905 = vunpack.c.h.b16 %v91
  %v906 = vunpack.c.l.b16 %v92
  %v907 = vunpack.c.l.b16 %v93
  %v908 = vunpack.c.h.b16 %v93
  %v909 = vunpack.c.l.b16 %v94
  %v910 = vunpack.c.h.b16 %v94
  %v911 = vunpack.c.l.b16 %v95
  %v912 = vunpack.c.h.b16 %v95
  %v913 = vunpack.c.l.b16 %v96
  %v914 = vunpack.c.l.b16 %v97
  %v915 = vunpack.c.h.b16 %v97
  %v916 = vunpack.c.l.b16 %v98
  %v917 = vunpack.c.h.b16 %v98
  %v918 = vunpack.c.l.b16 %v99
  %v919 = vunpack.c.h.b16 %v99
  %v920 = vunpack.c.l.b16 %v100
  %v921 = vunpack.c.l.b16 %v101
  %v922 = vunpack.c.h.b16 %v101
  %v923 = vunpack.c.l.b16 %v102
  %v924 = vunpack.c.h.b16 %v102
  %v925 = vunpack.c.l.b16 %v103
  %v926 = vunpack.c.h.b16 %v103
  %v927 = vunpack.c.l.b16 %v104
  %v928 = vunpack.c.l.b16 %v105
  %v929 = vunpack.c.h.b16 %v105
  %v930 = vunpack.c.l.b16 %v106
  %v931 = vunpack.c.h.b16 %v106
  %v932 = vunpack.c.l.b16 %v107
  %v933 = vunpack.c.h.b16 %v107
  %v934 = vunpack.c.l.b16 %v108
  %v935 = vunpack.c.l.b16 %v109
  %v936 = vunpack.c.h.b16 %v109
  %v937 = vunpack.c.l.b16 %v110
  %v938 = vunpack.c.h.b16 %v110
  %v939 = vunpack.c.l.b16 %v111
  %v940 = vunpack.c.h.b16 %v111
  %v941 = vunpack.c.l.b16 %v112
  %v942 = vunpack.c.l.b16 %v113
  %v943 = vunpack.c.h.b16 %v113
  %v944 = vunpack.c.l.b16 %v114
  %v945 = vunpack.c.h.b16 %v114
  %v946 = vunpack.c.l.b16 %v115
  %v947 = vunpack.c.h.b16 %v115
  %v948 = vunpack.c.l.b16 %v116
  %v949 = vunpack.c.l.b16 %v117
  %v950 = vunpack.c.h.b16 %v117
  %v951 = vunpack.c.l.b16 %v118
  %v952 = vunpack.c.h.b16 %v118
  %v953 = vunpack.c.l.b16 %v119
  %v954 = vunpack.c.h.b16 %v119
  %v955 = vunpack.c.l.b16 %v120
  %v956 = vunpack.c.l.b16 %v121
  %v957 = vunpack.c.h.b16 %v121
  %v958 = vunpack.c.l.b16 %v122
  %v959 = vunpack.c.h.b16 %v122
  %v960 = vunpack.c.l.b16 %v123
  %v961 = vunpack.c.h.b16 %v123
  %v962 = vunpack.c.l.b16 %v124
  %v963 = vunpack.c.l.b16 %v125
  %v964 = vunpack.c.h.b16 %v125
  %v965 = vunpack.c.l.b16 %v126
  %v966 = vunpack.c.h.b16 %v126
  %v967 = vunpack.c.l.b16 %v127
  %v968 = vunpack.c.h.b16 %v127
  %v969 = vunpack.c.l.b16 %v128
  %v970 = vunpack.c.l.b16 %v129
  %v971 = vunpack.c.h.b16 %v129
  %v972 = vunpack.c.l.b16 %v130
  %v973 = vunpack.c.h.b16 %v130
  %v974 = vunpack.c.l.b16 %v131
  %v975 = vunpack.c.h.b16 %v131
  %v976 = vunpack.c.l.b16 %v132
  %v977 = vunpack.c.l.b16 %v133
  %v978 = vunpack.c.h.b16 %v133
  %v979 = vunpack.c.l.b16 %v134
  %v980 = vunpack.c.h.b16 %v134
  %v981 = vunpack.c.l.b16 %v135
  %v982 = vunpack.c.h.b16 %v135
  %v983 = vunpack.c.l.b16 %v136
  %v984 = vunpack.c.l.b16 %v137
  %v985 = vunpack.c.h.b16 %v137
  %v986 = vunpack.c.l.b16 %v138
  %v987 = vunpack.c.h.b16 %v138
  %v988 = vunpack.c.l.b16 %v139
  %v989 = vunpack.c.h.b16 %v139
  %v990 = vunpack.c.l.b16 %v140
  %v991 = vunpack.c.l.b16 %v141
  %v992 = vunpack.c.h.b16 %v141
  %v993 = vunpack.c.l.b16 %v142
  %v994 = vunpack.c.h.b16 %v142
  %v995 = vunpack.c.l.b16 %v143
  %v996 = vunpack.c.h.b16 %v143
  %v997 = vunpack.c.l.b16 %v144
  %v998 = vunpack.c.l.b16 %v145
  %v999 = vunpack.c.h.b16 %v145
  %v1000 = vunpack.c.l.b16 %v146
  %v1001 = vunpack.c.h.b16 %v146
  %v1002 = vunpack.c.l.b16 %v147
  %v1003 = vunpack.c.h.b16 %v147
  %v1004 = vunpack.c.l.b16 %v148
  %v1005 = vunpack.c.l.b16 %v149
  %v1006 = vunpack.c.h.b16 %v149
  %v1007 = vunpack.c.l.b16 %v150
  %v1008 = vunpack.c.h.b16 %v150
  %v1009 = vunpack.c.l.b16 %v151
  %v1010 = vunpack.c.h.b16 %v151
  %v1011 = vunpack.c.l.b16 %v152
  %v1012 = vunpack.c.l.b16 %v153
  %v1013 = vunpack.c.h.b16 %v153
  %v1014 = vunpack.c.l.b16 %v154
  %v1015 = vunpack.c.h.b16 %v154
  %v1016 = vunpack.c.l.b16 %v155
  %v1017 = vunpack.c.h.b16 %v155
  %v1018 = vunpack.c.l.b16 %v156
  %v1019 = vunpack.c.l.b16 %v157
  %v1020 = vunpack.c.h.b16 %v157
  %v1021 = vunpack.c.l.b16 %v158
  %v1022 = vunpack.c.h.b16 %v158
  %v1023 = vunpack.c.l.b16 %v159
  %v1024 = vunpack.c.h.b16 %v159
  %v1025 = vunpack.c.l.b16 %v160
  %v1026 = vunpack.c.l.b16 %v161
  %v1027 = vunpack.c.h.b16 %v161
  %v1028 = vunpack.c.l.b16 %v162
  %v1029 = vunpack.c.h.b16 %v162
  %v1030 = vunpack.c.l.b16 %v163
  %v1031 = vunpack.c.h.b16 %v163
  %v1032 = vunpack.c.l.b16 %v164
  %v1033 = vunpack.c.l.b16 %v165
  %v1034 = vunpack.c.h.b16 %v165
  %v1035 = vunpack.c.l.b16 %v166
  %v1036 = vunpack.c.h.b16 %v166
  %v1037 = vunpack.c.l.b16 %v167
  %v1038 = vunpack.c.h.b16 %v167
  %v1039 = vunpack.c.l.b16 %v168
  %v1040 = vunpack.c.l.b16 %v169
  %v1041 = vunpack.c.h.b16 %v169
  %v1042 = vunpack.c.l.b16 %v170
  %v1043 = vunpack.c.h.b16 %v170
  %v1044 = vunpack.c.l.b16 %v171
  %v1045 = vunpack.c.h.b16 %v171
  %v1046 = vunpack.c.l.b16 %v172
  %v1047 = vunpack.c.l.b16 %v173
  %v1048 = vunpack.c.h.b16 %v173
  %v1049 = vunpack.c.l.b16 %v174
  %v1050 = vunpack.c.h.b16 %v174
  %v1051 = vunpack.c.l.b16 %v175
  %v1052 = vunpack.c.h.b16 %v175
  %v1053 = vunpack.c.l.b16 %v176
  %v1054 = vunpack.c.l.b16 %v177
  %v1055 = vunpack.c.h.b16 %v177
  %v1056 = vunpack.c.l.b16 %v178
  %v1057 = vunpack.c.h.b16 %v178
  %v1058 = vunpack.c.l.b16 %v179
  %v1059 = vunpack.c.h.b16 %v179
  %v1060 = vunpack.c.l.b16 %v180
  %v1061 = vunpack.c.l.b16 %v181
  %v1062 = vunpack.c.h.b16 %v181
  %v1063 = vunpack.c.l.b16 %v182
  %v1064 = vunpack.c.h.b16 %v182
  %v1065 = vunpack.c.l.b16 %v183
  %v1066 = vunpack.c.h.b16 %v183
  %v1067 = vunpack.c.l.b16 %v184
  %v1068 = vunpack.c.l.b16 %v185
  %v1069 = vunpack.c.h.b16 %v185
  %v1070 = vunpack.c.l.b16 %v186
  %v1071 = vunpack.c.h.b16 %v186
  %v1072 = vunpack.c.l.b16 %v187
  %v1073 = vunpack.c.h.b16 %v187
  %v1074 = vunpack.c.l.b16 %v188
  %v1075 = vunpack.c.l.b16 %v189
  %v1076 = vunpack.c.h.b16 %v189
  %v1077 = vunpack.c.l.b16 %v190
  %v1078 = vunpack.c.h.b16 %v190
  %v1079 = vunpack.c.l.b16 %v191
  %v1080 = vunpack.c.h.b16 %v191
  %v1081 = vunpack.c.l.b16 %v192
  %v1082 = vunpack.c.l.b16 %v193
  %v1083 = vunpack.c.h.b16 %v193
  %v1084 = vunpack.c.l.b16 %v194
  %v1085 = vunpack.c.h.b16 %v194
  %v1086 = vunpack.c.l.b16 %v195
  %v1087 = vunpack.c.h.b16 %v195
  %v1088 = vunpack.c.l.b16 %v196
  %v1089 = vunpack.c.l.b16 %v197
  %v1090 = vunpack.c.h.b16 %v197
  %v1091 = vunpack.c.l.b16 %v198
  %v1092 = vunpack.c.h.b16 %v198
  %v1093 = vunpack.c.l.b16 %v199
  %v1094 = vunpack.c.h.b16 %v199
  %v1095 = vunpack.c.l.b16 %v200
  %v1096 = vunpack.c.l.b16 %v201
  %v1097 = vunpack.c.h.b16 %v201
  %v1098 = vunpack.c.l.b16 %v202
  %v1099 = vunpack.c.h.b16 %v202
  %v1100 = vunpack.c.l.b16 %v203
  %v1101 = vunpack.c.h.b16 %v203
  %v1102 = vunpack.c.l.b16 %v204
  %v1103 = vunpack.c.l.b16 %v205
  %v1104 = vunpack.c.h.b16 %v205
  %v1105 = vunpack.c.l.b16 %v206
  %v1106 = vunpack.c.h.b16 %v206
  %v1107 = vunpack.c.l.b16 %v207
  %v1108 = vunpack.c.h.b16 %v207
  %v1109 = vunpack.c.l.b16 %v208
  %v1110 = vunpack.c.l.b16 %v209
  %v1111 = vunpack.c.h.b16 %v209
  %v1112 = vunpack.c.l.b16 %v210
  %v1113 = vunpack.c.h.b16 %v210
  %v1114 = vunpack.c.l.b16 %v211
  %v1115 = vunpack.c.h.b16 %v211
  %v1116 = vunpack.c.l.b16 %v212
  %v1117 = vunpack.c.l.b16 %v213
  %v1118 = vunpack.c.h.b16 %v213
  %v1119 = vunpack.c.l.b16 %v214
  %v1120 = vunpack.c.h.b16 %v214
  %v1121 = vunpack.c.l.b16 %v215
  %v1122 = vunpack.c.h.b16 %v215
  %v1123 = vunpack.c.l.b16 %v216
  %v1124 = vunpack.c.l.b16 %v217
  %v1125 = vunpack.c.h.b16 %v217
  %v1126 = vunpack.c.l.b16 %v218
  %v1127 = vunpack.c.h.b16 %v218
  %v1128 = vunpack.c.l.b16 %v219
  %v1129 = vunpack.c.h.b16 %v219
  %v1130 = vunpack.c.l.b16 %v220
  %v1131 = vunpack.c.l.b16 %v221
  %v1132 = vunpack.c.h.b16 %v221
  %v1133 = vunpack.c.l.b16 %v222
  %v1134 = vunpack.c.h.b16 %v222
  %v1135 = vunpack.c.l.b16 %v223
  %v1136 = vunpack.c.h.b16 %v223
  %v1137 = vunpack.c.l.b16 %v224
  %v1138 = vunpack.c.l.b16 %v225
  %v1139 = vunpack.c.h.b16 %v225
  %v1140 = vunpack.c.l.b16 %v226
  %v1141 = vunpack.c.h.b16 %v226
  %v1142 = vunpack.c.l.b16 %v227
  %v1143 = vunpack.c.h.b16 %v227
  %v1144 = vunpack.c.l.b16 %v228
  %v1145 = vunpack.c.l.b16 %v229
  %v1146 = vunpack.c.h.b16 %v229
  %v1147 = vunpack.c.l.b16 %v230
  %v1148 = vunpack.c.h.b16 %v230
  %v1149 = vunpack.c.l.b16 %v231
  %v1150 = vunpack.c.h.b16 %v231
  %v1151 = vunpack.c.l.b16 %v232
  %v1152 = vunpack.c.l.b16 %v233
  %v1153 = vunpack.c.h.b16 %v233
  %v1154 = vunpack.c.l.b16 %v234
  %v1155 = vunpack.c.h.b16 %v234
  %v1156 = vunpack.c.l.b16 %v235
  %v1157 = vunpack.c.h.b16 %v235
  %v1158 = vunpack.c.l.b16 %v236
  %v1159 = vunpack.c.l.b16 %v237
  %v1160 = vunpack.c.h.b16 %v237
  %v1161 = vunpack.c.l.b16 %v238
  %v1162 = vunpack.c.h.b16 %v238
  %v1163 = vunpack.c.l.b16 %v239
  %v1164 = vunpack.c.h.b16 %v239
  %v1165 = vunpack.c.l.b16 %v240
  %v1166 = vunpack.c.l.b16 %v241
  %v1167 = vunpack.c.h.b16 %v241
  %v1168 = vunpack.c.l.b16 %v242
  %v1169 = vunpack.c.h.b16 %v242
  %v1170 = vunpack.c.l.b16 %v243
  %v1171 = vunpack.c.h.b16 %v243
  %v1172 = vunpack.c.l.b16 %v244
  %v1173 = vunpack.c.l.b16 %v245
  %v1174 = vunpack.c.h.b16 %v245
  %v1175 = vunpack.c.l.b16 %v246
  %v1176 = vunpack.c.h.b16 %v246
  %v1177 = vunpack.c.l.b16 %v247
  %v1178 = vunpack.c.h.b16 %v247
  %v1179 = vunpack.c.l.b16 %v248
  %v1180 = vunpack.c.l.b16 %v249
  %v1181 = vunpack.c.h.b16 %v249
  %v1182 = vunpack.c.l.b16 %v250
  %v1183 = vunpack.c.h.b16 %v250
  %v1184 = vunpack.c.l.b16 %v251
  %v1185 = vunpack.c.h.b16 %v251
  %v1186 = vunpack.c.l.b16 %v252
  %v1187 = vunpack.c.l.b16 %v253
  %v1188 = vunpack.c.h.b16 %v253
  %v1189 = vunpack.c.l.b16 %v254
  %v1190 = vunpack.c.h.b16 %v254
  %v1191 = vunpack.c.l.b16 %v255
  %v1192 = vunpack.c.h.b16 %v255
  %v1193 = vunpack.c.l.b16 %v256
  %v1194 = vunpack.c.l.b16 %v257
  %v1195 = vunpack.c.h.b16 %v257
  %v1196 = vunpack.c.l.b16 %v258
  %v1197 = vunpack.c.h.b16 %v258
  %v1198 = vunpack.c.l.b16 %v259
  %v1199 = vunpack.c.h.b16 %v259
  %v1200 = vunpack.c.l.b16 %v260
  %v1201 = vunpack.c.l.b16 %v261
  %v1202 = vunpack.c.h.b16 %v261
  %v1203 = vunpack.c.l.b16 %v262
  %v1204 = vunpack.c.h.b16 %v262
  %v1205 = vunpack.c.l.b16 %v263
  %v1206 = vunpack.c.h.b16 %v263
  %v1207 = vunpack.c.l.b16 %v264
  %v1208 = vunpack.c.l.b16 %v265
  %v1209 = vunpack.c.h.b16 %v265
  %v1210 = vunpack.c.l.b16 %v266
  %v1211 = vunpack.c.h.b16 %v266
  %v1212 = vunpack.c.l.b16 %v267
  %v1213 = vunpack.c.h.b16 %v267
  %v1214 = vunpack.c.l.b16 %v268
  %v1215 = vunpack.c.l.b16 %v269
  %v1216 = vunpack.c.h.b16 %v269
  %v1217 = vunpack.c.l.b16 %v270
  %v1218 = vunpack.c.h.b16 %v270
  %v1219 = vunpack.c.l.b16 %v271
  %v1220 = vunpack.c.h.b16 %v271
  %v1221 = vunpack.c.l.b16 %v272
  %v1222 = vunpack.c.l.b16 %v273
  %v1223 = vunpack.c.h.b16 %v273
  %v1224 = vunpack.c.l.b16 %v274
  %v1225 = vunpack.c.h.b16 %v274
  %v1226 = vunpack.c.l.b16 %v275
  %v1227 = vunpack.c.h.b16 %v275
  %v1228 = vunpack.c.l.b16 %v276
  %v1229 = vunpack.c.l.b16 %v277
  %v1230 = vunpack.c.h.b16 %v277
  %v1231 = vunpack.c.l.b16 %v278
  %v1232 = vunpack.c.h.b16 %v278
  %v1233 = vunpack.c.l.b16 %v279
  %v1234 = vunpack.c.h.b16 %v279
  %v1235 = vunpack.c.l.b16 %v280
  %v1236 = vunpack.c.l.b16 %v281
  %v1237 = vunpack.c.h.b16 %v281
  %v1238 = vunpack.c.l.b16 %v282
  %v1239 = vunpack.c.h.b16 %v282
  %v1240 = vunpack.c.l.b16 %v283
  %v1241 = vunpack.c.h.b16 %v283
  %v1242 = vunpack.c.l.b16 %v284
  %v1243 = vunpack.c.l.b16 %v285
  %v1244 = vunpack.c.h.b16 %v285
  %v1245 = vunpack.c.l.b16 %v286
  %v1246 = vunpack.c.h.b16 %v286
  %v1247 = vunpack.c.l.b16 %v287
  %v1248 = vunpack.c.h.b16 %v287
  %v1249 = vunpack.c.l.b16 %v288
  %v1250 = vunpack.c.l.b16 %v289
  %v1251 = vunpack.c.h.b16 %v289
  %v1252 = vunpack.c.l.b16 %v290
  %v1253 = vunpack.c.h.b16 %v290
  %v1254 = vunpack.c.l.b16 %v291
  %v1255 = vunpack.c.h.b16 %v291
  %v1256 = vunpack.c.l.b16 %v292
  %v1257 = vunpack.c.l.b16 %v293
  %v1258 = vunpack.c.h.b16 %v293
  %v1259 = vunpack.c.l.b16 %v294
  %v1260 = vunpack.c.h.b16 %v294
  %v1261 = vunpack.c.l.b16 %v295
  %v1262 = vunpack.c.h.b16 %v295
  %v1263 = vunpack.c.l.b16 %v296
  %v1264 = vunpack.c.l.b16 %v297
  %v1265 = vunpack.c.h.b16 %v297
  %v1266 = vunpack.c.l.b16 %v298
  %v1267 = vunpack.c.h.b16 %v298
  %v1268 = vunpack.c.l.b16 %v299
  %v1269 = vunpack.c.h.b16 %v299
  %v1270 = vunpack.c.l.b16 %v300
  %v1271 = vunpack.c.l.b16 %v301
  %v1272 = vunpack.c.h.b16 %v301
  %v1273 = vunpack.c.l.b16 %v302
  %v1274 = vunpack.c.h.b16 %v302
  %v1275 = vunpack.c.l.b16 %v303
  %v1276 = vunpack.c.h.b16 %v303
  %v1277 = vunpack.c.l.b16 %v304
  %v1278 = vunpack.c.l.b16 %v305
  %v1279 = vunpack.c.h.b16 %v305
  %v1280 = vunpack.c.l.b16 %v306
  %v1281 = vunpack.c.h.b16 %v306
  %v1282 = vunpack.c.l.b16 %v307
  %v1283 = vunpack.c.h.b16 %v307
  %v1284 = vunpack.c.l.b16 %v308
  %v1285 = vunpack.c.l.b16 %v309
  %v1286 = vunpack.c.h.b16 %v309
  %v1287 = vunpack.c.l.b16 %v310
  %v1288 = vunpack.c.h.b16 %v310
  %v1289 = vunpack.c.l.b16 %v311
  %v1290 = vunpack.c.h.b16 %v311
  %v1291 = vunpack.c.l.b16 %v312
  %v1292 = vunpack.c.l.b16 %v313
  %v1293 = vunpack.c.h.b16 %v313
  %v1294 = vunpack.c.l.b16 %v314
  %v1295 = vunpack.c.h.b16 %v314
  %v1296 = vunpack.c.l.b16 %v315
  %v1297 = vunpack.c.h.b16 %v315
  %v1298 = vunpack.c.l.b16 %v316
  %v1299 = vunpack.c.l.b16 %v317
  %v1300 = vunpack.c.h.b16 %v317
  %v1301 = vunpack.c.l.b16 %v318
  %v1302 = vunpack.c.h.b16 %v318
  %v1303 = vunpack.c.l.b16 %v319
  %v1304 = vunpack.c.h.b16 %v319
  %v1305 = vunpack.c.l.b16 %v320
  %v1306 = vunpack.c.l.b16 %v321
  %v1307 = vunpack.c.h.b16 %v321
  %v1308 = vunpack.c.l.b16 %v322
  %v1309 = vunpack.c.h.b16 %v322
  %v1310 = vunpack.c.l.b16 %v323
  %v1311 = vunpack.c.h.b16 %v323
  %v1312 = vunpack.c.l.b16 %v324
  %v1313 = vunpack.c.l.b16 %v325
  %v1314 = vunpack.c.h.b16 %v325
  %v1315 = vunpack.c.l.b16 %v326
  %v1316 = vunpack.c.h.b16 %v326
  %v1317 = vunpack.c.l.b16 %v327
  %v1318 = vunpack.c.h.b16 %v327
  %v1319 = vunpack.c.l.b16 %v328
  %v1320 = vunpack.c.l.b16 %v329
  %v1321 = vunpack.c.h.b16 %v329
  %v1322 = vunpack.c.l.b16 %v330
  %v1323 = vunpack.c.h.b16 %v330
  %v1324 = vunpack.c.l.b16 %v331
  %v1325 = vunpack.c.h.b16 %v331
  %v1326 = vunpack.c.l.b16 %v332
  %v1327 = vunpack.c.l.b16 %v333
  %v1328 = vunpack.c.h.b16 %v333
  %v1329 = vunpack.c.l.b16 %v334
  %v1330 = vunpack.c.h.b16 %v334
  %v1331 = vunpack.c.l.b16 %v335
  %v1332 = vunpack.c.h.b16 %v335
  %v1333 = vunpack.c.l.b16 %v336
  %v1334 = vunpack.c.l.b16 %v337
  %v1335 = vunpack.c.h.b16 %v337
  %v1336 = vunpack.c.l.b16 %v338
  %v1337 = vunpack.c.h.b16 %v338
  %v1338 = vunpack.c.l.b16 %v339
  %v1339 = vunpack.c.h.b16 %v339
  %v1340 = vunpack.c.l.b16 %v340
  %v1341 = vunpack.c.l.b16 %v341
  %v1342 = vunpack.c.h.b16 %v341
  %v1343 = vunpack.c.l.b16 %v342
  %v1344 = vunpack.c.h.b16 %v342
  %v1345 = vunpack.c.l.b16 %v343
  %v1346 = vunpack.c.h.b16 %v343
  %v1347 = vunpack.c.l.b16 %v344
  %v1348 = vunpack.c.l.b16 %v345
  %v1349 = vunpack.c.h.b16 %v345
  %v1350 = vunpack.c.l.b16 %v346
  %v1351 = vunpack.c.h.b16 %v346
  %v1352 = vunpack.c.l.b16 %v347
  %v1353 = vunpack.c.h.b16 %v347
  %v1354 = vunpack.c.l.b16 %v348
  %v1355 = vunpack.c.l.b16 %v349
  %v1356 = vunpack.c.h.b16 %v349
  %v1357 = vunpack.c.l.b16 %v350
  %v1358 = vunpack.c.h.b16 %v350
  %v1359 = vunpack.c.l.b16 %v351
  %v1360 = vunpack.c.h.b16 %v351
  %v1361 = vunpack.c.l.b16 %v352
  %v1362 = vunpack.c.l.b16 %v353
  %v1363 = vunpack.c.h.b16 %v353
  %v1364 = vunpack.c.l.b16 %v354
  %v1365 = vunpack.c.h.b16 %v354
  %v1366 = vunpack.c.l.b16 %v355
  %v1367 = vunpack.c.h.b16 %v355
  %v1368 = vunpack.c.l.b16 %v356
  %v1369 = vunpack.c.l.b16 %v357
  %v1370 = vunpack.c.h.b16 %v357
  %v1371 = vunpack.c.l.b16 %v358
  %v1372 = vunpack.c.h.b16 %v358
  %v1373 = vunpack.c.l.b16 %v359
  %v1374 = vunpack.c.h.b16 %v359
  %v1375 = vunpack.c.l.b16 %v360
  %v1376 = vunpack.c.l.b16 %v361
  %v1377 = vunpack.c.h.b16 %v361
  %v1378 = vunpack.c.l.b16 %v362
  %v1379 = vunpack.c.h.b16 %v362
  %v1380 = vunpack.c.l.b16 %v363
  %v1381 = vunpack.c.h.b16 %v363
  %v1382 = vunpack.c.l.b16 %v364
  %v1383 = vunpack.c.l.b16 %v365
  %v1384 = vunpack.c.h.b16 %v365
  %v1385 = vunpack.c.l.b16 %v366
  %v1386 = vunpack.c.h.b16 %v366
  %v1387 = vunpack.c.l.b16 %v367
  %v1388 = vunpack.c.h.b16 %v367
  %v1389 = vunpack.c.l.b16 %v368
  %v1390 = vunpack.c.l.b16 %v369
  %v1391 = vunpack.c.h.b16 %v369
  %v1392 = vunpack.c.l.b16 %v370
  %v1393 = vunpack.c.h.b16 %v370
  %v1394 = vunpack.c.l.b16 %v371
  %v1395 = vunpack.c.h.b16 %v371
  %v1396 = vunpack.c.l.b16 %v372
  %v1397 = vunpack.c.l.b16 %v373
  %v1398 = vunpack.c.h.b16 %v373
  %v1399 = vunpack.c.l.b16 %v374
  %v1400 = vunpack.c.h.b16 %v374
  %v1401 = vunpack.c.l.b16 %v375
  %v1402 = vunpack.c.h.b16 %v375
  %v1403 = vunpack.c.l.b16 %v376
  %v1404 = vunpack.c.l.b16 %v377
  %v1405 = vunpack.c.h.b16 %v377
  %v1406 = vunpack.c.l.b16 %v378
  %v1407 = vunpack.c.h.b16 %v378
  %v1408 = vunpack.c.l.b16 %v379
  %v1409 = vunpack.c.h.b16 %v379
  %v1410 = vunpack.c.l.b16 %v380
  %v1411 = vunpack.c.l.b16 %v381
  %v1412 = vunpack.c.h.b16 %v381
  %v1413 = vunpack.c.l.b16 %v382
  %v1414 = vunpack.c.h.b16 %v382
  %v1415 = vunpack.c.l.b16 %v383
  %v1416 = vunpack.c.h.b16 %v383
  %v1417 = vunpack.c.l.b16 %v384
  %v1418 = vunpack.c.l.b16 %v385
  %v1419 = vunpack.c.h.b16 %v385
  %v1420 = vunpack.c.l.b16 %v386
  %v1421 = vunpack.c.h.b16 %v386
  %v1422 = vunpack.c.l.b16 %v387
  %v1423 = vunpack.c.h.b16 %v387
  %v1424 = vunpack.c.l.b16 %v388
  %v1425 = vunpack.c.l.b16 %v389
  %v1426 = vunpack.c.h.b16 %v389
  %v1427 = vunpack.c.l.b16 %v390
  %v1428 = vunpack.c.h.b16 %v390
  %v1429 = vunpack.c.l.b16 %v391
  %v1430 = vunpack.c.h.b16 %v391
  %v1431 = vunpack.c.l.b16 %v392
  %v1432 = vunpack.c.l.b16 %v393
  %v1433 = vunpack.c.h.b16 %v393
  %v1434 = vunpack.c.l.b16 %v394
  %v1435 = vunpack.c.h.b16 %v394
  %v1436 = vunpack.c.l.b16 %v395
  %v1437 = vunpack.c.h.b16 %v395
  %v1438 = vunpack.c.l.b16 %v396
  %v1439 = vunpack.c.l.b16 %v397
  %v1440 = vunpack.c.h.b16 %v397
  %v1441 = vunpack.c.l.b16 %v398
  %v1442 = vunpack.c.h.b16 %v398
  %v1443 = vunpack.c.l.b16 %v399
  %v1444 = vunpack.c.h.b16 %v399
  %v1445 = vunpack.c.l.b16 %v400
  %v1446 = vunpack.c.l.b16 %v401
  %v1447 = vunpack.c.h.b16 %v401
  %v1448 = vunpack.c.l.b16 %v402
  %v1449 = vunpack.c.h.b16 %v402
  %v1450 = vunpack.c.l.b16 %v403
  %v1451 = vunpack.c.h.b16 %v403
  %v1452 = vunpack.c.l.b16 %v404
  %v1453 = vunpack.c.l.b16 %v405
  %v1454 = vunpack.c.h.b16 %v405
  %v1455 = vunpack.c.l.b16 %v406
  %v1456 = vunpack.c.h.b16 %v406
  %v1457 = vunpack.c.l.b16 %v407
  %v1458 = vunpack.c.h.b16 %v407
  %v1459 = vunpack.c.l.b16 %v408
  %v1460 = vunpack.c.l.b16 %v409
  %v1461 = vunpack.c.h.b16 %v409
  %v1462 = vunpack.c.l.b16 %v410
  %v1463 = vunpack.c.h.b16 %v410
  %v1464 = vunpack.c.l.b16 %v411
  %v1465 = vunpack.c.h.b16 %v411
  %v1466 = vunpack.c.l.b16 %v412
  %v1467 = vunpack.c.l.b16 %v413
  %v1468 = vunpack.c.h.b16 %v413
  %v1469 = vunpack.c.l.b16 %v414
  %v1470 = vunpack.c.h.b16 %v414
  %v1471 = vunpack.c.l.b16 %v415
  %v1472 = vunpack.c.h.b16 %v415
  %v1473 = vunpack.c.l.b16 %v416
  %v1474 = vunpack.c.l.b16 %v417
  %v1475 = vunpack.c.h.b16 %v417
  %v1476 = vunpack.c.l.b16 %v418
  %v1477 = vunpack.c.h.b16 %v418
  %v1478 = vunpack.c.l.b16 %v419
  %v1479 = vunpack.c.h.b16 %v419
  %v1480 = vunpack.c.l.b16 %v420
  %v1481 = vunpack.c.l.b16 %v421
  %v1482 = vunpack.c.h.b16 %v421
  %v1483 = vunpack.c.l.b16 %v422
  %v1484 = vunpack.c.h.b16 %v422
  %v1485 = vunpack.c.l.b16 %v423
  %v1486 = vunpack.c.h.b16 %v423
  %v1487 = vunpack.c.l.b16 %v424
  %v1488 = vunpack.c.l.b16 %v425
  %v1489 = vunpack.c.h.b16 %v425
  %v1490 = vunpack.c.l.b16 %v426
  %v1491 = vunpack.c.h.b16 %v426
  %v1492 = vunpack.c.l.b16 %v427
  %v1493 = vunpack.c.h.b16 %v427
  %v1494 = vunpack.c.l.b16 %v428
  %v1495 = vunpack.c.l.b16 %v429
  %v1496 = vunpack.c.h.b16 %v429
  %v1497 = vunpack.c.l.b16 %v430
  %v1498 = vunpack.c.h.b16 %v430
  %v1499 = vunpack.c.l.b16 %v431
  %v1500 = vunpack.c.h.b16 %v431
  %v1501 = vunpack.c.l.b16 %v432
  %v1502 = vunpack.c.l.b16 %v433
  %v1503 = vunpack.c.h.b16 %v433
  %v1504 = vunpack.c.l.b16 %v434
  %v1505 = vunpack.c.h.b16 %v434
  %v1506 = vunpack.c.l.b16 %v435
  %v1507 = vunpack.c.h.b16 %v435
  %v1508 = vunpack.c.l.b16 %v436
  %v1509 = vunpack.c.l.b16 %v437
  %v1510 = vunpack.c.h.b16 %v437
  %v1511 = vunpack.c.l.b16 %v438
  %v1512 = vunpack.c.h.b16 %v438
  %v1513 = vunpack.c.l.b16 %v439
  %v1514 = vunpack.c.h.b16 %v439
  %v1515 = vunpack.c.l.b16 %v440
  %v1516 = vunpack.c.l.b16 %v441
  %v1517 = vunpack.c.h.b16 %v441
  %v1518 = vunpack.c.l.b16 %v442
  %v1519 = vunpack.c.h.b16 %v442
  %v1520 = vunpack.c.l.b16 %v443
  %v1521 = vunpack.c.h.b16 %v443
  %v1522 = vunpack.c.l.b16 %v444
  %v1523 = vpack.c.b16 %v844, %v837
  %v1524 = vpack.c.b16 %v845, %v838
  %v1525 = vpack.c.b16 %v846, %v839
  %v1526 = vpack.c.b16 %v847, %v840
  %v1527 = vpack.c.b16 %v848, %v841
  %v1528 = vpack.c.b16 %v849, %v842
  %v1529 = vpack.c.b16 %v850, %v843
  %v1530 = vpack.c.b16 %v858, %v851
  %v1531 = vpack.c.b16 %v859, %v852
  %v1532 = vpack.c.b16 %v860, %v853
  %v1533 = vpack.c.b16 %v861, %v854
  %v1534 = vpack.c.b16 %v862, %v855
  %v1535 = vpack.c.b16 %v863, %v856
  %v1536 = vpack.c.b16 %v864, %v857
  %v1537 = vpack.c.b16 %v872, %v865
  %v1538 = vpack.c.b16 %v873, %v866
  %v1539 = vpack.c.b16 %v874, %v867
  %v1540 = vpack.c.b16 %v875, %v868
  %v1541 = vpack.c.b16 %v876, %v869
  %v1542 = vpack.c.b16 %v877, %v870
  %v1543 = vpack.c.b16 %v878, %v871
  %v1544 = vpack.c.b16 %v886, %v879
  %v1545 = vpack.c.b16 %v887, %v880
  %v1546 = vpack.c.b16 %v888, %v881
  %v1547 = vpack.c.b16 %v889, %v882
  %v1548 = vpack.c.b16 %v890, %v883
  %v1549 = vpack.c.b16 %v891, %v884
  %v1550 = vpack.c.b16 %v892, %v885
  %v1551 = vpack.c.b16 %v900, %v893
  %v1552 = vpack.c.b16 %v901, %v894
  %v1553 = vpack.c.b16 %v902, %v895
  %v1554 = vpack.c.b16 %v903, %v896
  %v1555 = vpack.c.b16 %v904, %v897
  %v1556 = vpack.c.b16 %v905, %v898
  %v1557 = vpack.c.b16 %v906, %v899
  %v1558 = vpack.c.b16 %v914, %v907
  %v1559 = vpack.c.b16 %v915, %v908
  %v1560 = vpack.c.b16 %v916, %v909
  %v1561 = vpack.c.b16 %v917, %v910
  %v1562 = vpack.c.b16 %v918, %v911
  %v1563 = vpack.c.b16 %v919, %v912
  %v1564 = vpack.c.b16 %v920, %v913
  %v1565 = vpack.c.b16 %v928, %v921
  %v1566 = vpack.c.b16 %v929, %v922
  %v1567 = vpack.c.b16 %v930, %v923
  %v1568 = vpack.c.b16 %v931, %v924
  %v1569 = vpack.c.b16 %v932, %v925
  %v1570 = vpack.c.b16 %v933, %v926
  %v1571 = vpack.c.b16 %v934, %v927
  %v1572 = vpack.c.b16 %v942, %v935
  %v1573 = vpack.c.b16 %v943, %v936
  %v1574 = vpack.c.b16 %v944, %v937
  %v1575 = vpack.c.b16 %v945, %v938
  %v1576 = vpack.c.b16 %v946, %v939
  %v1577 = vpack.c.b16 %v947, %v940
  %v1578 = vpack.c.b16 %v948, %v941
  %v1579 = vpack.c.b16 %v956, %v949
  %v1580 = vpack.c.b16 %v957, %v950
  %v1581 = vpack.c.b16 %v958, %v951
  %v1582 = vpack.c.b16 %v959, %v952
  %v1583 = vpack.c.b16 %v960, %v953
  %v1584 = vpack.c.b16 %v961, %v954
  %v1585 = vpack.c.b16 %v962, %v955
  %v1586 = vpack.c.b16 %v970, %v963
  %v1587 = vpack.c.b16 %v971, %v964
  %v1588 = vpack.c.b16 %v972, %v965
  %v1589 = vpack.c.b16 %v973, %v966
  %v1590 = vpack.c.b16 %v974, %v967
  %v1591 = vpack.c.b16 %v975, %v968
  %v1592 = vpack.c.b16 %v976, %v969
  %v1593 = vpack.c.b16 %v984, %v977
  %v1594 = vpack.c.b16 %v985, %v978
  %v1595 = vpack.c.b16 %v986, %v979
  %v1596 = vpack.c.b16 %v987, %v980
  %v1597 = vpack.c.b16 %v988, %v981
  %v1598 = vpack.c.b16 %v989, %v982
  %v1599 = vpack.c.b16 %v990, %v983
  %v1600 = vpack.c.b16 %v998, %v991
  %v1601 = vpack.c.b16 %v999, %v992
  %v1602 = vpack.c.b16 %v1000, %v993
  %v1603 = vpack.c.b16 %v1001, %v994
  %v1604 = vpack.c.b16 %v1002, %v995
  %v1605 = vpack.c.b16 %v1003, %v996
  %v1606 = vpack.c.b16 %v1004, %v997
  %v1607 = vpack.c.b16 %v1012, %v1005
  %v1608 = vpack.c.b16 %v1013, %v1006
  %v1609 = vpack.c.b16 %v1014, %v1007
  %v1610 = vpack.c.b16 %v1015, %v1008
  %v1611 = vpack.c.b16 %v1016, %v1009
  %v1612 = vpack.c.b16 %v1017, %v1010
  %v1613 = vpack.c.b16 %v1018, %v1011
  %v1614 = vpack.c.b16 %v1026, %v1019
  %v1615 = vpack.c.b16 %v1027, %v1020
  %v1616 = vpack.c.b16 %v1028, %v1021
  %v1617 = vpack.c.b16 %v1029, %v1022
  %v1618 = vpack.c.b16 %v1030, %v1023
  %v1619 = vpack.c.b16 %v1031, %v1024
  %v1620 = vpack.c.b16 %v1032, %v1025
  %v1621 = vpack.c.b16 %v1040, %v1033
  %v1622 = vpack.c.b16 %v1041, %v1034
  %v1623 = vpack.c.b16 %v1042, %v1035
  %v1624 = vpack.c.b16 %v1043, %v1036
  %v1625 = vpack.c.b16 %v1044, %v1037
  %v1626 = vpack.c.b16 %v1045, %v1038
  %v1627 = vpack.c.b16 %v1046, %v1039
  %v1628 = vpack.c.b16 %v1054, %v1047
  %v1629 = vpack.c.b16 %v1055, %v1048
  %v1630 = vpack.c.b16 %v1056, %v1049
  %v1631 = vpack.c.b16 %v1057, %v1050
  %v1632 = vpack.c.b16 %v1058, %v1051
  %v1633 = vpack.c.b16 %v1059, %v1052
  %v1634 = vpack.c.b16 %v1060, %v1053
  %v1635 = vpack.c.b16 %v1068, %v1061
  %v1636 = vpack.c.b16 %v1069, %v1062
  %v1637 = vpack.c.b16 %v1070, %v1063
  %v1638 = vpack.c.b16 %v1071, %v1064
  %v1639 = vpack.c.b16 %v1072, %v1065
  %v1640 = vpack.c.b16 %v1073, %v1066
  %v1641 = vpack.c.b16 %v1074, %v1067
  %v1642 = vpack.c.b16 %v1082, %v1075
  %v1643 = vpack.c.b16 %v1083, %v1076
  %v1644 = vpack.c.b16 %v1084, %v1077
  %v1645 = vpack.c.b16 %v1085, %v1078
  %v1646 = vpack.c.b16 %v1086, %v1079
  %v1647 = vpack.c.b16 %v1087, %v1080
  %v1648 = vpack.c.b16 %v1088, %v1081
  %v1649 = vpack.c.b16 %v1096, %v1089
  %v1650 = vpack.c.b16 %v1097, %v1090
  %v1651 = vpack.c.b16 %v1098, %v1091
  %v1652 = vpack.c.b16 %v1099, %v1092
  %v1653 = vpack.c.b16 %v1100, %v1093
  %v1654 = vpack.c.b16 %v1101, %v1094
  %v1655 = vpack.c.b16 %v1102, %v1095
  %v1656 = vpack.c.b16 %v1110, %v1103
  %v1657 = vpack.c.b16 %v1111, %v1104
  %v1658 = vpack.c.b16 %v1112, %v1105
  %v1659 = vpack.c.b16 %v1113, %v1106
  %v1660 = vpack.c.b16 %v1114, %v1107
  %v1661 = vpack.c.b16 %v1115, %v1108
  %v1662 = vpack.c.b16 %v1116, %v1109
  %v1663 = vpack.c.b16 %v1124, %v1117
  %v1664 = vpack.c.b16 %v1125, %v1118
  %v1665 = vpack.c.b16 %v1126, %v1119
  %v1666 = vpack.c.b16 %v1127, %v1120
  %v1667 = vpack.c.b16 %v1128, %v1121
  %v1668 = vpack.c.b16 %v1129, %v1122
  %v1669 = vpack.c.b16 %v1130, %v1123
  %v1670 = vpack.c.b16 %v1138, %v1131
  %v1671 = vpack.c.b16 %v1139, %v1132
  %v1672 = vpack.c.b16 %v1140, %v1133
  %v1673 = vpack.c.b16 %v1141, %v1134
  %v1674 = vpack.c.b16 %v1142, %v1135
  %v1675 = vpack.c.b16 %v1143, %v1136
  %v1676 = vpack.c.b16 %v1144, %v1137
  %v1677 = vpack.c.b16 %v1152, %v1145
  %v1678 = vpack.c.b16 %v1153, %v1146
  %v1679 = vpack.c.b16 %v1154, %v1147
  %v1680 = vpack.c.b16 %v1155, %v1148
  %v1681 = vpack.c.b16 %v1156, %v1149
  %v1682 = vpack.c.b16 %v1157, %v1150
  %v1683 = vpack.c.b16 %v1158, %v1151
  %v1684 = vpack.c.b16 %v1166, %v1159
  %v1685 = vpack.c.b16 %v1167, %v1160
  %v1686 = vpack.c.b16 %v1168, %v1161
  %v1687 = vpack.c.b16 %v1169, %v1162
  %v1688 = vpack.c.b16 %v1170, %v1163
  %v1689 = vpack.c.b16 %v1171, %v1164
  %v1690 = vpack.c.b16 %v1172, %v1165
  %v1691 = vpack.c.b16 %v1180, %v1173
  %v1692 = vpack.c.b16 %v1181, %v1174
  %v1693 = vpack.c.b16 %v1182, %v1175
  %v1694 = vpack.c.b16 %v1183, %v1176
  %v1695 = vpack.c.b16 %v1184, %v1177
  %v1696 = vpack.c.b16 %v1185, %v1178
  %v1697 = vpack.c.b16 %v1186, %v1179
  %v1698 = vpack.c.b16 %v1194, %v1187
  %v1699 = vpack.c.b16 %v1195, %v1188
  %v1700 = vpack.c.b16 %v1196, %v1189
  %v1701 = vpack.c.b16 %v1197, %v1190
  %v1702 = vpack.c.b16 %v1198, %v1191
  %v1703 = vpack.c.b16 %v1199, %v1192
  %v1704 = vpack.c.b16 %v1200, %v1193
  %v1705 = vpack.c.b16 %v1208, %v1201
  %v1706 = vpack.c.b16 %v1209, %v1202
  %v1707 = vpack.c.b16 %v1210, %v1203
  %v1708 = vpack.c.b16 %v1211, %v1204
  %v1709 = vpack.c.b16 %v1212, %v1205
  %v1710 = vpack.c.b16 %v1213, %v1206
  %v1711 = vpack.c.b16 %v1214, %v1207
  %v1712 = vpack.c.b16 %v1222, %v1215
  %v1713 = vpack.c.b16 %v1223, %v1216
  %v1714 = vpack.c.b16 %v1224, %v1217
  %v1715 = vpack.c.b16 %v1225, %v1218
  %v1716 = vpack.c.b16 %v1226, %v1219
  %v1717 = vpack.c.b16 %v1227, %v1220
  %v1718 = vpack.c.b16 %v1228, %v1221
  %v1719 = vpack.c.b16 %v1236, %v1229
  %v1720 = vpack.c.b16 %v1237, %v1230
  %v1721 = vpack.c.b16 %v1238, %v1231
  %v1722 = vpack.c.b16 %v1239, %v1232
  %v1723 = vpack.c.b16 %v1240, %v1233
  %v1724 = vpack.c.b16 %v1241, %v1234
  %v1725 = vpack.c.b16 %v1242, %v1235
  %v1726 = vpack.c.b16 %v1250, %v1243
  %v1727 = vpack.c.b16 %v1251, %v1244
  %v1728 = vpack.c.b16 %v1252, %v1245
  %v1729 = vpack.c.b16 %v1253, %v1246
  %v1730 = vpack.c.b16 %v1254, %v1247
  %v1731 = vpack.c.b16 %v1255, %v1248
  %v1732 = vpack.c.b16 %v1256, %v1249
  %v1733 = vpack.c.b16 %v1264, %v1257
  %v1734 = vpack.c.b16 %v1265, %v1258
  %v1735 = vpack.c.b16 %v1266, %v1259
  %v1736 = vpack.c.b16 %v1267, %v1260
  %v1737 = vpack.c.b16 %v1268, %v1261
  %v1738 = vpack.c.b16 %v1269, %v1262
  %v1739 = vpack.c.b16 %v1270, %v1263
  %v1740 = vpack.c.b16 %v1278, %v1271
  %v1741 = vpack.c.b16 %v1279, %v1272
  %v1742 = vpack.c.b16 %v1280, %v1273
  %v1743 = vpack.c.b16 %v1281, %v1274
  %v1744 = vpack.c.b16 %v1282, %v1275
  %v1745 = vpack.c.b16 %v1283, %v1276
  %v1746 = vpack.c.b16 %v1284, %v1277
  %v1747 = vpack.c.b16 %v1292, %v1285
  %v1748 = vpack.c.b16 %v1293, %v1286
  %v1749 = vpack.c.b16 %v1294, %v1287
  %v1750 = vpack.c.b16 %v1295, %v1288
  %v1751 = vpack.c.b16 %v1296, %v1289
  %v1752 = vpack.c.b16 %v1297, %v1290
  %v1753 = vpack.c.b16 %v1298, %v1291
  %v1754 = vpack.c.b16 %v1306, %v1299
  %v1755 = vpack.c.b16 %v1307, %v1300
  %v1756 = vpack.c.b16 %v1308, %v1301
  %v1757 = vpack.c.b16 %v1309, %v1302
  %v1758 = vpack.c.b16 %v1310, %v1303
  %v1759 = vpack.c.b16 %v1311, %v1304
  %v1760 = vpack.c.b16 %v1312, %v1305
  %v1761 = vpack.c.b16 %v1320, %v1313
  %v1762 = vpack.c.b16 %v1321, %v1314
  %v1763 = vpack.c.b16 %v1322, %v1315
  %v1764 = vpack.c.b16 %v1323, %v1316
  %v1765 = vpack.c.b16 %v1324, %v1317
  %v1766 = vpack.c.b16 %v1325, %v1318
  %v1767 = vpack.c.b16 %v1326, %v1319
  %v1768 = vpack.c.b16 %v1334, %v1327
  %v1769 = vpack.c.b16 %v1335, %v1328
  %v1770 = vpack.c.b16 %v1336, %v1329
  %v1771 = vpack.c.b16 %v1337, %v1330
  %v1772 = vpack.c.b16 %v1338, %v1331
  %v1773 = vpack.c.b16 %v1339, %v1332
  %v1774 = vpack.c.b16 %v1340, %v1333
  %v1775 = vpack.c.b16 %v1348, %v1341
  %v1776 = vpack.c.b16 %v1349, %v1342
  %v1777 = vpack.c.b16 %v1350, %v1343
  %v1778 = vpack.c.b16 %v1351, %v1344
  %v1779 = vpack.c.b16 %v1352, %v1345
  %v1780 = vpack.c.b16 %v1353, %v1346
  %v1781 = vpack.c.b16 %v1354, %v1347
  %v1782 = vpack.c.b16 %v1362, %v1355
  %v1783 = vpack.c.b16 %v1363, %v1356
  %v1784 = vpack.c.b16 %v1364, %v1357
  %v1785 = vpack.c.b16 %v1365, %v1358
  %v1786 = vpack.c.b16 %v1366, %v1359
  %v1787 = vpack.c.b16 %v1367, %v1360
  %v1788 = vpack.c.b16 %v1368, %v1361
  %v1789 = vpack.c.b16 %v1376, %v1369
  %v1790 = vpack.c.b16 %v1377, %v1370
  %v1791 = vpack.c.b16 %v1378, %v1371
  %v1792 = vpack.c.b16 %v1379, %v1372
  %v1793 = vpack.c.b16 %v1380, %v1373
  %v1794 = vpack.c.b16 %v1381, %v1374
  %v1795 = vpack.c.b16 %v1382, %v1375
  %v1796 = vpack.c.b16 %v1390, %v1383
  %v1797 = vpack.c.b16 %v1391, %v1384
  %v1798 = vpack.c.b16 %v1392, %v1385
  %v1799 = vpack.c.b16 %v1393, %v1386
  %v1800 = vpack.c.b16 %v1394, %v1387
  %v1801 = vpack.c.b16 %v1395, %v1388
  %v1802 = vpack.c.b16 %v1396, %v1389
  %v1803 = vpack.c.b16 %v1404, %v1397
  %v1804 = vpack.c.b16 %v1405, %v1398
  %v1805 = vpack.c.b16 %v1406, %v1399
  %v1806 = vpack.c.b16 %v1407, %v1400
  %v1807 = vpack.c.b16 %v1408, %v1401
  %v1808 = vpack.c.b16 %v1409, %v1402
  %v1809 = vpack.c.b16 %v1410, %v1403
  %v1810 = vpack.c.b16 %v1418, %v1411
  %v1811 = vpack.c.b16 %v1419, %v1412
  %v1812 = vpack.c.b16 %v1420, %v1413
  %v1813 = vpack.c.b16 %v1421, %v1414
  %v1814 = vpack.c.b16 %v1422, %v1415
  %v1815 = vpack.c.b16 %v1423, %v1416
  %v1816 = vpack.c.b16 %v1424, %v1417
  %v1817 = vpack.c.b16 %v1432, %v1425
  %v1818 = vpack.c.b16 %v1433, %v1426
  %v1819 = vpack.c.b16 %v1434, %v1427
  %v1820 = vpack.c.b16 %v1435, %v1428
  %v1821 = vpack.c.b16 %v1436, %v1429
  %v1822 = vpack.c.b16 %v1437, %v1430
  %v1823 = vpack.c.b16 %v1438, %v1431
  %v1824 = vpack.c.b16 %v1446, %v1439
  %v1825 = vpack.c.b16 %v1447, %v1440
  %v1826 = vpack.c.b16 %v1448, %v1441
  %v1827 = vpack.c.b16 %v1449, %v1442
  %v1828 = vpack.c.b16 %v1450, %v1443
  %v1829 = vpack.c.b16 %v1451, %v1444
  %v1830 = vpack.c.b16 %v1452, %v1445
  %v1831 = vpack.c.b16 %v1460, %v1453
  %v1832 = vpack.c.b16 %v1461, %v1454
  %v1833 = vpack.c.b16 %v1462, %v1455
  %v1834 = vpack.c.b16 %v1463, %v1456
  %v1835 = vpack.c.b16 %v1464, %v1457
  %v1836 = vpack.c.b16 %v1465, %v1458
  %v1837 = vpack.c.b16 %v1466, %v1459
  %v1838 = vpack.c.b16 %v1474, %v1467
  %v1839 = vpack.c.b16 %v1475, %v1468
  %v1840 = vpack.c.b16 %v1476, %v1469
  %v1841 = vpack.c.b16 %v1477, %v1470
  %v1842 = vpack.c.b16 %v1478, %v1471
  %v1843 = vpack.c.b16 %v1479, %v1472
  %v1844 = vpack.c.b16 %v1480, %v1473
  %v1845 = vpack.c.b16 %v1488, %v1481
  %v1846 = vpack.c.b16 %v1489, %v1482
  %v1847 = vpack.c.b16 %v1490, %v1483
  %v1848 = vpack.c.b16 %v1491, %v1484
  %v1849 = vpack.c.b16 %v1492, %v1485
  %v1850 = vpack.c.b16 %v1493, %v1486
  %v1851 = vpack.c.b16 %v1494, %v1487
  %v1852 = vpack.c.b16 %v1502, %v1495
  %v1853 = vpack.c.b16 %v1503, %v1496
  %v1854 = vpack.c.b16 %v1504, %v1497
  %v1855 = vpack.c.b16 %v1505, %v1498
  %v1856 = vpack.c.b16 %v1506, %v1499
  %v1857 = vpack.c.b16 %v1507, %v1500
  %v1858 = vpack.c.b16 %v1508, %v1501
  %v1859 = vpack.c.b16 %v1516, %v1509
  %v1860 = vpack.c.b16 %v1517, %v1510
  %v1861 = vpack.c.b16 %v1518, %v1511
  %v1862 = vpack.c.b16 %v1519, %v1512
  %v1863 = vpack.c.b16 %v1520, %v1513
  %v1864 = vpack.c.b16 %v1521, %v1514
  %v1865 = vpack.c.b16 %v1522, %v1515
  %vm2209 = vcmask 130048
  %v2211 = vsel %vm2209, %v52, 0
  %2213 = vmatprep.subr.bf16.mxu0 %v1524
  %2214 = vmatpush1.bf16.msra.mxu0 %v1523
  %2215 = vmatprep.subr.bf16.mxu0 %v1531
  %2216 = vmatpush1.bf16.msra.mxu0 %v1530
  %2217 = vmatprep.subr.bf16.mxu0 %v1538
  %2218 = vmatpush1.bf16.msra.mxu0 %v1537
  %2219 = vmatprep.subr.bf16.mxu0 %v1545
  %2220 = vmatpush1.bf16.msra.mxu0 %v1544
  %2221 = vmatprep.subr.bf16.mxu0 %v1552
  %2222 = vmatpush1.bf16.msra.mxu0 %v1551
  %2223 = vmatprep.subr.bf16.mxu0 %v1559
  %2224 = vmatpush1.bf16.msra.mxu0 %v1558
  %2225 = vmatprep.subr.bf16.mxu0 %v1566
  %2226 = vmatpush1.bf16.msra.mxu0 %v1565
  %2227 = vmatprep.subr.bf16.mxu0 %v1573
  %2228 = vmatpush1.bf16.msra.mxu0 %v1572
  %2229 = vmatprep.subr.bf16.mxu0 %v1580
  %2230 = vmatpush1.bf16.msra.mxu0 %v1579
  %2231 = vmatprep.subr.bf16.mxu0 %v1587
  %2232 = vmatpush1.bf16.msra.mxu0 %v1586
  %2233 = vmatprep.subr.bf16.mxu0 %v1594
  %2234 = vmatpush1.bf16.msra.mxu0 %v1593
  %2235 = vmatprep.subr.bf16.mxu0 %v1601
  %2236 = vmatpush1.bf16.msra.mxu0 %v1600
  %2237 = vmatprep.subr.bf16.mxu0 %v1608
  %2238 = vmatpush1.bf16.msra.mxu0 %v1607
  %2239 = vmatprep.subr.bf16.mxu0 %v1615
  %2240 = vmatpush1.bf16.msra.mxu0 %v1614
  %2241 = vmatprep.subr.bf16.mxu0 %v1622
  %2242 = vmatpush1.bf16.msra.mxu0 %v1621
  %2243 = vmatprep.subr.bf16.mxu0 %v1629
  %2244 = vmatpush1.bf16.msra.mxu0 %v1628
  %2245 = vmatprep.mubr.bf16.mxu0 %v47
  %2246 = vmatmul.mubr.bf16.gmra.mrb[0].mxu0 %v46
  %v2247 = vpop.f32.mrb[0].mxu0
  %v2248 = vadd.f32 0.0, %v2247
  %v2249 = vpop.f32.mrb[0].mxu0
  %v2250 = vadd.f32 0.0, %v2249
  %v2251 = vpop.f32.mrb[0].mxu0
  %v2252 = vpop.f32.mrb[0].mxu0
  %2253 = vdwg.mxu0
  %2254 = vmatprep.subr.bf16.mxu0 %v1636
  %2255 = vmatpush1.bf16.msra.mxu0 %v1635
  %2256 = vmatprep.subr.bf16.mxu0 %v1643
  %2257 = vmatpush1.bf16.msra.mxu0 %v1642
  %2258 = vmatprep.subr.bf16.mxu0 %v1650
  %2259 = vmatpush1.bf16.msra.mxu0 %v1649
  %2260 = vmatprep.subr.bf16.mxu0 %v1657
  %2261 = vmatpush1.bf16.msra.mxu0 %v1656
  %2262 = vmatprep.subr.bf16.mxu0 %v1664
  %2263 = vmatpush1.bf16.msra.mxu0 %v1663
  %2264 = vmatprep.subr.bf16.mxu0 %v1671
  %2265 = vmatpush1.bf16.msra.mxu0 %v1670
  %2266 = vmatprep.subr.bf16.mxu0 %v1678
  %2267 = vmatpush1.bf16.msra.mxu0 %v1677
  %2268 = vmatprep.subr.bf16.mxu0 %v1685
  %2269 = vmatpush1.bf16.msra.mxu0 %v1684
  %2270 = vmatprep.subr.bf16.mxu0 %v1692
  %2271 = vmatpush1.bf16.msra.mxu0 %v1691
  %2272 = vmatprep.subr.bf16.mxu0 %v1699
  %2273 = vmatpush1.bf16.msra.mxu0 %v1698
  %2274 = vmatprep.subr.bf16.mxu0 %v1706
  %2275 = vmatpush1.bf16.msra.mxu0 %v1705
  %2276 = vmatprep.subr.bf16.mxu0 %v1713
  %2277 = vmatpush1.bf16.msra.mxu0 %v1712
  %2278 = vmatprep.subr.bf16.mxu0 %v1720
  %2279 = vmatpush1.bf16.msra.mxu0 %v1719
  %2280 = vmatprep.subr.bf16.mxu0 %v1727
  %2281 = vmatpush1.bf16.msra.mxu0 %v1726
  %2282 = vmatprep.subr.bf16.mxu0 %v1734
  %2283 = vmatpush1.bf16.msra.mxu0 %v1733
  %2284 = vmatprep.subr.bf16.mxu0 %v1741
  %2285 = vmatpush1.bf16.msra.mxu0 %v1740
  %2286 = vmatprep.mubr.bf16.mxu0 %v49
  %2287 = vmatmul.mubr.bf16.gmra.mrb[0].mxu0 %v48
  %v2288 = vpop.f32.mrb[0].mxu0
  %v2289 = vadd.f32 %v2248, %v2288
  %v2290 = vpop.f32.mrb[0].mxu0
  %v2291 = vadd.f32 %v2250, %v2290
  %v2292 = vpop.f32.mrb[0].mxu0
  %v2293 = vpop.f32.mrb[0].mxu0
  %2294 = vdwg.mxu0
  %2295 = vmatprep.subr.bf16.mxu0 %v1748
  %2296 = vmatpush1.bf16.msra.mxu0 %v1747
  %2297 = vmatprep.subr.bf16.mxu0 %v1755
  %2298 = vmatpush1.bf16.msra.mxu0 %v1754
  %2299 = vmatprep.subr.bf16.mxu0 %v1762
  %2300 = vmatpush1.bf16.msra.mxu0 %v1761
  %2301 = vmatprep.subr.bf16.mxu0 %v1769
  %2302 = vmatpush1.bf16.msra.mxu0 %v1768
  %2303 = vmatprep.subr.bf16.mxu0 %v1776
  %2304 = vmatpush1.bf16.msra.mxu0 %v1775
  %2305 = vmatprep.subr.bf16.mxu0 %v1783
  %2306 = vmatpush1.bf16.msra.mxu0 %v1782
  %2307 = vmatprep.subr.bf16.mxu0 %v1790
  %2308 = vmatpush1.bf16.msra.mxu0 %v1789
  %2309 = vmatprep.subr.bf16.mxu0 %v1797
  %2310 = vmatpush1.bf16.msra.mxu0 %v1796
  %2311 = vmatprep.subr.bf16.mxu0 %v1804
  %2312 = vmatpush1.bf16.msra.mxu0 %v1803
  %2313 = vmatprep.subr.bf16.mxu0 %v1811
  %2314 = vmatpush1.bf16.msra.mxu0 %v1810
  %2315 = vmatprep.subr.bf16.mxu0 %v1818
  %2316 = vmatpush1.bf16.msra.mxu0 %v1817
  %2317 = vmatprep.subr.bf16.mxu0 %v1825
  %2318 = vmatpush1.bf16.msra.mxu0 %v1824
  %2319 = vmatprep.subr.bf16.mxu0 %v1832
  %2320 = vmatpush1.bf16.msra.mxu0 %v1831
  %2321 = vmatprep.subr.bf16.mxu0 %v1839
  %2322 = vmatpush1.bf16.msra.mxu0 %v1838
  %2323 = vmatprep.subr.bf16.mxu0 %v1846
  %2324 = vmatpush1.bf16.msra.mxu0 %v1845
  %2325 = vmatprep.subr.bf16.mxu0 %v1853
  %2326 = vmatpush1.bf16.msra.mxu0 %v1852
  %2327 = vmatprep.mubr.bf16.mxu0 %v51
  %2328 = vmatmul.mubr.bf16.gmra.mrb[0].mxu0 %v50
  %v2329 = vpop.f32.mrb[0].mxu0
  %v2330 = vadd.f32 %v2289, %v2329
  %v2331 = vpop.f32.mrb[0].mxu0
  %v2332 = vadd.f32 %v2291, %v2331
  %v2333 = vpop.f32.mrb[0].mxu0
  %v2334 = vpop.f32.mrb[0].mxu0
  %2335 = vdwg.mxu0
  %2336 = vmatprep.subr.bf16.mxu0 %v1860
  %2337 = vmatpush1.bf16.msra.mxu0 %v1859
  %2338 = vmatprep.subr.bf16.mxu0 0
  %2339 = vmatpush1.bf16.msra.mxu0 0
  %2340 = vmatprep.subr.bf16.mxu0 0
  %2341 = vmatpush1.bf16.msra.mxu0 0
  %2342 = vmatprep.subr.bf16.mxu0 0
  %2343 = vmatpush1.bf16.msra.mxu0 0
  %2344 = vmatprep.subr.bf16.mxu0 0
  %2345 = vmatpush1.bf16.msra.mxu0 0
  %2346 = vmatprep.subr.bf16.mxu0 0
  %2347 = vmatpush1.bf16.msra.mxu0 0
  %2348 = vmatprep.subr.bf16.mxu0 0
  %2349 = vmatpush1.bf16.msra.mxu0 0
  %2350 = vmatprep.subr.bf16.mxu0 0
  %2351 = vmatpush1.bf16.msra.mxu0 0
  %2352 = vmatprep.subr.bf16.mxu0 0
  %2353 = vmatpush1.bf16.msra.mxu0 0
  %2354 = vmatprep.subr.bf16.mxu0 0
  %2355 = vmatpush1.bf16.msra.mxu0 0
  %2356 = vmatprep.subr.bf16.mxu0 0
  %2357 = vmatpush1.bf16.msra.mxu0 0
  %2358 = vmatprep.subr.bf16.mxu0 0
  %2359 = vmatpush1.bf16.msra.mxu0 0
  %2360 = vmatprep.subr.bf16.mxu0 0
  %2361 = vmatpush1.bf16.msra.mxu0 0
  %2362 = vmatprep.subr.bf16.mxu0 0
  %2363 = vmatpush1.bf16.msra.mxu0 0
  %2364 = vmatprep.subr.bf16.mxu0 0
  %2365 = vmatpush1.bf16.msra.mxu0 0
  %2366 = vmatprep.subr.bf16.mxu0 0
  %2367 = vmatpush1.bf16.msra.mxu0 0
  %2368 = vmatprep.mubr.bf16.mxu0 0
  %2369 = vmatmul.mubr.bf16.gmra.mrb[0].mxu0 %v2211
  %v2370 = vpop.f32.mrb[0].mxu0
  %v2371 = vadd.f32 %v2330, %v2370
  %v2372 = vpop.f32.mrb[0].mxu0
  %v2373 = vadd.f32 %v2332, %v2372
  %v2374 = vpop.f32.mrb[0].mxu0
  %v2375 = vpop.f32.mrb[0].mxu0
  %2376 = vdwg.mxu0
  %2377 = vmatprep.subr.bf16.mxu0 %v1526
  %2378 = vmatpush1.bf16.msra.mxu0 %v1525
  %2379 = vmatprep.subr.bf16.mxu0 %v1533
  %2380 = vmatpush1.bf16.msra.mxu0 %v1532
  %2381 = vmatprep.subr.bf16.mxu0 %v1540
  %2382 = vmatpush1.bf16.msra.mxu0 %v1539
  %2383 = vmatprep.subr.bf16.mxu0 %v1547
  %2384 = vmatpush1.bf16.msra.mxu0 %v1546
  %2385 = vmatprep.subr.bf16.mxu0 %v1554
  %2386 = vmatpush1.bf16.msra.mxu0 %v1553
  %2387 = vmatprep.subr.bf16.mxu0 %v1561
  %2388 = vmatpush1.bf16.msra.mxu0 %v1560
  %2389 = vmatprep.subr.bf16.mxu0 %v1568
  %2390 = vmatpush1.bf16.msra.mxu0 %v1567
  %2391 = vmatprep.subr.bf16.mxu0 %v1575
  %2392 = vmatpush1.bf16.msra.mxu0 %v1574
  %2393 = vmatprep.subr.bf16.mxu0 %v1582
  %2394 = vmatpush1.bf16.msra.mxu0 %v1581
  %2395 = vmatprep.subr.bf16.mxu0 %v1589
  %2396 = vmatpush1.bf16.msra.mxu0 %v1588
  %2397 = vmatprep.subr.bf16.mxu0 %v1596
  %2398 = vmatpush1.bf16.msra.mxu0 %v1595
  %2399 = vmatprep.subr.bf16.mxu0 %v1603
  %2400 = vmatpush1.bf16.msra.mxu0 %v1602
  %2401 = vmatprep.subr.bf16.mxu0 %v1610
  %2402 = vmatpush1.bf16.msra.mxu0 %v1609
  %2403 = vmatprep.subr.bf16.mxu0 %v1617
  %2404 = vmatpush1.bf16.msra.mxu0 %v1616
  %2405 = vmatprep.subr.bf16.mxu0 %v1624
  %2406 = vmatpush1.bf16.msra.mxu0 %v1623
  %2407 = vmatprep.subr.bf16.mxu0 %v1631
  %2408 = vmatpush1.bf16.msra.mxu0 %v1630
  %2409 = vmatprep.mubr.bf16.mxu0 %v47
  %2410 = vmatmul.mubr.bf16.gmra.mrb[0].mxu0 %v46
  %v2411 = vpop.f32.mrb[0].mxu0
  %v2412 = vadd.f32 0.0, %v2411
  %v2413 = vpop.f32.mrb[0].mxu0
  %v2414 = vadd.f32 0.0, %v2413
  %v2415 = vpop.f32.mrb[0].mxu0
  %v2416 = vpop.f32.mrb[0].mxu0
  %2417 = vdwg.mxu0
  %2418 = vmatprep.subr.bf16.mxu0 %v1638
  %2419 = vmatpush1.bf16.msra.mxu0 %v1637
  %2420 = vmatprep.subr.bf16.mxu0 %v1645
  %2421 = vmatpush1.bf16.msra.mxu0 %v1644
  %2422 = vmatprep.subr.bf16.mxu0 %v1652
  %2423 = vmatpush1.bf16.msra.mxu0 %v1651
  %2424 = vmatprep.subr.bf16.mxu0 %v1659
  %2425 = vmatpush1.bf16.msra.mxu0 %v1658
  %2426 = vmatprep.subr.bf16.mxu0 %v1666
  %2427 = vmatpush1.bf16.msra.mxu0 %v1665
  %2428 = vmatprep.subr.bf16.mxu0 %v1673
  %2429 = vmatpush1.bf16.msra.mxu0 %v1672
  %2430 = vmatprep.subr.bf16.mxu0 %v1680
  %2431 = vmatpush1.bf16.msra.mxu0 %v1679
  %2432 = vmatprep.subr.bf16.mxu0 %v1687
  %2433 = vmatpush1.bf16.msra.mxu0 %v1686
  %2434 = vmatprep.subr.bf16.mxu0 %v1694
  %2435 = vmatpush1.bf16.msra.mxu0 %v1693
  %2436 = vmatprep.subr.bf16.mxu0 %v1701
  %2437 = vmatpush1.bf16.msra.mxu0 %v1700
  %2438 = vmatprep.subr.bf16.mxu0 %v1708
  %2439 = vmatpush1.bf16.msra.mxu0 %v1707
  %2440 = vmatprep.subr.bf16.mxu0 %v1715
  %2441 = vmatpush1.bf16.msra.mxu0 %v1714
  %2442 = vmatprep.subr.bf16.mxu0 %v1722
  %2443 = vmatpush1.bf16.msra.mxu0 %v1721
  %2444 = vmatprep.subr.bf16.mxu0 %v1729
  %2445 = vmatpush1.bf16.msra.mxu0 %v1728
  %2446 = vmatprep.subr.bf16.mxu0 %v1736
  %2447 = vmatpush1.bf16.msra.mxu0 %v1735
  %2448 = vmatprep.subr.bf16.mxu0 %v1743
  %2449 = vmatpush1.bf16.msra.mxu0 %v1742
  %2450 = vmatprep.mubr.bf16.mxu0 %v49
  %2451 = vmatmul.mubr.bf16.gmra.mrb[0].mxu0 %v48
  %v2452 = vpop.f32.mrb[0].mxu0
  %v2453 = vadd.f32 %v2412, %v2452
  %v2454 = vpop.f32.mrb[0].mxu0
  %v2455 = vadd.f32 %v2414, %v2454
  %v2456 = vpop.f32.mrb[0].mxu0
  %v2457 = vpop.f32.mrb[0].mxu0
  %2458 = vdwg.mxu0
  %2459 = vmatprep.subr.bf16.mxu0 %v1750
  %2460 = vmatpush1.bf16.msra.mxu0 %v1749
  %2461 = vmatprep.subr.bf16.mxu0 %v1757
  %2462 = vmatpush1.bf16.msra.mxu0 %v1756
  %2463 = vmatprep.subr.bf16.mxu0 %v1764
  %2464 = vmatpush1.bf16.msra.mxu0 %v1763
  %2465 = vmatprep.subr.bf16.mxu0 %v1771
  %2466 = vmatpush1.bf16.msra.mxu0 %v1770
  %2467 = vmatprep.subr.bf16.mxu0 %v1778
  %2468 = vmatpush1.bf16.msra.mxu0 %v1777
  %2469 = vmatprep.subr.bf16.mxu0 %v1785
  %2470 = vmatpush1.bf16.msra.mxu0 %v1784
  %2471 = vmatprep.subr.bf16.mxu0 %v1792
  %2472 = vmatpush1.bf16.msra.mxu0 %v1791
  %2473 = vmatprep.subr.bf16.mxu0 %v1799
  %2474 = vmatpush1.bf16.msra.mxu0 %v1798
  %2475 = vmatprep.subr.bf16.mxu0 %v1806
  %2476 = vmatpush1.bf16.msra.mxu0 %v1805
  %2477 = vmatprep.subr.bf16.mxu0 %v1813
  %2478 = vmatpush1.bf16.msra.mxu0 %v1812
  %2479 = vmatprep.subr.bf16.mxu0 %v1820
  %2480 = vmatpush1.bf16.msra.mxu0 %v1819
  %2481 = vmatprep.subr.bf16.mxu0 %v1827
  %2482 = vmatpush1.bf16.msra.mxu0 %v1826
  %2483 = vmatprep.subr.bf16.mxu0 %v1834
  %2484 = vmatpush1.bf16.msra.mxu0 %v1833
  %2485 = vmatprep.subr.bf16.mxu0 %v1841
  %2486 = vmatpush1.bf16.msra.mxu0 %v1840
  %2487 = vmatprep.subr.bf16.mxu0 %v1848
  %2488 = vmatpush1.bf16.msra.mxu0 %v1847
  %2489 = vmatprep.subr.bf16.mxu0 %v1855
  %2490 = vmatpush1.bf16.msra.mxu0 %v1854
  %2491 = vmatprep.mubr.bf16.mxu0 %v51
  %2492 = vmatmul.mubr.bf16.gmra.mrb[0].mxu0 %v50
  %v2493 = vpop.f32.mrb[0].mxu0
  %v2494 = vadd.f32 %v2453, %v2493
  %v2495 = vpop.f32.mrb[0].mxu0
  %v2496 = vadd.f32 %v2455, %v2495
  %v2497 = vpop.f32.mrb[0].mxu0
  %v2498 = vpop.f32.mrb[0].mxu0
  %2499 = vdwg.mxu0
  %2500 = vmatprep.subr.bf16.mxu0 %v1862
  %2501 = vmatpush1.bf16.msra.mxu0 %v1861
  %2502 = vmatprep.subr.bf16.mxu0 0
  %2503 = vmatpush1.bf16.msra.mxu0 0
  %2504 = vmatprep.subr.bf16.mxu0 0
  %2505 = vmatpush1.bf16.msra.mxu0 0
  %2506 = vmatprep.subr.bf16.mxu0 0
  %2507 = vmatpush1.bf16.msra.mxu0 0
  %2508 = vmatprep.subr.bf16.mxu0 0
  %2509 = vmatpush1.bf16.msra.mxu0 0
  %2510 = vmatprep.subr.bf16.mxu0 0
  %2511 = vmatpush1.bf16.msra.mxu0 0
  %2512 = vmatprep.subr.bf16.mxu0 0
  %2513 = vmatpush1.bf16.msra.mxu0 0
  %2514 = vmatprep.subr.bf16.mxu0 0
  %2515 = vmatpush1.bf16.msra.mxu0 0
  %2516 = vmatprep.subr.bf16.mxu0 0
  %2517 = vmatpush1.bf16.msra.mxu0 0
  %2518 = vmatprep.subr.bf16.mxu0 0
  %2519 = vmatpush1.bf16.msra.mxu0 0
  %2520 = vmatprep.subr.bf16.mxu0 0
  %2521 = vmatpush1.bf16.msra.mxu0 0
  %2522 = vmatprep.subr.bf16.mxu0 0
  %2523 = vmatpush1.bf16.msra.mxu0 0
  %2524 = vmatprep.subr.bf16.mxu0 0
  %2525 = vmatpush1.bf16.msra.mxu0 0
  %2526 = vmatprep.subr.bf16.mxu0 0
  %2527 = vmatpush1.bf16.msra.mxu0 0
  %2528 = vmatprep.subr.bf16.mxu0 0
  %2529 = vmatpush1.bf16.msra.mxu0 0
  %2530 = vmatprep.subr.bf16.mxu0 0
  %2531 = vmatpush1.bf16.msra.mxu0 0
  %2532 = vmatprep.mubr.bf16.mxu0 0
  %2533 = vmatmul.mubr.bf16.gmra.mrb[0].mxu0 %v2211
  %v2534 = vpop.f32.mrb[0].mxu0
  %v2535 = vadd.f32 %v2494, %v2534
  %v2536 = vpop.f32.mrb[0].mxu0
  %v2537 = vadd.f32 %v2496, %v2536
  %v2538 = vpop.f32.mrb[0].mxu0
  %v2539 = vpop.f32.mrb[0].mxu0
  %2540 = vdwg.mxu0
  %2541 = vmatprep.subr.bf16.mxu0 %v1528
  %2542 = vmatpush1.bf16.msra.mxu0 %v1527
  %2543 = vmatprep.subr.bf16.mxu0 %v1535
  %2544 = vmatpush1.bf16.msra.mxu0 %v1534
  %2545 = vmatprep.subr.bf16.mxu0 %v1542
  %2546 = vmatpush1.bf16.msra.mxu0 %v1541
  %2547 = vmatprep.subr.bf16.mxu0 %v1549
  %2548 = vmatpush1.bf16.msra.mxu0 %v1548
  %2549 = vmatprep.subr.bf16.mxu0 %v1556
  %2550 = vmatpush1.bf16.msra.mxu0 %v1555
  %2551 = vmatprep.subr.bf16.mxu0 %v1563
  %2552 = vmatpush1.bf16.msra.mxu0 %v1562
  %2553 = vmatprep.subr.bf16.mxu0 %v1570
  %2554 = vmatpush1.bf16.msra.mxu0 %v1569
  %2555 = vmatprep.subr.bf16.mxu0 %v1577
  %2556 = vmatpush1.bf16.msra.mxu0 %v1576
  %2557 = vmatprep.subr.bf16.mxu0 %v1584
  %2558 = vmatpush1.bf16.msra.mxu0 %v1583
  %2559 = vmatprep.subr.bf16.mxu0 %v1591
  %2560 = vmatpush1.bf16.msra.mxu0 %v1590
  %2561 = vmatprep.subr.bf16.mxu0 %v1598
  %2562 = vmatpush1.bf16.msra.mxu0 %v1597
  %2563 = vmatprep.subr.bf16.mxu0 %v1605
  %2564 = vmatpush1.bf16.msra.mxu0 %v1604
  %2565 = vmatprep.subr.bf16.mxu0 %v1612
  %2566 = vmatpush1.bf16.msra.mxu0 %v1611
  %2567 = vmatprep.subr.bf16.mxu0 %v1619
  %2568 = vmatpush1.bf16.msra.mxu0 %v1618
  %2569 = vmatprep.subr.bf16.mxu0 %v1626
  %2570 = vmatpush1.bf16.msra.mxu0 %v1625
  %2571 = vmatprep.subr.bf16.mxu0 %v1633
  %2572 = vmatpush1.bf16.msra.mxu0 %v1632
  %2573 = vmatprep.mubr.bf16.mxu0 %v47
  %2574 = vmatmul.mubr.bf16.gmra.mrb[0].mxu0 %v46
  %v2575 = vpop.f32.mrb[0].mxu0
  %v2576 = vadd.f32 0.0, %v2575
  %v2577 = vpop.f32.mrb[0].mxu0
  %v2578 = vadd.f32 0.0, %v2577
  %v2579 = vpop.f32.mrb[0].mxu0
  %v2580 = vpop.f32.mrb[0].mxu0
  %2581 = vdwg.mxu0
  %2582 = vmatprep.subr.bf16.mxu0 %v1640
  %2583 = vmatpush1.bf16.msra.mxu0 %v1639
  %2584 = vmatprep.subr.bf16.mxu0 %v1647
  %2585 = vmatpush1.bf16.msra.mxu0 %v1646
  %2586 = vmatprep.subr.bf16.mxu0 %v1654
  %2587 = vmatpush1.bf16.msra.mxu0 %v1653
  %2588 = vmatprep.subr.bf16.mxu0 %v1661
  %2589 = vmatpush1.bf16.msra.mxu0 %v1660
  %2590 = vmatprep.subr.bf16.mxu0 %v1668
  %2591 = vmatpush1.bf16.msra.mxu0 %v1667
  %2592 = vmatprep.subr.bf16.mxu0 %v1675
  %2593 = vmatpush1.bf16.msra.mxu0 %v1674
  %2594 = vmatprep.subr.bf16.mxu0 %v1682
  %2595 = vmatpush1.bf16.msra.mxu0 %v1681
  %2596 = vmatprep.subr.bf16.mxu0 %v1689
  %2597 = vmatpush1.bf16.msra.mxu0 %v1688
  %2598 = vmatprep.subr.bf16.mxu0 %v1696
  %2599 = vmatpush1.bf16.msra.mxu0 %v1695
  %2600 = vmatprep.subr.bf16.mxu0 %v1703
  %2601 = vmatpush1.bf16.msra.mxu0 %v1702
  %2602 = vmatprep.subr.bf16.mxu0 %v1710
  %2603 = vmatpush1.bf16.msra.mxu0 %v1709
  %2604 = vmatprep.subr.bf16.mxu0 %v1717
  %2605 = vmatpush1.bf16.msra.mxu0 %v1716
  %2606 = vmatprep.subr.bf16.mxu0 %v1724
  %2607 = vmatpush1.bf16.msra.mxu0 %v1723
  %2608 = vmatprep.subr.bf16.mxu0 %v1731
  %2609 = vmatpush1.bf16.msra.mxu0 %v1730
  %2610 = vmatprep.subr.bf16.mxu0 %v1738
  %2611 = vmatpush1.bf16.msra.mxu0 %v1737
  %2612 = vmatprep.subr.bf16.mxu0 %v1745
  %2613 = vmatpush1.bf16.msra.mxu0 %v1744
  %2614 = vmatprep.mubr.bf16.mxu0 %v49
  %2615 = vmatmul.mubr.bf16.gmra.mrb[0].mxu0 %v48
  %v2616 = vpop.f32.mrb[0].mxu0
  %v2617 = vadd.f32 %v2576, %v2616
  %v2618 = vpop.f32.mrb[0].mxu0
  %v2619 = vadd.f32 %v2578, %v2618
  %v2620 = vpop.f32.mrb[0].mxu0
  %v2621 = vpop.f32.mrb[0].mxu0
  %2622 = vdwg.mxu0
  %2623 = vmatprep.subr.bf16.mxu0 %v1752
  %2624 = vmatpush1.bf16.msra.mxu0 %v1751
  %2625 = vmatprep.subr.bf16.mxu0 %v1759
  %2626 = vmatpush1.bf16.msra.mxu0 %v1758
  %2627 = vmatprep.subr.bf16.mxu0 %v1766
  %2628 = vmatpush1.bf16.msra.mxu0 %v1765
  %2629 = vmatprep.subr.bf16.mxu0 %v1773
  %2630 = vmatpush1.bf16.msra.mxu0 %v1772
  %2631 = vmatprep.subr.bf16.mxu0 %v1780
  %2632 = vmatpush1.bf16.msra.mxu0 %v1779
  %2633 = vmatprep.subr.bf16.mxu0 %v1787
  %2634 = vmatpush1.bf16.msra.mxu0 %v1786
  %2635 = vmatprep.subr.bf16.mxu0 %v1794
  %2636 = vmatpush1.bf16.msra.mxu0 %v1793
  %2637 = vmatprep.subr.bf16.mxu0 %v1801
  %2638 = vmatpush1.bf16.msra.mxu0 %v1800
  %2639 = vmatprep.subr.bf16.mxu0 %v1808
  %2640 = vmatpush1.bf16.msra.mxu0 %v1807
  %2641 = vmatprep.subr.bf16.mxu0 %v1815
  %2642 = vmatpush1.bf16.msra.mxu0 %v1814
  %2643 = vmatprep.subr.bf16.mxu0 %v1822
  %2644 = vmatpush1.bf16.msra.mxu0 %v1821
  %2645 = vmatprep.subr.bf16.mxu0 %v1829
  %2646 = vmatpush1.bf16.msra.mxu0 %v1828
  %2647 = vmatprep.subr.bf16.mxu0 %v1836
  %2648 = vmatpush1.bf16.msra.mxu0 %v1835
  %2649 = vmatprep.subr.bf16.mxu0 %v1843
  %2650 = vmatpush1.bf16.msra.mxu0 %v1842
  %2651 = vmatprep.subr.bf16.mxu0 %v1850
  %2652 = vmatpush1.bf16.msra.mxu0 %v1849
  %2653 = vmatprep.subr.bf16.mxu0 %v1857
  %2654 = vmatpush1.bf16.msra.mxu0 %v1856
  %2655 = vmatprep.mubr.bf16.mxu0 %v51
  %2656 = vmatmul.mubr.bf16.gmra.mrb[0].mxu0 %v50
  %v2657 = vpop.f32.mrb[0].mxu0
  %v2658 = vadd.f32 %v2617, %v2657
  %v2659 = vpop.f32.mrb[0].mxu0
  %v2660 = vadd.f32 %v2619, %v2659
  %v2661 = vpop.f32.mrb[0].mxu0
  %v2662 = vpop.f32.mrb[0].mxu0
  %2663 = vdwg.mxu0
  %2664 = vmatprep.subr.bf16.mxu0 %v1864
  %2665 = vmatpush1.bf16.msra.mxu0 %v1863
  %2666 = vmatprep.subr.bf16.mxu0 0
  %2667 = vmatpush1.bf16.msra.mxu0 0
  %2668 = vmatprep.subr.bf16.mxu0 0
  %2669 = vmatpush1.bf16.msra.mxu0 0
  %2670 = vmatprep.subr.bf16.mxu0 0
  %2671 = vmatpush1.bf16.msra.mxu0 0
  %2672 = vmatprep.subr.bf16.mxu0 0
  %2673 = vmatpush1.bf16.msra.mxu0 0
  %2674 = vmatprep.subr.bf16.mxu0 0
  %2675 = vmatpush1.bf16.msra.mxu0 0
  %2676 = vmatprep.subr.bf16.mxu0 0
  %2677 = vmatpush1.bf16.msra.mxu0 0
  %2678 = vmatprep.subr.bf16.mxu0 0
  %2679 = vmatpush1.bf16.msra.mxu0 0
  %2680 = vmatprep.subr.bf16.mxu0 0
  %2681 = vmatpush1.bf16.msra.mxu0 0
  %2682 = vmatprep.subr.bf16.mxu0 0
  %2683 = vmatpush1.bf16.msra.mxu0 0
  %2684 = vmatprep.subr.bf16.mxu0 0
  %2685 = vmatpush1.bf16.msra.mxu0 0
  %2686 = vmatprep.subr.bf16.mxu0 0
  %2687 = vmatpush1.bf16.msra.mxu0 0
  %2688 = vmatprep.subr.bf16.mxu0 0
  %2689 = vmatpush1.bf16.msra.mxu0 0
  %2690 = vmatprep.subr.bf16.mxu0 0
  %2691 = vmatpush1.bf16.msra.mxu0 0
  %2692 = vmatprep.subr.bf16.mxu0 0
  %2693 = vmatpush1.bf16.msra.mxu0 0
  %2694 = vmatprep.subr.bf16.mxu0 0
  %2695 = vmatpush1.bf16.msra.mxu0 0
  %2696 = vmatprep.mubr.bf16.mxu0 0
  %2697 = vmatmul.mubr.bf16.gmra.mrb[0].mxu0 %v2211
  %v2698 = vpop.f32.mrb[0].mxu0
  %v2699 = vadd.f32 %v2658, %v2698
  %v2700 = vpop.f32.mrb[0].mxu0
  %v2701 = vadd.f32 %v2660, %v2700
  %v2702 = vpop.f32.mrb[0].mxu0
  %v2703 = vpop.f32.mrb[0].mxu0
  %2704 = vdwg.mxu0
  %2705 = vmatprep.subr.bf16.mxu0 0
  %2706 = vmatpush1.bf16.msra.mxu0 %v1529
  %2707 = vmatprep.subr.bf16.mxu0 0
  %2708 = vmatpush1.bf16.msra.mxu0 %v1536
  %2709 = vmatprep.subr.bf16.mxu0 0
  %2710 = vmatpush1.bf16.msra.mxu0 %v1543
  %2711 = vmatprep.subr.bf16.mxu0 0
  %2712 = vmatpush1.bf16.msra.mxu0 %v1550
  %2713 = vmatprep.subr.bf16.mxu0 0
  %2714 = vmatpush1.bf16.msra.mxu0 %v1557
  %2715 = vmatprep.subr.bf16.mxu0 0
  %2716 = vmatpush1.bf16.msra.mxu0 %v1564
  %2717 = vmatprep.subr.bf16.mxu0 0
  %2718 = vmatpush1.bf16.msra.mxu0 %v1571
  %2719 = vmatprep.subr.bf16.mxu0 0
  %2720 = vmatpush1.bf16.msra.mxu0 %v1578
  %2721 = vmatprep.subr.bf16.mxu0 0
  %2722 = vmatpush1.bf16.msra.mxu0 %v1585
  %2723 = vmatprep.subr.bf16.mxu0 0
  %2724 = vmatpush1.bf16.msra.mxu0 %v1592
  %2725 = vmatprep.subr.bf16.mxu0 0
  %2726 = vmatpush1.bf16.msra.mxu0 %v1599
  %2727 = vmatprep.subr.bf16.mxu0 0
  %2728 = vmatpush1.bf16.msra.mxu0 %v1606
  %2729 = vmatprep.subr.bf16.mxu0 0
  %2730 = vmatpush1.bf16.msra.mxu0 %v1613
  %2731 = vmatprep.subr.bf16.mxu0 0
  %2732 = vmatpush1.bf16.msra.mxu0 %v1620
  %2733 = vmatprep.subr.bf16.mxu0 0
  %2734 = vmatpush1.bf16.msra.mxu0 %v1627
  %2735 = vmatprep.subr.bf16.mxu0 0
  %2736 = vmatpush1.bf16.msra.mxu0 %v1634
  %2737 = vmatprep.mubr.bf16.mxu0 %v47
  %2738 = vmatmul.mubr.bf16.gmra.mrb[0].mxu0 %v46
  %v2739 = vpop.f32.mrb[0].mxu0
  %v2740 = vadd.f32 0.0, %v2739
  %v2741 = vpop.f32.mrb[0].mxu0
  %v2742 = vpop.f32.mrb[0].mxu0
  %v2743 = vpop.f32.mrb[0].mxu0
  %2744 = vdwg.mxu0
  %2745 = vmatprep.subr.bf16.mxu0 0
  %2746 = vmatpush1.bf16.msra.mxu0 %v1641
  %2747 = vmatprep.subr.bf16.mxu0 0
  %2748 = vmatpush1.bf16.msra.mxu0 %v1648
  %2749 = vmatprep.subr.bf16.mxu0 0
  %2750 = vmatpush1.bf16.msra.mxu0 %v1655
  %2751 = vmatprep.subr.bf16.mxu0 0
  %2752 = vmatpush1.bf16.msra.mxu0 %v1662
  %2753 = vmatprep.subr.bf16.mxu0 0
  %2754 = vmatpush1.bf16.msra.mxu0 %v1669
  %2755 = vmatprep.subr.bf16.mxu0 0
  %2756 = vmatpush1.bf16.msra.mxu0 %v1676
  %2757 = vmatprep.subr.bf16.mxu0 0
  %2758 = vmatpush1.bf16.msra.mxu0 %v1683
  %2759 = vmatprep.subr.bf16.mxu0 0
  %2760 = vmatpush1.bf16.msra.mxu0 %v1690
  %2761 = vmatprep.subr.bf16.mxu0 0
  %2762 = vmatpush1.bf16.msra.mxu0 %v1697
  %2763 = vmatprep.subr.bf16.mxu0 0
  %2764 = vmatpush1.bf16.msra.mxu0 %v1704
  %2765 = vmatprep.subr.bf16.mxu0 0
  %2766 = vmatpush1.bf16.msra.mxu0 %v1711
  %2767 = vmatprep.subr.bf16.mxu0 0
  %2768 = vmatpush1.bf16.msra.mxu0 %v1718
  %2769 = vmatprep.subr.bf16.mxu0 0
  %2770 = vmatpush1.bf16.msra.mxu0 %v1725
  %2771 = vmatprep.subr.bf16.mxu0 0
  %2772 = vmatpush1.bf16.msra.mxu0 %v1732
  %2773 = vmatprep.subr.bf16.mxu0 0
  %2774 = vmatpush1.bf16.msra.mxu0 %v1739
  %2775 = vmatprep.subr.bf16.mxu0 0
  %2776 = vmatpush1.bf16.msra.mxu0 %v1746
  %2777 = vmatprep.mubr.bf16.mxu0 %v49
  %2778 = vmatmul.mubr.bf16.gmra.mrb[0].mxu0 %v48
  %v2779 = vpop.f32.mrb[0].mxu0
  %v2780 = vadd.f32 %v2740, %v2779
  %v2781 = vpop.f32.mrb[0].mxu0
  %v2782 = vpop.f32.mrb[0].mxu0
  %v2783 = vpop.f32.mrb[0].mxu0
  %2784 = vdwg.mxu0
  %2785 = vmatprep.subr.bf16.mxu0 0
  %2786 = vmatpush1.bf16.msra.mxu0 %v1753
  %2787 = vmatprep.subr.bf16.mxu0 0
  %2788 = vmatpush1.bf16.msra.mxu0 %v1760
  %2789 = vmatprep.subr.bf16.mxu0 0
  %2790 = vmatpush1.bf16.msra.mxu0 %v1767
  %2791 = vmatprep.subr.bf16.mxu0 0
  %2792 = vmatpush1.bf16.msra.mxu0 %v1774
  %2793 = vmatprep.subr.bf16.mxu0 0
  %2794 = vmatpush1.bf16.msra.mxu0 %v1781
  %2795 = vmatprep.subr.bf16.mxu0 0
  %2796 = vmatpush1.bf16.msra.mxu0 %v1788
  %2797 = vmatprep.subr.bf16.mxu0 0
  %2798 = vmatpush1.bf16.msra.mxu0 %v1795
  %2799 = vmatprep.subr.bf16.mxu0 0
  %2800 = vmatpush1.bf16.msra.mxu0 %v1802
  %2801 = vmatprep.subr.bf16.mxu0 0
  %2802 = vmatpush1.bf16.msra.mxu0 %v1809
  %2803 = vmatprep.subr.bf16.mxu0 0
  %2804 = vmatpush1.bf16.msra.mxu0 %v1816
  %2805 = vmatprep.subr.bf16.mxu0 0
  %2806 = vmatpush1.bf16.msra.mxu0 %v1823
  %2807 = vmatprep.subr.bf16.mxu0 0
  %2808 = vmatpush1.bf16.msra.mxu0 %v1830
  %2809 = vmatprep.subr.bf16.mxu0 0
  %2810 = vmatpush1.bf16.msra.mxu0 %v1837
  %2811 = vmatprep.subr.bf16.mxu0 0
  %2812 = vmatpush1.bf16.msra.mxu0 %v1844
  %2813 = vmatprep.subr.bf16.mxu0 0
  %2814 = vmatpush1.bf16.msra.mxu0 %v1851
  %2815 = vmatprep.subr.bf16.mxu0 0
  %2816 = vmatpush1.bf16.msra.mxu0 %v1858
  %2817 = vmatprep.mubr.bf16.mxu0 %v51
  %2818 = vmatmul.mubr.bf16.gmra.mrb[0].mxu0 %v50
  %v2819 = vpop.f32.mrb[0].mxu0
  %v2820 = vadd.f32 %v2780, %v2819
  %v2821 = vpop.f32.mrb[0].mxu0
  %v2822 = vpop.f32.mrb[0].mxu0
  %v2823 = vpop.f32.mrb[0].mxu0
  %2824 = vdwg.mxu0
  %2825 = vmatprep.subr.bf16.mxu0 0
  %2826 = vmatpush1.bf16.msra.mxu0 %v1865
  %2827 = vmatprep.subr.bf16.mxu0 0
  %2828 = vmatpush1.bf16.msra.mxu0 0
  %2829 = vmatprep.subr.bf16.mxu0 0
  %2830 = vmatpush1.bf16.msra.mxu0 0
  %2831 = vmatprep.subr.bf16.mxu0 0
  %2832 = vmatpush1.bf16.msra.mxu0 0
  %2833 = vmatprep.subr.bf16.mxu0 0
  %2834 = vmatpush1.bf16.msra.mxu0 0
  %2835 = vmatprep.subr.bf16.mxu0 0
  %2836 = vmatpush1.bf16.msra.mxu0 0
  %2837 = vmatprep.subr.bf16.mxu0 0
  %2838 = vmatpush1.bf16.msra.mxu0 0
  %2839 = vmatprep.subr.bf16.mxu0 0
  %2840 = vmatpush1.bf16.msra.mxu0 0
  %2841 = vmatprep.subr.bf16.mxu0 0
  %2842 = vmatpush1.bf16.msra.mxu0 0
  %2843 = vmatprep.subr.bf16.mxu0 0
  %2844 = vmatpush1.bf16.msra.mxu0 0
  %2845 = vmatprep.subr.bf16.mxu0 0
  %2846 = vmatpush1.bf16.msra.mxu0 0
  %2847 = vmatprep.subr.bf16.mxu0 0
  %2848 = vmatpush1.bf16.msra.mxu0 0
  %2849 = vmatprep.subr.bf16.mxu0 0
  %2850 = vmatpush1.bf16.msra.mxu0 0
  %2851 = vmatprep.subr.bf16.mxu0 0
  %2852 = vmatpush1.bf16.msra.mxu0 0
  %2853 = vmatprep.subr.bf16.mxu0 0
  %2854 = vmatpush1.bf16.msra.mxu0 0
  %2855 = vmatprep.subr.bf16.mxu0 0
  %2856 = vmatpush1.bf16.msra.mxu0 0
  %2857 = vmatprep.mubr.bf16.mxu0 0
  %2858 = vmatmul.mubr.bf16.gmra.mrb[0].mxu0 %v2211
  %v2859 = vpop.f32.mrb[0].mxu0
  %v2860 = vadd.f32 %v2820, %v2859
  %v2861 = vpop.f32.mrb[0].mxu0
  %v2862 = vpop.f32.mrb[0].mxu0
  %v2863 = vpop.f32.mrb[0].mxu0
  %2864 = vdwg.mxu0
  %s2865 = scalar_lea.vmem %s1, 2744
  %v2866 = vld [vmem:[%s2865] sm:$0xff]
  %v2867 = vld [vmem:[%s2865 + $0x8] sm:$0xff]
  %v2868 = vld [vmem:[%s2865 + $0x10] sm:$0xff]
  %v2869 = vld [vmem:[%s2865 + $0x18] sm:$0xf]
  %v2870 = vld [vmem:[%s2865 + $0x1c] sm:$0xff]
  %v2871 = vld [vmem:[%s2865 + $0x24] sm:$0xff]
  %v2872 = vld [vmem:[%s2865 + $0x2c] sm:$0xff]
  %v2873 = vld [vmem:[%s2865 + $0x34] sm:$0xf]
  %v2874 = vld [vmem:[%s2865 + $0x38] sm:$0xff]
  %v2875 = vld [vmem:[%s2865 + $0x40] sm:$0xff]
  %v2876 = vld [vmem:[%s2865 + $0x48] sm:$0xff]
  %v2877 = vld [vmem:[%s2865 + $0x50] sm:$0xf]
  %v2878 = vld [vmem:[%s2865 + $0x54] sm:$0xff]
  %v2879 = vld [vmem:[%s2865 + $0x5c] sm:$0xff]
  %v2880 = vld [vmem:[%s2865 + $0x64] sm:$0xff]
  %v2881 = vld [vmem:[%s2865 + $0x6c] sm:$0xf]
  %v2882 = vld [vmem:[%s2865 + $0x70] sm:$0xff]
  %v2883 = vld [vmem:[%s2865 + $0x78] sm:$0xff]
  %v2884 = vld [vmem:[%s2865 + $0x80] sm:$0xff]
  %v2885 = vld [vmem:[%s2865 + $0x88] sm:$0xf]
  %v2886 = vld [vmem:[%s2865 + $0x8c] sm:$0xff]
  %v2887 = vld [vmem:[%s2865 + $0x94] sm:$0xff]
  %v2888 = vld [vmem:[%s2865 + $0x9c] sm:$0xff]
  %v2889 = vld [vmem:[%s2865 + $0xa4] sm:$0xf]
  %v2890 = vld [vmem:[%s2865 + $0xa8] sm:$0xff]
  %v2891 = vld [vmem:[%s2865 + $0xb0] sm:$0xff]
  %v2892 = vld [vmem:[%s2865 + $0xb8] sm:$0xff]
  %v2893 = vld [vmem:[%s2865 + $0xc0] sm:$0xf]
  %v2894 = vld [vmem:[%s2865 + $0xc4] sm:$0xff]
  %v2895 = vld [vmem:[%s2865 + $0xcc] sm:$0xff]
  %v2896 = vld [vmem:[%s2865 + $0xd4] sm:$0xff]
  %v2897 = vld [vmem:[%s2865 + $0xdc] sm:$0xf]
  %v2898 = vld [vmem:[%s2865 + $0xe0] sm:$0xff]
  %v2899 = vld [vmem:[%s2865 + $0xe8] sm:$0xff]
  %v2900 = vld [vmem:[%s2865 + $0xf0] sm:$0xff]
  %v2901 = vld [vmem:[%s2865 + $0xf8] sm:$0xf]
  %v2902 = vld [vmem:[%s2865 + $0xfc] sm:$0xff]
  %v2903 = vld [vmem:[%s2865 + $0x104] sm:$0xff]
  %v2904 = vld [vmem:[%s2865 + $0x10c] sm:$0xff]
  %v2905 = vld [vmem:[%s2865 + $0x114] sm:$0xf]
  %v2906 = vld [vmem:[%s2865 + $0x118] sm:$0xff]
  %v2907 = vld [vmem:[%s2865 + $0x120] sm:$0xff]
  %v2908 = vld [vmem:[%s2865 + $0x128] sm:$0xff]
  %v2909 = vld [vmem:[%s2865 + $0x130] sm:$0xf]
  %v2910 = vld [vmem:[%s2865 + $0x134] sm:$0xff]
  %v2911 = vld [vmem:[%s2865 + $0x13c] sm:$0xff]
  %v2912 = vld [vmem:[%s2865 + $0x144] sm:$0xff]
  %v2913 = vld [vmem:[%s2865 + $0x14c] sm:$0xf]
  %v2914 = vld [vmem:[%s2865 + $0x150] sm:$0xff]
  %v2915 = vld [vmem:[%s2865 + $0x158] sm:$0xff]
  %v2916 = vld [vmem:[%s2865 + $0x160] sm:$0xff]
  %v2917 = vld [vmem:[%s2865 + $0x168] sm:$0xf]
  %v2918 = vld [vmem:[%s2865 + $0x16c] sm:$0xff]
  %v2919 = vld [vmem:[%s2865 + $0x174] sm:$0xff]
  %v2920 = vld [vmem:[%s2865 + $0x17c] sm:$0xff]
  %v2921 = vld [vmem:[%s2865 + $0x184] sm:$0xf]
  %v2922 = vld [vmem:[%s2865 + $0x188] sm:$0xff]
  %v2923 = vld [vmem:[%s2865 + $0x190] sm:$0xff]
  %v2924 = vld [vmem:[%s2865 + $0x198] sm:$0xff]
  %v2925 = vld [vmem:[%s2865 + $0x1a0] sm:$0xf]
  %v2926 = vld [vmem:[%s2865 + $0x1a4] sm:$0xff]
  %v2927 = vld [vmem:[%s2865 + $0x1ac] sm:$0xff]
  %v2928 = vld [vmem:[%s2865 + $0x1b4] sm:$0xff]
  %v2929 = vld [vmem:[%s2865 + $0x1bc] sm:$0xf]
  %v2930 = vld [vmem:[%s2865 + $0x1c0] sm:$0xff]
  %v2931 = vld [vmem:[%s2865 + $0x1c8] sm:$0xff]
  %v2932 = vld [vmem:[%s2865 + $0x1d0] sm:$0xff]
  %v2933 = vld [vmem:[%s2865 + $0x1d8] sm:$0xf]
  %v2934 = vld [vmem:[%s2865 + $0x1dc] sm:$0xff]
  %v2935 = vld [vmem:[%s2865 + $0x1e4] sm:$0xff]
  %v2936 = vld [vmem:[%s2865 + $0x1ec] sm:$0xff]
  %v2937 = vld [vmem:[%s2865 + $0x1f4] sm:$0xf]
  %v2938 = vld [vmem:[%s2865 + $0x1f8] sm:$0xff]
  %v2939 = vld [vmem:[%s2865 + $0x200] sm:$0xff]
  %v2940 = vld [vmem:[%s2865 + $0x208] sm:$0xff]
  %v2941 = vld [vmem:[%s2865 + $0x210] sm:$0xf]
  %v2942 = vld [vmem:[%s2865 + $0x214] sm:$0xff]
  %v2943 = vld [vmem:[%s2865 + $0x21c] sm:$0xff]
  %v2944 = vld [vmem:[%s2865 + $0x224] sm:$0xff]
  %v2945 = vld [vmem:[%s2865 + $0x22c] sm:$0xf]
  %v2946 = vld [vmem:[%s2865 + $0x230] sm:$0xff]
  %v2947 = vld [vmem:[%s2865 + $0x238] sm:$0xff]
  %v2948 = vld [vmem:[%s2865 + $0x240] sm:$0xff]
  %v2949 = vld [vmem:[%s2865 + $0x248] sm:$0xf]
  %v2950 = vld [vmem:[%s2865 + $0x24c] sm:$0xff]
  %v2951 = vld [vmem:[%s2865 + $0x254] sm:$0xff]
  %v2952 = vld [vmem:[%s2865 + $0x25c] sm:$0xff]
  %v2953 = vld [vmem:[%s2865 + $0x264] sm:$0xf]
  %v2954 = vld [vmem:[%s2865 + $0x268] sm:$0xff]
  %v2955 = vld [vmem:[%s2865 + $0x270] sm:$0xff]
  %v2956 = vld [vmem:[%s2865 + $0x278] sm:$0xff]
  %v2957 = vld [vmem:[%s2865 + $0x280] sm:$0xf]
  %v2958 = vld [vmem:[%s2865 + $0x284] sm:$0xff]
  %v2959 = vld [vmem:[%s2865 + $0x28c] sm:$0xff]
  %v2960 = vld [vmem:[%s2865 + $0x294] sm:$0xff]
  %v2961 = vld [vmem:[%s2865 + $0x29c] sm:$0xf]
  %v2962 = vld [vmem:[%s2865 + $0x2a0] sm:$0xff]
  %v2963 = vld [vmem:[%s2865 + $0x2a8] sm:$0xff]
  %v2964 = vld [vmem:[%s2865 + $0x2b0] sm:$0xff]
  %v2965 = vld [vmem:[%s2865 + $0x2b8] sm:$0xf]
  %v2966 = vld [vmem:[%s2865 + $0x2bc] sm:$0xff]
  %v2967 = vld [vmem:[%s2865 + $0x2c4] sm:$0xff]
  %v2968 = vld [vmem:[%s2865 + $0x2cc] sm:$0xff]
  %v2969 = vld [vmem:[%s2865 + $0x2d4] sm:$0xf]
  %v2970 = vld [vmem:[%s2865 + $0x2d8] sm:$0xff]
  %v2971 = vld [vmem:[%s2865 + $0x2e0] sm:$0xff]
  %v2972 = vld [vmem:[%s2865 + $0x2e8] sm:$0xff]
  %v2973 = vld [vmem:[%s2865 + $0x2f0] sm:$0xf]
  %v2974 = vld [vmem:[%s2865 + $0x2f4] sm:$0xff]
  %v2975 = vld [vmem:[%s2865 + $0x2fc] sm:$0xff]
  %v2976 = vld [vmem:[%s2865 + $0x304] sm:$0xff]
  %v2977 = vld [vmem:[%s2865 + $0x30c] sm:$0xf]
  %v2978 = vld [vmem:[%s2865 + $0x310] sm:$0xff]
  %v2979 = vld [vmem:[%s2865 + $0x318] sm:$0xff]
  %v2980 = vld [vmem:[%s2865 + $0x320] sm:$0xff]
  %v2981 = vld [vmem:[%s2865 + $0x328] sm:$0xf]
  %v2982 = vld [vmem:[%s2865 + $0x32c] sm:$0xff]
  %v2983 = vld [vmem:[%s2865 + $0x334] sm:$0xff]
  %v2984 = vld [vmem:[%s2865 + $0x33c] sm:$0xff]
  %v2985 = vld [vmem:[%s2865 + $0x344] sm:$0xf]
  %v2986 = vld [vmem:[%s2865 + $0x348] sm:$0xff]
  %v2987 = vld [vmem:[%s2865 + $0x350] sm:$0xff]
  %v2988 = vld [vmem:[%s2865 + $0x358] sm:$0xff]
  %v2989 = vld [vmem:[%s2865 + $0x360] sm:$0xf]
  %v2990 = vld [vmem:[%s2865 + $0x364] sm:$0xff]
  %v2991 = vld [vmem:[%s2865 + $0x36c] sm:$0xff]
  %v2992 = vld [vmem:[%s2865 + $0x374] sm:$0xff]
  %v2993 = vld [vmem:[%s2865 + $0x37c] sm:$0xf]
  %v2994 = vld [vmem:[%s2865 + $0x380] sm:$0xff]
  %v2995 = vld [vmem:[%s2865 + $0x388] sm:$0xff]
  %v2996 = vld [vmem:[%s2865 + $0x390] sm:$0xff]
  %v2997 = vld [vmem:[%s2865 + $0x398] sm:$0xf]
  %v2998 = vld [vmem:[%s2865 + $0x39c] sm:$0xff]
  %v2999 = vld [vmem:[%s2865 + $0x3a4] sm:$0xff]
  %v3000 = vld [vmem:[%s2865 + $0x3ac] sm:$0xff]
  %v3001 = vld [vmem:[%s2865 + $0x3b4] sm:$0xf]
  %v3002 = vld [vmem:[%s2865 + $0x3b8] sm:$0xff]
  %v3003 = vld [vmem:[%s2865 + $0x3c0] sm:$0xff]
  %v3004 = vld [vmem:[%s2865 + $0x3c8] sm:$0xff]
  %v3005 = vld [vmem:[%s2865 + $0x3d0] sm:$0xf]
  %v3006 = vld [vmem:[%s2865 + $0x3d4] sm:$0xff]
  %v3007 = vld [vmem:[%s2865 + $0x3dc] sm:$0xff]
  %v3008 = vld [vmem:[%s2865 + $0x3e4] sm:$0xff]
  %v3009 = vld [vmem:[%s2865 + $0x3ec] sm:$0xf]
  %v3010 = vld [vmem:[%s2865 + $0x3f0] sm:$0xff]
  %v3011 = vld [vmem:[%s2865 + $0x3f8] sm:$0xff]
  %v3012 = vld [vmem:[%s2865 + $0x400] sm:$0xff]
  %v3013 = vld [vmem:[%s2865 + $0x408] sm:$0xf]
  %v3014 = vld [vmem:[%s2865 + $0x40c] sm:$0xff]
  %v3015 = vld [vmem:[%s2865 + $0x414] sm:$0xff]
  %v3016 = vld [vmem:[%s2865 + $0x41c] sm:$0xff]
  %v3017 = vld [vmem:[%s2865 + $0x424] sm:$0xf]
  %v3018 = vld [vmem:[%s2865 + $0x428] sm:$0xff]
  %v3019 = vld [vmem:[%s2865 + $0x430] sm:$0xff]
  %v3020 = vld [vmem:[%s2865 + $0x438] sm:$0xff]
  %v3021 = vld [vmem:[%s2865 + $0x440] sm:$0xf]
  %v3022 = vld [vmem:[%s2865 + $0x444] sm:$0xff]
  %v3023 = vld [vmem:[%s2865 + $0x44c] sm:$0xff]
  %v3024 = vld [vmem:[%s2865 + $0x454] sm:$0xff]
  %v3025 = vld [vmem:[%s2865 + $0x45c] sm:$0xf]
  %v3026 = vld [vmem:[%s2865 + $0x460] sm:$0xff]
  %v3027 = vld [vmem:[%s2865 + $0x468] sm:$0xff]
  %v3028 = vld [vmem:[%s2865 + $0x470] sm:$0xff]
  %v3029 = vld [vmem:[%s2865 + $0x478] sm:$0xf]
  %v3030 = vld [vmem:[%s2865 + $0x47c] sm:$0xff]
  %v3031 = vld [vmem:[%s2865 + $0x484] sm:$0xff]
  %v3032 = vld [vmem:[%s2865 + $0x48c] sm:$0xff]
  %v3033 = vld [vmem:[%s2865 + $0x494] sm:$0xf]
  %v3034 = vld [vmem:[%s2865 + $0x498] sm:$0xff]
  %v3035 = vld [vmem:[%s2865 + $0x4a0] sm:$0xff]
  %v3036 = vld [vmem:[%s2865 + $0x4a8] sm:$0xff]
  %v3037 = vld [vmem:[%s2865 + $0x4b0] sm:$0xf]
  %v3038 = vld [vmem:[%s2865 + $0x4b4] sm:$0xff]
  %v3039 = vld [vmem:[%s2865 + $0x4bc] sm:$0xff]
  %v3040 = vld [vmem:[%s2865 + $0x4c4] sm:$0xff]
  %v3041 = vld [vmem:[%s2865 + $0x4cc] sm:$0xf]
  %v3042 = vld [vmem:[%s2865 + $0x4d0] sm:$0xff]
  %v3043 = vld [vmem:[%s2865 + $0x4d8] sm:$0xff]
  %v3044 = vld [vmem:[%s2865 + $0x4e0] sm:$0xff]
  %v3045 = vld [vmem:[%s2865 + $0x4e8] sm:$0xf]
  %v3046 = vld [vmem:[%s2865 + $0x4ec] sm:$0xff]
  %v3047 = vld [vmem:[%s2865 + $0x4f4] sm:$0xff]
  %v3048 = vld [vmem:[%s2865 + $0x4fc] sm:$0xff]
  %v3049 = vld [vmem:[%s2865 + $0x504] sm:$0xf]
  %v3050 = vld [vmem:[%s2865 + $0x508] sm:$0xff]
  %v3051 = vld [vmem:[%s2865 + $0x510] sm:$0xff]
  %v3052 = vld [vmem:[%s2865 + $0x518] sm:$0xff]
  %v3053 = vld [vmem:[%s2865 + $0x520] sm:$0xf]
  %v3054 = vld [vmem:[%s2865 + $0x524] sm:$0xff]
  %v3055 = vld [vmem:[%s2865 + $0x52c] sm:$0xff]
  %v3056 = vld [vmem:[%s2865 + $0x534] sm:$0xff]
  %v3057 = vld [vmem:[%s2865 + $0x53c] sm:$0xf]
  %v3058 = vld [vmem:[%s2865 + $0x540] sm:$0xff]
  %v3059 = vld [vmem:[%s2865 + $0x548] sm:$0xff]
  %v3060 = vld [vmem:[%s2865 + $0x550] sm:$0xff]
  %v3061 = vld [vmem:[%s2865 + $0x558] sm:$0xf]
  %v3062 = vld [vmem:[%s2865 + $0x55c] sm:$0xff]
  %v3063 = vld [vmem:[%s2865 + $0x564] sm:$0xff]
  %v3064 = vld [vmem:[%s2865 + $0x56c] sm:$0xff]
  %v3065 = vld [vmem:[%s2865 + $0x574] sm:$0xf]
  %v3066 = vld [vmem:[%s2865 + $0x578] sm:$0xff]
  %v3067 = vld [vmem:[%s2865 + $0x580] sm:$0xff]
  %v3068 = vld [vmem:[%s2865 + $0x588] sm:$0xff]
  %v3069 = vld [vmem:[%s2865 + $0x590] sm:$0xf]
  %v3070 = vld [vmem:[%s2865 + $0x594] sm:$0xff]
  %v3071 = vld [vmem:[%s2865 + $0x59c] sm:$0xff]
  %v3072 = vld [vmem:[%s2865 + $0x5a4] sm:$0xff]
  %v3073 = vld [vmem:[%s2865 + $0x5ac] sm:$0xf]
  %v3074 = vld [vmem:[%s2865 + $0x5b0] sm:$0xff]
  %v3075 = vld [vmem:[%s2865 + $0x5b8] sm:$0xff]
  %v3076 = vld [vmem:[%s2865 + $0x5c0] sm:$0xff]
  %v3077 = vld [vmem:[%s2865 + $0x5c8] sm:$0xf]
  %v3078 = vld [vmem:[%s2865 + $0x5cc] sm:$0xff]
  %v3079 = vld [vmem:[%s2865 + $0x5d4] sm:$0xff]
  %v3080 = vld [vmem:[%s2865 + $0x5dc] sm:$0xff]
  %v3081 = vld [vmem:[%s2865 + $0x5e4] sm:$0xf]
  %v3082 = vld [vmem:[%s2865 + $0x5e8] sm:$0xff]
  %v3083 = vld [vmem:[%s2865 + $0x5f0] sm:$0xff]
  %v3084 = vld [vmem:[%s2865 + $0x5f8] sm:$0xff]
  %v3085 = vld [vmem:[%s2865 + $0x600] sm:$0xf]
  %v3086 = vld [vmem:[%s2865 + $0x604] sm:$0xff]
  %v3087 = vld [vmem:[%s2865 + $0x60c] sm:$0xff]
  %v3088 = vld [vmem:[%s2865 + $0x614] sm:$0xff]
  %v3089 = vld [vmem:[%s2865 + $0x61c] sm:$0xf]
  %v3090 = vld [vmem:[%s2865 + $0x620] sm:$0xff]
  %v3091 = vld [vmem:[%s2865 + $0x628] sm:$0xff]
  %v3092 = vld [vmem:[%s2865 + $0x630] sm:$0xff]
  %v3093 = vld [vmem:[%s2865 + $0x638] sm:$0xf]
  %v3094 = vld [vmem:[%s2865 + $0x63c] sm:$0xff]
  %v3095 = vld [vmem:[%s2865 + $0x644] sm:$0xff]
  %v3096 = vld [vmem:[%s2865 + $0x64c] sm:$0xff]
  %v3097 = vld [vmem:[%s2865 + $0x654] sm:$0xf]
  %v3098 = vld [vmem:[%s2865 + $0x658] sm:$0xff]
  %v3099 = vld [vmem:[%s2865 + $0x660] sm:$0xff]
  %v3100 = vld [vmem:[%s2865 + $0x668] sm:$0xff]
  %v3101 = vld [vmem:[%s2865 + $0x670] sm:$0xf]
  %v3102 = vld [vmem:[%s2865 + $0x674] sm:$0xff]
  %v3103 = vld [vmem:[%s2865 + $0x67c] sm:$0xff]
  %v3104 = vld [vmem:[%s2865 + $0x684] sm:$0xff]
  %v3105 = vld [vmem:[%s2865 + $0x68c] sm:$0xf]
  %v3106 = vld [vmem:[%s2865 + $0x690] sm:$0xff]
  %v3107 = vld [vmem:[%s2865 + $0x698] sm:$0xff]
  %v3108 = vld [vmem:[%s2865 + $0x6a0] sm:$0xff]
  %v3109 = vld [vmem:[%s2865 + $0x6a8] sm:$0xf]
  %v3110 = vld [vmem:[%s2865 + $0x6ac] sm:$0xff]
  %v3111 = vld [vmem:[%s2865 + $0x6b4] sm:$0xff]
  %v3112 = vld [vmem:[%s2865 + $0x6bc] sm:$0xff]
  %v3113 = vld [vmem:[%s2865 + $0x6c4] sm:$0xf]
  %v3114 = vld [vmem:[%s2865 + $0x6c8] sm:$0xff]
  %v3115 = vld [vmem:[%s2865 + $0x6d0] sm:$0xff]
  %v3116 = vld [vmem:[%s2865 + $0x6d8] sm:$0xff]
  %v3117 = vld [vmem:[%s2865 + $0x6e0] sm:$0xf]
  %v3118 = vld [vmem:[%s2865 + $0x6e4] sm:$0xff]
  %v3119 = vld [vmem:[%s2865 + $0x6ec] sm:$0xff]
  %v3120 = vld [vmem:[%s2865 + $0x6f4] sm:$0xff]
  %v3121 = vld [vmem:[%s2865 + $0x6fc] sm:$0xf]
  %v3122 = vld [vmem:[%s2865 + $0x700] sm:$0xff]
  %v3123 = vld [vmem:[%s2865 + $0x708] sm:$0xff]
  %v3124 = vld [vmem:[%s2865 + $0x710] sm:$0xff]
  %v3125 = vld [vmem:[%s2865 + $0x718] sm:$0xf]
  %v3126 = vld [vmem:[%s2865 + $0x71c] sm:$0xff]
  %v3127 = vld [vmem:[%s2865 + $0x724] sm:$0xff]
  %v3128 = vld [vmem:[%s2865 + $0x72c] sm:$0xff]
  %v3129 = vld [vmem:[%s2865 + $0x734] sm:$0xf]
  %v3130 = vld [vmem:[%s2865 + $0x738] sm:$0xff]
  %v3131 = vld [vmem:[%s2865 + $0x740] sm:$0xff]
  %v3132 = vld [vmem:[%s2865 + $0x748] sm:$0xff]
  %v3133 = vld [vmem:[%s2865 + $0x750] sm:$0xf]
  %v3134 = vld [vmem:[%s2865 + $0x754] sm:$0xff]
  %v3135 = vld [vmem:[%s2865 + $0x75c] sm:$0xff]
  %v3136 = vld [vmem:[%s2865 + $0x764] sm:$0xff]
  %v3137 = vld [vmem:[%s2865 + $0x76c] sm:$0xf]
  %v3138 = vld [vmem:[%s2865 + $0x770] sm:$0xff]
  %v3139 = vld [vmem:[%s2865 + $0x778] sm:$0xff]
  %v3140 = vld [vmem:[%s2865 + $0x780] sm:$0xff]
  %v3141 = vld [vmem:[%s2865 + $0x788] sm:$0xf]
  %v3142 = vld [vmem:[%s2865 + $0x78c] sm:$0xff]
  %v3143 = vld [vmem:[%s2865 + $0x794] sm:$0xff]
  %v3144 = vld [vmem:[%s2865 + $0x79c] sm:$0xff]
  %v3145 = vld [vmem:[%s2865 + $0x7a4] sm:$0xf]
  %v3146 = vld [vmem:[%s2865 + $0x7a8] sm:$0xff]
  %v3147 = vld [vmem:[%s2865 + $0x7b0] sm:$0xff]
  %v3148 = vld [vmem:[%s2865 + $0x7b8] sm:$0xff]
  %v3149 = vld [vmem:[%s2865 + $0x7c0] sm:$0xf]
  %v3150 = vld [vmem:[%s2865 + $0x7c4] sm:$0xff]
  %v3151 = vld [vmem:[%s2865 + $0x7cc] sm:$0xff]
  %v3152 = vld [vmem:[%s2865 + $0x7d4] sm:$0xff]
  %v3153 = vld [vmem:[%s2865 + $0x7dc] sm:$0xf]
  %v3154 = vld [vmem:[%s2865 + $0x7e0] sm:$0xff]
  %v3155 = vld [vmem:[%s2865 + $0x7e8] sm:$0xff]
  %v3156 = vld [vmem:[%s2865 + $0x7f0] sm:$0xff]
  %v3157 = vld [vmem:[%s2865 + $0x7f8] sm:$0xf]
  %v3158 = vld [vmem:[%s2865 + $0x7fc] sm:$0xff]
  %v3159 = vld [vmem:[%s2865 + $0x804] sm:$0xff]
  %v3160 = vld [vmem:[%s2865 + $0x80c] sm:$0xff]
  %v3161 = vld [vmem:[%s2865 + $0x814] sm:$0xf]
  %v3162 = vld [vmem:[%s2865 + $0x818] sm:$0xff]
  %v3163 = vld [vmem:[%s2865 + $0x820] sm:$0xff]
  %v3164 = vld [vmem:[%s2865 + $0x828] sm:$0xff]
  %v3165 = vld [vmem:[%s2865 + $0x830] sm:$0xf]
  %v3166 = vld [vmem:[%s2865 + $0x834] sm:$0xff]
  %v3167 = vld [vmem:[%s2865 + $0x83c] sm:$0xff]
  %v3168 = vld [vmem:[%s2865 + $0x844] sm:$0xff]
  %v3169 = vld [vmem:[%s2865 + $0x84c] sm:$0xf]
  %v3170 = vld [vmem:[%s2865 + $0x850] sm:$0xff]
  %v3171 = vld [vmem:[%s2865 + $0x858] sm:$0xff]
  %v3172 = vld [vmem:[%s2865 + $0x860] sm:$0xff]
  %v3173 = vld [vmem:[%s2865 + $0x868] sm:$0xf]
  %v3174 = vld [vmem:[%s2865 + $0x86c] sm:$0xff]
  %v3175 = vld [vmem:[%s2865 + $0x874] sm:$0xff]
  %v3176 = vld [vmem:[%s2865 + $0x87c] sm:$0xff]
  %v3177 = vld [vmem:[%s2865 + $0x884] sm:$0xf]
  %v3178 = vld [vmem:[%s2865 + $0x888] sm:$0xff]
  %v3179 = vld [vmem:[%s2865 + $0x890] sm:$0xff]
  %v3180 = vld [vmem:[%s2865 + $0x898] sm:$0xff]
  %v3181 = vld [vmem:[%s2865 + $0x8a0] sm:$0xf]
  %v3182 = vld [vmem:[%s2865 + $0x8a4] sm:$0xff]
  %v3183 = vld [vmem:[%s2865 + $0x8ac] sm:$0xff]
  %v3184 = vld [vmem:[%s2865 + $0x8b4] sm:$0xff]
  %v3185 = vld [vmem:[%s2865 + $0x8bc] sm:$0xf]
  %v3186 = vld [vmem:[%s2865 + $0x8c0] sm:$0xff]
  %v3187 = vld [vmem:[%s2865 + $0x8c8] sm:$0xff]
  %v3188 = vld [vmem:[%s2865 + $0x8d0] sm:$0xff]
  %v3189 = vld [vmem:[%s2865 + $0x8d8] sm:$0xf]
  %v3190 = vld [vmem:[%s2865 + $0x8dc] sm:$0xff]
  %v3191 = vld [vmem:[%s2865 + $0x8e4] sm:$0xff]
  %v3192 = vld [vmem:[%s2865 + $0x8ec] sm:$0xff]
  %v3193 = vld [vmem:[%s2865 + $0x8f4] sm:$0xf]
  %v3194 = vld [vmem:[%s2865 + $0x8f8] sm:$0xff]
  %v3195 = vld [vmem:[%s2865 + $0x900] sm:$0xff]
  %v3196 = vld [vmem:[%s2865 + $0x908] sm:$0xff]
  %v3197 = vld [vmem:[%s2865 + $0x910] sm:$0xf]
  %v3198 = vld [vmem:[%s2865 + $0x914] sm:$0xff]
  %v3199 = vld [vmem:[%s2865 + $0x91c] sm:$0xff]
  %v3200 = vld [vmem:[%s2865 + $0x924] sm:$0xff]
  %v3201 = vld [vmem:[%s2865 + $0x92c] sm:$0xf]
  %v3202 = vld [vmem:[%s2865 + $0x930] sm:$0xff]
  %v3203 = vld [vmem:[%s2865 + $0x938] sm:$0xff]
  %v3204 = vld [vmem:[%s2865 + $0x940] sm:$0xff]
  %v3205 = vld [vmem:[%s2865 + $0x948] sm:$0xf]
  %v3206 = vld [vmem:[%s2865 + $0x94c] sm:$0xff]
  %v3207 = vld [vmem:[%s2865 + $0x954] sm:$0xff]
  %v3208 = vld [vmem:[%s2865 + $0x95c] sm:$0xff]
  %v3209 = vld [vmem:[%s2865 + $0x964] sm:$0xf]
  %v3210 = vld [vmem:[%s2865 + $0x968] sm:$0xff]
  %v3211 = vld [vmem:[%s2865 + $0x970] sm:$0xff]
  %v3212 = vld [vmem:[%s2865 + $0x978] sm:$0xff]
  %v3213 = vld [vmem:[%s2865 + $0x980] sm:$0xf]
  %v3214 = vld [vmem:[%s2865 + $0x984] sm:$0xff]
  %v3215 = vld [vmem:[%s2865 + $0x98c] sm:$0xff]
  %v3216 = vld [vmem:[%s2865 + $0x994] sm:$0xff]
  %v3217 = vld [vmem:[%s2865 + $0x99c] sm:$0xf]
  %v3218 = vld [vmem:[%s2865 + $0x9a0] sm:$0xff]
  %v3219 = vld [vmem:[%s2865 + $0x9a8] sm:$0xff]
  %v3220 = vld [vmem:[%s2865 + $0x9b0] sm:$0xff]
  %v3221 = vld [vmem:[%s2865 + $0x9b8] sm:$0xf]
  %v3222 = vld [vmem:[%s2865 + $0x9bc] sm:$0xff]
  %v3223 = vld [vmem:[%s2865 + $0x9c4] sm:$0xff]
  %v3224 = vld [vmem:[%s2865 + $0x9cc] sm:$0xff]
  %v3225 = vld [vmem:[%s2865 + $0x9d4] sm:$0xf]
  %v3226 = vld [vmem:[%s2865 + $0x9d8] sm:$0xff]
  %v3227 = vld [vmem:[%s2865 + $0x9e0] sm:$0xff]
  %v3228 = vld [vmem:[%s2865 + $0x9e8] sm:$0xff]
  %v3229 = vld [vmem:[%s2865 + $0x9f0] sm:$0xf]
  %v3230 = vld [vmem:[%s2865 + $0x9f4] sm:$0xff]
  %v3231 = vld [vmem:[%s2865 + $0x9fc] sm:$0xff]
  %v3232 = vld [vmem:[%s2865 + $0xa04] sm:$0xff]
  %v3233 = vld [vmem:[%s2865 + $0xa0c] sm:$0xf]
  %v3234 = vld [vmem:[%s2865 + $0xa10] sm:$0xff]
  %v3235 = vld [vmem:[%s2865 + $0xa18] sm:$0xff]
  %v3236 = vld [vmem:[%s2865 + $0xa20] sm:$0xff]
  %v3237 = vld [vmem:[%s2865 + $0xa28] sm:$0xf]
  %v3238 = vld [vmem:[%s2865 + $0xa2c] sm:$0xff]
  %v3239 = vld [vmem:[%s2865 + $0xa34] sm:$0xff]
  %v3240 = vld [vmem:[%s2865 + $0xa3c] sm:$0xff]
  %v3241 = vld [vmem:[%s2865 + $0xa44] sm:$0xf]
  %v3242 = vld [vmem:[%s2865 + $0xa48] sm:$0xff]
  %v3243 = vld [vmem:[%s2865 + $0xa50] sm:$0xff]
  %v3244 = vld [vmem:[%s2865 + $0xa58] sm:$0xff]
  %v3245 = vld [vmem:[%s2865 + $0xa60] sm:$0xf]
  %v3246 = vld [vmem:[%s2865 + $0xa64] sm:$0xff]
  %v3247 = vld [vmem:[%s2865 + $0xa6c] sm:$0xff]
  %v3248 = vld [vmem:[%s2865 + $0xa74] sm:$0xff]
  %v3249 = vld [vmem:[%s2865 + $0xa7c] sm:$0xf]
  %v3250 = vld [vmem:[%s2865 + $0xa80] sm:$0xff]
  %v3251 = vld [vmem:[%s2865 + $0xa88] sm:$0xff]
  %v3252 = vld [vmem:[%s2865 + $0xa90] sm:$0xff]
  %v3253 = vld [vmem:[%s2865 + $0xa98] sm:$0xf]
  %v3254 = vld [vmem:[%s2865 + $0xa9c] sm:$0xff]
  %v3255 = vld [vmem:[%s2865 + $0xaa4] sm:$0xff]
  %v3256 = vld [vmem:[%s2865 + $0xaac] sm:$0xff]
  %v3257 = vld [vmem:[%s2865 + $0xab4] sm:$0xf]
  %v3650 = vunpack.c.l.b16 %v2866
  %v3651 = vunpack.c.h.b16 %v2866
  %v3652 = vunpack.c.l.b16 %v2867
  %v3653 = vunpack.c.h.b16 %v2867
  %v3654 = vunpack.c.l.b16 %v2868
  %v3655 = vunpack.c.h.b16 %v2868
  %v3656 = vunpack.c.l.b16 %v2869
  %v3657 = vunpack.c.l.b16 %v2870
  %v3658 = vunpack.c.h.b16 %v2870
  %v3659 = vunpack.c.l.b16 %v2871
  %v3660 = vunpack.c.h.b16 %v2871
  %v3661 = vunpack.c.l.b16 %v2872
  %v3662 = vunpack.c.h.b16 %v2872
  %v3663 = vunpack.c.l.b16 %v2873
  %v3664 = vunpack.c.l.b16 %v2874
  %v3665 = vunpack.c.h.b16 %v2874
  %v3666 = vunpack.c.l.b16 %v2875
  %v3667 = vunpack.c.h.b16 %v2875
  %v3668 = vunpack.c.l.b16 %v2876
  %v3669 = vunpack.c.h.b16 %v2876
  %v3670 = vunpack.c.l.b16 %v2877
  %v3671 = vunpack.c.l.b16 %v2878
  %v3672 = vunpack.c.h.b16 %v2878
  %v3673 = vunpack.c.l.b16 %v2879
  %v3674 = vunpack.c.h.b16 %v2879
  %v3675 = vunpack.c.l.b16 %v2880
  %v3676 = vunpack.c.h.b16 %v2880
  %v3677 = vunpack.c.l.b16 %v2881
  %v3678 = vunpack.c.l.b16 %v2882
  %v3679 = vunpack.c.h.b16 %v2882
  %v3680 = vunpack.c.l.b16 %v2883
  %v3681 = vunpack.c.h.b16 %v2883
  %v3682 = vunpack.c.l.b16 %v2884
  %v3683 = vunpack.c.h.b16 %v2884
  %v3684 = vunpack.c.l.b16 %v2885
  %v3685 = vunpack.c.l.b16 %v2886
  %v3686 = vunpack.c.h.b16 %v2886
  %v3687 = vunpack.c.l.b16 %v2887
  %v3688 = vunpack.c.h.b16 %v2887
  %v3689 = vunpack.c.l.b16 %v2888
  %v3690 = vunpack.c.h.b16 %v2888
  %v3691 = vunpack.c.l.b16 %v2889
  %v3692 = vunpack.c.l.b16 %v2890
  %v3693 = vunpack.c.h.b16 %v2890
  %v3694 = vunpack.c.l.b16 %v2891
  %v3695 = vunpack.c.h.b16 %v2891
  %v3696 = vunpack.c.l.b16 %v2892
  %v3697 = vunpack.c.h.b16 %v2892
  %v3698 = vunpack.c.l.b16 %v2893
  %v3699 = vunpack.c.l.b16 %v2894
  %v3700 = vunpack.c.h.b16 %v2894
  %v3701 = vunpack.c.l.b16 %v2895
  %v3702 = vunpack.c.h.b16 %v2895
  %v3703 = vunpack.c.l.b16 %v2896
  %v3704 = vunpack.c.h.b16 %v2896
  %v3705 = vunpack.c.l.b16 %v2897
  %v3706 = vunpack.c.l.b16 %v2898
  %v3707 = vunpack.c.h.b16 %v2898
  %v3708 = vunpack.c.l.b16 %v2899
  %v3709 = vunpack.c.h.b16 %v2899
  %v3710 = vunpack.c.l.b16 %v2900
  %v3711 = vunpack.c.h.b16 %v2900
  %v3712 = vunpack.c.l.b16 %v2901
  %v3713 = vunpack.c.l.b16 %v2902
  %v3714 = vunpack.c.h.b16 %v2902
  %v3715 = vunpack.c.l.b16 %v2903
  %v3716 = vunpack.c.h.b16 %v2903
  %v3717 = vunpack.c.l.b16 %v2904
  %v3718 = vunpack.c.h.b16 %v2904
  %v3719 = vunpack.c.l.b16 %v2905
  %v3720 = vunpack.c.l.b16 %v2906
  %v3721 = vunpack.c.h.b16 %v2906
  %v3722 = vunpack.c.l.b16 %v2907
  %v3723 = vunpack.c.h.b16 %v2907
  %v3724 = vunpack.c.l.b16 %v2908
  %v3725 = vunpack.c.h.b16 %v2908
  %v3726 = vunpack.c.l.b16 %v2909
  %v3727 = vunpack.c.l.b16 %v2910
  %v3728 = vunpack.c.h.b16 %v2910
  %v3729 = vunpack.c.l.b16 %v2911
  %v3730 = vunpack.c.h.b16 %v2911
  %v3731 = vunpack.c.l.b16 %v2912
  %v3732 = vunpack.c.h.b16 %v2912
  %v3733 = vunpack.c.l.b16 %v2913
  %v3734 = vunpack.c.l.b16 %v2914
  %v3735 = vunpack.c.h.b16 %v2914
  %v3736 = vunpack.c.l.b16 %v2915
  %v3737 = vunpack.c.h.b16 %v2915
  %v3738 = vunpack.c.l.b16 %v2916
  %v3739 = vunpack.c.h.b16 %v2916
  %v3740 = vunpack.c.l.b16 %v2917
  %v3741 = vunpack.c.l.b16 %v2918
  %v3742 = vunpack.c.h.b16 %v2918
  %v3743 = vunpack.c.l.b16 %v2919
  %v3744 = vunpack.c.h.b16 %v2919
  %v3745 = vunpack.c.l.b16 %v2920
  %v3746 = vunpack.c.h.b16 %v2920
  %v3747 = vunpack.c.l.b16 %v2921
  %v3748 = vunpack.c.l.b16 %v2922
  %v3749 = vunpack.c.h.b16 %v2922
  %v3750 = vunpack.c.l.b16 %v2923
  %v3751 = vunpack.c.h.b16 %v2923
  %v3752 = vunpack.c.l.b16 %v2924
  %v3753 = vunpack.c.h.b16 %v2924
  %v3754 = vunpack.c.l.b16 %v2925
  %v3755 = vunpack.c.l.b16 %v2926
  %v3756 = vunpack.c.h.b16 %v2926
  %v3757 = vunpack.c.l.b16 %v2927
  %v3758 = vunpack.c.h.b16 %v2927
  %v3759 = vunpack.c.l.b16 %v2928
  %v3760 = vunpack.c.h.b16 %v2928
  %v3761 = vunpack.c.l.b16 %v2929
  %v3762 = vunpack.c.l.b16 %v2930
  %v3763 = vunpack.c.h.b16 %v2930
  %v3764 = vunpack.c.l.b16 %v2931
  %v3765 = vunpack.c.h.b16 %v2931
  %v3766 = vunpack.c.l.b16 %v2932
  %v3767 = vunpack.c.h.b16 %v2932
  %v3768 = vunpack.c.l.b16 %v2933
  %v3769 = vunpack.c.l.b16 %v2934
  %v3770 = vunpack.c.h.b16 %v2934
  %v3771 = vunpack.c.l.b16 %v2935
  %v3772 = vunpack.c.h.b16 %v2935
  %v3773 = vunpack.c.l.b16 %v2936
  %v3774 = vunpack.c.h.b16 %v2936
  %v3775 = vunpack.c.l.b16 %v2937
  %v3776 = vunpack.c.l.b16 %v2938
  %v3777 = vunpack.c.h.b16 %v2938
  %v3778 = vunpack.c.l.b16 %v2939
  %v3779 = vunpack.c.h.b16 %v2939
  %v3780 = vunpack.c.l.b16 %v2940
  %v3781 = vunpack.c.h.b16 %v2940
  %v3782 = vunpack.c.l.b16 %v2941
  %v3783 = vunpack.c.l.b16 %v2942
  %v3784 = vunpack.c.h.b16 %v2942
  %v3785 = vunpack.c.l.b16 %v2943
  %v3786 = vunpack.c.h.b16 %v2943
  %v3787 = vunpack.c.l.b16 %v2944
  %v3788 = vunpack.c.h.b16 %v2944
  %v3789 = vunpack.c.l.b16 %v2945
  %v3790 = vunpack.c.l.b16 %v2946
  %v3791 = vunpack.c.h.b16 %v2946
  %v3792 = vunpack.c.l.b16 %v2947
  %v3793 = vunpack.c.h.b16 %v2947
  %v3794 = vunpack.c.l.b16 %v2948
  %v3795 = vunpack.c.h.b16 %v2948
  %v3796 = vunpack.c.l.b16 %v2949
  %v3797 = vunpack.c.l.b16 %v2950
  %v3798 = vunpack.c.h.b16 %v2950
  %v3799 = vunpack.c.l.b16 %v2951
  %v3800 = vunpack.c.h.b16 %v2951
  %v3801 = vunpack.c.l.b16 %v2952
  %v3802 = vunpack.c.h.b16 %v2952
  %v3803 = vunpack.c.l.b16 %v2953
  %v3804 = vunpack.c.l.b16 %v2954
  %v3805 = vunpack.c.h.b16 %v2954
  %v3806 = vunpack.c.l.b16 %v2955
  %v3807 = vunpack.c.h.b16 %v2955
  %v3808 = vunpack.c.l.b16 %v2956
  %v3809 = vunpack.c.h.b16 %v2956
  %v3810 = vunpack.c.l.b16 %v2957
  %v3811 = vunpack.c.l.b16 %v2958
  %v3812 = vunpack.c.h.b16 %v2958
  %v3813 = vunpack.c.l.b16 %v2959
  %v3814 = vunpack.c.h.b16 %v2959
  %v3815 = vunpack.c.l.b16 %v2960
  %v3816 = vunpack.c.h.b16 %v2960
  %v3817 = vunpack.c.l.b16 %v2961
  %v3818 = vunpack.c.l.b16 %v2962
  %v3819 = vunpack.c.h.b16 %v2962
  %v3820 = vunpack.c.l.b16 %v2963
  %v3821 = vunpack.c.h.b16 %v2963
  %v3822 = vunpack.c.l.b16 %v2964
  %v3823 = vunpack.c.h.b16 %v2964
  %v3824 = vunpack.c.l.b16 %v2965
  %v3825 = vunpack.c.l.b16 %v2966
  %v3826 = vunpack.c.h.b16 %v2966
  %v3827 = vunpack.c.l.b16 %v2967
  %v3828 = vunpack.c.h.b16 %v2967
  %v3829 = vunpack.c.l.b16 %v2968
  %v3830 = vunpack.c.h.b16 %v2968
  %v3831 = vunpack.c.l.b16 %v2969
  %v3832 = vunpack.c.l.b16 %v2970
  %v3833 = vunpack.c.h.b16 %v2970
  %v3834 = vunpack.c.l.b16 %v2971
  %v3835 = vunpack.c.h.b16 %v2971
  %v3836 = vunpack.c.l.b16 %v2972
  %v3837 = vunpack.c.h.b16 %v2972
  %v3838 = vunpack.c.l.b16 %v2973
  %v3839 = vunpack.c.l.b16 %v2974
  %v3840 = vunpack.c.h.b16 %v2974
  %v3841 = vunpack.c.l.b16 %v2975
  %v3842 = vunpack.c.h.b16 %v2975
  %v3843 = vunpack.c.l.b16 %v2976
  %v3844 = vunpack.c.h.b16 %v2976
  %v3845 = vunpack.c.l.b16 %v2977
  %v3846 = vunpack.c.l.b16 %v2978
  %v3847 = vunpack.c.h.b16 %v2978
  %v3848 = vunpack.c.l.b16 %v2979
  %v3849 = vunpack.c.h.b16 %v2979
  %v3850 = vunpack.c.l.b16 %v2980
  %v3851 = vunpack.c.h.b16 %v2980
  %v3852 = vunpack.c.l.b16 %v2981
  %v3853 = vunpack.c.l.b16 %v2982
  %v3854 = vunpack.c.h.b16 %v2982
  %v3855 = vunpack.c.l.b16 %v2983
  %v3856 = vunpack.c.h.b16 %v2983
  %v3857 = vunpack.c.l.b16 %v2984
  %v3858 = vunpack.c.h.b16 %v2984
  %v3859 = vunpack.c.l.b16 %v2985
  %v3860 = vunpack.c.l.b16 %v2986
  %v3861 = vunpack.c.h.b16 %v2986
  %v3862 = vunpack.c.l.b16 %v2987
  %v3863 = vunpack.c.h.b16 %v2987
  %v3864 = vunpack.c.l.b16 %v2988
  %v3865 = vunpack.c.h.b16 %v2988
  %v3866 = vunpack.c.l.b16 %v2989
  %v3867 = vunpack.c.l.b16 %v2990
  %v3868 = vunpack.c.h.b16 %v2990
  %v3869 = vunpack.c.l.b16 %v2991
  %v3870 = vunpack.c.h.b16 %v2991
  %v3871 = vunpack.c.l.b16 %v2992
  %v3872 = vunpack.c.h.b16 %v2992
  %v3873 = vunpack.c.l.b16 %v2993
  %v3874 = vunpack.c.l.b16 %v2994
  %v3875 = vunpack.c.h.b16 %v2994
  %v3876 = vunpack.c.l.b16 %v2995
  %v3877 = vunpack.c.h.b16 %v2995
  %v3878 = vunpack.c.l.b16 %v2996
  %v3879 = vunpack.c.h.b16 %v2996
  %v3880 = vunpack.c.l.b16 %v2997
  %v3881 = vunpack.c.l.b16 %v2998
  %v3882 = vunpack.c.h.b16 %v2998
  %v3883 = vunpack.c.l.b16 %v2999
  %v3884 = vunpack.c.h.b16 %v2999
  %v3885 = vunpack.c.l.b16 %v3000
  %v3886 = vunpack.c.h.b16 %v3000
  %v3887 = vunpack.c.l.b16 %v3001
  %v3888 = vunpack.c.l.b16 %v3002
  %v3889 = vunpack.c.h.b16 %v3002
  %v3890 = vunpack.c.l.b16 %v3003
  %v3891 = vunpack.c.h.b16 %v3003
  %v3892 = vunpack.c.l.b16 %v3004
  %v3893 = vunpack.c.h.b16 %v3004
  %v3894 = vunpack.c.l.b16 %v3005
  %v3895 = vunpack.c.l.b16 %v3006
  %v3896 = vunpack.c.h.b16 %v3006
  %v3897 = vunpack.c.l.b16 %v3007
  %v3898 = vunpack.c.h.b16 %v3007
  %v3899 = vunpack.c.l.b16 %v3008
  %v3900 = vunpack.c.h.b16 %v3008
  %v3901 = vunpack.c.l.b16 %v3009
  %v3902 = vunpack.c.l.b16 %v3010
  %v3903 = vunpack.c.h.b16 %v3010
  %v3904 = vunpack.c.l.b16 %v3011
  %v3905 = vunpack.c.h.b16 %v3011
  %v3906 = vunpack.c.l.b16 %v3012
  %v3907 = vunpack.c.h.b16 %v3012
  %v3908 = vunpack.c.l.b16 %v3013
  %v3909 = vunpack.c.l.b16 %v3014
  %v3910 = vunpack.c.h.b16 %v3014
  %v3911 = vunpack.c.l.b16 %v3015
  %v3912 = vunpack.c.h.b16 %v3015
  %v3913 = vunpack.c.l.b16 %v3016
  %v3914 = vunpack.c.h.b16 %v3016
  %v3915 = vunpack.c.l.b16 %v3017
  %v3916 = vunpack.c.l.b16 %v3018
  %v3917 = vunpack.c.h.b16 %v3018
  %v3918 = vunpack.c.l.b16 %v3019
  %v3919 = vunpack.c.h.b16 %v3019
  %v3920 = vunpack.c.l.b16 %v3020
  %v3921 = vunpack.c.h.b16 %v3020
  %v3922 = vunpack.c.l.b16 %v3021
  %v3923 = vunpack.c.l.b16 %v3022
  %v3924 = vunpack.c.h.b16 %v3022
  %v3925 = vunpack.c.l.b16 %v3023
  %v3926 = vunpack.c.h.b16 %v3023
  %v3927 = vunpack.c.l.b16 %v3024
  %v3928 = vunpack.c.h.b16 %v3024
  %v3929 = vunpack.c.l.b16 %v3025
  %v3930 = vunpack.c.l.b16 %v3026
  %v3931 = vunpack.c.h.b16 %v3026
  %v3932 = vunpack.c.l.b16 %v3027
  %v3933 = vunpack.c.h.b16 %v3027
  %v3934 = vunpack.c.l.b16 %v3028
  %v3935 = vunpack.c.h.b16 %v3028
  %v3936 = vunpack.c.l.b16 %v3029
  %v3937 = vunpack.c.l.b16 %v3030
  %v3938 = vunpack.c.h.b16 %v3030
  %v3939 = vunpack.c.l.b16 %v3031
  %v3940 = vunpack.c.h.b16 %v3031
  %v3941 = vunpack.c.l.b16 %v3032
  %v3942 = vunpack.c.h.b16 %v3032
  %v3943 = vunpack.c.l.b16 %v3033
  %v3944 = vunpack.c.l.b16 %v3034
  %v3945 = vunpack.c.h.b16 %v3034
  %v3946 = vunpack.c.l.b16 %v3035
  %v3947 = vunpack.c.h.b16 %v3035
  %v3948 = vunpack.c.l.b16 %v3036
  %v3949 = vunpack.c.h.b16 %v3036
  %v3950 = vunpack.c.l.b16 %v3037
  %v3951 = vunpack.c.l.b16 %v3038
  %v3952 = vunpack.c.h.b16 %v3038
  %v3953 = vunpack.c.l.b16 %v3039
  %v3954 = vunpack.c.h.b16 %v3039
  %v3955 = vunpack.c.l.b16 %v3040
  %v3956 = vunpack.c.h.b16 %v3040
  %v3957 = vunpack.c.l.b16 %v3041
  %v3958 = vunpack.c.l.b16 %v3042
  %v3959 = vunpack.c.h.b16 %v3042
  %v3960 = vunpack.c.l.b16 %v3043
  %v3961 = vunpack.c.h.b16 %v3043
  %v3962 = vunpack.c.l.b16 %v3044
  %v3963 = vunpack.c.h.b16 %v3044
  %v3964 = vunpack.c.l.b16 %v3045
  %v3965 = vunpack.c.l.b16 %v3046
  %v3966 = vunpack.c.h.b16 %v3046
  %v3967 = vunpack.c.l.b16 %v3047
  %v3968 = vunpack.c.h.b16 %v3047
  %v3969 = vunpack.c.l.b16 %v3048
  %v3970 = vunpack.c.h.b16 %v3048
  %v3971 = vunpack.c.l.b16 %v3049
  %v3972 = vunpack.c.l.b16 %v3050
  %v3973 = vunpack.c.h.b16 %v3050
  %v3974 = vunpack.c.l.b16 %v3051
  %v3975 = vunpack.c.h.b16 %v3051
  %v3976 = vunpack.c.l.b16 %v3052
  %v3977 = vunpack.c.h.b16 %v3052
  %v3978 = vunpack.c.l.b16 %v3053
  %v3979 = vunpack.c.l.b16 %v3054
  %v3980 = vunpack.c.h.b16 %v3054
  %v3981 = vunpack.c.l.b16 %v3055
  %v3982 = vunpack.c.h.b16 %v3055
  %v3983 = vunpack.c.l.b16 %v3056
  %v3984 = vunpack.c.h.b16 %v3056
  %v3985 = vunpack.c.l.b16 %v3057
  %v3986 = vunpack.c.l.b16 %v3058
  %v3987 = vunpack.c.h.b16 %v3058
  %v3988 = vunpack.c.l.b16 %v3059
  %v3989 = vunpack.c.h.b16 %v3059
  %v3990 = vunpack.c.l.b16 %v3060
  %v3991 = vunpack.c.h.b16 %v3060
  %v3992 = vunpack.c.l.b16 %v3061
  %v3993 = vunpack.c.l.b16 %v3062
  %v3994 = vunpack.c.h.b16 %v3062
  %v3995 = vunpack.c.l.b16 %v3063
  %v3996 = vunpack.c.h.b16 %v3063
  %v3997 = vunpack.c.l.b16 %v3064
  %v3998 = vunpack.c.h.b16 %v3064
  %v3999 = vunpack.c.l.b16 %v3065
  %v4000 = vunpack.c.l.b16 %v3066
  %v4001 = vunpack.c.h.b16 %v3066
  %v4002 = vunpack.c.l.b16 %v3067
  %v4003 = vunpack.c.h.b16 %v3067
  %v4004 = vunpack.c.l.b16 %v3068
  %v4005 = vunpack.c.h.b16 %v3068
  %v4006 = vunpack.c.l.b16 %v3069
  %v4007 = vunpack.c.l.b16 %v3070
  %v4008 = vunpack.c.h.b16 %v3070
  %v4009 = vunpack.c.l.b16 %v3071
  %v4010 = vunpack.c.h.b16 %v3071
  %v4011 = vunpack.c.l.b16 %v3072
  %v4012 = vunpack.c.h.b16 %v3072
  %v4013 = vunpack.c.l.b16 %v3073
  %v4014 = vunpack.c.l.b16 %v3074
  %v4015 = vunpack.c.h.b16 %v3074
  %v4016 = vunpack.c.l.b16 %v3075
  %v4017 = vunpack.c.h.b16 %v3075
  %v4018 = vunpack.c.l.b16 %v3076
  %v4019 = vunpack.c.h.b16 %v3076
  %v4020 = vunpack.c.l.b16 %v3077
  %v4021 = vunpack.c.l.b16 %v3078
  %v4022 = vunpack.c.h.b16 %v3078
  %v4023 = vunpack.c.l.b16 %v3079
  %v4024 = vunpack.c.h.b16 %v3079
  %v4025 = vunpack.c.l.b16 %v3080
  %v4026 = vunpack.c.h.b16 %v3080
  %v4027 = vunpack.c.l.b16 %v3081
  %v4028 = vunpack.c.l.b16 %v3082
  %v4029 = vunpack.c.h.b16 %v3082
  %v4030 = vunpack.c.l.b16 %v3083
  %v4031 = vunpack.c.h.b16 %v3083
  %v4032 = vunpack.c.l.b16 %v3084
  %v4033 = vunpack.c.h.b16 %v3084
  %v4034 = vunpack.c.l.b16 %v3085
  %v4035 = vunpack.c.l.b16 %v3086
  %v4036 = vunpack.c.h.b16 %v3086
  %v4037 = vunpack.c.l.b16 %v3087
  %v4038 = vunpack.c.h.b16 %v3087
  %v4039 = vunpack.c.l.b16 %v3088
  %v4040 = vunpack.c.h.b16 %v3088
  %v4041 = vunpack.c.l.b16 %v3089
  %v4042 = vunpack.c.l.b16 %v3090
  %v4043 = vunpack.c.h.b16 %v3090
  %v4044 = vunpack.c.l.b16 %v3091
  %v4045 = vunpack.c.h.b16 %v3091
  %v4046 = vunpack.c.l.b16 %v3092
  %v4047 = vunpack.c.h.b16 %v3092
  %v4048 = vunpack.c.l.b16 %v3093
  %v4049 = vunpack.c.l.b16 %v3094
  %v4050 = vunpack.c.h.b16 %v3094
  %v4051 = vunpack.c.l.b16 %v3095
  %v4052 = vunpack.c.h.b16 %v3095
  %v4053 = vunpack.c.l.b16 %v3096
  %v4054 = vunpack.c.h.b16 %v3096
  %v4055 = vunpack.c.l.b16 %v3097
  %v4056 = vunpack.c.l.b16 %v3098
  %v4057 = vunpack.c.h.b16 %v3098
  %v4058 = vunpack.c.l.b16 %v3099
  %v4059 = vunpack.c.h.b16 %v3099
  %v4060 = vunpack.c.l.b16 %v3100
  %v4061 = vunpack.c.h.b16 %v3100
  %v4062 = vunpack.c.l.b16 %v3101
  %v4063 = vunpack.c.l.b16 %v3102
  %v4064 = vunpack.c.h.b16 %v3102
  %v4065 = vunpack.c.l.b16 %v3103
  %v4066 = vunpack.c.h.b16 %v3103
  %v4067 = vunpack.c.l.b16 %v3104
  %v4068 = vunpack.c.h.b16 %v3104
  %v4069 = vunpack.c.l.b16 %v3105
  %v4070 = vunpack.c.l.b16 %v3106
  %v4071 = vunpack.c.h.b16 %v3106
  %v4072 = vunpack.c.l.b16 %v3107
  %v4073 = vunpack.c.h.b16 %v3107
  %v4074 = vunpack.c.l.b16 %v3108
  %v4075 = vunpack.c.h.b16 %v3108
  %v4076 = vunpack.c.l.b16 %v3109
  %v4077 = vunpack.c.l.b16 %v3110
  %v4078 = vunpack.c.h.b16 %v3110
  %v4079 = vunpack.c.l.b16 %v3111
  %v4080 = vunpack.c.h.b16 %v3111
  %v4081 = vunpack.c.l.b16 %v3112
  %v4082 = vunpack.c.h.b16 %v3112
  %v4083 = vunpack.c.l.b16 %v3113
  %v4084 = vunpack.c.l.b16 %v3114
  %v4085 = vunpack.c.h.b16 %v3114
  %v4086 = vunpack.c.l.b16 %v3115
  %v4087 = vunpack.c.h.b16 %v3115
  %v4088 = vunpack.c.l.b16 %v3116
  %v4089 = vunpack.c.h.b16 %v3116
  %v4090 = vunpack.c.l.b16 %v3117
  %v4091 = vunpack.c.l.b16 %v3118
  %v4092 = vunpack.c.h.b16 %v3118
  %v4093 = vunpack.c.l.b16 %v3119
  %v4094 = vunpack.c.h.b16 %v3119
  %v4095 = vunpack.c.l.b16 %v3120
  %v4096 = vunpack.c.h.b16 %v3120
  %v4097 = vunpack.c.l.b16 %v3121
  %v4098 = vunpack.c.l.b16 %v3122
  %v4099 = vunpack.c.h.b16 %v3122
  %v4100 = vunpack.c.l.b16 %v3123
  %v4101 = vunpack.c.h.b16 %v3123
  %v4102 = vunpack.c.l.b16 %v3124
  %v4103 = vunpack.c.h.b16 %v3124
  %v4104 = vunpack.c.l.b16 %v3125
  %v4105 = vunpack.c.l.b16 %v3126
  %v4106 = vunpack.c.h.b16 %v3126
  %v4107 = vunpack.c.l.b16 %v3127
  %v4108 = vunpack.c.h.b16 %v3127
  %v4109 = vunpack.c.l.b16 %v3128
  %v4110 = vunpack.c.h.b16 %v3128
  %v4111 = vunpack.c.l.b16 %v3129
  %v4112 = vunpack.c.l.b16 %v3130
  %v4113 = vunpack.c.h.b16 %v3130
  %v4114 = vunpack.c.l.b16 %v3131
  %v4115 = vunpack.c.h.b16 %v3131
  %v4116 = vunpack.c.l.b16 %v3132
  %v4117 = vunpack.c.h.b16 %v3132
  %v4118 = vunpack.c.l.b16 %v3133
  %v4119 = vunpack.c.l.b16 %v3134
  %v4120 = vunpack.c.h.b16 %v3134
  %v4121 = vunpack.c.l.b16 %v3135
  %v4122 = vunpack.c.h.b16 %v3135
  %v4123 = vunpack.c.l.b16 %v3136
  %v4124 = vunpack.c.h.b16 %v3136
  %v4125 = vunpack.c.l.b16 %v3137
  %v4126 = vunpack.c.l.b16 %v3138
  %v4127 = vunpack.c.h.b16 %v3138
  %v4128 = vunpack.c.l.b16 %v3139
  %v4129 = vunpack.c.h.b16 %v3139
  %v4130 = vunpack.c.l.b16 %v3140
  %v4131 = vunpack.c.h.b16 %v3140
  %v4132 = vunpack.c.l.b16 %v3141
  %v4133 = vunpack.c.l.b16 %v3142
  %v4134 = vunpack.c.h.b16 %v3142
  %v4135 = vunpack.c.l.b16 %v3143
  %v4136 = vunpack.c.h.b16 %v3143
  %v4137 = vunpack.c.l.b16 %v3144
  %v4138 = vunpack.c.h.b16 %v3144
  %v4139 = vunpack.c.l.b16 %v3145
  %v4140 = vunpack.c.l.b16 %v3146
  %v4141 = vunpack.c.h.b16 %v3146
  %v4142 = vunpack.c.l.b16 %v3147
  %v4143 = vunpack.c.h.b16 %v3147
  %v4144 = vunpack.c.l.b16 %v3148
  %v4145 = vunpack.c.h.b16 %v3148
  %v4146 = vunpack.c.l.b16 %v3149
  %v4147 = vunpack.c.l.b16 %v3150
  %v4148 = vunpack.c.h.b16 %v3150
  %v4149 = vunpack.c.l.b16 %v3151
  %v4150 = vunpack.c.h.b16 %v3151
  %v4151 = vunpack.c.l.b16 %v3152
  %v4152 = vunpack.c.h.b16 %v3152
  %v4153 = vunpack.c.l.b16 %v3153
  %v4154 = vunpack.c.l.b16 %v3154
  %v4155 = vunpack.c.h.b16 %v3154
  %v4156 = vunpack.c.l.b16 %v3155
  %v4157 = vunpack.c.h.b16 %v3155
  %v4158 = vunpack.c.l.b16 %v3156
  %v4159 = vunpack.c.h.b16 %v3156
  %v4160 = vunpack.c.l.b16 %v3157
  %v4161 = vunpack.c.l.b16 %v3158
  %v4162 = vunpack.c.h.b16 %v3158
  %v4163 = vunpack.c.l.b16 %v3159
  %v4164 = vunpack.c.h.b16 %v3159
  %v4165 = vunpack.c.l.b16 %v3160
  %v4166 = vunpack.c.h.b16 %v3160
  %v4167 = vunpack.c.l.b16 %v3161
  %v4168 = vunpack.c.l.b16 %v3162
  %v4169 = vunpack.c.h.b16 %v3162
  %v4170 = vunpack.c.l.b16 %v3163
  %v4171 = vunpack.c.h.b16 %v3163
  %v4172 = vunpack.c.l.b16 %v3164
  %v4173 = vunpack.c.h.b16 %v3164
  %v4174 = vunpack.c.l.b16 %v3165
  %v4175 = vunpack.c.l.b16 %v3166
  %v4176 = vunpack.c.h.b16 %v3166
  %v4177 = vunpack.c.l.b16 %v3167
  %v4178 = vunpack.c.h.b16 %v3167
  %v4179 = vunpack.c.l.b16 %v3168
  %v4180 = vunpack.c.h.b16 %v3168
  %v4181 = vunpack.c.l.b16 %v3169
  %v4182 = vunpack.c.l.b16 %v3170
  %v4183 = vunpack.c.h.b16 %v3170
  %v4184 = vunpack.c.l.b16 %v3171
  %v4185 = vunpack.c.h.b16 %v3171
  %v4186 = vunpack.c.l.b16 %v3172
  %v4187 = vunpack.c.h.b16 %v3172
  %v4188 = vunpack.c.l.b16 %v3173
  %v4189 = vunpack.c.l.b16 %v3174
  %v4190 = vunpack.c.h.b16 %v3174
  %v4191 = vunpack.c.l.b16 %v3175
  %v4192 = vunpack.c.h.b16 %v3175
  %v4193 = vunpack.c.l.b16 %v3176
  %v4194 = vunpack.c.h.b16 %v3176
  %v4195 = vunpack.c.l.b16 %v3177
  %v4196 = vunpack.c.l.b16 %v3178
  %v4197 = vunpack.c.h.b16 %v3178
  %v4198 = vunpack.c.l.b16 %v3179
  %v4199 = vunpack.c.h.b16 %v3179
  %v4200 = vunpack.c.l.b16 %v3180
  %v4201 = vunpack.c.h.b16 %v3180
  %v4202 = vunpack.c.l.b16 %v3181
  %v4203 = vunpack.c.l.b16 %v3182
  %v4204 = vunpack.c.h.b16 %v3182
  %v4205 = vunpack.c.l.b16 %v3183
  %v4206 = vunpack.c.h.b16 %v3183
  %v4207 = vunpack.c.l.b16 %v3184
  %v4208 = vunpack.c.h.b16 %v3184
  %v4209 = vunpack.c.l.b16 %v3185
  %v4210 = vunpack.c.l.b16 %v3186
  %v4211 = vunpack.c.h.b16 %v3186
  %v4212 = vunpack.c.l.b16 %v3187
  %v4213 = vunpack.c.h.b16 %v3187
  %v4214 = vunpack.c.l.b16 %v3188
  %v4215 = vunpack.c.h.b16 %v3188
  %v4216 = vunpack.c.l.b16 %v3189
  %v4217 = vunpack.c.l.b16 %v3190
  %v4218 = vunpack.c.h.b16 %v3190
  %v4219 = vunpack.c.l.b16 %v3191
  %v4220 = vunpack.c.h.b16 %v3191
  %v4221 = vunpack.c.l.b16 %v3192
  %v4222 = vunpack.c.h.b16 %v3192
  %v4223 = vunpack.c.l.b16 %v3193
  %v4224 = vunpack.c.l.b16 %v3194
  %v4225 = vunpack.c.h.b16 %v3194
  %v4226 = vunpack.c.l.b16 %v3195
  %v4227 = vunpack.c.h.b16 %v3195
  %v4228 = vunpack.c.l.b16 %v3196
  %v4229 = vunpack.c.h.b16 %v3196
  %v4230 = vunpack.c.l.b16 %v3197
  %v4231 = vunpack.c.l.b16 %v3198
  %v4232 = vunpack.c.h.b16 %v3198
  %v4233 = vunpack.c.l.b16 %v3199
  %v4234 = vunpack.c.h.b16 %v3199
  %v4235 = vunpack.c.l.b16 %v3200
  %v4236 = vunpack.c.h.b16 %v3200
  %v4237 = vunpack.c.l.b16 %v3201
  %v4238 = vunpack.c.l.b16 %v3202
  %v4239 = vunpack.c.h.b16 %v3202
  %v4240 = vunpack.c.l.b16 %v3203
  %v4241 = vunpack.c.h.b16 %v3203
  %v4242 = vunpack.c.l.b16 %v3204
  %v4243 = vunpack.c.h.b16 %v3204
  %v4244 = vunpack.c.l.b16 %v3205
  %v4245 = vunpack.c.l.b16 %v3206
  %v4246 = vunpack.c.h.b16 %v3206
  %v4247 = vunpack.c.l.b16 %v3207
  %v4248 = vunpack.c.h.b16 %v3207
  %v4249 = vunpack.c.l.b16 %v3208
  %v4250 = vunpack.c.h.b16 %v3208
  %v4251 = vunpack.c.l.b16 %v3209
  %v4252 = vunpack.c.l.b16 %v3210
  %v4253 = vunpack.c.h.b16 %v3210
  %v4254 = vunpack.c.l.b16 %v3211
  %v4255 = vunpack.c.h.b16 %v3211
  %v4256 = vunpack.c.l.b16 %v3212
  %v4257 = vunpack.c.h.b16 %v3212
  %v4258 = vunpack.c.l.b16 %v3213
  %v4259 = vunpack.c.l.b16 %v3214
  %v4260 = vunpack.c.h.b16 %v3214
  %v4261 = vunpack.c.l.b16 %v3215
  %v4262 = vunpack.c.h.b16 %v3215
  %v4263 = vunpack.c.l.b16 %v3216
  %v4264 = vunpack.c.h.b16 %v3216
  %v4265 = vunpack.c.l.b16 %v3217
  %v4266 = vunpack.c.l.b16 %v3218
  %v4267 = vunpack.c.h.b16 %v3218
  %v4268 = vunpack.c.l.b16 %v3219
  %v4269 = vunpack.c.h.b16 %v3219
  %v4270 = vunpack.c.l.b16 %v3220
  %v4271 = vunpack.c.h.b16 %v3220
  %v4272 = vunpack.c.l.b16 %v3221
  %v4273 = vunpack.c.l.b16 %v3222
  %v4274 = vunpack.c.h.b16 %v3222
  %v4275 = vunpack.c.l.b16 %v3223
  %v4276 = vunpack.c.h.b16 %v3223
  %v4277 = vunpack.c.l.b16 %v3224
  %v4278 = vunpack.c.h.b16 %v3224
  %v4279 = vunpack.c.l.b16 %v3225
  %v4280 = vunpack.c.l.b16 %v3226
  %v4281 = vunpack.c.h.b16 %v3226
  %v4282 = vunpack.c.l.b16 %v3227
  %v4283 = vunpack.c.h.b16 %v3227
  %v4284 = vunpack.c.l.b16 %v3228
  %v4285 = vunpack.c.h.b16 %v3228
  %v4286 = vunpack.c.l.b16 %v3229
  %v4287 = vunpack.c.l.b16 %v3230
  %v4288 = vunpack.c.h.b16 %v3230
  %v4289 = vunpack.c.l.b16 %v3231
  %v4290 = vunpack.c.h.b16 %v3231
  %v4291 = vunpack.c.l.b16 %v3232
  %v4292 = vunpack.c.h.b16 %v3232
  %v4293 = vunpack.c.l.b16 %v3233
  %v4294 = vunpack.c.l.b16 %v3234
  %v4295 = vunpack.c.h.b16 %v3234
  %v4296 = vunpack.c.l.b16 %v3235
  %v4297 = vunpack.c.h.b16 %v3235
  %v4298 = vunpack.c.l.b16 %v3236
  %v4299 = vunpack.c.h.b16 %v3236
  %v4300 = vunpack.c.l.b16 %v3237
  %v4301 = vunpack.c.l.b16 %v3238
  %v4302 = vunpack.c.h.b16 %v3238
  %v4303 = vunpack.c.l.b16 %v3239
  %v4304 = vunpack.c.h.b16 %v3239
  %v4305 = vunpack.c.l.b16 %v3240
  %v4306 = vunpack.c.h.b16 %v3240
  %v4307 = vunpack.c.l.b16 %v3241
  %v4308 = vunpack.c.l.b16 %v3242
  %v4309 = vunpack.c.h.b16 %v3242
  %v4310 = vunpack.c.l.b16 %v3243
  %v4311 = vunpack.c.h.b16 %v3243
  %v4312 = vunpack.c.l.b16 %v3244
  %v4313 = vunpack.c.h.b16 %v3244
  %v4314 = vunpack.c.l.b16 %v3245
  %v4315 = vunpack.c.l.b16 %v3246
  %v4316 = vunpack.c.h.b16 %v3246
  %v4317 = vunpack.c.l.b16 %v3247
  %v4318 = vunpack.c.h.b16 %v3247
  %v4319 = vunpack.c.l.b16 %v3248
  %v4320 = vunpack.c.h.b16 %v3248
  %v4321 = vunpack.c.l.b16 %v3249
  %v4322 = vunpack.c.l.b16 %v3250
  %v4323 = vunpack.c.h.b16 %v3250
  %v4324 = vunpack.c.l.b16 %v3251
  %v4325 = vunpack.c.h.b16 %v3251
  %v4326 = vunpack.c.l.b16 %v3252
  %v4327 = vunpack.c.h.b16 %v3252
  %v4328 = vunpack.c.l.b16 %v3253
  %v4329 = vunpack.c.l.b16 %v3254
  %v4330 = vunpack.c.h.b16 %v3254
  %v4331 = vunpack.c.l.b16 %v3255
  %v4332 = vunpack.c.h.b16 %v3255
  %v4333 = vunpack.c.l.b16 %v3256
  %v4334 = vunpack.c.h.b16 %v3256
  %v4335 = vunpack.c.l.b16 %v3257
  %v4336 = vpack.c.b16 %v3657, %v3650
  %v4337 = vpack.c.b16 %v3658, %v3651
  %v4338 = vpack.c.b16 %v3659, %v3652
  %v4339 = vpack.c.b16 %v3660, %v3653
  %v4340 = vpack.c.b16 %v3661, %v3654
  %v4341 = vpack.c.b16 %v3662, %v3655
  %v4342 = vpack.c.b16 %v3663, %v3656
  %v4343 = vpack.c.b16 %v3671, %v3664
  %v4344 = vpack.c.b16 %v3672, %v3665
  %v4345 = vpack.c.b16 %v3673, %v3666
  %v4346 = vpack.c.b16 %v3674, %v3667
  %v4347 = vpack.c.b16 %v3675, %v3668
  %v4348 = vpack.c.b16 %v3676, %v3669
  %v4349 = vpack.c.b16 %v3677, %v3670
  %v4350 = vpack.c.b16 %v3685, %v3678
  %v4351 = vpack.c.b16 %v3686, %v3679
  %v4352 = vpack.c.b16 %v3687, %v3680
  %v4353 = vpack.c.b16 %v3688, %v3681
  %v4354 = vpack.c.b16 %v3689, %v3682
  %v4355 = vpack.c.b16 %v3690, %v3683
  %v4356 = vpack.c.b16 %v3691, %v3684
  %v4357 = vpack.c.b16 %v3699, %v3692
  %v4358 = vpack.c.b16 %v3700, %v3693
  %v4359 = vpack.c.b16 %v3701, %v3694
  %v4360 = vpack.c.b16 %v3702, %v3695
  %v4361 = vpack.c.b16 %v3703, %v3696
  %v4362 = vpack.c.b16 %v3704, %v3697
  %v4363 = vpack.c.b16 %v3705, %v3698
  %v4364 = vpack.c.b16 %v3713, %v3706
  %v4365 = vpack.c.b16 %v3714, %v3707
  %v4366 = vpack.c.b16 %v3715, %v3708
  %v4367 = vpack.c.b16 %v3716, %v3709
  %v4368 = vpack.c.b16 %v3717, %v3710
  %v4369 = vpack.c.b16 %v3718, %v3711
  %v4370 = vpack.c.b16 %v3719, %v3712
  %v4371 = vpack.c.b16 %v3727, %v3720
  %v4372 = vpack.c.b16 %v3728, %v3721
  %v4373 = vpack.c.b16 %v3729, %v3722
  %v4374 = vpack.c.b16 %v3730, %v3723
  %v4375 = vpack.c.b16 %v3731, %v3724
  %v4376 = vpack.c.b16 %v3732, %v3725
  %v4377 = vpack.c.b16 %v3733, %v3726
  %v4378 = vpack.c.b16 %v3741, %v3734
  %v4379 = vpack.c.b16 %v3742, %v3735
  %v4380 = vpack.c.b16 %v3743, %v3736
  %v4381 = vpack.c.b16 %v3744, %v3737
  %v4382 = vpack.c.b16 %v3745, %v3738
  %v4383 = vpack.c.b16 %v3746, %v3739
  %v4384 = vpack.c.b16 %v3747, %v3740
  %v4385 = vpack.c.b16 %v3755, %v3748
  %v4386 = vpack.c.b16 %v3756, %v3749
  %v4387 = vpack.c.b16 %v3757, %v3750
  %v4388 = vpack.c.b16 %v3758, %v3751
  %v4389 = vpack.c.b16 %v3759, %v3752
  %v4390 = vpack.c.b16 %v3760, %v3753
  %v4391 = vpack.c.b16 %v3761, %v3754
  %v4392 = vpack.c.b16 %v3769, %v3762
  %v4393 = vpack.c.b16 %v3770, %v3763
  %v4394 = vpack.c.b16 %v3771, %v3764
  %v4395 = vpack.c.b16 %v3772, %v3765
  %v4396 = vpack.c.b16 %v3773, %v3766
  %v4397 = vpack.c.b16 %v3774, %v3767
  %v4398 = vpack.c.b16 %v3775, %v3768
  %v4399 = vpack.c.b16 %v3783, %v3776
  %v4400 = vpack.c.b16 %v3784, %v3777
  %v4401 = vpack.c.b16 %v3785, %v3778
  %v4402 = vpack.c.b16 %v3786, %v3779
  %v4403 = vpack.c.b16 %v3787, %v3780
  %v4404 = vpack.c.b16 %v3788, %v3781
  %v4405 = vpack.c.b16 %v3789, %v3782
  %v4406 = vpack.c.b16 %v3797, %v3790
  %v4407 = vpack.c.b16 %v3798, %v3791
  %v4408 = vpack.c.b16 %v3799, %v3792
  %v4409 = vpack.c.b16 %v3800, %v3793
  %v4410 = vpack.c.b16 %v3801, %v3794
  %v4411 = vpack.c.b16 %v3802, %v3795
  %v4412 = vpack.c.b16 %v3803, %v3796
  %v4413 = vpack.c.b16 %v3811, %v3804
  %v4414 = vpack.c.b16 %v3812, %v3805
  %v4415 = vpack.c.b16 %v3813, %v3806
  %v4416 = vpack.c.b16 %v3814, %v3807
  %v4417 = vpack.c.b16 %v3815, %v3808
  %v4418 = vpack.c.b16 %v3816, %v3809
  %v4419 = vpack.c.b16 %v3817, %v3810
  %v4420 = vpack.c.b16 %v3825, %v3818
  %v4421 = vpack.c.b16 %v3826, %v3819
  %v4422 = vpack.c.b16 %v3827, %v3820
  %v4423 = vpack.c.b16 %v3828, %v3821
  %v4424 = vpack.c.b16 %v3829, %v3822
  %v4425 = vpack.c.b16 %v3830, %v3823
  %v4426 = vpack.c.b16 %v3831, %v3824
  %v4427 = vpack.c.b16 %v3839, %v3832
  %v4428 = vpack.c.b16 %v3840, %v3833
  %v4429 = vpack.c.b16 %v3841, %v3834
  %v4430 = vpack.c.b16 %v3842, %v3835
  %v4431 = vpack.c.b16 %v3843, %v3836
  %v4432 = vpack.c.b16 %v3844, %v3837
  %v4433 = vpack.c.b16 %v3845, %v3838
  %v4434 = vpack.c.b16 %v3853, %v3846
  %v4435 = vpack.c.b16 %v3854, %v3847
  %v4436 = vpack.c.b16 %v3855, %v3848
  %v4437 = vpack.c.b16 %v3856, %v3849
  %v4438 = vpack.c.b16 %v3857, %v3850
  %v4439 = vpack.c.b16 %v3858, %v3851
  %v4440 = vpack.c.b16 %v3859, %v3852
  %v4441 = vpack.c.b16 %v3867, %v3860
  %v4442 = vpack.c.b16 %v3868, %v3861
  %v4443 = vpack.c.b16 %v3869, %v3862
  %v4444 = vpack.c.b16 %v3870, %v3863
  %v4445 = vpack.c.b16 %v3871, %v3864
  %v4446 = vpack.c.b16 %v3872, %v3865
  %v4447 = vpack.c.b16 %v3873, %v3866
  %v4448 = vpack.c.b16 %v3881, %v3874
  %v4449 = vpack.c.b16 %v3882, %v3875
  %v4450 = vpack.c.b16 %v3883, %v3876
  %v4451 = vpack.c.b16 %v3884, %v3877
  %v4452 = vpack.c.b16 %v3885, %v3878
  %v4453 = vpack.c.b16 %v3886, %v3879
  %v4454 = vpack.c.b16 %v3887, %v3880
  %v4455 = vpack.c.b16 %v3895, %v3888
  %v4456 = vpack.c.b16 %v3896, %v3889
  %v4457 = vpack.c.b16 %v3897, %v3890
  %v4458 = vpack.c.b16 %v3898, %v3891
  %v4459 = vpack.c.b16 %v3899, %v3892
  %v4460 = vpack.c.b16 %v3900, %v3893
  %v4461 = vpack.c.b16 %v3901, %v3894
  %v4462 = vpack.c.b16 %v3909, %v3902
  %v4463 = vpack.c.b16 %v3910, %v3903
  %v4464 = vpack.c.b16 %v3911, %v3904
  %v4465 = vpack.c.b16 %v3912, %v3905
  %v4466 = vpack.c.b16 %v3913, %v3906
  %v4467 = vpack.c.b16 %v3914, %v3907
  %v4468 = vpack.c.b16 %v3915, %v3908
  %v4469 = vpack.c.b16 %v3923, %v3916
  %v4470 = vpack.c.b16 %v3924, %v3917
  %v4471 = vpack.c.b16 %v3925, %v3918
  %v4472 = vpack.c.b16 %v3926, %v3919
  %v4473 = vpack.c.b16 %v3927, %v3920
  %v4474 = vpack.c.b16 %v3928, %v3921
  %v4475 = vpack.c.b16 %v3929, %v3922
  %v4476 = vpack.c.b16 %v3937, %v3930
  %v4477 = vpack.c.b16 %v3938, %v3931
  %v4478 = vpack.c.b16 %v3939, %v3932
  %v4479 = vpack.c.b16 %v3940, %v3933
  %v4480 = vpack.c.b16 %v3941, %v3934
  %v4481 = vpack.c.b16 %v3942, %v3935
  %v4482 = vpack.c.b16 %v3943, %v3936
  %v4483 = vpack.c.b16 %v3951, %v3944
  %v4484 = vpack.c.b16 %v3952, %v3945
  %v4485 = vpack.c.b16 %v3953, %v3946
  %v4486 = vpack.c.b16 %v3954, %v3947
  %v4487 = vpack.c.b16 %v3955, %v3948
  %v4488 = vpack.c.b16 %v3956, %v3949
  %v4489 = vpack.c.b16 %v3957, %v3950
  %v4490 = vpack.c.b16 %v3965, %v3958
  %v4491 = vpack.c.b16 %v3966, %v3959
  %v4492 = vpack.c.b16 %v3967, %v3960
  %v4493 = vpack.c.b16 %v3968, %v3961
  %v4494 = vpack.c.b16 %v3969, %v3962
  %v4495 = vpack.c.b16 %v3970, %v3963
  %v4496 = vpack.c.b16 %v3971, %v3964
  %v4497 = vpack.c.b16 %v3979, %v3972
  %v4498 = vpack.c.b16 %v3980, %v3973
  %v4499 = vpack.c.b16 %v3981, %v3974
  %v4500 = vpack.c.b16 %v3982, %v3975
  %v4501 = vpack.c.b16 %v3983, %v3976
  %v4502 = vpack.c.b16 %v3984, %v3977
  %v4503 = vpack.c.b16 %v3985, %v3978
  %v4504 = vpack.c.b16 %v3993, %v3986
  %v4505 = vpack.c.b16 %v3994, %v3987
  %v4506 = vpack.c.b16 %v3995, %v3988
  %v4507 = vpack.c.b16 %v3996, %v3989
  %v4508 = vpack.c.b16 %v3997, %v3990
  %v4509 = vpack.c.b16 %v3998, %v3991
  %v4510 = vpack.c.b16 %v3999, %v3992
  %v4511 = vpack.c.b16 %v4007, %v4000
  %v4512 = vpack.c.b16 %v4008, %v4001
  %v4513 = vpack.c.b16 %v4009, %v4002
  %v4514 = vpack.c.b16 %v4010, %v4003
  %v4515 = vpack.c.b16 %v4011, %v4004
  %v4516 = vpack.c.b16 %v4012, %v4005
  %v4517 = vpack.c.b16 %v4013, %v4006
  %v4518 = vpack.c.b16 %v4021, %v4014
  %v4519 = vpack.c.b16 %v4022, %v4015
  %v4520 = vpack.c.b16 %v4023, %v4016
  %v4521 = vpack.c.b16 %v4024, %v4017
  %v4522 = vpack.c.b16 %v4025, %v4018
  %v4523 = vpack.c.b16 %v4026, %v4019
  %v4524 = vpack.c.b16 %v4027, %v4020
  %v4525 = vpack.c.b16 %v4035, %v4028
  %v4526 = vpack.c.b16 %v4036, %v4029
  %v4527 = vpack.c.b16 %v4037, %v4030
  %v4528 = vpack.c.b16 %v4038, %v4031
  %v4529 = vpack.c.b16 %v4039, %v4032
  %v4530 = vpack.c.b16 %v4040, %v4033
  %v4531 = vpack.c.b16 %v4041, %v4034
  %v4532 = vpack.c.b16 %v4049, %v4042
  %v4533 = vpack.c.b16 %v4050, %v4043
  %v4534 = vpack.c.b16 %v4051, %v4044
  %v4535 = vpack.c.b16 %v4052, %v4045
  %v4536 = vpack.c.b16 %v4053, %v4046
  %v4537 = vpack.c.b16 %v4054, %v4047
  %v4538 = vpack.c.b16 %v4055, %v4048
  %v4539 = vpack.c.b16 %v4063, %v4056
  %v4540 = vpack.c.b16 %v4064, %v4057
  %v4541 = vpack.c.b16 %v4065, %v4058
  %v4542 = vpack.c.b16 %v4066, %v4059
  %v4543 = vpack.c.b16 %v4067, %v4060
  %v4544 = vpack.c.b16 %v4068, %v4061
  %v4545 = vpack.c.b16 %v4069, %v4062
  %v4546 = vpack.c.b16 %v4077, %v4070
  %v4547 = vpack.c.b16 %v4078, %v4071
  %v4548 = vpack.c.b16 %v4079, %v4072
  %v4549 = vpack.c.b16 %v4080, %v4073
  %v4550 = vpack.c.b16 %v4081, %v4074
  %v4551 = vpack.c.b16 %v4082, %v4075
  %v4552 = vpack.c.b16 %v4083, %v4076
  %v4553 = vpack.c.b16 %v4091, %v4084
  %v4554 = vpack.c.b16 %v4092, %v4085
  %v4555 = vpack.c.b16 %v4093, %v4086
  %v4556 = vpack.c.b16 %v4094, %v4087
  %v4557 = vpack.c.b16 %v4095, %v4088
  %v4558 = vpack.c.b16 %v4096, %v4089
  %v4559 = vpack.c.b16 %v4097, %v4090
  %v4560 = vpack.c.b16 %v4105, %v4098
  %v4561 = vpack.c.b16 %v4106, %v4099
  %v4562 = vpack.c.b16 %v4107, %v4100
  %v4563 = vpack.c.b16 %v4108, %v4101
  %v4564 = vpack.c.b16 %v4109, %v4102
  %v4565 = vpack.c.b16 %v4110, %v4103
  %v4566 = vpack.c.b16 %v4111, %v4104
  %v4567 = vpack.c.b16 %v4119, %v4112
  %v4568 = vpack.c.b16 %v4120, %v4113
  %v4569 = vpack.c.b16 %v4121, %v4114
  %v4570 = vpack.c.b16 %v4122, %v4115
  %v4571 = vpack.c.b16 %v4123, %v4116
  %v4572 = vpack.c.b16 %v4124, %v4117
  %v4573 = vpack.c.b16 %v4125, %v4118
  %v4574 = vpack.c.b16 %v4133, %v4126
  %v4575 = vpack.c.b16 %v4134, %v4127
  %v4576 = vpack.c.b16 %v4135, %v4128
  %v4577 = vpack.c.b16 %v4136, %v4129
  %v4578 = vpack.c.b16 %v4137, %v4130
  %v4579 = vpack.c.b16 %v4138, %v4131
  %v4580 = vpack.c.b16 %v4139, %v4132
  %v4581 = vpack.c.b16 %v4147, %v4140
  %v4582 = vpack.c.b16 %v4148, %v4141
  %v4583 = vpack.c.b16 %v4149, %v4142
  %v4584 = vpack.c.b16 %v4150, %v4143
  %v4585 = vpack.c.b16 %v4151, %v4144
  %v4586 = vpack.c.b16 %v4152, %v4145
  %v4587 = vpack.c.b16 %v4153, %v4146
  %v4588 = vpack.c.b16 %v4161, %v4154
  %v4589 = vpack.c.b16 %v4162, %v4155
  %v4590 = vpack.c.b16 %v4163, %v4156
  %v4591 = vpack.c.b16 %v4164, %v4157
  %v4592 = vpack.c.b16 %v4165, %v4158
  %v4593 = vpack.c.b16 %v4166, %v4159
  %v4594 = vpack.c.b16 %v4167, %v4160
  %v4595 = vpack.c.b16 %v4175, %v4168
  %v4596 = vpack.c.b16 %v4176, %v4169
  %v4597 = vpack.c.b16 %v4177, %v4170
  %v4598 = vpack.c.b16 %v4178, %v4171
  %v4599 = vpack.c.b16 %v4179, %v4172
  %v4600 = vpack.c.b16 %v4180, %v4173
  %v4601 = vpack.c.b16 %v4181, %v4174
  %v4602 = vpack.c.b16 %v4189, %v4182
  %v4603 = vpack.c.b16 %v4190, %v4183
  %v4604 = vpack.c.b16 %v4191, %v4184
  %v4605 = vpack.c.b16 %v4192, %v4185
  %v4606 = vpack.c.b16 %v4193, %v4186
  %v4607 = vpack.c.b16 %v4194, %v4187
  %v4608 = vpack.c.b16 %v4195, %v4188
  %v4609 = vpack.c.b16 %v4203, %v4196
  %v4610 = vpack.c.b16 %v4204, %v4197
  %v4611 = vpack.c.b16 %v4205, %v4198
  %v4612 = vpack.c.b16 %v4206, %v4199
  %v4613 = vpack.c.b16 %v4207, %v4200
  %v4614 = vpack.c.b16 %v4208, %v4201
  %v4615 = vpack.c.b16 %v4209, %v4202
  %v4616 = vpack.c.b16 %v4217, %v4210
  %v4617 = vpack.c.b16 %v4218, %v4211
  %v4618 = vpack.c.b16 %v4219, %v4212
  %v4619 = vpack.c.b16 %v4220, %v4213
  %v4620 = vpack.c.b16 %v4221, %v4214
  %v4621 = vpack.c.b16 %v4222, %v4215
  %v4622 = vpack.c.b16 %v4223, %v4216
  %v4623 = vpack.c.b16 %v4231, %v4224
  %v4624 = vpack.c.b16 %v4232, %v4225
  %v4625 = vpack.c.b16 %v4233, %v4226
  %v4626 = vpack.c.b16 %v4234, %v4227
  %v4627 = vpack.c.b16 %v4235, %v4228
  %v4628 = vpack.c.b16 %v4236, %v4229
  %v4629 = vpack.c.b16 %v4237, %v4230
  %v4630 = vpack.c.b16 %v4245, %v4238
  %v4631 = vpack.c.b16 %v4246, %v4239
  %v4632 = vpack.c.b16 %v4247, %v4240
  %v4633 = vpack.c.b16 %v4248, %v4241
  %v4634 = vpack.c.b16 %v4249, %v4242
  %v4635 = vpack.c.b16 %v4250, %v4243
  %v4636 = vpack.c.b16 %v4251, %v4244
  %v4637 = vpack.c.b16 %v4259, %v4252
  %v4638 = vpack.c.b16 %v4260, %v4253
  %v4639 = vpack.c.b16 %v4261, %v4254
  %v4640 = vpack.c.b16 %v4262, %v4255
  %v4641 = vpack.c.b16 %v4263, %v4256
  %v4642 = vpack.c.b16 %v4264, %v4257
  %v4643 = vpack.c.b16 %v4265, %v4258
  %v4644 = vpack.c.b16 %v4273, %v4266
  %v4645 = vpack.c.b16 %v4274, %v4267
  %v4646 = vpack.c.b16 %v4275, %v4268
  %v4647 = vpack.c.b16 %v4276, %v4269
  %v4648 = vpack.c.b16 %v4277, %v4270
  %v4649 = vpack.c.b16 %v4278, %v4271
  %v4650 = vpack.c.b16 %v4279, %v4272
  %v4651 = vpack.c.b16 %v4287, %v4280
  %v4652 = vpack.c.b16 %v4288, %v4281
  %v4653 = vpack.c.b16 %v4289, %v4282
  %v4654 = vpack.c.b16 %v4290, %v4283
  %v4655 = vpack.c.b16 %v4291, %v4284
  %v4656 = vpack.c.b16 %v4292, %v4285
  %v4657 = vpack.c.b16 %v4293, %v4286
  %v4658 = vpack.c.b16 %v4301, %v4294
  %v4659 = vpack.c.b16 %v4302, %v4295
  %v4660 = vpack.c.b16 %v4303, %v4296
  %v4661 = vpack.c.b16 %v4304, %v4297
  %v4662 = vpack.c.b16 %v4305, %v4298
  %v4663 = vpack.c.b16 %v4306, %v4299
  %v4664 = vpack.c.b16 %v4307, %v4300
  %v4665 = vpack.c.b16 %v4315, %v4308
  %v4666 = vpack.c.b16 %v4316, %v4309
  %v4667 = vpack.c.b16 %v4317, %v4310
  %v4668 = vpack.c.b16 %v4318, %v4311
  %v4669 = vpack.c.b16 %v4319, %v4312
  %v4670 = vpack.c.b16 %v4320, %v4313
  %v4671 = vpack.c.b16 %v4321, %v4314
  %v4672 = vpack.c.b16 %v4329, %v4322
  %v4673 = vpack.c.b16 %v4330, %v4323
  %v4674 = vpack.c.b16 %v4331, %v4324
  %v4675 = vpack.c.b16 %v4332, %v4325
  %v4676 = vpack.c.b16 %v4333, %v4326
  %v4677 = vpack.c.b16 %v4334, %v4327
  %v4678 = vpack.c.b16 %v4335, %v4328
  %5022 = vmatprep.subr.bf16.mxu0 %v4337
  %5023 = vmatpush1.bf16.msra.mxu0 %v4336
  %5024 = vmatprep.subr.bf16.mxu0 %v4344
  %5025 = vmatpush1.bf16.msra.mxu0 %v4343
  %5026 = vmatprep.subr.bf16.mxu0 %v4351
  %5027 = vmatpush1.bf16.msra.mxu0 %v4350
  %5028 = vmatprep.subr.bf16.mxu0 %v4358
  %5029 = vmatpush1.bf16.msra.mxu0 %v4357
  %5030 = vmatprep.subr.bf16.mxu0 %v4365
  %5031 = vmatpush1.bf16.msra.mxu0 %v4364
  %5032 = vmatprep.subr.bf16.mxu0 %v4372
  %5033 = vmatpush1.bf16.msra.mxu0 %v4371
  %5034 = vmatprep.subr.bf16.mxu0 %v4379
  %5035 = vmatpush1.bf16.msra.mxu0 %v4378
  %5036 = vmatprep.subr.bf16.mxu0 %v4386
  %5037 = vmatpush1.bf16.msra.mxu0 %v4385
  %5038 = vmatprep.subr.bf16.mxu0 %v4393
  %5039 = vmatpush1.bf16.msra.mxu0 %v4392
  %5040 = vmatprep.subr.bf16.mxu0 %v4400
  %5041 = vmatpush1.bf16.msra.mxu0 %v4399
  %5042 = vmatprep.subr.bf16.mxu0 %v4407
  %5043 = vmatpush1.bf16.msra.mxu0 %v4406
  %5044 = vmatprep.subr.bf16.mxu0 %v4414
  %5045 = vmatpush1.bf16.msra.mxu0 %v4413
  %5046 = vmatprep.subr.bf16.mxu0 %v4421
  %5047 = vmatpush1.bf16.msra.mxu0 %v4420
  %5048 = vmatprep.subr.bf16.mxu0 %v4428
  %5049 = vmatpush1.bf16.msra.mxu0 %v4427
  %5050 = vmatprep.subr.bf16.mxu0 %v4435
  %5051 = vmatpush1.bf16.msra.mxu0 %v4434
  %5052 = vmatprep.subr.bf16.mxu0 %v4442
  %5053 = vmatpush1.bf16.msra.mxu0 %v4441
  %5054 = vmatprep.mubr.bf16.mxu0 %v47
  %5055 = vmatmul.mubr.bf16.gmra.mrb[0].mxu0 %v46
  %v5056 = vpop.f32.mrb[0].mxu0
  %v5057 = vadd.f32 0.0, %v5056
  %v5058 = vpop.f32.mrb[0].mxu0
  %v5059 = vadd.f32 0.0, %v5058
  %v5060 = vpop.f32.mrb[0].mxu0
  %v5061 = vpop.f32.mrb[0].mxu0
  %5062 = vdwg.mxu0
  %5063 = vmatprep.subr.bf16.mxu0 %v4449
  %5064 = vmatpush1.bf16.msra.mxu0 %v4448
  %5065 = vmatprep.subr.bf16.mxu0 %v4456
  %5066 = vmatpush1.bf16.msra.mxu0 %v4455
  %5067 = vmatprep.subr.bf16.mxu0 %v4463
  %5068 = vmatpush1.bf16.msra.mxu0 %v4462
  %5069 = vmatprep.subr.bf16.mxu0 %v4470
  %5070 = vmatpush1.bf16.msra.mxu0 %v4469
  %5071 = vmatprep.subr.bf16.mxu0 %v4477
  %5072 = vmatpush1.bf16.msra.mxu0 %v4476
  %5073 = vmatprep.subr.bf16.mxu0 %v4484
  %5074 = vmatpush1.bf16.msra.mxu0 %v4483
  %5075 = vmatprep.subr.bf16.mxu0 %v4491
  %5076 = vmatpush1.bf16.msra.mxu0 %v4490
  %5077 = vmatprep.subr.bf16.mxu0 %v4498
  %5078 = vmatpush1.bf16.msra.mxu0 %v4497
  %5079 = vmatprep.subr.bf16.mxu0 %v4505
  %5080 = vmatpush1.bf16.msra.mxu0 %v4504
  %5081 = vmatprep.subr.bf16.mxu0 %v4512
  %5082 = vmatpush1.bf16.msra.mxu0 %v4511
  %5083 = vmatprep.subr.bf16.mxu0 %v4519
  %5084 = vmatpush1.bf16.msra.mxu0 %v4518
  %5085 = vmatprep.subr.bf16.mxu0 %v4526
  %5086 = vmatpush1.bf16.msra.mxu0 %v4525
  %5087 = vmatprep.subr.bf16.mxu0 %v4533
  %5088 = vmatpush1.bf16.msra.mxu0 %v4532
  %5089 = vmatprep.subr.bf16.mxu0 %v4540
  %5090 = vmatpush1.bf16.msra.mxu0 %v4539
  %5091 = vmatprep.subr.bf16.mxu0 %v4547
  %5092 = vmatpush1.bf16.msra.mxu0 %v4546
  %5093 = vmatprep.subr.bf16.mxu0 %v4554
  %5094 = vmatpush1.bf16.msra.mxu0 %v4553
  %5095 = vmatprep.mubr.bf16.mxu0 %v49
  %5096 = vmatmul.mubr.bf16.gmra.mrb[0].mxu0 %v48
  %v5097 = vpop.f32.mrb[0].mxu0
  %v5098 = vadd.f32 %v5057, %v5097
  %v5099 = vpop.f32.mrb[0].mxu0
  %v5100 = vadd.f32 %v5059, %v5099
  %v5101 = vpop.f32.mrb[0].mxu0
  %v5102 = vpop.f32.mrb[0].mxu0
  %5103 = vdwg.mxu0
  %5104 = vmatprep.subr.bf16.mxu0 %v4561
  %5105 = vmatpush1.bf16.msra.mxu0 %v4560
  %5106 = vmatprep.subr.bf16.mxu0 %v4568
  %5107 = vmatpush1.bf16.msra.mxu0 %v4567
  %5108 = vmatprep.subr.bf16.mxu0 %v4575
  %5109 = vmatpush1.bf16.msra.mxu0 %v4574
  %5110 = vmatprep.subr.bf16.mxu0 %v4582
  %5111 = vmatpush1.bf16.msra.mxu0 %v4581
  %5112 = vmatprep.subr.bf16.mxu0 %v4589
  %5113 = vmatpush1.bf16.msra.mxu0 %v4588
  %5114 = vmatprep.subr.bf16.mxu0 %v4596
  %5115 = vmatpush1.bf16.msra.mxu0 %v4595
  %5116 = vmatprep.subr.bf16.mxu0 %v4603
  %5117 = vmatpush1.bf16.msra.mxu0 %v4602
  %5118 = vmatprep.subr.bf16.mxu0 %v4610
  %5119 = vmatpush1.bf16.msra.mxu0 %v4609
  %5120 = vmatprep.subr.bf16.mxu0 %v4617
  %5121 = vmatpush1.bf16.msra.mxu0 %v4616
  %5122 = vmatprep.subr.bf16.mxu0 %v4624
  %5123 = vmatpush1.bf16.msra.mxu0 %v4623
  %5124 = vmatprep.subr.bf16.mxu0 %v4631
  %5125 = vmatpush1.bf16.msra.mxu0 %v4630
  %5126 = vmatprep.subr.bf16.mxu0 %v4638
  %5127 = vmatpush1.bf16.msra.mxu0 %v4637
  %5128 = vmatprep.subr.bf16.mxu0 %v4645
  %5129 = vmatpush1.bf16.msra.mxu0 %v4644
  %5130 = vmatprep.subr.bf16.mxu0 %v4652
  %5131 = vmatpush1.bf16.msra.mxu0 %v4651
  %5132 = vmatprep.subr.bf16.mxu0 %v4659
  %5133 = vmatpush1.bf16.msra.mxu0 %v4658
  %5134 = vmatprep.subr.bf16.mxu0 %v4666
  %5135 = vmatpush1.bf16.msra.mxu0 %v4665
  %5136 = vmatprep.mubr.bf16.mxu0 %v51
  %5137 = vmatmul.mubr.bf16.gmra.mrb[0].mxu0 %v50
  %v5138 = vpop.f32.mrb[0].mxu0
  %v5139 = vadd.f32 %v5098, %v5138
  %v5140 = vpop.f32.mrb[0].mxu0
  %v5141 = vadd.f32 %v5100, %v5140
  %v5142 = vpop.f32.mrb[0].mxu0
  %v5143 = vpop.f32.mrb[0].mxu0
  %5144 = vdwg.mxu0
  %5145 = vmatprep.subr.bf16.mxu0 %v4673
  %5146 = vmatpush1.bf16.msra.mxu0 %v4672
  %5147 = vmatprep.subr.bf16.mxu0 0
  %5148 = vmatpush1.bf16.msra.mxu0 0
  %5149 = vmatprep.subr.bf16.mxu0 0
  %5150 = vmatpush1.bf16.msra.mxu0 0
  %5151 = vmatprep.subr.bf16.mxu0 0
  %5152 = vmatpush1.bf16.msra.mxu0 0
  %5153 = vmatprep.subr.bf16.mxu0 0
  %5154 = vmatpush1.bf16.msra.mxu0 0
  %5155 = vmatprep.subr.bf16.mxu0 0
  %5156 = vmatpush1.bf16.msra.mxu0 0
  %5157 = vmatprep.subr.bf16.mxu0 0
  %5158 = vmatpush1.bf16.msra.mxu0 0
  %5159 = vmatprep.subr.bf16.mxu0 0
  %5160 = vmatpush1.bf16.msra.mxu0 0
  %5161 = vmatprep.subr.bf16.mxu0 0
  %5162 = vmatpush1.bf16.msra.mxu0 0
  %5163 = vmatprep.subr.bf16.mxu0 0
  %5164 = vmatpush1.bf16.msra.mxu0 0
  %5165 = vmatprep.subr.bf16.mxu0 0
  %5166 = vmatpush1.bf16.msra.mxu0 0
  %5167 = vmatprep.subr.bf16.mxu0 0
  %5168 = vmatpush1.bf16.msra.mxu0 0
  %5169 = vmatprep.subr.bf16.mxu0 0
  %5170 = vmatpush1.bf16.msra.mxu0 0
  %5171 = vmatprep.subr.bf16.mxu0 0
  %5172 = vmatpush1.bf16.msra.mxu0 0
  %5173 = vmatprep.subr.bf16.mxu0 0
  %5174 = vmatpush1.bf16.msra.mxu0 0
  %5175 = vmatprep.subr.bf16.mxu0 0
  %5176 = vmatpush1.bf16.msra.mxu0 0
  %5177 = vmatprep.mubr.bf16.mxu0 0
  %5178 = vmatmul.mubr.bf16.gmra.mrb[0].mxu0 %v2211
  %v5179 = vpop.f32.mrb[0].mxu0
  %v5180 = vadd.f32 %v5139, %v5179
  %v5181 = vpop.f32.mrb[0].mxu0
  %v5182 = vadd.f32 %v5141, %v5181
  %v5183 = vpop.f32.mrb[0].mxu0
  %v5184 = vpop.f32.mrb[0].mxu0
  %5185 = vdwg.mxu0
  %5186 = vmatprep.subr.bf16.mxu0 %v4339
  %5187 = vmatpush1.bf16.msra.mxu0 %v4338
  %5188 = vmatprep.subr.bf16.mxu0 %v4346
  %5189 = vmatpush1.bf16.msra.mxu0 %v4345
  %5190 = vmatprep.subr.bf16.mxu0 %v4353
  %5191 = vmatpush1.bf16.msra.mxu0 %v4352
  %5192 = vmatprep.subr.bf16.mxu0 %v4360
  %5193 = vmatpush1.bf16.msra.mxu0 %v4359
  %5194 = vmatprep.subr.bf16.mxu0 %v4367
  %5195 = vmatpush1.bf16.msra.mxu0 %v4366
  %5196 = vmatprep.subr.bf16.mxu0 %v4374
  %5197 = vmatpush1.bf16.msra.mxu0 %v4373
  %5198 = vmatprep.subr.bf16.mxu0 %v4381
  %5199 = vmatpush1.bf16.msra.mxu0 %v4380
  %5200 = vmatprep.subr.bf16.mxu0 %v4388
  %5201 = vmatpush1.bf16.msra.mxu0 %v4387
  %5202 = vmatprep.subr.bf16.mxu0 %v4395
  %5203 = vmatpush1.bf16.msra.mxu0 %v4394
  %5204 = vmatprep.subr.bf16.mxu0 %v4402
  %5205 = vmatpush1.bf16.msra.mxu0 %v4401
  %5206 = vmatprep.subr.bf16.mxu0 %v4409
  %5207 = vmatpush1.bf16.msra.mxu0 %v4408
  %5208 = vmatprep.subr.bf16.mxu0 %v4416
  %5209 = vmatpush1.bf16.msra.mxu0 %v4415
  %5210 = vmatprep.subr.bf16.mxu0 %v4423
  %5211 = vmatpush1.bf16.msra.mxu0 %v4422
  %5212 = vmatprep.subr.bf16.mxu0 %v4430
  %5213 = vmatpush1.bf16.msra.mxu0 %v4429
  %5214 = vmatprep.subr.bf16.mxu0 %v4437
  %5215 = vmatpush1.bf16.msra.mxu0 %v4436
  %5216 = vmatprep.subr.bf16.mxu0 %v4444
  %5217 = vmatpush1.bf16.msra.mxu0 %v4443
  %5218 = vmatprep.mubr.bf16.mxu0 %v47
  %5219 = vmatmul.mubr.bf16.gmra.mrb[0].mxu0 %v46
  %v5220 = vpop.f32.mrb[0].mxu0
  %v5221 = vadd.f32 0.0, %v5220
  %v5222 = vpop.f32.mrb[0].mxu0
  %v5223 = vadd.f32 0.0, %v5222
  %v5224 = vpop.f32.mrb[0].mxu0
  %v5225 = vpop.f32.mrb[0].mxu0
  %5226 = vdwg.mxu0
  %5227 = vmatprep.subr.bf16.mxu0 %v4451
  %5228 = vmatpush1.bf16.msra.mxu0 %v4450
  %5229 = vmatprep.subr.bf16.mxu0 %v4458
  %5230 = vmatpush1.bf16.msra.mxu0 %v4457
  %5231 = vmatprep.subr.bf16.mxu0 %v4465
  %5232 = vmatpush1.bf16.msra.mxu0 %v4464
  %5233 = vmatprep.subr.bf16.mxu0 %v4472
  %5234 = vmatpush1.bf16.msra.mxu0 %v4471
  %5235 = vmatprep.subr.bf16.mxu0 %v4479
  %5236 = vmatpush1.bf16.msra.mxu0 %v4478
  %5237 = vmatprep.subr.bf16.mxu0 %v4486
  %5238 = vmatpush1.bf16.msra.mxu0 %v4485
  %5239 = vmatprep.subr.bf16.mxu0 %v4493
  %5240 = vmatpush1.bf16.msra.mxu0 %v4492
  %5241 = vmatprep.subr.bf16.mxu0 %v4500
  %5242 = vmatpush1.bf16.msra.mxu0 %v4499
  %5243 = vmatprep.subr.bf16.mxu0 %v4507
  %5244 = vmatpush1.bf16.msra.mxu0 %v4506
  %5245 = vmatprep.subr.bf16.mxu0 %v4514
  %5246 = vmatpush1.bf16.msra.mxu0 %v4513
  %5247 = vmatprep.subr.bf16.mxu0 %v4521
  %5248 = vmatpush1.bf16.msra.mxu0 %v4520
  %5249 = vmatprep.subr.bf16.mxu0 %v4528
  %5250 = vmatpush1.bf16.msra.mxu0 %v4527
  %5251 = vmatprep.subr.bf16.mxu0 %v4535
  %5252 = vmatpush1.bf16.msra.mxu0 %v4534
  %5253 = vmatprep.subr.bf16.mxu0 %v4542
  %5254 = vmatpush1.bf16.msra.mxu0 %v4541
  %5255 = vmatprep.subr.bf16.mxu0 %v4549
  %5256 = vmatpush1.bf16.msra.mxu0 %v4548
  %5257 = vmatprep.subr.bf16.mxu0 %v4556
  %5258 = vmatpush1.bf16.msra.mxu0 %v4555
  %5259 = vmatprep.mubr.bf16.mxu0 %v49
  %5260 = vmatmul.mubr.bf16.gmra.mrb[0].mxu0 %v48
  %v5261 = vpop.f32.mrb[0].mxu0
  %v5262 = vadd.f32 %v5221, %v5261
  %v5263 = vpop.f32.mrb[0].mxu0
  %v5264 = vadd.f32 %v5223, %v5263
  %v5265 = vpop.f32.mrb[0].mxu0
  %v5266 = vpop.f32.mrb[0].mxu0
  %5267 = vdwg.mxu0
  %5268 = vmatprep.subr.bf16.mxu0 %v4563
  %5269 = vmatpush1.bf16.msra.mxu0 %v4562
  %5270 = vmatprep.subr.bf16.mxu0 %v4570
  %5271 = vmatpush1.bf16.msra.mxu0 %v4569
  %5272 = vmatprep.subr.bf16.mxu0 %v4577
  %5273 = vmatpush1.bf16.msra.mxu0 %v4576
  %5274 = vmatprep.subr.bf16.mxu0 %v4584
  %5275 = vmatpush1.bf16.msra.mxu0 %v4583
  %5276 = vmatprep.subr.bf16.mxu0 %v4591
  %5277 = vmatpush1.bf16.msra.mxu0 %v4590
  %5278 = vmatprep.subr.bf16.mxu0 %v4598
  %5279 = vmatpush1.bf16.msra.mxu0 %v4597
  %5280 = vmatprep.subr.bf16.mxu0 %v4605
  %5281 = vmatpush1.bf16.msra.mxu0 %v4604
  %5282 = vmatprep.subr.bf16.mxu0 %v4612
  %5283 = vmatpush1.bf16.msra.mxu0 %v4611
  %5284 = vmatprep.subr.bf16.mxu0 %v4619
  %5285 = vmatpush1.bf16.msra.mxu0 %v4618
  %5286 = vmatprep.subr.bf16.mxu0 %v4626
  %5287 = vmatpush1.bf16.msra.mxu0 %v4625
  %5288 = vmatprep.subr.bf16.mxu0 %v4633
  %5289 = vmatpush1.bf16.msra.mxu0 %v4632
  %5290 = vmatprep.subr.bf16.mxu0 %v4640
  %5291 = vmatpush1.bf16.msra.mxu0 %v4639
  %5292 = vmatprep.subr.bf16.mxu0 %v4647
  %5293 = vmatpush1.bf16.msra.mxu0 %v4646
  %5294 = vmatprep.subr.bf16.mxu0 %v4654
  %5295 = vmatpush1.bf16.msra.mxu0 %v4653
  %5296 = vmatprep.subr.bf16.mxu0 %v4661
  %5297 = vmatpush1.bf16.msra.mxu0 %v4660
  %5298 = vmatprep.subr.bf16.mxu0 %v4668
  %5299 = vmatpush1.bf16.msra.mxu0 %v4667
  %5300 = vmatprep.mubr.bf16.mxu0 %v51
  %5301 = vmatmul.mubr.bf16.gmra.mrb[0].mxu0 %v50
  %v5302 = vpop.f32.mrb[0].mxu0
  %v5303 = vadd.f32 %v5262, %v5302
  %v5304 = vpop.f32.mrb[0].mxu0
  %v5305 = vadd.f32 %v5264, %v5304
  %v5306 = vpop.f32.mrb[0].mxu0
  %v5307 = vpop.f32.mrb[0].mxu0
  %5308 = vdwg.mxu0
  %5309 = vmatprep.subr.bf16.mxu0 %v4675
  %5310 = vmatpush1.bf16.msra.mxu0 %v4674
  %5311 = vmatprep.subr.bf16.mxu0 0
  %5312 = vmatpush1.bf16.msra.mxu0 0
  %5313 = vmatprep.subr.bf16.mxu0 0
  %5314 = vmatpush1.bf16.msra.mxu0 0
  %5315 = vmatprep.subr.bf16.mxu0 0
  %5316 = vmatpush1.bf16.msra.mxu0 0
  %5317 = vmatprep.subr.bf16.mxu0 0
  %5318 = vmatpush1.bf16.msra.mxu0 0
  %5319 = vmatprep.subr.bf16.mxu0 0
  %5320 = vmatpush1.bf16.msra.mxu0 0
  %5321 = vmatprep.subr.bf16.mxu0 0
  %5322 = vmatpush1.bf16.msra.mxu0 0
  %5323 = vmatprep.subr.bf16.mxu0 0
  %5324 = vmatpush1.bf16.msra.mxu0 0
  %5325 = vmatprep.subr.bf16.mxu0 0
  %5326 = vmatpush1.bf16.msra.mxu0 0
  %5327 = vmatprep.subr.bf16.mxu0 0
  %5328 = vmatpush1.bf16.msra.mxu0 0
  %5329 = vmatprep.subr.bf16.mxu0 0
  %5330 = vmatpush1.bf16.msra.mxu0 0
  %5331 = vmatprep.subr.bf16.mxu0 0
  %5332 = vmatpush1.bf16.msra.mxu0 0
  %5333 = vmatprep.subr.bf16.mxu0 0
  %5334 = vmatpush1.bf16.msra.mxu0 0
  %5335 = vmatprep.subr.bf16.mxu0 0
  %5336 = vmatpush1.bf16.msra.mxu0 0
  %5337 = vmatprep.subr.bf16.mxu0 0
  %5338 = vmatpush1.bf16.msra.mxu0 0
  %5339 = vmatprep.subr.bf16.mxu0 0
  %5340 = vmatpush1.bf16.msra.mxu0 0
  %5341 = vmatprep.mubr.bf16.mxu0 0
  %5342 = vmatmul.mubr.bf16.gmra.mrb[0].mxu0 %v2211
  %v5343 = vpop.f32.mrb[0].mxu0
  %v5344 = vadd.f32 %v5303, %v5343
  %v5345 = vpop.f32.mrb[0].mxu0
  %v5346 = vadd.f32 %v5305, %v5345
  %v5347 = vpop.f32.mrb[0].mxu0
  %v5348 = vpop.f32.mrb[0].mxu0
  %5349 = vdwg.mxu0
  %5350 = vmatprep.subr.bf16.mxu0 %v4341
  %5351 = vmatpush1.bf16.msra.mxu0 %v4340
  %5352 = vmatprep.subr.bf16.mxu0 %v4348
  %5353 = vmatpush1.bf16.msra.mxu0 %v4347
  %5354 = vmatprep.subr.bf16.mxu0 %v4355
  %5355 = vmatpush1.bf16.msra.mxu0 %v4354
  %5356 = vmatprep.subr.bf16.mxu0 %v4362
  %5357 = vmatpush1.bf16.msra.mxu0 %v4361
  %5358 = vmatprep.subr.bf16.mxu0 %v4369
  %5359 = vmatpush1.bf16.msra.mxu0 %v4368
  %5360 = vmatprep.subr.bf16.mxu0 %v4376
  %5361 = vmatpush1.bf16.msra.mxu0 %v4375
  %5362 = vmatprep.subr.bf16.mxu0 %v4383
  %5363 = vmatpush1.bf16.msra.mxu0 %v4382
  %5364 = vmatprep.subr.bf16.mxu0 %v4390
  %5365 = vmatpush1.bf16.msra.mxu0 %v4389
  %5366 = vmatprep.subr.bf16.mxu0 %v4397
  %5367 = vmatpush1.bf16.msra.mxu0 %v4396
  %5368 = vmatprep.subr.bf16.mxu0 %v4404
  %5369 = vmatpush1.bf16.msra.mxu0 %v4403
  %5370 = vmatprep.subr.bf16.mxu0 %v4411
  %5371 = vmatpush1.bf16.msra.mxu0 %v4410
  %5372 = vmatprep.subr.bf16.mxu0 %v4418
  %5373 = vmatpush1.bf16.msra.mxu0 %v4417
  %5374 = vmatprep.subr.bf16.mxu0 %v4425
  %5375 = vmatpush1.bf16.msra.mxu0 %v4424
  %5376 = vmatprep.subr.bf16.mxu0 %v4432
  %5377 = vmatpush1.bf16.msra.mxu0 %v4431
  %5378 = vmatprep.subr.bf16.mxu0 %v4439
  %5379 = vmatpush1.bf16.msra.mxu0 %v4438
  %5380 = vmatprep.subr.bf16.mxu0 %v4446
  %5381 = vmatpush1.bf16.msra.mxu0 %v4445
  %5382 = vmatprep.mubr.bf16.mxu0 %v47
  %5383 = vmatmul.mubr.bf16.gmra.mrb[0].mxu0 %v46
  %v5384 = vpop.f32.mrb[0].mxu0
  %v5385 = vadd.f32 0.0, %v5384
  %v5386 = vpop.f32.mrb[0].mxu0
  %v5387 = vadd.f32 0.0, %v5386
  %v5388 = vpop.f32.mrb[0].mxu0
  %v5389 = vpop.f32.mrb[0].mxu0
  %5390 = vdwg.mxu0
  %5391 = vmatprep.subr.bf16.mxu0 %v4453
  %5392 = vmatpush1.bf16.msra.mxu0 %v4452
  %5393 = vmatprep.subr.bf16.mxu0 %v4460
  %5394 = vmatpush1.bf16.msra.mxu0 %v4459
  %5395 = vmatprep.subr.bf16.mxu0 %v4467
  %5396 = vmatpush1.bf16.msra.mxu0 %v4466
  %5397 = vmatprep.subr.bf16.mxu0 %v4474
  %5398 = vmatpush1.bf16.msra.mxu0 %v4473
  %5399 = vmatprep.subr.bf16.mxu0 %v4481
  %5400 = vmatpush1.bf16.msra.mxu0 %v4480
  %5401 = vmatprep.subr.bf16.mxu0 %v4488
  %5402 = vmatpush1.bf16.msra.mxu0 %v4487
  %5403 = vmatprep.subr.bf16.mxu0 %v4495
  %5404 = vmatpush1.bf16.msra.mxu0 %v4494
  %5405 = vmatprep.subr.bf16.mxu0 %v4502
  %5406 = vmatpush1.bf16.msra.mxu0 %v4501
  %5407 = vmatprep.subr.bf16.mxu0 %v4509
  %5408 = vmatpush1.bf16.msra.mxu0 %v4508
  %5409 = vmatprep.subr.bf16.mxu0 %v4516
  %5410 = vmatpush1.bf16.msra.mxu0 %v4515
  %5411 = vmatprep.subr.bf16.mxu0 %v4523
  %5412 = vmatpush1.bf16.msra.mxu0 %v4522
  %5413 = vmatprep.subr.bf16.mxu0 %v4530
  %5414 = vmatpush1.bf16.msra.mxu0 %v4529
  %5415 = vmatprep.subr.bf16.mxu0 %v4537
  %5416 = vmatpush1.bf16.msra.mxu0 %v4536
  %5417 = vmatprep.subr.bf16.mxu0 %v4544
  %5418 = vmatpush1.bf16.msra.mxu0 %v4543
  %5419 = vmatprep.subr.bf16.mxu0 %v4551
  %5420 = vmatpush1.bf16.msra.mxu0 %v4550
  %5421 = vmatprep.subr.bf16.mxu0 %v4558
  %5422 = vmatpush1.bf16.msra.mxu0 %v4557
  %5423 = vmatprep.mubr.bf16.mxu0 %v49
  %5424 = vmatmul.mubr.bf16.gmra.mrb[0].mxu0 %v48
  %v5425 = vpop.f32.mrb[0].mxu0
  %v5426 = vadd.f32 %v5385, %v5425
  %v5427 = vpop.f32.mrb[0].mxu0
  %v5428 = vadd.f32 %v5387, %v5427
  %v5429 = vpop.f32.mrb[0].mxu0
  %v5430 = vpop.f32.mrb[0].mxu0
  %5431 = vdwg.mxu0
  %5432 = vmatprep.subr.bf16.mxu0 %v4565
  %5433 = vmatpush1.bf16.msra.mxu0 %v4564
  %5434 = vmatprep.subr.bf16.mxu0 %v4572
  %5435 = vmatpush1.bf16.msra.mxu0 %v4571
  %5436 = vmatprep.subr.bf16.mxu0 %v4579
  %5437 = vmatpush1.bf16.msra.mxu0 %v4578
  %5438 = vmatprep.subr.bf16.mxu0 %v4586
  %5439 = vmatpush1.bf16.msra.mxu0 %v4585
  %5440 = vmatprep.subr.bf16.mxu0 %v4593
  %5441 = vmatpush1.bf16.msra.mxu0 %v4592
  %5442 = vmatprep.subr.bf16.mxu0 %v4600
  %5443 = vmatpush1.bf16.msra.mxu0 %v4599
  %5444 = vmatprep.subr.bf16.mxu0 %v4607
  %5445 = vmatpush1.bf16.msra.mxu0 %v4606
  %5446 = vmatprep.subr.bf16.mxu0 %v4614
  %5447 = vmatpush1.bf16.msra.mxu0 %v4613
  %5448 = vmatprep.subr.bf16.mxu0 %v4621
  %5449 = vmatpush1.bf16.msra.mxu0 %v4620
  %5450 = vmatprep.subr.bf16.mxu0 %v4628
  %5451 = vmatpush1.bf16.msra.mxu0 %v4627
  %5452 = vmatprep.subr.bf16.mxu0 %v4635
  %5453 = vmatpush1.bf16.msra.mxu0 %v4634
  %5454 = vmatprep.subr.bf16.mxu0 %v4642
  %5455 = vmatpush1.bf16.msra.mxu0 %v4641
  %5456 = vmatprep.subr.bf16.mxu0 %v4649
  %5457 = vmatpush1.bf16.msra.mxu0 %v4648
  %5458 = vmatprep.subr.bf16.mxu0 %v4656
  %5459 = vmatpush1.bf16.msra.mxu0 %v4655
  %5460 = vmatprep.subr.bf16.mxu0 %v4663
  %5461 = vmatpush1.bf16.msra.mxu0 %v4662
  %5462 = vmatprep.subr.bf16.mxu0 %v4670
  %5463 = vmatpush1.bf16.msra.mxu0 %v4669
  %5464 = vmatprep.mubr.bf16.mxu0 %v51
  %5465 = vmatmul.mubr.bf16.gmra.mrb[0].mxu0 %v50
  %v5466 = vpop.f32.mrb[0].mxu0
  %v5467 = vadd.f32 %v5426, %v5466
  %v5468 = vpop.f32.mrb[0].mxu0
  %v5469 = vadd.f32 %v5428, %v5468
  %v5470 = vpop.f32.mrb[0].mxu0
  %v5471 = vpop.f32.mrb[0].mxu0
  %5472 = vdwg.mxu0
  %5473 = vmatprep.subr.bf16.mxu0 %v4677
  %5474 = vmatpush1.bf16.msra.mxu0 %v4676
  %5475 = vmatprep.subr.bf16.mxu0 0
  %5476 = vmatpush1.bf16.msra.mxu0 0
  %5477 = vmatprep.subr.bf16.mxu0 0
  %5478 = vmatpush1.bf16.msra.mxu0 0
  %5479 = vmatprep.subr.bf16.mxu0 0
  %5480 = vmatpush1.bf16.msra.mxu0 0
  %5481 = vmatprep.subr.bf16.mxu0 0
  %5482 = vmatpush1.bf16.msra.mxu0 0
  %5483 = vmatprep.subr.bf16.mxu0 0
  %5484 = vmatpush1.bf16.msra.mxu0 0
  %5485 = vmatprep.subr.bf16.mxu0 0
  %5486 = vmatpush1.bf16.msra.mxu0 0
  %5487 = vmatprep.subr.bf16.mxu0 0
  %5488 = vmatpush1.bf16.msra.mxu0 0
  %5489 = vmatprep.subr.bf16.mxu0 0
  %5490 = vmatpush1.bf16.msra.mxu0 0
  %5491 = vmatprep.subr.bf16.mxu0 0
  %5492 = vmatpush1.bf16.msra.mxu0 0
  %5493 = vmatprep.subr.bf16.mxu0 0
  %5494 = vmatpush1.bf16.msra.mxu0 0
  %5495 = vmatprep.subr.bf16.mxu0 0
  %5496 = vmatpush1.bf16.msra.mxu0 0
  %5497 = vmatprep.subr.bf16.mxu0 0
  %5498 = vmatpush1.bf16.msra.mxu0 0
  %5499 = vmatprep.subr.bf16.mxu0 0
  %5500 = vmatpush1.bf16.msra.mxu0 0
  %5501 = vmatprep.subr.bf16.mxu0 0
  %5502 = vmatpush1.bf16.msra.mxu0 0
  %5503 = vmatprep.subr.bf16.mxu0 0
  %5504 = vmatpush1.bf16.msra.mxu0 0
  %5505 = vmatprep.mubr.bf16.mxu0 0
  %5506 = vmatmul.mubr.bf16.gmra.mrb[0].mxu0 %v2211
  %v5507 = vpop.f32.mrb[0].mxu0
  %v5508 = vadd.f32 %v5467, %v5507
  %v5509 = vpop.f32.mrb[0].mxu0
  %v5510 = vadd.f32 %v5469, %v5509
  %v5511 = vpop.f32.mrb[0].mxu0
  %v5512 = vpop.f32.mrb[0].mxu0
  %5513 = vdwg.mxu0
  %5514 = vmatprep.subr.bf16.mxu0 0
  %5515 = vmatpush1.bf16.msra.mxu0 %v4342
  %5516 = vmatprep.subr.bf16.mxu0 0
  %5517 = vmatpush1.bf16.msra.mxu0 %v4349
  %5518 = vmatprep.subr.bf16.mxu0 0
  %5519 = vmatpush1.bf16.msra.mxu0 %v4356
  %5520 = vmatprep.subr.bf16.mxu0 0
  %5521 = vmatpush1.bf16.msra.mxu0 %v4363
  %5522 = vmatprep.subr.bf16.mxu0 0
  %5523 = vmatpush1.bf16.msra.mxu0 %v4370
  %5524 = vmatprep.subr.bf16.mxu0 0
  %5525 = vmatpush1.bf16.msra.mxu0 %v4377
  %5526 = vmatprep.subr.bf16.mxu0 0
  %5527 = vmatpush1.bf16.msra.mxu0 %v4384
  %5528 = vmatprep.subr.bf16.mxu0 0
  %5529 = vmatpush1.bf16.msra.mxu0 %v4391
  %5530 = vmatprep.subr.bf16.mxu0 0
  %5531 = vmatpush1.bf16.msra.mxu0 %v4398
  %5532 = vmatprep.subr.bf16.mxu0 0
  %5533 = vmatpush1.bf16.msra.mxu0 %v4405
  %5534 = vmatprep.subr.bf16.mxu0 0
  %5535 = vmatpush1.bf16.msra.mxu0 %v4412
  %5536 = vmatprep.subr.bf16.mxu0 0
  %5537 = vmatpush1.bf16.msra.mxu0 %v4419
  %5538 = vmatprep.subr.bf16.mxu0 0
  %5539 = vmatpush1.bf16.msra.mxu0 %v4426
  %5540 = vmatprep.subr.bf16.mxu0 0
  %5541 = vmatpush1.bf16.msra.mxu0 %v4433
  %5542 = vmatprep.subr.bf16.mxu0 0
  %5543 = vmatpush1.bf16.msra.mxu0 %v4440
  %5544 = vmatprep.subr.bf16.mxu0 0
  %5545 = vmatpush1.bf16.msra.mxu0 %v4447
  %5546 = vmatprep.mubr.bf16.mxu0 %v47
  %5547 = vmatmul.mubr.bf16.gmra.mrb[0].mxu0 %v46
  %v5548 = vpop.f32.mrb[0].mxu0
  %v5549 = vadd.f32 0.0, %v5548
  %v5550 = vpop.f32.mrb[0].mxu0
  %v5551 = vpop.f32.mrb[0].mxu0
  %v5552 = vpop.f32.mrb[0].mxu0
  %5553 = vdwg.mxu0
  %5554 = vmatprep.subr.bf16.mxu0 0
  %5555 = vmatpush1.bf16.msra.mxu0 %v4454
  %5556 = vmatprep.subr.bf16.mxu0 0
  %5557 = vmatpush1.bf16.msra.mxu0 %v4461
  %5558 = vmatprep.subr.bf16.mxu0 0
  %5559 = vmatpush1.bf16.msra.mxu0 %v4468
  %5560 = vmatprep.subr.bf16.mxu0 0
  %5561 = vmatpush1.bf16.msra.mxu0 %v4475
  %5562 = vmatprep.subr.bf16.mxu0 0
  %5563 = vmatpush1.bf16.msra.mxu0 %v4482
  %5564 = vmatprep.subr.bf16.mxu0 0
  %5565 = vmatpush1.bf16.msra.mxu0 %v4489
  %5566 = vmatprep.subr.bf16.mxu0 0
  %5567 = vmatpush1.bf16.msra.mxu0 %v4496
  %5568 = vmatprep.subr.bf16.mxu0 0
  %5569 = vmatpush1.bf16.msra.mxu0 %v4503
  %5570 = vmatprep.subr.bf16.mxu0 0
  %5571 = vmatpush1.bf16.msra.mxu0 %v4510
  %5572 = vmatprep.subr.bf16.mxu0 0
  %5573 = vmatpush1.bf16.msra.mxu0 %v4517
  %5574 = vmatprep.subr.bf16.mxu0 0
  %5575 = vmatpush1.bf16.msra.mxu0 %v4524
  %5576 = vmatprep.subr.bf16.mxu0 0
  %5577 = vmatpush1.bf16.msra.mxu0 %v4531
  %5578 = vmatprep.subr.bf16.mxu0 0
  %5579 = vmatpush1.bf16.msra.mxu0 %v4538
  %5580 = vmatprep.subr.bf16.mxu0 0
  %5581 = vmatpush1.bf16.msra.mxu0 %v4545
  %5582 = vmatprep.subr.bf16.mxu0 0
  %5583 = vmatpush1.bf16.msra.mxu0 %v4552
  %5584 = vmatprep.subr.bf16.mxu0 0
  %5585 = vmatpush1.bf16.msra.mxu0 %v4559
  %5586 = vmatprep.mubr.bf16.mxu0 %v49
  %5587 = vmatmul.mubr.bf16.gmra.mrb[0].mxu0 %v48
  %v5588 = vpop.f32.mrb[0].mxu0
  %v5589 = vadd.f32 %v5549, %v5588
  %v5590 = vpop.f32.mrb[0].mxu0
  %v5591 = vpop.f32.mrb[0].mxu0
  %v5592 = vpop.f32.mrb[0].mxu0
  %5593 = vdwg.mxu0
  %5594 = vmatprep.subr.bf16.mxu0 0
  %5595 = vmatpush1.bf16.msra.mxu0 %v4566
  %5596 = vmatprep.subr.bf16.mxu0 0
  %5597 = vmatpush1.bf16.msra.mxu0 %v4573
  %5598 = vmatprep.subr.bf16.mxu0 0
  %5599 = vmatpush1.bf16.msra.mxu0 %v4580
  %5600 = vmatprep.subr.bf16.mxu0 0
  %5601 = vmatpush1.bf16.msra.mxu0 %v4587
  %5602 = vmatprep.subr.bf16.mxu0 0
  %5603 = vmatpush1.bf16.msra.mxu0 %v4594
  %5604 = vmatprep.subr.bf16.mxu0 0
  %5605 = vmatpush1.bf16.msra.mxu0 %v4601
  %5606 = vmatprep.subr.bf16.mxu0 0
  %5607 = vmatpush1.bf16.msra.mxu0 %v4608
  %5608 = vmatprep.subr.bf16.mxu0 0
  %5609 = vmatpush1.bf16.msra.mxu0 %v4615
  %5610 = vmatprep.subr.bf16.mxu0 0
  %5611 = vmatpush1.bf16.msra.mxu0 %v4622
  %5612 = vmatprep.subr.bf16.mxu0 0
  %5613 = vmatpush1.bf16.msra.mxu0 %v4629
  %5614 = vmatprep.subr.bf16.mxu0 0
  %5615 = vmatpush1.bf16.msra.mxu0 %v4636
  %5616 = vmatprep.subr.bf16.mxu0 0
  %5617 = vmatpush1.bf16.msra.mxu0 %v4643
  %5618 = vmatprep.subr.bf16.mxu0 0
  %5619 = vmatpush1.bf16.msra.mxu0 %v4650
  %5620 = vmatprep.subr.bf16.mxu0 0
  %5621 = vmatpush1.bf16.msra.mxu0 %v4657
  %5622 = vmatprep.subr.bf16.mxu0 0
  %5623 = vmatpush1.bf16.msra.mxu0 %v4664
  %5624 = vmatprep.subr.bf16.mxu0 0
  %5625 = vmatpush1.bf16.msra.mxu0 %v4671
  %5626 = vmatprep.mubr.bf16.mxu0 %v51
  %5627 = vmatmul.mubr.bf16.gmra.mrb[0].mxu0 %v50
  %v5628 = vpop.f32.mrb[0].mxu0
  %v5629 = vadd.f32 %v5589, %v5628
  %v5630 = vpop.f32.mrb[0].mxu0
  %v5631 = vpop.f32.mrb[0].mxu0
  %v5632 = vpop.f32.mrb[0].mxu0
  %5633 = vdwg.mxu0
  %5634 = vmatprep.subr.bf16.mxu0 0
  %5635 = vmatpush1.bf16.msra.mxu0 %v4678
  %5636 = vmatprep.subr.bf16.mxu0 0
  %5637 = vmatpush1.bf16.msra.mxu0 0
  %5638 = vmatprep.subr.bf16.mxu0 0
  %5639 = vmatpush1.bf16.msra.mxu0 0
  %5640 = vmatprep.subr.bf16.mxu0 0
  %5641 = vmatpush1.bf16.msra.mxu0 0
  %5642 = vmatprep.subr.bf16.mxu0 0
  %5643 = vmatpush1.bf16.msra.mxu0 0
  %5644 = vmatprep.subr.bf16.mxu0 0
  %5645 = vmatpush1.bf16.msra.mxu0 0
  %5646 = vmatprep.subr.bf16.mxu0 0
  %5647 = vmatpush1.bf16.msra.mxu0 0
  %5648 = vmatprep.subr.bf16.mxu0 0
  %5649 = vmatpush1.bf16.msra.mxu0 0
  %5650 = vmatprep.subr.bf16.mxu0 0
  %5651 = vmatpush1.bf16.msra.mxu0 0
  %5652 = vmatprep.subr.bf16.mxu0 0
  %5653 = vmatpush1.bf16.msra.mxu0 0
  %5654 = vmatprep.subr.bf16.mxu0 0
  %5655 = vmatpush1.bf16.msra.mxu0 0
  %5656 = vmatprep.subr.bf16.mxu0 0
  %5657 = vmatpush1.bf16.msra.mxu0 0
  %5658 = vmatprep.subr.bf16.mxu0 0
  %5659 = vmatpush1.bf16.msra.mxu0 0
  %5660 = vmatprep.subr.bf16.mxu0 0
  %5661 = vmatpush1.bf16.msra.mxu0 0
  %5662 = vmatprep.subr.bf16.mxu0 0
  %5663 = vmatpush1.bf16.msra.mxu0 0
  %5664 = vmatprep.subr.bf16.mxu0 0
  %5665 = vmatpush1.bf16.msra.mxu0 0
  %5666 = vmatprep.mubr.bf16.mxu0 0
  %5667 = vmatmul.mubr.bf16.gmra.mrb[0].mxu0 %v2211
  %v5668 = vpop.f32.mrb[0].mxu0
  %v5669 = vadd.f32 %v5629, %v5668
  %v5670 = vpop.f32.mrb[0].mxu0
  %v5671 = vpop.f32.mrb[0].mxu0
  %v5672 = vpop.f32.mrb[0].mxu0
  %5673 = vdwg.mxu0
  %v5674 = vmax.f32 %v2371, %v5180
  %v5675 = vmax.f32 %v2373, %v5182
  %v5676 = vmax.f32 %v2535, %v5344
  %v5677 = vmax.f32 %v2537, %v5346
  %v5678 = vmax.f32 %v2699, %v5508
  %v5679 = vmax.f32 %v2701, %v5510
  %v5680 = vmax.f32 %v2860, %v5669
  %s5681 = scalar_lea.vmem %s1, 5488
  %v5682 = vld [vmem:[%s5681] sm:$0xff]
  %v5683 = vld [vmem:[%s5681 + $0x8] sm:$0xff]
  %v5684 = vld [vmem:[%s5681 + $0x10] sm:$0xff]
  %v5685 = vld [vmem:[%s5681 + $0x18] sm:$0xf]
  %v5686 = vld [vmem:[%s5681 + $0x1c] sm:$0xff]
  %v5687 = vld [vmem:[%s5681 + $0x24] sm:$0xff]
  %v5688 = vld [vmem:[%s5681 + $0x2c] sm:$0xff]
  %v5689 = vld [vmem:[%s5681 + $0x34] sm:$0xf]
  %v5690 = vld [vmem:[%s5681 + $0x38] sm:$0xff]
  %v5691 = vld [vmem:[%s5681 + $0x40] sm:$0xff]
  %v5692 = vld [vmem:[%s5681 + $0x48] sm:$0xff]
  %v5693 = vld [vmem:[%s5681 + $0x50] sm:$0xf]
  %v5694 = vld [vmem:[%s5681 + $0x54] sm:$0xff]
  %v5695 = vld [vmem:[%s5681 + $0x5c] sm:$0xff]
  %v5696 = vld [vmem:[%s5681 + $0x64] sm:$0xff]
  %v5697 = vld [vmem:[%s5681 + $0x6c] sm:$0xf]
  %v5698 = vld [vmem:[%s5681 + $0x70] sm:$0xff]
  %v5699 = vld [vmem:[%s5681 + $0x78] sm:$0xff]
  %v5700 = vld [vmem:[%s5681 + $0x80] sm:$0xff]
  %v5701 = vld [vmem:[%s5681 + $0x88] sm:$0xf]
  %v5702 = vld [vmem:[%s5681 + $0x8c] sm:$0xff]
  %v5703 = vld [vmem:[%s5681 + $0x94] sm:$0xff]
  %v5704 = vld [vmem:[%s5681 + $0x9c] sm:$0xff]
  %v5705 = vld [vmem:[%s5681 + $0xa4] sm:$0xf]
  %v5706 = vld [vmem:[%s5681 + $0xa8] sm:$0xff]
  %v5707 = vld [vmem:[%s5681 + $0xb0] sm:$0xff]
  %v5708 = vld [vmem:[%s5681 + $0xb8] sm:$0xff]
  %v5709 = vld [vmem:[%s5681 + $0xc0] sm:$0xf]
  %v5710 = vld [vmem:[%s5681 + $0xc4] sm:$0xff]
  %v5711 = vld [vmem:[%s5681 + $0xcc] sm:$0xff]
  %v5712 = vld [vmem:[%s5681 + $0xd4] sm:$0xff]
  %v5713 = vld [vmem:[%s5681 + $0xdc] sm:$0xf]
  %v5714 = vld [vmem:[%s5681 + $0xe0] sm:$0xff]
  %v5715 = vld [vmem:[%s5681 + $0xe8] sm:$0xff]
  %v5716 = vld [vmem:[%s5681 + $0xf0] sm:$0xff]
  %v5717 = vld [vmem:[%s5681 + $0xf8] sm:$0xf]
  %v5718 = vld [vmem:[%s5681 + $0xfc] sm:$0xff]
  %v5719 = vld [vmem:[%s5681 + $0x104] sm:$0xff]
  %v5720 = vld [vmem:[%s5681 + $0x10c] sm:$0xff]
  %v5721 = vld [vmem:[%s5681 + $0x114] sm:$0xf]
  %v5722 = vld [vmem:[%s5681 + $0x118] sm:$0xff]
  %v5723 = vld [vmem:[%s5681 + $0x120] sm:$0xff]
  %v5724 = vld [vmem:[%s5681 + $0x128] sm:$0xff]
  %v5725 = vld [vmem:[%s5681 + $0x130] sm:$0xf]
  %v5726 = vld [vmem:[%s5681 + $0x134] sm:$0xff]
  %v5727 = vld [vmem:[%s5681 + $0x13c] sm:$0xff]
  %v5728 = vld [vmem:[%s5681 + $0x144] sm:$0xff]
  %v5729 = vld [vmem:[%s5681 + $0x14c] sm:$0xf]
  %v5730 = vld [vmem:[%s5681 + $0x150] sm:$0xff]
  %v5731 = vld [vmem:[%s5681 + $0x158] sm:$0xff]
  %v5732 = vld [vmem:[%s5681 + $0x160] sm:$0xff]
  %v5733 = vld [vmem:[%s5681 + $0x168] sm:$0xf]
  %v5734 = vld [vmem:[%s5681 + $0x16c] sm:$0xff]
  %v5735 = vld [vmem:[%s5681 + $0x174] sm:$0xff]
  %v5736 = vld [vmem:[%s5681 + $0x17c] sm:$0xff]
  %v5737 = vld [vmem:[%s5681 + $0x184] sm:$0xf]
  %v5738 = vld [vmem:[%s5681 + $0x188] sm:$0xff]
  %v5739 = vld [vmem:[%s5681 + $0x190] sm:$0xff]
  %v5740 = vld [vmem:[%s5681 + $0x198] sm:$0xff]
  %v5741 = vld [vmem:[%s5681 + $0x1a0] sm:$0xf]
  %v5742 = vld [vmem:[%s5681 + $0x1a4] sm:$0xff]
  %v5743 = vld [vmem:[%s5681 + $0x1ac] sm:$0xff]
  %v5744 = vld [vmem:[%s5681 + $0x1b4] sm:$0xff]
  %v5745 = vld [vmem:[%s5681 + $0x1bc] sm:$0xf]
  %v5746 = vld [vmem:[%s5681 + $0x1c0] sm:$0xff]
  %v5747 = vld [vmem:[%s5681 + $0x1c8] sm:$0xff]
  %v5748 = vld [vmem:[%s5681 + $0x1d0] sm:$0xff]
  %v5749 = vld [vmem:[%s5681 + $0x1d8] sm:$0xf]
  %v5750 = vld [vmem:[%s5681 + $0x1dc] sm:$0xff]
  %v5751 = vld [vmem:[%s5681 + $0x1e4] sm:$0xff]
  %v5752 = vld [vmem:[%s5681 + $0x1ec] sm:$0xff]
  %v5753 = vld [vmem:[%s5681 + $0x1f4] sm:$0xf]
  %v5754 = vld [vmem:[%s5681 + $0x1f8] sm:$0xff]
  %v5755 = vld [vmem:[%s5681 + $0x200] sm:$0xff]
  %v5756 = vld [vmem:[%s5681 + $0x208] sm:$0xff]
  %v5757 = vld [vmem:[%s5681 + $0x210] sm:$0xf]
  %v5758 = vld [vmem:[%s5681 + $0x214] sm:$0xff]
  %v5759 = vld [vmem:[%s5681 + $0x21c] sm:$0xff]
  %v5760 = vld [vmem:[%s5681 + $0x224] sm:$0xff]
  %v5761 = vld [vmem:[%s5681 + $0x22c] sm:$0xf]
  %v5762 = vld [vmem:[%s5681 + $0x230] sm:$0xff]
  %v5763 = vld [vmem:[%s5681 + $0x238] sm:$0xff]
  %v5764 = vld [vmem:[%s5681 + $0x240] sm:$0xff]
  %v5765 = vld [vmem:[%s5681 + $0x248] sm:$0xf]
  %v5766 = vld [vmem:[%s5681 + $0x24c] sm:$0xff]
  %v5767 = vld [vmem:[%s5681 + $0x254] sm:$0xff]
  %v5768 = vld [vmem:[%s5681 + $0x25c] sm:$0xff]
  %v5769 = vld [vmem:[%s5681 + $0x264] sm:$0xf]
  %v5770 = vld [vmem:[%s5681 + $0x268] sm:$0xff]
  %v5771 = vld [vmem:[%s5681 + $0x270] sm:$0xff]
  %v5772 = vld [vmem:[%s5681 + $0x278] sm:$0xff]
  %v5773 = vld [vmem:[%s5681 + $0x280] sm:$0xf]
  %v5774 = vld [vmem:[%s5681 + $0x284] sm:$0xff]
  %v5775 = vld [vmem:[%s5681 + $0x28c] sm:$0xff]
  %v5776 = vld [vmem:[%s5681 + $0x294] sm:$0xff]
  %v5777 = vld [vmem:[%s5681 + $0x29c] sm:$0xf]
  %v5778 = vld [vmem:[%s5681 + $0x2a0] sm:$0xff]
  %v5779 = vld [vmem:[%s5681 + $0x2a8] sm:$0xff]
  %v5780 = vld [vmem:[%s5681 + $0x2b0] sm:$0xff]
  %v5781 = vld [vmem:[%s5681 + $0x2b8] sm:$0xf]
  %v5782 = vld [vmem:[%s5681 + $0x2bc] sm:$0xff]
  %v5783 = vld [vmem:[%s5681 + $0x2c4] sm:$0xff]
  %v5784 = vld [vmem:[%s5681 + $0x2cc] sm:$0xff]
  %v5785 = vld [vmem:[%s5681 + $0x2d4] sm:$0xf]
  %v5786 = vld [vmem:[%s5681 + $0x2d8] sm:$0xff]
  %v5787 = vld [vmem:[%s5681 + $0x2e0] sm:$0xff]
  %v5788 = vld [vmem:[%s5681 + $0x2e8] sm:$0xff]
  %v5789 = vld [vmem:[%s5681 + $0x2f0] sm:$0xf]
  %v5790 = vld [vmem:[%s5681 + $0x2f4] sm:$0xff]
  %v5791 = vld [vmem:[%s5681 + $0x2fc] sm:$0xff]
  %v5792 = vld [vmem:[%s5681 + $0x304] sm:$0xff]
  %v5793 = vld [vmem:[%s5681 + $0x30c] sm:$0xf]
  %v5794 = vld [vmem:[%s5681 + $0x310] sm:$0xff]
  %v5795 = vld [vmem:[%s5681 + $0x318] sm:$0xff]
  %v5796 = vld [vmem:[%s5681 + $0x320] sm:$0xff]
  %v5797 = vld [vmem:[%s5681 + $0x328] sm:$0xf]
  %v5798 = vld [vmem:[%s5681 + $0x32c] sm:$0xff]
  %v5799 = vld [vmem:[%s5681 + $0x334] sm:$0xff]
  %v5800 = vld [vmem:[%s5681 + $0x33c] sm:$0xff]
  %v5801 = vld [vmem:[%s5681 + $0x344] sm:$0xf]
  %v5802 = vld [vmem:[%s5681 + $0x348] sm:$0xff]
  %v5803 = vld [vmem:[%s5681 + $0x350] sm:$0xff]
  %v5804 = vld [vmem:[%s5681 + $0x358] sm:$0xff]
  %v5805 = vld [vmem:[%s5681 + $0x360] sm:$0xf]
  %v5806 = vld [vmem:[%s5681 + $0x364] sm:$0xff]
  %v5807 = vld [vmem:[%s5681 + $0x36c] sm:$0xff]
  %v5808 = vld [vmem:[%s5681 + $0x374] sm:$0xff]
  %v5809 = vld [vmem:[%s5681 + $0x37c] sm:$0xf]
  %v5810 = vld [vmem:[%s5681 + $0x380] sm:$0xff]
  %v5811 = vld [vmem:[%s5681 + $0x388] sm:$0xff]
  %v5812 = vld [vmem:[%s5681 + $0x390] sm:$0xff]
  %v5813 = vld [vmem:[%s5681 + $0x398] sm:$0xf]
  %v5814 = vld [vmem:[%s5681 + $0x39c] sm:$0xff]
  %v5815 = vld [vmem:[%s5681 + $0x3a4] sm:$0xff]
  %v5816 = vld [vmem:[%s5681 + $0x3ac] sm:$0xff]
  %v5817 = vld [vmem:[%s5681 + $0x3b4] sm:$0xf]
  %v5818 = vld [vmem:[%s5681 + $0x3b8] sm:$0xff]
  %v5819 = vld [vmem:[%s5681 + $0x3c0] sm:$0xff]
  %v5820 = vld [vmem:[%s5681 + $0x3c8] sm:$0xff]
  %v5821 = vld [vmem:[%s5681 + $0x3d0] sm:$0xf]
  %v5822 = vld [vmem:[%s5681 + $0x3d4] sm:$0xff]
  %v5823 = vld [vmem:[%s5681 + $0x3dc] sm:$0xff]
  %v5824 = vld [vmem:[%s5681 + $0x3e4] sm:$0xff]
  %v5825 = vld [vmem:[%s5681 + $0x3ec] sm:$0xf]
  %v5826 = vld [vmem:[%s5681 + $0x3f0] sm:$0xff]
  %v5827 = vld [vmem:[%s5681 + $0x3f8] sm:$0xff]
  %v5828 = vld [vmem:[%s5681 + $0x400] sm:$0xff]
  %v5829 = vld [vmem:[%s5681 + $0x408] sm:$0xf]
  %v5830 = vld [vmem:[%s5681 + $0x40c] sm:$0xff]
  %v5831 = vld [vmem:[%s5681 + $0x414] sm:$0xff]
  %v5832 = vld [vmem:[%s5681 + $0x41c] sm:$0xff]
  %v5833 = vld [vmem:[%s5681 + $0x424] sm:$0xf]
  %v5834 = vld [vmem:[%s5681 + $0x428] sm:$0xff]
  %v5835 = vld [vmem:[%s5681 + $0x430] sm:$0xff]
  %v5836 = vld [vmem:[%s5681 + $0x438] sm:$0xff]
  %v5837 = vld [vmem:[%s5681 + $0x440] sm:$0xf]
  %v5838 = vld [vmem:[%s5681 + $0x444] sm:$0xff]
  %v5839 = vld [vmem:[%s5681 + $0x44c] sm:$0xff]
  %v5840 = vld [vmem:[%s5681 + $0x454] sm:$0xff]
  %v5841 = vld [vmem:[%s5681 + $0x45c] sm:$0xf]
  %v5842 = vld [vmem:[%s5681 + $0x460] sm:$0xff]
  %v5843 = vld [vmem:[%s5681 + $0x468] sm:$0xff]
  %v5844 = vld [vmem:[%s5681 + $0x470] sm:$0xff]
  %v5845 = vld [vmem:[%s5681 + $0x478] sm:$0xf]
  %v5846 = vld [vmem:[%s5681 + $0x47c] sm:$0xff]
  %v5847 = vld [vmem:[%s5681 + $0x484] sm:$0xff]
  %v5848 = vld [vmem:[%s5681 + $0x48c] sm:$0xff]
  %v5849 = vld [vmem:[%s5681 + $0x494] sm:$0xf]
  %v5850 = vld [vmem:[%s5681 + $0x498] sm:$0xff]
  %v5851 = vld [vmem:[%s5681 + $0x4a0] sm:$0xff]
  %v5852 = vld [vmem:[%s5681 + $0x4a8] sm:$0xff]
  %v5853 = vld [vmem:[%s5681 + $0x4b0] sm:$0xf]
  %v5854 = vld [vmem:[%s5681 + $0x4b4] sm:$0xff]
  %v5855 = vld [vmem:[%s5681 + $0x4bc] sm:$0xff]
  %v5856 = vld [vmem:[%s5681 + $0x4c4] sm:$0xff]
  %v5857 = vld [vmem:[%s5681 + $0x4cc] sm:$0xf]
  %v5858 = vld [vmem:[%s5681 + $0x4d0] sm:$0xff]
  %v5859 = vld [vmem:[%s5681 + $0x4d8] sm:$0xff]
  %v5860 = vld [vmem:[%s5681 + $0x4e0] sm:$0xff]
  %v5861 = vld [vmem:[%s5681 + $0x4e8] sm:$0xf]
  %v5862 = vld [vmem:[%s5681 + $0x4ec] sm:$0xff]
  %v5863 = vld [vmem:[%s5681 + $0x4f4] sm:$0xff]
  %v5864 = vld [vmem:[%s5681 + $0x4fc] sm:$0xff]
  %v5865 = vld [vmem:[%s5681 + $0x504] sm:$0xf]
  %v5866 = vld [vmem:[%s5681 + $0x508] sm:$0xff]
  %v5867 = vld [vmem:[%s5681 + $0x510] sm:$0xff]
  %v5868 = vld [vmem:[%s5681 + $0x518] sm:$0xff]
  %v5869 = vld [vmem:[%s5681 + $0x520] sm:$0xf]
  %v5870 = vld [vmem:[%s5681 + $0x524] sm:$0xff]
  %v5871 = vld [vmem:[%s5681 + $0x52c] sm:$0xff]
  %v5872 = vld [vmem:[%s5681 + $0x534] sm:$0xff]
  %v5873 = vld [vmem:[%s5681 + $0x53c] sm:$0xf]
  %v5874 = vld [vmem:[%s5681 + $0x540] sm:$0xff]
  %v5875 = vld [vmem:[%s5681 + $0x548] sm:$0xff]
  %v5876 = vld [vmem:[%s5681 + $0x550] sm:$0xff]
  %v5877 = vld [vmem:[%s5681 + $0x558] sm:$0xf]
  %v5878 = vld [vmem:[%s5681 + $0x55c] sm:$0xff]
  %v5879 = vld [vmem:[%s5681 + $0x564] sm:$0xff]
  %v5880 = vld [vmem:[%s5681 + $0x56c] sm:$0xff]
  %v5881 = vld [vmem:[%s5681 + $0x574] sm:$0xf]
  %v5882 = vld [vmem:[%s5681 + $0x578] sm:$0xff]
  %v5883 = vld [vmem:[%s5681 + $0x580] sm:$0xff]
  %v5884 = vld [vmem:[%s5681 + $0x588] sm:$0xff]
  %v5885 = vld [vmem:[%s5681 + $0x590] sm:$0xf]
  %v5886 = vld [vmem:[%s5681 + $0x594] sm:$0xff]
  %v5887 = vld [vmem:[%s5681 + $0x59c] sm:$0xff]
  %v5888 = vld [vmem:[%s5681 + $0x5a4] sm:$0xff]
  %v5889 = vld [vmem:[%s5681 + $0x5ac] sm:$0xf]
  %v5890 = vld [vmem:[%s5681 + $0x5b0] sm:$0xff]
  %v5891 = vld [vmem:[%s5681 + $0x5b8] sm:$0xff]
  %v5892 = vld [vmem:[%s5681 + $0x5c0] sm:$0xff]
  %v5893 = vld [vmem:[%s5681 + $0x5c8] sm:$0xf]
  %v5894 = vld [vmem:[%s5681 + $0x5cc] sm:$0xff]
  %v5895 = vld [vmem:[%s5681 + $0x5d4] sm:$0xff]
  %v5896 = vld [vmem:[%s5681 + $0x5dc] sm:$0xff]
  %v5897 = vld [vmem:[%s5681 + $0x5e4] sm:$0xf]
  %v5898 = vld [vmem:[%s5681 + $0x5e8] sm:$0xff]
  %v5899 = vld [vmem:[%s5681 + $0x5f0] sm:$0xff]
  %v5900 = vld [vmem:[%s5681 + $0x5f8] sm:$0xff]
  %v5901 = vld [vmem:[%s5681 + $0x600] sm:$0xf]
  %v5902 = vld [vmem:[%s5681 + $0x604] sm:$0xff]
  %v5903 = vld [vmem:[%s5681 + $0x60c] sm:$0xff]
  %v5904 = vld [vmem:[%s5681 + $0x614] sm:$0xff]
  %v5905 = vld [vmem:[%s5681 + $0x61c] sm:$0xf]
  %v5906 = vld [vmem:[%s5681 + $0x620] sm:$0xff]
  %v5907 = vld [vmem:[%s5681 + $0x628] sm:$0xff]
  %v5908 = vld [vmem:[%s5681 + $0x630] sm:$0xff]
  %v5909 = vld [vmem:[%s5681 + $0x638] sm:$0xf]
  %v5910 = vld [vmem:[%s5681 + $0x63c] sm:$0xff]
  %v5911 = vld [vmem:[%s5681 + $0x644] sm:$0xff]
  %v5912 = vld [vmem:[%s5681 + $0x64c] sm:$0xff]
  %v5913 = vld [vmem:[%s5681 + $0x654] sm:$0xf]
  %v5914 = vld [vmem:[%s5681 + $0x658] sm:$0xff]
  %v5915 = vld [vmem:[%s5681 + $0x660] sm:$0xff]
  %v5916 = vld [vmem:[%s5681 + $0x668] sm:$0xff]
  %v5917 = vld [vmem:[%s5681 + $0x670] sm:$0xf]
  %v5918 = vld [vmem:[%s5681 + $0x674] sm:$0xff]
  %v5919 = vld [vmem:[%s5681 + $0x67c] sm:$0xff]
  %v5920 = vld [vmem:[%s5681 + $0x684] sm:$0xff]
  %v5921 = vld [vmem:[%s5681 + $0x68c] sm:$0xf]
  %v5922 = vld [vmem:[%s5681 + $0x690] sm:$0xff]
  %v5923 = vld [vmem:[%s5681 + $0x698] sm:$0xff]
  %v5924 = vld [vmem:[%s5681 + $0x6a0] sm:$0xff]
  %v5925 = vld [vmem:[%s5681 + $0x6a8] sm:$0xf]
  %v5926 = vld [vmem:[%s5681 + $0x6ac] sm:$0xff]
  %v5927 = vld [vmem:[%s5681 + $0x6b4] sm:$0xff]
  %v5928 = vld [vmem:[%s5681 + $0x6bc] sm:$0xff]
  %v5929 = vld [vmem:[%s5681 + $0x6c4] sm:$0xf]
  %v5930 = vld [vmem:[%s5681 + $0x6c8] sm:$0xff]
  %v5931 = vld [vmem:[%s5681 + $0x6d0] sm:$0xff]
  %v5932 = vld [vmem:[%s5681 + $0x6d8] sm:$0xff]
  %v5933 = vld [vmem:[%s5681 + $0x6e0] sm:$0xf]
  %v5934 = vld [vmem:[%s5681 + $0x6e4] sm:$0xff]
  %v5935 = vld [vmem:[%s5681 + $0x6ec] sm:$0xff]
  %v5936 = vld [vmem:[%s5681 + $0x6f4] sm:$0xff]
  %v5937 = vld [vmem:[%s5681 + $0x6fc] sm:$0xf]
  %v5938 = vld [vmem:[%s5681 + $0x700] sm:$0xff]
  %v5939 = vld [vmem:[%s5681 + $0x708] sm:$0xff]
  %v5940 = vld [vmem:[%s5681 + $0x710] sm:$0xff]
  %v5941 = vld [vmem:[%s5681 + $0x718] sm:$0xf]
  %v5942 = vld [vmem:[%s5681 + $0x71c] sm:$0xff]
  %v5943 = vld [vmem:[%s5681 + $0x724] sm:$0xff]
  %v5944 = vld [vmem:[%s5681 + $0x72c] sm:$0xff]
  %v5945 = vld [vmem:[%s5681 + $0x734] sm:$0xf]
  %v5946 = vld [vmem:[%s5681 + $0x738] sm:$0xff]
  %v5947 = vld [vmem:[%s5681 + $0x740] sm:$0xff]
  %v5948 = vld [vmem:[%s5681 + $0x748] sm:$0xff]
  %v5949 = vld [vmem:[%s5681 + $0x750] sm:$0xf]
  %v5950 = vld [vmem:[%s5681 + $0x754] sm:$0xff]
  %v5951 = vld [vmem:[%s5681 + $0x75c] sm:$0xff]
  %v5952 = vld [vmem:[%s5681 + $0x764] sm:$0xff]
  %v5953 = vld [vmem:[%s5681 + $0x76c] sm:$0xf]
  %v5954 = vld [vmem:[%s5681 + $0x770] sm:$0xff]
  %v5955 = vld [vmem:[%s5681 + $0x778] sm:$0xff]
  %v5956 = vld [vmem:[%s5681 + $0x780] sm:$0xff]
  %v5957 = vld [vmem:[%s5681 + $0x788] sm:$0xf]
  %v5958 = vld [vmem:[%s5681 + $0x78c] sm:$0xff]
  %v5959 = vld [vmem:[%s5681 + $0x794] sm:$0xff]
  %v5960 = vld [vmem:[%s5681 + $0x79c] sm:$0xff]
  %v5961 = vld [vmem:[%s5681 + $0x7a4] sm:$0xf]
  %v5962 = vld [vmem:[%s5681 + $0x7a8] sm:$0xff]
  %v5963 = vld [vmem:[%s5681 + $0x7b0] sm:$0xff]
  %v5964 = vld [vmem:[%s5681 + $0x7b8] sm:$0xff]
  %v5965 = vld [vmem:[%s5681 + $0x7c0] sm:$0xf]
  %v5966 = vld [vmem:[%s5681 + $0x7c4] sm:$0xff]
  %v5967 = vld [vmem:[%s5681 + $0x7cc] sm:$0xff]
  %v5968 = vld [vmem:[%s5681 + $0x7d4] sm:$0xff]
  %v5969 = vld [vmem:[%s5681 + $0x7dc] sm:$0xf]
  %v5970 = vld [vmem:[%s5681 + $0x7e0] sm:$0xff]
  %v5971 = vld [vmem:[%s5681 + $0x7e8] sm:$0xff]
  %v5972 = vld [vmem:[%s5681 + $0x7f0] sm:$0xff]
  %v5973 = vld [vmem:[%s5681 + $0x7f8] sm:$0xf]
  %v5974 = vld [vmem:[%s5681 + $0x7fc] sm:$0xff]
  %v5975 = vld [vmem:[%s5681 + $0x804] sm:$0xff]
  %v5976 = vld [vmem:[%s5681 + $0x80c] sm:$0xff]
  %v5977 = vld [vmem:[%s5681 + $0x814] sm:$0xf]
  %v5978 = vld [vmem:[%s5681 + $0x818] sm:$0xff]
  %v5979 = vld [vmem:[%s5681 + $0x820] sm:$0xff]
  %v5980 = vld [vmem:[%s5681 + $0x828] sm:$0xff]
  %v5981 = vld [vmem:[%s5681 + $0x830] sm:$0xf]
  %v5982 = vld [vmem:[%s5681 + $0x834] sm:$0xff]
  %v5983 = vld [vmem:[%s5681 + $0x83c] sm:$0xff]
  %v5984 = vld [vmem:[%s5681 + $0x844] sm:$0xff]
  %v5985 = vld [vmem:[%s5681 + $0x84c] sm:$0xf]
  %v5986 = vld [vmem:[%s5681 + $0x850] sm:$0xff]
  %v5987 = vld [vmem:[%s5681 + $0x858] sm:$0xff]
  %v5988 = vld [vmem:[%s5681 + $0x860] sm:$0xff]
  %v5989 = vld [vmem:[%s5681 + $0x868] sm:$0xf]
  %v5990 = vld [vmem:[%s5681 + $0x86c] sm:$0xff]
  %v5991 = vld [vmem:[%s5681 + $0x874] sm:$0xff]
  %v5992 = vld [vmem:[%s5681 + $0x87c] sm:$0xff]
  %v5993 = vld [vmem:[%s5681 + $0x884] sm:$0xf]
  %v5994 = vld [vmem:[%s5681 + $0x888] sm:$0xff]
  %v5995 = vld [vmem:[%s5681 + $0x890] sm:$0xff]
  %v5996 = vld [vmem:[%s5681 + $0x898] sm:$0xff]
  %v5997 = vld [vmem:[%s5681 + $0x8a0] sm:$0xf]
  %v5998 = vld [vmem:[%s5681 + $0x8a4] sm:$0xff]
  %v5999 = vld [vmem:[%s5681 + $0x8ac] sm:$0xff]
  %v6000 = vld [vmem:[%s5681 + $0x8b4] sm:$0xff]
  %v6001 = vld [vmem:[%s5681 + $0x8bc] sm:$0xf]
  %v6002 = vld [vmem:[%s5681 + $0x8c0] sm:$0xff]
  %v6003 = vld [vmem:[%s5681 + $0x8c8] sm:$0xff]
  %v6004 = vld [vmem:[%s5681 + $0x8d0] sm:$0xff]
  %v6005 = vld [vmem:[%s5681 + $0x8d8] sm:$0xf]
  %v6006 = vld [vmem:[%s5681 + $0x8dc] sm:$0xff]
  %v6007 = vld [vmem:[%s5681 + $0x8e4] sm:$0xff]
  %v6008 = vld [vmem:[%s5681 + $0x8ec] sm:$0xff]
  %v6009 = vld [vmem:[%s5681 + $0x8f4] sm:$0xf]
  %v6010 = vld [vmem:[%s5681 + $0x8f8] sm:$0xff]
  %v6011 = vld [vmem:[%s5681 + $0x900] sm:$0xff]
  %v6012 = vld [vmem:[%s5681 + $0x908] sm:$0xff]
  %v6013 = vld [vmem:[%s5681 + $0x910] sm:$0xf]
  %v6014 = vld [vmem:[%s5681 + $0x914] sm:$0xff]
  %v6015 = vld [vmem:[%s5681 + $0x91c] sm:$0xff]
  %v6016 = vld [vmem:[%s5681 + $0x924] sm:$0xff]
  %v6017 = vld [vmem:[%s5681 + $0x92c] sm:$0xf]
  %v6018 = vld [vmem:[%s5681 + $0x930] sm:$0xff]
  %v6019 = vld [vmem:[%s5681 + $0x938] sm:$0xff]
  %v6020 = vld [vmem:[%s5681 + $0x940] sm:$0xff]
  %v6021 = vld [vmem:[%s5681 + $0x948] sm:$0xf]
  %v6022 = vld [vmem:[%s5681 + $0x94c] sm:$0xff]
  %v6023 = vld [vmem:[%s5681 + $0x954] sm:$0xff]
  %v6024 = vld [vmem:[%s5681 + $0x95c] sm:$0xff]
  %v6025 = vld [vmem:[%s5681 + $0x964] sm:$0xf]
  %v6026 = vld [vmem:[%s5681 + $0x968] sm:$0xff]
  %v6027 = vld [vmem:[%s5681 + $0x970] sm:$0xff]
  %v6028 = vld [vmem:[%s5681 + $0x978] sm:$0xff]
  %v6029 = vld [vmem:[%s5681 + $0x980] sm:$0xf]
  %v6030 = vld [vmem:[%s5681 + $0x984] sm:$0xff]
  %v6031 = vld [vmem:[%s5681 + $0x98c] sm:$0xff]
  %v6032 = vld [vmem:[%s5681 + $0x994] sm:$0xff]
  %v6033 = vld [vmem:[%s5681 + $0x99c] sm:$0xf]
  %v6034 = vld [vmem:[%s5681 + $0x9a0] sm:$0xff]
  %v6035 = vld [vmem:[%s5681 + $0x9a8] sm:$0xff]
  %v6036 = vld [vmem:[%s5681 + $0x9b0] sm:$0xff]
  %v6037 = vld [vmem:[%s5681 + $0x9b8] sm:$0xf]
  %v6038 = vld [vmem:[%s5681 + $0x9bc] sm:$0xff]
  %v6039 = vld [vmem:[%s5681 + $0x9c4] sm:$0xff]
  %v6040 = vld [vmem:[%s5681 + $0x9cc] sm:$0xff]
  %v6041 = vld [vmem:[%s5681 + $0x9d4] sm:$0xf]
  %v6042 = vld [vmem:[%s5681 + $0x9d8] sm:$0xff]
  %v6043 = vld [vmem:[%s5681 + $0x9e0] sm:$0xff]
  %v6044 = vld [vmem:[%s5681 + $0x9e8] sm:$0xff]
  %v6045 = vld [vmem:[%s5681 + $0x9f0] sm:$0xf]
  %v6046 = vld [vmem:[%s5681 + $0x9f4] sm:$0xff]
  %v6047 = vld [vmem:[%s5681 + $0x9fc] sm:$0xff]
  %v6048 = vld [vmem:[%s5681 + $0xa04] sm:$0xff]
  %v6049 = vld [vmem:[%s5681 + $0xa0c] sm:$0xf]
  %v6050 = vld [vmem:[%s5681 + $0xa10] sm:$0xff]
  %v6051 = vld [vmem:[%s5681 + $0xa18] sm:$0xff]
  %v6052 = vld [vmem:[%s5681 + $0xa20] sm:$0xff]
  %v6053 = vld [vmem:[%s5681 + $0xa28] sm:$0xf]
  %v6054 = vld [vmem:[%s5681 + $0xa2c] sm:$0xff]
  %v6055 = vld [vmem:[%s5681 + $0xa34] sm:$0xff]
  %v6056 = vld [vmem:[%s5681 + $0xa3c] sm:$0xff]
  %v6057 = vld [vmem:[%s5681 + $0xa44] sm:$0xf]
  %v6058 = vld [vmem:[%s5681 + $0xa48] sm:$0xff]
  %v6059 = vld [vmem:[%s5681 + $0xa50] sm:$0xff]
  %v6060 = vld [vmem:[%s5681 + $0xa58] sm:$0xff]
  %v6061 = vld [vmem:[%s5681 + $0xa60] sm:$0xf]
  %v6062 = vld [vmem:[%s5681 + $0xa64] sm:$0xff]
  %v6063 = vld [vmem:[%s5681 + $0xa6c] sm:$0xff]
  %v6064 = vld [vmem:[%s5681 + $0xa74] sm:$0xff]
  %v6065 = vld [vmem:[%s5681 + $0xa7c] sm:$0xf]
  %v6066 = vld [vmem:[%s5681 + $0xa80] sm:$0xff]
  %v6067 = vld [vmem:[%s5681 + $0xa88] sm:$0xff]
  %v6068 = vld [vmem:[%s5681 + $0xa90] sm:$0xff]
  %v6069 = vld [vmem:[%s5681 + $0xa98] sm:$0xf]
  %v6070 = vld [vmem:[%s5681 + $0xa9c] sm:$0xff]
  %v6071 = vld [vmem:[%s5681 + $0xaa4] sm:$0xff]
  %v6072 = vld [vmem:[%s5681 + $0xaac] sm:$0xff]
  %v6073 = vld [vmem:[%s5681 + $0xab4] sm:$0xf]
  %v6466 = vunpack.c.l.b16 %v5682
  %v6467 = vunpack.c.h.b16 %v5682
  %v6468 = vunpack.c.l.b16 %v5683
  %v6469 = vunpack.c.h.b16 %v5683
  %v6470 = vunpack.c.l.b16 %v5684
  %v6471 = vunpack.c.h.b16 %v5684
  %v6472 = vunpack.c.l.b16 %v5685
  %v6473 = vunpack.c.l.b16 %v5686
  %v6474 = vunpack.c.h.b16 %v5686
  %v6475 = vunpack.c.l.b16 %v5687
  %v6476 = vunpack.c.h.b16 %v5687
  %v6477 = vunpack.c.l.b16 %v5688
  %v6478 = vunpack.c.h.b16 %v5688
  %v6479 = vunpack.c.l.b16 %v5689
  %v6480 = vunpack.c.l.b16 %v5690
  %v6481 = vunpack.c.h.b16 %v5690
  %v6482 = vunpack.c.l.b16 %v5691
  %v6483 = vunpack.c.h.b16 %v5691
  %v6484 = vunpack.c.l.b16 %v5692
  %v6485 = vunpack.c.h.b16 %v5692
  %v6486 = vunpack.c.l.b16 %v5693
  %v6487 = vunpack.c.l.b16 %v5694
  %v6488 = vunpack.c.h.b16 %v5694
  %v6489 = vunpack.c.l.b16 %v5695
  %v6490 = vunpack.c.h.b16 %v5695
  %v6491 = vunpack.c.l.b16 %v5696
  %v6492 = vunpack.c.h.b16 %v5696
  %v6493 = vunpack.c.l.b16 %v5697
  %v6494 = vunpack.c.l.b16 %v5698
  %v6495 = vunpack.c.h.b16 %v5698
  %v6496 = vunpack.c.l.b16 %v5699
  %v6497 = vunpack.c.h.b16 %v5699
  %v6498 = vunpack.c.l.b16 %v5700
  %v6499 = vunpack.c.h.b16 %v5700
  %v6500 = vunpack.c.l.b16 %v5701
  %v6501 = vunpack.c.l.b16 %v5702
  %v6502 = vunpack.c.h.b16 %v5702
  %v6503 = vunpack.c.l.b16 %v5703
  %v6504 = vunpack.c.h.b16 %v5703
  %v6505 = vunpack.c.l.b16 %v5704
  %v6506 = vunpack.c.h.b16 %v5704
  %v6507 = vunpack.c.l.b16 %v5705
  %v6508 = vunpack.c.l.b16 %v5706
  %v6509 = vunpack.c.h.b16 %v5706
  %v6510 = vunpack.c.l.b16 %v5707
  %v6511 = vunpack.c.h.b16 %v5707
  %v6512 = vunpack.c.l.b16 %v5708
  %v6513 = vunpack.c.h.b16 %v5708
  %v6514 = vunpack.c.l.b16 %v5709
  %v6515 = vunpack.c.l.b16 %v5710
  %v6516 = vunpack.c.h.b16 %v5710
  %v6517 = vunpack.c.l.b16 %v5711
  %v6518 = vunpack.c.h.b16 %v5711
  %v6519 = vunpack.c.l.b16 %v5712
  %v6520 = vunpack.c.h.b16 %v5712
  %v6521 = vunpack.c.l.b16 %v5713
  %v6522 = vunpack.c.l.b16 %v5714
  %v6523 = vunpack.c.h.b16 %v5714
  %v6524 = vunpack.c.l.b16 %v5715
  %v6525 = vunpack.c.h.b16 %v5715
  %v6526 = vunpack.c.l.b16 %v5716
  %v6527 = vunpack.c.h.b16 %v5716
  %v6528 = vunpack.c.l.b16 %v5717
  %v6529 = vunpack.c.l.b16 %v5718
  %v6530 = vunpack.c.h.b16 %v5718
  %v6531 = vunpack.c.l.b16 %v5719
  %v6532 = vunpack.c.h.b16 %v5719
  %v6533 = vunpack.c.l.b16 %v5720
  %v6534 = vunpack.c.h.b16 %v5720
  %v6535 = vunpack.c.l.b16 %v5721
  %v6536 = vunpack.c.l.b16 %v5722
  %v6537 = vunpack.c.h.b16 %v5722
  %v6538 = vunpack.c.l.b16 %v5723
  %v6539 = vunpack.c.h.b16 %v5723
  %v6540 = vunpack.c.l.b16 %v5724
  %v6541 = vunpack.c.h.b16 %v5724
  %v6542 = vunpack.c.l.b16 %v5725
  %v6543 = vunpack.c.l.b16 %v5726
  %v6544 = vunpack.c.h.b16 %v5726
  %v6545 = vunpack.c.l.b16 %v5727
  %v6546 = vunpack.c.h.b16 %v5727
  %v6547 = vunpack.c.l.b16 %v5728
  %v6548 = vunpack.c.h.b16 %v5728
  %v6549 = vunpack.c.l.b16 %v5729
  %v6550 = vunpack.c.l.b16 %v5730
  %v6551 = vunpack.c.h.b16 %v5730
  %v6552 = vunpack.c.l.b16 %v5731
  %v6553 = vunpack.c.h.b16 %v5731
  %v6554 = vunpack.c.l.b16 %v5732
  %v6555 = vunpack.c.h.b16 %v5732
  %v6556 = vunpack.c.l.b16 %v5733
  %v6557 = vunpack.c.l.b16 %v5734
  %v6558 = vunpack.c.h.b16 %v5734
  %v6559 = vunpack.c.l.b16 %v5735
  %v6560 = vunpack.c.h.b16 %v5735
  %v6561 = vunpack.c.l.b16 %v5736
  %v6562 = vunpack.c.h.b16 %v5736
  %v6563 = vunpack.c.l.b16 %v5737
  %v6564 = vunpack.c.l.b16 %v5738
  %v6565 = vunpack.c.h.b16 %v5738
  %v6566 = vunpack.c.l.b16 %v5739
  %v6567 = vunpack.c.h.b16 %v5739
  %v6568 = vunpack.c.l.b16 %v5740
  %v6569 = vunpack.c.h.b16 %v5740
  %v6570 = vunpack.c.l.b16 %v5741
  %v6571 = vunpack.c.l.b16 %v5742
  %v6572 = vunpack.c.h.b16 %v5742
  %v6573 = vunpack.c.l.b16 %v5743
  %v6574 = vunpack.c.h.b16 %v5743
  %v6575 = vunpack.c.l.b16 %v5744
  %v6576 = vunpack.c.h.b16 %v5744
  %v6577 = vunpack.c.l.b16 %v5745
  %v6578 = vunpack.c.l.b16 %v5746
  %v6579 = vunpack.c.h.b16 %v5746
  %v6580 = vunpack.c.l.b16 %v5747
  %v6581 = vunpack.c.h.b16 %v5747
  %v6582 = vunpack.c.l.b16 %v5748
  %v6583 = vunpack.c.h.b16 %v5748
  %v6584 = vunpack.c.l.b16 %v5749
  %v6585 = vunpack.c.l.b16 %v5750
  %v6586 = vunpack.c.h.b16 %v5750
  %v6587 = vunpack.c.l.b16 %v5751
  %v6588 = vunpack.c.h.b16 %v5751
  %v6589 = vunpack.c.l.b16 %v5752
  %v6590 = vunpack.c.h.b16 %v5752
  %v6591 = vunpack.c.l.b16 %v5753
  %v6592 = vunpack.c.l.b16 %v5754
  %v6593 = vunpack.c.h.b16 %v5754
  %v6594 = vunpack.c.l.b16 %v5755
  %v6595 = vunpack.c.h.b16 %v5755
  %v6596 = vunpack.c.l.b16 %v5756
  %v6597 = vunpack.c.h.b16 %v5756
  %v6598 = vunpack.c.l.b16 %v5757
  %v6599 = vunpack.c.l.b16 %v5758
  %v6600 = vunpack.c.h.b16 %v5758
  %v6601 = vunpack.c.l.b16 %v5759
  %v6602 = vunpack.c.h.b16 %v5759
  %v6603 = vunpack.c.l.b16 %v5760
  %v6604 = vunpack.c.h.b16 %v5760
  %v6605 = vunpack.c.l.b16 %v5761
  %v6606 = vunpack.c.l.b16 %v5762
  %v6607 = vunpack.c.h.b16 %v5762
  %v6608 = vunpack.c.l.b16 %v5763
  %v6609 = vunpack.c.h.b16 %v5763
  %v6610 = vunpack.c.l.b16 %v5764
  %v6611 = vunpack.c.h.b16 %v5764
  %v6612 = vunpack.c.l.b16 %v5765
  %v6613 = vunpack.c.l.b16 %v5766
  %v6614 = vunpack.c.h.b16 %v5766
  %v6615 = vunpack.c.l.b16 %v5767
  %v6616 = vunpack.c.h.b16 %v5767
  %v6617 = vunpack.c.l.b16 %v5768
  %v6618 = vunpack.c.h.b16 %v5768
  %v6619 = vunpack.c.l.b16 %v5769
  %v6620 = vunpack.c.l.b16 %v5770
  %v6621 = vunpack.c.h.b16 %v5770
  %v6622 = vunpack.c.l.b16 %v5771
  %v6623 = vunpack.c.h.b16 %v5771
  %v6624 = vunpack.c.l.b16 %v5772
  %v6625 = vunpack.c.h.b16 %v5772
  %v6626 = vunpack.c.l.b16 %v5773
  %v6627 = vunpack.c.l.b16 %v5774
  %v6628 = vunpack.c.h.b16 %v5774
  %v6629 = vunpack.c.l.b16 %v5775
  %v6630 = vunpack.c.h.b16 %v5775
  %v6631 = vunpack.c.l.b16 %v5776
  %v6632 = vunpack.c.h.b16 %v5776
  %v6633 = vunpack.c.l.b16 %v5777
  %v6634 = vunpack.c.l.b16 %v5778
  %v6635 = vunpack.c.h.b16 %v5778
  %v6636 = vunpack.c.l.b16 %v5779
  %v6637 = vunpack.c.h.b16 %v5779
  %v6638 = vunpack.c.l.b16 %v5780
  %v6639 = vunpack.c.h.b16 %v5780
  %v6640 = vunpack.c.l.b16 %v5781
  %v6641 = vunpack.c.l.b16 %v5782
  %v6642 = vunpack.c.h.b16 %v5782
  %v6643 = vunpack.c.l.b16 %v5783
  %v6644 = vunpack.c.h.b16 %v5783
  %v6645 = vunpack.c.l.b16 %v5784
  %v6646 = vunpack.c.h.b16 %v5784
  %v6647 = vunpack.c.l.b16 %v5785
  %v6648 = vunpack.c.l.b16 %v5786
  %v6649 = vunpack.c.h.b16 %v5786
  %v6650 = vunpack.c.l.b16 %v5787
  %v6651 = vunpack.c.h.b16 %v5787
  %v6652 = vunpack.c.l.b16 %v5788
  %v6653 = vunpack.c.h.b16 %v5788
  %v6654 = vunpack.c.l.b16 %v5789
  %v6655 = vunpack.c.l.b16 %v5790
  %v6656 = vunpack.c.h.b16 %v5790
  %v6657 = vunpack.c.l.b16 %v5791
  %v6658 = vunpack.c.h.b16 %v5791
  %v6659 = vunpack.c.l.b16 %v5792
  %v6660 = vunpack.c.h.b16 %v5792
  %v6661 = vunpack.c.l.b16 %v5793
  %v6662 = vunpack.c.l.b16 %v5794
  %v6663 = vunpack.c.h.b16 %v5794
  %v6664 = vunpack.c.l.b16 %v5795
  %v6665 = vunpack.c.h.b16 %v5795
  %v6666 = vunpack.c.l.b16 %v5796
  %v6667 = vunpack.c.h.b16 %v5796
  %v6668 = vunpack.c.l.b16 %v5797
  %v6669 = vunpack.c.l.b16 %v5798
  %v6670 = vunpack.c.h.b16 %v5798
  %v6671 = vunpack.c.l.b16 %v5799
  %v6672 = vunpack.c.h.b16 %v5799
  %v6673 = vunpack.c.l.b16 %v5800
  %v6674 = vunpack.c.h.b16 %v5800
  %v6675 = vunpack.c.l.b16 %v5801
  %v6676 = vunpack.c.l.b16 %v5802
  %v6677 = vunpack.c.h.b16 %v5802
  %v6678 = vunpack.c.l.b16 %v5803
  %v6679 = vunpack.c.h.b16 %v5803
  %v6680 = vunpack.c.l.b16 %v5804
  %v6681 = vunpack.c.h.b16 %v5804
  %v6682 = vunpack.c.l.b16 %v5805
  %v6683 = vunpack.c.l.b16 %v5806
  %v6684 = vunpack.c.h.b16 %v5806
  %v6685 = vunpack.c.l.b16 %v5807
  %v6686 = vunpack.c.h.b16 %v5807
  %v6687 = vunpack.c.l.b16 %v5808
  %v6688 = vunpack.c.h.b16 %v5808
  %v6689 = vunpack.c.l.b16 %v5809
  %v6690 = vunpack.c.l.b16 %v5810
  %v6691 = vunpack.c.h.b16 %v5810
  %v6692 = vunpack.c.l.b16 %v5811
  %v6693 = vunpack.c.h.b16 %v5811
  %v6694 = vunpack.c.l.b16 %v5812
  %v6695 = vunpack.c.h.b16 %v5812
  %v6696 = vunpack.c.l.b16 %v5813
  %v6697 = vunpack.c.l.b16 %v5814
  %v6698 = vunpack.c.h.b16 %v5814
  %v6699 = vunpack.c.l.b16 %v5815
  %v6700 = vunpack.c.h.b16 %v5815
  %v6701 = vunpack.c.l.b16 %v5816
  %v6702 = vunpack.c.h.b16 %v5816
  %v6703 = vunpack.c.l.b16 %v5817
  %v6704 = vunpack.c.l.b16 %v5818
  %v6705 = vunpack.c.h.b16 %v5818
  %v6706 = vunpack.c.l.b16 %v5819
  %v6707 = vunpack.c.h.b16 %v5819
  %v6708 = vunpack.c.l.b16 %v5820
  %v6709 = vunpack.c.h.b16 %v5820
  %v6710 = vunpack.c.l.b16 %v5821
  %v6711 = vunpack.c.l.b16 %v5822
  %v6712 = vunpack.c.h.b16 %v5822
  %v6713 = vunpack.c.l.b16 %v5823
  %v6714 = vunpack.c.h.b16 %v5823
  %v6715 = vunpack.c.l.b16 %v5824
  %v6716 = vunpack.c.h.b16 %v5824
  %v6717 = vunpack.c.l.b16 %v5825
  %v6718 = vunpack.c.l.b16 %v5826
  %v6719 = vunpack.c.h.b16 %v5826
  %v6720 = vunpack.c.l.b16 %v5827
  %v6721 = vunpack.c.h.b16 %v5827
  %v6722 = vunpack.c.l.b16 %v5828
  %v6723 = vunpack.c.h.b16 %v5828
  %v6724 = vunpack.c.l.b16 %v5829
  %v6725 = vunpack.c.l.b16 %v5830
  %v6726 = vunpack.c.h.b16 %v5830
  %v6727 = vunpack.c.l.b16 %v5831
  %v6728 = vunpack.c.h.b16 %v5831
  %v6729 = vunpack.c.l.b16 %v5832
  %v6730 = vunpack.c.h.b16 %v5832
  %v6731 = vunpack.c.l.b16 %v5833
  %v6732 = vunpack.c.l.b16 %v5834
  %v6733 = vunpack.c.h.b16 %v5834
  %v6734 = vunpack.c.l.b16 %v5835
  %v6735 = vunpack.c.h.b16 %v5835
  %v6736 = vunpack.c.l.b16 %v5836
  %v6737 = vunpack.c.h.b16 %v5836
  %v6738 = vunpack.c.l.b16 %v5837
  %v6739 = vunpack.c.l.b16 %v5838
  %v6740 = vunpack.c.h.b16 %v5838
  %v6741 = vunpack.c.l.b16 %v5839
  %v6742 = vunpack.c.h.b16 %v5839
  %v6743 = vunpack.c.l.b16 %v5840
  %v6744 = vunpack.c.h.b16 %v5840
  %v6745 = vunpack.c.l.b16 %v5841
  %v6746 = vunpack.c.l.b16 %v5842
  %v6747 = vunpack.c.h.b16 %v5842
  %v6748 = vunpack.c.l.b16 %v5843
  %v6749 = vunpack.c.h.b16 %v5843
  %v6750 = vunpack.c.l.b16 %v5844
  %v6751 = vunpack.c.h.b16 %v5844
  %v6752 = vunpack.c.l.b16 %v5845
  %v6753 = vunpack.c.l.b16 %v5846
  %v6754 = vunpack.c.h.b16 %v5846
  %v6755 = vunpack.c.l.b16 %v5847
  %v6756 = vunpack.c.h.b16 %v5847
  %v6757 = vunpack.c.l.b16 %v5848
  %v6758 = vunpack.c.h.b16 %v5848
  %v6759 = vunpack.c.l.b16 %v5849
  %v6760 = vunpack.c.l.b16 %v5850
  %v6761 = vunpack.c.h.b16 %v5850
  %v6762 = vunpack.c.l.b16 %v5851
  %v6763 = vunpack.c.h.b16 %v5851
  %v6764 = vunpack.c.l.b16 %v5852
  %v6765 = vunpack.c.h.b16 %v5852
  %v6766 = vunpack.c.l.b16 %v5853
  %v6767 = vunpack.c.l.b16 %v5854
  %v6768 = vunpack.c.h.b16 %v5854
  %v6769 = vunpack.c.l.b16 %v5855
  %v6770 = vunpack.c.h.b16 %v5855
  %v6771 = vunpack.c.l.b16 %v5856
  %v6772 = vunpack.c.h.b16 %v5856
  %v6773 = vunpack.c.l.b16 %v5857
  %v6774 = vunpack.c.l.b16 %v5858
  %v6775 = vunpack.c.h.b16 %v5858
  %v6776 = vunpack.c.l.b16 %v5859
  %v6777 = vunpack.c.h.b16 %v5859
  %v6778 = vunpack.c.l.b16 %v5860
  %v6779 = vunpack.c.h.b16 %v5860
  %v6780 = vunpack.c.l.b16 %v5861
  %v6781 = vunpack.c.l.b16 %v5862
  %v6782 = vunpack.c.h.b16 %v5862
  %v6783 = vunpack.c.l.b16 %v5863
  %v6784 = vunpack.c.h.b16 %v5863
  %v6785 = vunpack.c.l.b16 %v5864
  %v6786 = vunpack.c.h.b16 %v5864
  %v6787 = vunpack.c.l.b16 %v5865
  %v6788 = vunpack.c.l.b16 %v5866
  %v6789 = vunpack.c.h.b16 %v5866
  %v6790 = vunpack.c.l.b16 %v5867
  %v6791 = vunpack.c.h.b16 %v5867
  %v6792 = vunpack.c.l.b16 %v5868
  %v6793 = vunpack.c.h.b16 %v5868
  %v6794 = vunpack.c.l.b16 %v5869
  %v6795 = vunpack.c.l.b16 %v5870
  %v6796 = vunpack.c.h.b16 %v5870
  %v6797 = vunpack.c.l.b16 %v5871
  %v6798 = vunpack.c.h.b16 %v5871
  %v6799 = vunpack.c.l.b16 %v5872
  %v6800 = vunpack.c.h.b16 %v5872
  %v6801 = vunpack.c.l.b16 %v5873
  %v6802 = vunpack.c.l.b16 %v5874
  %v6803 = vunpack.c.h.b16 %v5874
  %v6804 = vunpack.c.l.b16 %v5875
  %v6805 = vunpack.c.h.b16 %v5875
  %v6806 = vunpack.c.l.b16 %v5876
  %v6807 = vunpack.c.h.b16 %v5876
  %v6808 = vunpack.c.l.b16 %v5877
  %v6809 = vunpack.c.l.b16 %v5878
  %v6810 = vunpack.c.h.b16 %v5878
  %v6811 = vunpack.c.l.b16 %v5879
  %v6812 = vunpack.c.h.b16 %v5879
  %v6813 = vunpack.c.l.b16 %v5880
  %v6814 = vunpack.c.h.b16 %v5880
  %v6815 = vunpack.c.l.b16 %v5881
  %v6816 = vunpack.c.l.b16 %v5882
  %v6817 = vunpack.c.h.b16 %v5882
  %v6818 = vunpack.c.l.b16 %v5883
  %v6819 = vunpack.c.h.b16 %v5883
  %v6820 = vunpack.c.l.b16 %v5884
  %v6821 = vunpack.c.h.b16 %v5884
  %v6822 = vunpack.c.l.b16 %v5885
  %v6823 = vunpack.c.l.b16 %v5886
  %v6824 = vunpack.c.h.b16 %v5886
  %v6825 = vunpack.c.l.b16 %v5887
  %v6826 = vunpack.c.h.b16 %v5887
  %v6827 = vunpack.c.l.b16 %v5888
  %v6828 = vunpack.c.h.b16 %v5888
  %v6829 = vunpack.c.l.b16 %v5889
  %v6830 = vunpack.c.l.b16 %v5890
  %v6831 = vunpack.c.h.b16 %v5890
  %v6832 = vunpack.c.l.b16 %v5891
  %v6833 = vunpack.c.h.b16 %v5891
  %v6834 = vunpack.c.l.b16 %v5892
  %v6835 = vunpack.c.h.b16 %v5892
  %v6836 = vunpack.c.l.b16 %v5893
  %v6837 = vunpack.c.l.b16 %v5894
  %v6838 = vunpack.c.h.b16 %v5894
  %v6839 = vunpack.c.l.b16 %v5895
  %v6840 = vunpack.c.h.b16 %v5895
  %v6841 = vunpack.c.l.b16 %v5896
  %v6842 = vunpack.c.h.b16 %v5896
  %v6843 = vunpack.c.l.b16 %v5897
  %v6844 = vunpack.c.l.b16 %v5898
  %v6845 = vunpack.c.h.b16 %v5898
  %v6846 = vunpack.c.l.b16 %v5899
  %v6847 = vunpack.c.h.b16 %v5899
  %v6848 = vunpack.c.l.b16 %v5900
  %v6849 = vunpack.c.h.b16 %v5900
  %v6850 = vunpack.c.l.b16 %v5901
  %v6851 = vunpack.c.l.b16 %v5902
  %v6852 = vunpack.c.h.b16 %v5902
  %v6853 = vunpack.c.l.b16 %v5903
  %v6854 = vunpack.c.h.b16 %v5903
  %v6855 = vunpack.c.l.b16 %v5904
  %v6856 = vunpack.c.h.b16 %v5904
  %v6857 = vunpack.c.l.b16 %v5905
  %v6858 = vunpack.c.l.b16 %v5906
  %v6859 = vunpack.c.h.b16 %v5906
  %v6860 = vunpack.c.l.b16 %v5907
  %v6861 = vunpack.c.h.b16 %v5907
  %v6862 = vunpack.c.l.b16 %v5908
  %v6863 = vunpack.c.h.b16 %v5908
  %v6864 = vunpack.c.l.b16 %v5909
  %v6865 = vunpack.c.l.b16 %v5910
  %v6866 = vunpack.c.h.b16 %v5910
  %v6867 = vunpack.c.l.b16 %v5911
  %v6868 = vunpack.c.h.b16 %v5911
  %v6869 = vunpack.c.l.b16 %v5912
  %v6870 = vunpack.c.h.b16 %v5912
  %v6871 = vunpack.c.l.b16 %v5913
  %v6872 = vunpack.c.l.b16 %v5914
  %v6873 = vunpack.c.h.b16 %v5914
  %v6874 = vunpack.c.l.b16 %v5915
  %v6875 = vunpack.c.h.b16 %v5915
  %v6876 = vunpack.c.l.b16 %v5916
  %v6877 = vunpack.c.h.b16 %v5916
  %v6878 = vunpack.c.l.b16 %v5917
  %v6879 = vunpack.c.l.b16 %v5918
  %v6880 = vunpack.c.h.b16 %v5918
  %v6881 = vunpack.c.l.b16 %v5919
  %v6882 = vunpack.c.h.b16 %v5919
  %v6883 = vunpack.c.l.b16 %v5920
  %v6884 = vunpack.c.h.b16 %v5920
  %v6885 = vunpack.c.l.b16 %v5921
  %v6886 = vunpack.c.l.b16 %v5922
  %v6887 = vunpack.c.h.b16 %v5922
  %v6888 = vunpack.c.l.b16 %v5923
  %v6889 = vunpack.c.h.b16 %v5923
  %v6890 = vunpack.c.l.b16 %v5924
  %v6891 = vunpack.c.h.b16 %v5924
  %v6892 = vunpack.c.l.b16 %v5925
  %v6893 = vunpack.c.l.b16 %v5926
  %v6894 = vunpack.c.h.b16 %v5926
  %v6895 = vunpack.c.l.b16 %v5927
  %v6896 = vunpack.c.h.b16 %v5927
  %v6897 = vunpack.c.l.b16 %v5928
  %v6898 = vunpack.c.h.b16 %v5928
  %v6899 = vunpack.c.l.b16 %v5929
  %v6900 = vunpack.c.l.b16 %v5930
  %v6901 = vunpack.c.h.b16 %v5930
  %v6902 = vunpack.c.l.b16 %v5931
  %v6903 = vunpack.c.h.b16 %v5931
  %v6904 = vunpack.c.l.b16 %v5932
  %v6905 = vunpack.c.h.b16 %v5932
  %v6906 = vunpack.c.l.b16 %v5933
  %v6907 = vunpack.c.l.b16 %v5934
  %v6908 = vunpack.c.h.b16 %v5934
  %v6909 = vunpack.c.l.b16 %v5935
  %v6910 = vunpack.c.h.b16 %v5935
  %v6911 = vunpack.c.l.b16 %v5936
  %v6912 = vunpack.c.h.b16 %v5936
  %v6913 = vunpack.c.l.b16 %v5937
  %v6914 = vunpack.c.l.b16 %v5938
  %v6915 = vunpack.c.h.b16 %v5938
  %v6916 = vunpack.c.l.b16 %v5939
  %v6917 = vunpack.c.h.b16 %v5939
  %v6918 = vunpack.c.l.b16 %v5940
  %v6919 = vunpack.c.h.b16 %v5940
  %v6920 = vunpack.c.l.b16 %v5941
  %v6921 = vunpack.c.l.b16 %v5942
  %v6922 = vunpack.c.h.b16 %v5942
  %v6923 = vunpack.c.l.b16 %v5943
  %v6924 = vunpack.c.h.b16 %v5943
  %v6925 = vunpack.c.l.b16 %v5944
  %v6926 = vunpack.c.h.b16 %v5944
  %v6927 = vunpack.c.l.b16 %v5945
  %v6928 = vunpack.c.l.b16 %v5946
  %v6929 = vunpack.c.h.b16 %v5946
  %v6930 = vunpack.c.l.b16 %v5947
  %v6931 = vunpack.c.h.b16 %v5947
  %v6932 = vunpack.c.l.b16 %v5948
  %v6933 = vunpack.c.h.b16 %v5948
  %v6934 = vunpack.c.l.b16 %v5949
  %v6935 = vunpack.c.l.b16 %v5950
  %v6936 = vunpack.c.h.b16 %v5950
  %v6937 = vunpack.c.l.b16 %v5951
  %v6938 = vunpack.c.h.b16 %v5951
  %v6939 = vunpack.c.l.b16 %v5952
  %v6940 = vunpack.c.h.b16 %v5952
  %v6941 = vunpack.c.l.b16 %v5953
  %v6942 = vunpack.c.l.b16 %v5954
  %v6943 = vunpack.c.h.b16 %v5954
  %v6944 = vunpack.c.l.b16 %v5955
  %v6945 = vunpack.c.h.b16 %v5955
  %v6946 = vunpack.c.l.b16 %v5956
  %v6947 = vunpack.c.h.b16 %v5956
  %v6948 = vunpack.c.l.b16 %v5957
  %v6949 = vunpack.c.l.b16 %v5958
  %v6950 = vunpack.c.h.b16 %v5958
  %v6951 = vunpack.c.l.b16 %v5959
  %v6952 = vunpack.c.h.b16 %v5959
  %v6953 = vunpack.c.l.b16 %v5960
  %v6954 = vunpack.c.h.b16 %v5960
  %v6955 = vunpack.c.l.b16 %v5961
  %v6956 = vunpack.c.l.b16 %v5962
  %v6957 = vunpack.c.h.b16 %v5962
  %v6958 = vunpack.c.l.b16 %v5963
  %v6959 = vunpack.c.h.b16 %v5963
  %v6960 = vunpack.c.l.b16 %v5964
  %v6961 = vunpack.c.h.b16 %v5964
  %v6962 = vunpack.c.l.b16 %v5965
  %v6963 = vunpack.c.l.b16 %v5966
  %v6964 = vunpack.c.h.b16 %v5966
  %v6965 = vunpack.c.l.b16 %v5967
  %v6966 = vunpack.c.h.b16 %v5967
  %v6967 = vunpack.c.l.b16 %v5968
  %v6968 = vunpack.c.h.b16 %v5968
  %v6969 = vunpack.c.l.b16 %v5969
  %v6970 = vunpack.c.l.b16 %v5970
  %v6971 = vunpack.c.h.b16 %v5970
  %v6972 = vunpack.c.l.b16 %v5971
  %v6973 = vunpack.c.h.b16 %v5971
  %v6974 = vunpack.c.l.b16 %v5972
  %v6975 = vunpack.c.h.b16 %v5972
  %v6976 = vunpack.c.l.b16 %v5973
  %v6977 = vunpack.c.l.b16 %v5974
  %v6978 = vunpack.c.h.b16 %v5974
  %v6979 = vunpack.c.l.b16 %v5975
  %v6980 = vunpack.c.h.b16 %v5975
  %v6981 = vunpack.c.l.b16 %v5976
  %v6982 = vunpack.c.h.b16 %v5976
  %v6983 = vunpack.c.l.b16 %v5977
  %v6984 = vunpack.c.l.b16 %v5978
  %v6985 = vunpack.c.h.b16 %v5978
  %v6986 = vunpack.c.l.b16 %v5979
  %v6987 = vunpack.c.h.b16 %v5979
  %v6988 = vunpack.c.l.b16 %v5980
  %v6989 = vunpack.c.h.b16 %v5980
  %v6990 = vunpack.c.l.b16 %v5981
  %v6991 = vunpack.c.l.b16 %v5982
  %v6992 = vunpack.c.h.b16 %v5982
  %v6993 = vunpack.c.l.b16 %v5983
  %v6994 = vunpack.c.h.b16 %v5983
  %v6995 = vunpack.c.l.b16 %v5984
  %v6996 = vunpack.c.h.b16 %v5984
  %v6997 = vunpack.c.l.b16 %v5985
  %v6998 = vunpack.c.l.b16 %v5986
  %v6999 = vunpack.c.h.b16 %v5986
  %v7000 = vunpack.c.l.b16 %v5987
  %v7001 = vunpack.c.h.b16 %v5987
  %v7002 = vunpack.c.l.b16 %v5988
  %v7003 = vunpack.c.h.b16 %v5988
  %v7004 = vunpack.c.l.b16 %v5989
  %v7005 = vunpack.c.l.b16 %v5990
  %v7006 = vunpack.c.h.b16 %v5990
  %v7007 = vunpack.c.l.b16 %v5991
  %v7008 = vunpack.c.h.b16 %v5991
  %v7009 = vunpack.c.l.b16 %v5992
  %v7010 = vunpack.c.h.b16 %v5992
  %v7011 = vunpack.c.l.b16 %v5993
  %v7012 = vunpack.c.l.b16 %v5994
  %v7013 = vunpack.c.h.b16 %v5994
  %v7014 = vunpack.c.l.b16 %v5995
  %v7015 = vunpack.c.h.b16 %v5995
  %v7016 = vunpack.c.l.b16 %v5996
  %v7017 = vunpack.c.h.b16 %v5996
  %v7018 = vunpack.c.l.b16 %v5997
  %v7019 = vunpack.c.l.b16 %v5998
  %v7020 = vunpack.c.h.b16 %v5998
  %v7021 = vunpack.c.l.b16 %v5999
  %v7022 = vunpack.c.h.b16 %v5999
  %v7023 = vunpack.c.l.b16 %v6000
  %v7024 = vunpack.c.h.b16 %v6000
  %v7025 = vunpack.c.l.b16 %v6001
  %v7026 = vunpack.c.l.b16 %v6002
  %v7027 = vunpack.c.h.b16 %v6002
  %v7028 = vunpack.c.l.b16 %v6003
  %v7029 = vunpack.c.h.b16 %v6003
  %v7030 = vunpack.c.l.b16 %v6004
  %v7031 = vunpack.c.h.b16 %v6004
  %v7032 = vunpack.c.l.b16 %v6005
  %v7033 = vunpack.c.l.b16 %v6006
  %v7034 = vunpack.c.h.b16 %v6006
  %v7035 = vunpack.c.l.b16 %v6007
  %v7036 = vunpack.c.h.b16 %v6007
  %v7037 = vunpack.c.l.b16 %v6008
  %v7038 = vunpack.c.h.b16 %v6008
  %v7039 = vunpack.c.l.b16 %v6009
  %v7040 = vunpack.c.l.b16 %v6010
  %v7041 = vunpack.c.h.b16 %v6010
  %v7042 = vunpack.c.l.b16 %v6011
  %v7043 = vunpack.c.h.b16 %v6011
  %v7044 = vunpack.c.l.b16 %v6012
  %v7045 = vunpack.c.h.b16 %v6012
  %v7046 = vunpack.c.l.b16 %v6013
  %v7047 = vunpack.c.l.b16 %v6014
  %v7048 = vunpack.c.h.b16 %v6014
  %v7049 = vunpack.c.l.b16 %v6015
  %v7050 = vunpack.c.h.b16 %v6015
  %v7051 = vunpack.c.l.b16 %v6016
  %v7052 = vunpack.c.h.b16 %v6016
  %v7053 = vunpack.c.l.b16 %v6017
  %v7054 = vunpack.c.l.b16 %v6018
  %v7055 = vunpack.c.h.b16 %v6018
  %v7056 = vunpack.c.l.b16 %v6019
  %v7057 = vunpack.c.h.b16 %v6019
  %v7058 = vunpack.c.l.b16 %v6020
  %v7059 = vunpack.c.h.b16 %v6020
  %v7060 = vunpack.c.l.b16 %v6021
  %v7061 = vunpack.c.l.b16 %v6022
  %v7062 = vunpack.c.h.b16 %v6022
  %v7063 = vunpack.c.l.b16 %v6023
  %v7064 = vunpack.c.h.b16 %v6023
  %v7065 = vunpack.c.l.b16 %v6024
  %v7066 = vunpack.c.h.b16 %v6024
  %v7067 = vunpack.c.l.b16 %v6025
  %v7068 = vunpack.c.l.b16 %v6026
  %v7069 = vunpack.c.h.b16 %v6026
  %v7070 = vunpack.c.l.b16 %v6027
  %v7071 = vunpack.c.h.b16 %v6027
  %v7072 = vunpack.c.l.b16 %v6028
  %v7073 = vunpack.c.h.b16 %v6028
  %v7074 = vunpack.c.l.b16 %v6029
  %v7075 = vunpack.c.l.b16 %v6030
  %v7076 = vunpack.c.h.b16 %v6030
  %v7077 = vunpack.c.l.b16 %v6031
  %v7078 = vunpack.c.h.b16 %v6031
  %v7079 = vunpack.c.l.b16 %v6032
  %v7080 = vunpack.c.h.b16 %v6032
  %v7081 = vunpack.c.l.b16 %v6033
  %v7082 = vunpack.c.l.b16 %v6034
  %v7083 = vunpack.c.h.b16 %v6034
  %v7084 = vunpack.c.l.b16 %v6035
  %v7085 = vunpack.c.h.b16 %v6035
  %v7086 = vunpack.c.l.b16 %v6036
  %v7087 = vunpack.c.h.b16 %v6036
  %v7088 = vunpack.c.l.b16 %v6037
  %v7089 = vunpack.c.l.b16 %v6038
  %v7090 = vunpack.c.h.b16 %v6038
  %v7091 = vunpack.c.l.b16 %v6039
  %v7092 = vunpack.c.h.b16 %v6039
  %v7093 = vunpack.c.l.b16 %v6040
  %v7094 = vunpack.c.h.b16 %v6040
  %v7095 = vunpack.c.l.b16 %v6041
  %v7096 = vunpack.c.l.b16 %v6042
  %v7097 = vunpack.c.h.b16 %v6042
  %v7098 = vunpack.c.l.b16 %v6043
  %v7099 = vunpack.c.h.b16 %v6043
  %v7100 = vunpack.c.l.b16 %v6044
  %v7101 = vunpack.c.h.b16 %v6044
  %v7102 = vunpack.c.l.b16 %v6045
  %v7103 = vunpack.c.l.b16 %v6046
  %v7104 = vunpack.c.h.b16 %v6046
  %v7105 = vunpack.c.l.b16 %v6047
  %v7106 = vunpack.c.h.b16 %v6047
  %v7107 = vunpack.c.l.b16 %v6048
  %v7108 = vunpack.c.h.b16 %v6048
  %v7109 = vunpack.c.l.b16 %v6049
  %v7110 = vunpack.c.l.b16 %v6050
  %v7111 = vunpack.c.h.b16 %v6050
  %v7112 = vunpack.c.l.b16 %v6051
  %v7113 = vunpack.c.h.b16 %v6051
  %v7114 = vunpack.c.l.b16 %v6052
  %v7115 = vunpack.c.h.b16 %v6052
  %v7116 = vunpack.c.l.b16 %v6053
  %v7117 = vunpack.c.l.b16 %v6054
  %v7118 = vunpack.c.h.b16 %v6054
  %v7119 = vunpack.c.l.b16 %v6055
  %v7120 = vunpack.c.h.b16 %v6055
  %v7121 = vunpack.c.l.b16 %v6056
  %v7122 = vunpack.c.h.b16 %v6056
  %v7123 = vunpack.c.l.b16 %v6057
  %v7124 = vunpack.c.l.b16 %v6058
  %v7125 = vunpack.c.h.b16 %v6058
  %v7126 = vunpack.c.l.b16 %v6059
  %v7127 = vunpack.c.h.b16 %v6059
  %v7128 = vunpack.c.l.b16 %v6060
  %v7129 = vunpack.c.h.b16 %v6060
  %v7130 = vunpack.c.l.b16 %v6061
  %v7131 = vunpack.c.l.b16 %v6062
  %v7132 = vunpack.c.h.b16 %v6062
  %v7133 = vunpack.c.l.b16 %v6063
  %v7134 = vunpack.c.h.b16 %v6063
  %v7135 = vunpack.c.l.b16 %v6064
  %v7136 = vunpack.c.h.b16 %v6064
  %v7137 = vunpack.c.l.b16 %v6065
  %v7138 = vunpack.c.l.b16 %v6066
  %v7139 = vunpack.c.h.b16 %v6066
  %v7140 = vunpack.c.l.b16 %v6067
  %v7141 = vunpack.c.h.b16 %v6067
  %v7142 = vunpack.c.l.b16 %v6068
  %v7143 = vunpack.c.h.b16 %v6068
  %v7144 = vunpack.c.l.b16 %v6069
  %v7145 = vunpack.c.l.b16 %v6070
  %v7146 = vunpack.c.h.b16 %v6070
  %v7147 = vunpack.c.l.b16 %v6071
  %v7148 = vunpack.c.h.b16 %v6071
  %v7149 = vunpack.c.l.b16 %v6072
  %v7150 = vunpack.c.h.b16 %v6072
  %v7151 = vunpack.c.l.b16 %v6073
  %v7152 = vpack.c.b16 %v6473, %v6466
  %v7153 = vpack.c.b16 %v6474, %v6467
  %v7154 = vpack.c.b16 %v6475, %v6468
  %v7155 = vpack.c.b16 %v6476, %v6469
  %v7156 = vpack.c.b16 %v6477, %v6470
  %v7157 = vpack.c.b16 %v6478, %v6471
  %v7158 = vpack.c.b16 %v6479, %v6472
  %v7159 = vpack.c.b16 %v6487, %v6480
  %v7160 = vpack.c.b16 %v6488, %v6481
  %v7161 = vpack.c.b16 %v6489, %v6482
  %v7162 = vpack.c.b16 %v6490, %v6483
  %v7163 = vpack.c.b16 %v6491, %v6484
  %v7164 = vpack.c.b16 %v6492, %v6485
  %v7165 = vpack.c.b16 %v6493, %v6486
  %v7166 = vpack.c.b16 %v6501, %v6494
  %v7167 = vpack.c.b16 %v6502, %v6495
  %v7168 = vpack.c.b16 %v6503, %v6496
  %v7169 = vpack.c.b16 %v6504, %v6497
  %v7170 = vpack.c.b16 %v6505, %v6498
  %v7171 = vpack.c.b16 %v6506, %v6499
  %v7172 = vpack.c.b16 %v6507, %v6500
  %v7173 = vpack.c.b16 %v6515, %v6508
  %v7174 = vpack.c.b16 %v6516, %v6509
  %v7175 = vpack.c.b16 %v6517, %v6510
  %v7176 = vpack.c.b16 %v6518, %v6511
  %v7177 = vpack.c.b16 %v6519, %v6512
  %v7178 = vpack.c.b16 %v6520, %v6513
  %v7179 = vpack.c.b16 %v6521, %v6514
  %v7180 = vpack.c.b16 %v6529, %v6522
  %v7181 = vpack.c.b16 %v6530, %v6523
  %v7182 = vpack.c.b16 %v6531, %v6524
  %v7183 = vpack.c.b16 %v6532, %v6525
  %v7184 = vpack.c.b16 %v6533, %v6526
  %v7185 = vpack.c.b16 %v6534, %v6527
  %v7186 = vpack.c.b16 %v6535, %v6528
  %v7187 = vpack.c.b16 %v6543, %v6536
  %v7188 = vpack.c.b16 %v6544, %v6537
  %v7189 = vpack.c.b16 %v6545, %v6538
  %v7190 = vpack.c.b16 %v6546, %v6539
  %v7191 = vpack.c.b16 %v6547, %v6540
  %v7192 = vpack.c.b16 %v6548, %v6541
  %v7193 = vpack.c.b16 %v6549, %v6542
  %v7194 = vpack.c.b16 %v6557, %v6550
  %v7195 = vpack.c.b16 %v6558, %v6551
  %v7196 = vpack.c.b16 %v6559, %v6552
  %v7197 = vpack.c.b16 %v6560, %v6553
  %v7198 = vpack.c.b16 %v6561, %v6554
  %v7199 = vpack.c.b16 %v6562, %v6555
  %v7200 = vpack.c.b16 %v6563, %v6556
  %v7201 = vpack.c.b16 %v6571, %v6564
  %v7202 = vpack.c.b16 %v6572, %v6565
  %v7203 = vpack.c.b16 %v6573, %v6566
  %v7204 = vpack.c.b16 %v6574, %v6567
  %v7205 = vpack.c.b16 %v6575, %v6568
  %v7206 = vpack.c.b16 %v6576, %v6569
  %v7207 = vpack.c.b16 %v6577, %v6570
  %v7208 = vpack.c.b16 %v6585, %v6578
  %v7209 = vpack.c.b16 %v6586, %v6579
  %v7210 = vpack.c.b16 %v6587, %v6580
  %v7211 = vpack.c.b16 %v6588, %v6581
  %v7212 = vpack.c.b16 %v6589, %v6582
  %v7213 = vpack.c.b16 %v6590, %v6583
  %v7214 = vpack.c.b16 %v6591, %v6584
  %v7215 = vpack.c.b16 %v6599, %v6592
  %v7216 = vpack.c.b16 %v6600, %v6593
  %v7217 = vpack.c.b16 %v6601, %v6594
  %v7218 = vpack.c.b16 %v6602, %v6595
  %v7219 = vpack.c.b16 %v6603, %v6596
  %v7220 = vpack.c.b16 %v6604, %v6597
  %v7221 = vpack.c.b16 %v6605, %v6598
  %v7222 = vpack.c.b16 %v6613, %v6606
  %v7223 = vpack.c.b16 %v6614, %v6607
  %v7224 = vpack.c.b16 %v6615, %v6608
  %v7225 = vpack.c.b16 %v6616, %v6609
  %v7226 = vpack.c.b16 %v6617, %v6610
  %v7227 = vpack.c.b16 %v6618, %v6611
  %v7228 = vpack.c.b16 %v6619, %v6612
  %v7229 = vpack.c.b16 %v6627, %v6620
  %v7230 = vpack.c.b16 %v6628, %v6621
  %v7231 = vpack.c.b16 %v6629, %v6622
  %v7232 = vpack.c.b16 %v6630, %v6623
  %v7233 = vpack.c.b16 %v6631, %v6624
  %v7234 = vpack.c.b16 %v6632, %v6625
  %v7235 = vpack.c.b16 %v6633, %v6626
  %v7236 = vpack.c.b16 %v6641, %v6634
  %v7237 = vpack.c.b16 %v6642, %v6635
  %v7238 = vpack.c.b16 %v6643, %v6636
  %v7239 = vpack.c.b16 %v6644, %v6637
  %v7240 = vpack.c.b16 %v6645, %v6638
  %v7241 = vpack.c.b16 %v6646, %v6639
  %v7242 = vpack.c.b16 %v6647, %v6640
  %v7243 = vpack.c.b16 %v6655, %v6648
  %v7244 = vpack.c.b16 %v6656, %v6649
  %v7245 = vpack.c.b16 %v6657, %v6650
  %v7246 = vpack.c.b16 %v6658, %v6651
  %v7247 = vpack.c.b16 %v6659, %v6652
  %v7248 = vpack.c.b16 %v6660, %v6653
  %v7249 = vpack.c.b16 %v6661, %v6654
  %v7250 = vpack.c.b16 %v6669, %v6662
  %v7251 = vpack.c.b16 %v6670, %v6663
  %v7252 = vpack.c.b16 %v6671, %v6664
  %v7253 = vpack.c.b16 %v6672, %v6665
  %v7254 = vpack.c.b16 %v6673, %v6666
  %v7255 = vpack.c.b16 %v6674, %v6667
  %v7256 = vpack.c.b16 %v6675, %v6668
  %v7257 = vpack.c.b16 %v6683, %v6676
  %v7258 = vpack.c.b16 %v6684, %v6677
  %v7259 = vpack.c.b16 %v6685, %v6678
  %v7260 = vpack.c.b16 %v6686, %v6679
  %v7261 = vpack.c.b16 %v6687, %v6680
  %v7262 = vpack.c.b16 %v6688, %v6681
  %v7263 = vpack.c.b16 %v6689, %v6682
  %v7264 = vpack.c.b16 %v6697, %v6690
  %v7265 = vpack.c.b16 %v6698, %v6691
  %v7266 = vpack.c.b16 %v6699, %v6692
  %v7267 = vpack.c.b16 %v6700, %v6693
  %v7268 = vpack.c.b16 %v6701, %v6694
  %v7269 = vpack.c.b16 %v6702, %v6695
  %v7270 = vpack.c.b16 %v6703, %v6696
  %v7271 = vpack.c.b16 %v6711, %v6704
  %v7272 = vpack.c.b16 %v6712, %v6705
  %v7273 = vpack.c.b16 %v6713, %v6706
  %v7274 = vpack.c.b16 %v6714, %v6707
  %v7275 = vpack.c.b16 %v6715, %v6708
  %v7276 = vpack.c.b16 %v6716, %v6709
  %v7277 = vpack.c.b16 %v6717, %v6710
  %v7278 = vpack.c.b16 %v6725, %v6718
  %v7279 = vpack.c.b16 %v6726, %v6719
  %v7280 = vpack.c.b16 %v6727, %v6720
  %v7281 = vpack.c.b16 %v6728, %v6721
  %v7282 = vpack.c.b16 %v6729, %v6722
  %v7283 = vpack.c.b16 %v6730, %v6723
  %v7284 = vpack.c.b16 %v6731, %v6724
  %v7285 = vpack.c.b16 %v6739, %v6732
  %v7286 = vpack.c.b16 %v6740, %v6733
  %v7287 = vpack.c.b16 %v6741, %v6734
  %v7288 = vpack.c.b16 %v6742, %v6735
  %v7289 = vpack.c.b16 %v6743, %v6736
  %v7290 = vpack.c.b16 %v6744, %v6737
  %v7291 = vpack.c.b16 %v6745, %v6738
  %v7292 = vpack.c.b16 %v6753, %v6746
  %v7293 = vpack.c.b16 %v6754, %v6747
  %v7294 = vpack.c.b16 %v6755, %v6748
  %v7295 = vpack.c.b16 %v6756, %v6749
  %v7296 = vpack.c.b16 %v6757, %v6750
  %v7297 = vpack.c.b16 %v6758, %v6751
  %v7298 = vpack.c.b16 %v6759, %v6752
  %v7299 = vpack.c.b16 %v6767, %v6760
  %v7300 = vpack.c.b16 %v6768, %v6761
  %v7301 = vpack.c.b16 %v6769, %v6762
  %v7302 = vpack.c.b16 %v6770, %v6763
  %v7303 = vpack.c.b16 %v6771, %v6764
  %v7304 = vpack.c.b16 %v6772, %v6765
  %v7305 = vpack.c.b16 %v6773, %v6766
  %v7306 = vpack.c.b16 %v6781, %v6774
  %v7307 = vpack.c.b16 %v6782, %v6775
  %v7308 = vpack.c.b16 %v6783, %v6776
  %v7309 = vpack.c.b16 %v6784, %v6777
  %v7310 = vpack.c.b16 %v6785, %v6778
  %v7311 = vpack.c.b16 %v6786, %v6779
  %v7312 = vpack.c.b16 %v6787, %v6780
  %v7313 = vpack.c.b16 %v6795, %v6788
  %v7314 = vpack.c.b16 %v6796, %v6789
  %v7315 = vpack.c.b16 %v6797, %v6790
  %v7316 = vpack.c.b16 %v6798, %v6791
  %v7317 = vpack.c.b16 %v6799, %v6792
  %v7318 = vpack.c.b16 %v6800, %v6793
  %v7319 = vpack.c.b16 %v6801, %v6794
  %v7320 = vpack.c.b16 %v6809, %v6802
  %v7321 = vpack.c.b16 %v6810, %v6803
  %v7322 = vpack.c.b16 %v6811, %v6804
  %v7323 = vpack.c.b16 %v6812, %v6805
  %v7324 = vpack.c.b16 %v6813, %v6806
  %v7325 = vpack.c.b16 %v6814, %v6807
  %v7326 = vpack.c.b16 %v6815, %v6808
  %v7327 = vpack.c.b16 %v6823, %v6816
  %v7328 = vpack.c.b16 %v6824, %v6817
  %v7329 = vpack.c.b16 %v6825, %v6818
  %v7330 = vpack.c.b16 %v6826, %v6819
  %v7331 = vpack.c.b16 %v6827, %v6820
  %v7332 = vpack.c.b16 %v6828, %v6821
  %v7333 = vpack.c.b16 %v6829, %v6822
  %v7334 = vpack.c.b16 %v6837, %v6830
  %v7335 = vpack.c.b16 %v6838, %v6831
  %v7336 = vpack.c.b16 %v6839, %v6832
  %v7337 = vpack.c.b16 %v6840, %v6833
  %v7338 = vpack.c.b16 %v6841, %v6834
  %v7339 = vpack.c.b16 %v6842, %v6835
  %v7340 = vpack.c.b16 %v6843, %v6836
  %v7341 = vpack.c.b16 %v6851, %v6844
  %v7342 = vpack.c.b16 %v6852, %v6845
  %v7343 = vpack.c.b16 %v6853, %v6846
  %v7344 = vpack.c.b16 %v6854, %v6847
  %v7345 = vpack.c.b16 %v6855, %v6848
  %v7346 = vpack.c.b16 %v6856, %v6849
  %v7347 = vpack.c.b16 %v6857, %v6850
  %v7348 = vpack.c.b16 %v6865, %v6858
  %v7349 = vpack.c.b16 %v6866, %v6859
  %v7350 = vpack.c.b16 %v6867, %v6860
  %v7351 = vpack.c.b16 %v6868, %v6861
  %v7352 = vpack.c.b16 %v6869, %v6862
  %v7353 = vpack.c.b16 %v6870, %v6863
  %v7354 = vpack.c.b16 %v6871, %v6864
  %v7355 = vpack.c.b16 %v6879, %v6872
  %v7356 = vpack.c.b16 %v6880, %v6873
  %v7357 = vpack.c.b16 %v6881, %v6874
  %v7358 = vpack.c.b16 %v6882, %v6875
  %v7359 = vpack.c.b16 %v6883, %v6876
  %v7360 = vpack.c.b16 %v6884, %v6877
  %v7361 = vpack.c.b16 %v6885, %v6878
  %v7362 = vpack.c.b16 %v6893, %v6886
  %v7363 = vpack.c.b16 %v6894, %v6887
  %v7364 = vpack.c.b16 %v6895, %v6888
  %v7365 = vpack.c.b16 %v6896, %v6889
  %v7366 = vpack.c.b16 %v6897, %v6890
  %v7367 = vpack.c.b16 %v6898, %v6891
  %v7368 = vpack.c.b16 %v6899, %v6892
  %v7369 = vpack.c.b16 %v6907, %v6900
  %v7370 = vpack.c.b16 %v6908, %v6901
  %v7371 = vpack.c.b16 %v6909, %v6902
  %v7372 = vpack.c.b16 %v6910, %v6903
  %v7373 = vpack.c.b16 %v6911, %v6904
  %v7374 = vpack.c.b16 %v6912, %v6905
  %v7375 = vpack.c.b16 %v6913, %v6906
  %v7376 = vpack.c.b16 %v6921, %v6914
  %v7377 = vpack.c.b16 %v6922, %v6915
  %v7378 = vpack.c.b16 %v6923, %v6916
  %v7379 = vpack.c.b16 %v6924, %v6917
  %v7380 = vpack.c.b16 %v6925, %v6918
  %v7381 = vpack.c.b16 %v6926, %v6919
  %v7382 = vpack.c.b16 %v6927, %v6920
  %v7383 = vpack.c.b16 %v6935, %v6928
  %v7384 = vpack.c.b16 %v6936, %v6929
  %v7385 = vpack.c.b16 %v6937, %v6930
  %v7386 = vpack.c.b16 %v6938, %v6931
  %v7387 = vpack.c.b16 %v6939, %v6932
  %v7388 = vpack.c.b16 %v6940, %v6933
  %v7389 = vpack.c.b16 %v6941, %v6934
  %v7390 = vpack.c.b16 %v6949, %v6942
  %v7391 = vpack.c.b16 %v6950, %v6943
  %v7392 = vpack.c.b16 %v6951, %v6944
  %v7393 = vpack.c.b16 %v6952, %v6945
  %v7394 = vpack.c.b16 %v6953, %v6946
  %v7395 = vpack.c.b16 %v6954, %v6947
  %v7396 = vpack.c.b16 %v6955, %v6948
  %v7397 = vpack.c.b16 %v6963, %v6956
  %v7398 = vpack.c.b16 %v6964, %v6957
  %v7399 = vpack.c.b16 %v6965, %v6958
  %v7400 = vpack.c.b16 %v6966, %v6959
  %v7401 = vpack.c.b16 %v6967, %v6960
  %v7402 = vpack.c.b16 %v6968, %v6961
  %v7403 = vpack.c.b16 %v6969, %v6962
  %v7404 = vpack.c.b16 %v6977, %v6970
  %v7405 = vpack.c.b16 %v6978, %v6971
  %v7406 = vpack.c.b16 %v6979, %v6972
  %v7407 = vpack.c.b16 %v6980, %v6973
  %v7408 = vpack.c.b16 %v6981, %v6974
  %v7409 = vpack.c.b16 %v6982, %v6975
  %v7410 = vpack.c.b16 %v6983, %v6976
  %v7411 = vpack.c.b16 %v6991, %v6984
  %v7412 = vpack.c.b16 %v6992, %v6985
  %v7413 = vpack.c.b16 %v6993, %v6986
  %v7414 = vpack.c.b16 %v6994, %v6987
  %v7415 = vpack.c.b16 %v6995, %v6988
  %v7416 = vpack.c.b16 %v6996, %v6989
  %v7417 = vpack.c.b16 %v6997, %v6990
  %v7418 = vpack.c.b16 %v7005, %v6998
  %v7419 = vpack.c.b16 %v7006, %v6999
  %v7420 = vpack.c.b16 %v7007, %v7000
  %v7421 = vpack.c.b16 %v7008, %v7001
  %v7422 = vpack.c.b16 %v7009, %v7002
  %v7423 = vpack.c.b16 %v7010, %v7003
  %v7424 = vpack.c.b16 %v7011, %v7004
  %v7425 = vpack.c.b16 %v7019, %v7012
  %v7426 = vpack.c.b16 %v7020, %v7013
  %v7427 = vpack.c.b16 %v7021, %v7014
  %v7428 = vpack.c.b16 %v7022, %v7015
  %v7429 = vpack.c.b16 %v7023, %v7016
  %v7430 = vpack.c.b16 %v7024, %v7017
  %v7431 = vpack.c.b16 %v7025, %v7018
  %v7432 = vpack.c.b16 %v7033, %v7026
  %v7433 = vpack.c.b16 %v7034, %v7027
  %v7434 = vpack.c.b16 %v7035, %v7028
  %v7435 = vpack.c.b16 %v7036, %v7029
  %v7436 = vpack.c.b16 %v7037, %v7030
  %v7437 = vpack.c.b16 %v7038, %v7031
  %v7438 = vpack.c.b16 %v7039, %v7032
  %v7439 = vpack.c.b16 %v7047, %v7040
  %v7440 = vpack.c.b16 %v7048, %v7041
  %v7441 = vpack.c.b16 %v7049, %v7042
  %v7442 = vpack.c.b16 %v7050, %v7043
  %v7443 = vpack.c.b16 %v7051, %v7044
  %v7444 = vpack.c.b16 %v7052, %v7045
  %v7445 = vpack.c.b16 %v7053, %v7046
  %v7446 = vpack.c.b16 %v7061, %v7054
  %v7447 = vpack.c.b16 %v7062, %v7055
  %v7448 = vpack.c.b16 %v7063, %v7056
  %v7449 = vpack.c.b16 %v7064, %v7057
  %v7450 = vpack.c.b16 %v7065, %v7058
  %v7451 = vpack.c.b16 %v7066, %v7059
  %v7452 = vpack.c.b16 %v7067, %v7060
  %v7453 = vpack.c.b16 %v7075, %v7068
  %v7454 = vpack.c.b16 %v7076, %v7069
  %v7455 = vpack.c.b16 %v7077, %v7070
  %v7456 = vpack.c.b16 %v7078, %v7071
  %v7457 = vpack.c.b16 %v7079, %v7072
  %v7458 = vpack.c.b16 %v7080, %v7073
  %v7459 = vpack.c.b16 %v7081, %v7074
  %v7460 = vpack.c.b16 %v7089, %v7082
  %v7461 = vpack.c.b16 %v7090, %v7083
  %v7462 = vpack.c.b16 %v7091, %v7084
  %v7463 = vpack.c.b16 %v7092, %v7085
  %v7464 = vpack.c.b16 %v7093, %v7086
  %v7465 = vpack.c.b16 %v7094, %v7087
  %v7466 = vpack.c.b16 %v7095, %v7088
  %v7467 = vpack.c.b16 %v7103, %v7096
  %v7468 = vpack.c.b16 %v7104, %v7097
  %v7469 = vpack.c.b16 %v7105, %v7098
  %v7470 = vpack.c.b16 %v7106, %v7099
  %v7471 = vpack.c.b16 %v7107, %v7100
  %v7472 = vpack.c.b16 %v7108, %v7101
  %v7473 = vpack.c.b16 %v7109, %v7102
  %v7474 = vpack.c.b16 %v7117, %v7110
  %v7475 = vpack.c.b16 %v7118, %v7111
  %v7476 = vpack.c.b16 %v7119, %v7112
  %v7477 = vpack.c.b16 %v7120, %v7113
  %v7478 = vpack.c.b16 %v7121, %v7114
  %v7479 = vpack.c.b16 %v7122, %v7115
  %v7480 = vpack.c.b16 %v7123, %v7116
  %v7481 = vpack.c.b16 %v7131, %v7124
  %v7482 = vpack.c.b16 %v7132, %v7125
  %v7483 = vpack.c.b16 %v7133, %v7126
  %v7484 = vpack.c.b16 %v7134, %v7127
  %v7485 = vpack.c.b16 %v7135, %v7128
  %v7486 = vpack.c.b16 %v7136, %v7129
  %v7487 = vpack.c.b16 %v7137, %v7130
  %v7488 = vpack.c.b16 %v7145, %v7138
  %v7489 = vpack.c.b16 %v7146, %v7139
  %v7490 = vpack.c.b16 %v7147, %v7140
  %v7491 = vpack.c.b16 %v7148, %v7141
  %v7492 = vpack.c.b16 %v7149, %v7142
  %v7493 = vpack.c.b16 %v7150, %v7143
  %v7494 = vpack.c.b16 %v7151, %v7144
  %7838 = vmatprep.subr.bf16.mxu0 %v7153
  %7839 = vmatpush1.bf16.msra.mxu0 %v7152
  %7840 = vmatprep.subr.bf16.mxu0 %v7160
  %7841 = vmatpush1.bf16.msra.mxu0 %v7159
  %7842 = vmatprep.subr.bf16.mxu0 %v7167
  %7843 = vmatpush1.bf16.msra.mxu0 %v7166
  %7844 = vmatprep.subr.bf16.mxu0 %v7174
  %7845 = vmatpush1.bf16.msra.mxu0 %v7173
  %7846 = vmatprep.subr.bf16.mxu0 %v7181
  %7847 = vmatpush1.bf16.msra.mxu0 %v7180
  %7848 = vmatprep.subr.bf16.mxu0 %v7188
  %7849 = vmatpush1.bf16.msra.mxu0 %v7187
  %7850 = vmatprep.subr.bf16.mxu0 %v7195
  %7851 = vmatpush1.bf16.msra.mxu0 %v7194
  %7852 = vmatprep.subr.bf16.mxu0 %v7202
  %7853 = vmatpush1.bf16.msra.mxu0 %v7201
  %7854 = vmatprep.subr.bf16.mxu0 %v7209
  %7855 = vmatpush1.bf16.msra.mxu0 %v7208
  %7856 = vmatprep.subr.bf16.mxu0 %v7216
  %7857 = vmatpush1.bf16.msra.mxu0 %v7215
  %7858 = vmatprep.subr.bf16.mxu0 %v7223
  %7859 = vmatpush1.bf16.msra.mxu0 %v7222
  %7860 = vmatprep.subr.bf16.mxu0 %v7230
  %7861 = vmatpush1.bf16.msra.mxu0 %v7229
  %7862 = vmatprep.subr.bf16.mxu0 %v7237
  %7863 = vmatpush1.bf16.msra.mxu0 %v7236
  %7864 = vmatprep.subr.bf16.mxu0 %v7244
  %7865 = vmatpush1.bf16.msra.mxu0 %v7243
  %7866 = vmatprep.subr.bf16.mxu0 %v7251
  %7867 = vmatpush1.bf16.msra.mxu0 %v7250
  %7868 = vmatprep.subr.bf16.mxu0 %v7258
  %7869 = vmatpush1.bf16.msra.mxu0 %v7257
  %7870 = vmatprep.mubr.bf16.mxu0 %v47
  %7871 = vmatmul.mubr.bf16.gmra.mrb[0].mxu0 %v46
  %v7872 = vpop.f32.mrb[0].mxu0
  %v7873 = vadd.f32 0.0, %v7872
  %v7874 = vpop.f32.mrb[0].mxu0
  %v7875 = vadd.f32 0.0, %v7874
  %v7876 = vpop.f32.mrb[0].mxu0
  %v7877 = vpop.f32.mrb[0].mxu0
  %7878 = vdwg.mxu0
  %7879 = vmatprep.subr.bf16.mxu0 %v7265
  %7880 = vmatpush1.bf16.msra.mxu0 %v7264
  %7881 = vmatprep.subr.bf16.mxu0 %v7272
  %7882 = vmatpush1.bf16.msra.mxu0 %v7271
  %7883 = vmatprep.subr.bf16.mxu0 %v7279
  %7884 = vmatpush1.bf16.msra.mxu0 %v7278
  %7885 = vmatprep.subr.bf16.mxu0 %v7286
  %7886 = vmatpush1.bf16.msra.mxu0 %v7285
  %7887 = vmatprep.subr.bf16.mxu0 %v7293
  %7888 = vmatpush1.bf16.msra.mxu0 %v7292
  %7889 = vmatprep.subr.bf16.mxu0 %v7300
  %7890 = vmatpush1.bf16.msra.mxu0 %v7299
  %7891 = vmatprep.subr.bf16.mxu0 %v7307
  %7892 = vmatpush1.bf16.msra.mxu0 %v7306
  %7893 = vmatprep.subr.bf16.mxu0 %v7314
  %7894 = vmatpush1.bf16.msra.mxu0 %v7313
  %7895 = vmatprep.subr.bf16.mxu0 %v7321
  %7896 = vmatpush1.bf16.msra.mxu0 %v7320
  %7897 = vmatprep.subr.bf16.mxu0 %v7328
  %7898 = vmatpush1.bf16.msra.mxu0 %v7327
  %7899 = vmatprep.subr.bf16.mxu0 %v7335
  %7900 = vmatpush1.bf16.msra.mxu0 %v7334
  %7901 = vmatprep.subr.bf16.mxu0 %v7342
  %7902 = vmatpush1.bf16.msra.mxu0 %v7341
  %7903 = vmatprep.subr.bf16.mxu0 %v7349
  %7904 = vmatpush1.bf16.msra.mxu0 %v7348
  %7905 = vmatprep.subr.bf16.mxu0 %v7356
  %7906 = vmatpush1.bf16.msra.mxu0 %v7355
  %7907 = vmatprep.subr.bf16.mxu0 %v7363
  %7908 = vmatpush1.bf16.msra.mxu0 %v7362
  %7909 = vmatprep.subr.bf16.mxu0 %v7370
  %7910 = vmatpush1.bf16.msra.mxu0 %v7369
  %7911 = vmatprep.mubr.bf16.mxu0 %v49
  %7912 = vmatmul.mubr.bf16.gmra.mrb[0].mxu0 %v48
  %v7913 = vpop.f32.mrb[0].mxu0
  %v7914 = vadd.f32 %v7873, %v7913
  %v7915 = vpop.f32.mrb[0].mxu0
  %v7916 = vadd.f32 %v7875, %v7915
  %v7917 = vpop.f32.mrb[0].mxu0
  %v7918 = vpop.f32.mrb[0].mxu0
  %7919 = vdwg.mxu0
  %7920 = vmatprep.subr.bf16.mxu0 %v7377
  %7921 = vmatpush1.bf16.msra.mxu0 %v7376
  %7922 = vmatprep.subr.bf16.mxu0 %v7384
  %7923 = vmatpush1.bf16.msra.mxu0 %v7383
  %7924 = vmatprep.subr.bf16.mxu0 %v7391
  %7925 = vmatpush1.bf16.msra.mxu0 %v7390
  %7926 = vmatprep.subr.bf16.mxu0 %v7398
  %7927 = vmatpush1.bf16.msra.mxu0 %v7397
  %7928 = vmatprep.subr.bf16.mxu0 %v7405
  %7929 = vmatpush1.bf16.msra.mxu0 %v7404
  %7930 = vmatprep.subr.bf16.mxu0 %v7412
  %7931 = vmatpush1.bf16.msra.mxu0 %v7411
  %7932 = vmatprep.subr.bf16.mxu0 %v7419
  %7933 = vmatpush1.bf16.msra.mxu0 %v7418
  %7934 = vmatprep.subr.bf16.mxu0 %v7426
  %7935 = vmatpush1.bf16.msra.mxu0 %v7425
  %7936 = vmatprep.subr.bf16.mxu0 %v7433
  %7937 = vmatpush1.bf16.msra.mxu0 %v7432
  %7938 = vmatprep.subr.bf16.mxu0 %v7440
  %7939 = vmatpush1.bf16.msra.mxu0 %v7439
  %7940 = vmatprep.subr.bf16.mxu0 %v7447
  %7941 = vmatpush1.bf16.msra.mxu0 %v7446
  %7942 = vmatprep.subr.bf16.mxu0 %v7454
  %7943 = vmatpush1.bf16.msra.mxu0 %v7453
  %7944 = vmatprep.subr.bf16.mxu0 %v7461
  %7945 = vmatpush1.bf16.msra.mxu0 %v7460
  %7946 = vmatprep.subr.bf16.mxu0 %v7468
  %7947 = vmatpush1.bf16.msra.mxu0 %v7467
  %7948 = vmatprep.subr.bf16.mxu0 %v7475
  %7949 = vmatpush1.bf16.msra.mxu0 %v7474
  %7950 = vmatprep.subr.bf16.mxu0 %v7482
  %7951 = vmatpush1.bf16.msra.mxu0 %v7481
  %7952 = vmatprep.mubr.bf16.mxu0 %v51
  %7953 = vmatmul.mubr.bf16.gmra.mrb[0].mxu0 %v50
  %v7954 = vpop.f32.mrb[0].mxu0
  %v7955 = vadd.f32 %v7914, %v7954
  %v7956 = vpop.f32.mrb[0].mxu0
  %v7957 = vadd.f32 %v7916, %v7956
  %v7958 = vpop.f32.mrb[0].mxu0
  %v7959 = vpop.f32.mrb[0].mxu0
  %7960 = vdwg.mxu0
  %7961 = vmatprep.subr.bf16.mxu0 %v7489
  %7962 = vmatpush1.bf16.msra.mxu0 %v7488
  %7963 = vmatprep.subr.bf16.mxu0 0
  %7964 = vmatpush1.bf16.msra.mxu0 0
  %7965 = vmatprep.subr.bf16.mxu0 0
  %7966 = vmatpush1.bf16.msra.mxu0 0
  %7967 = vmatprep.subr.bf16.mxu0 0
  %7968 = vmatpush1.bf16.msra.mxu0 0
  %7969 = vmatprep.subr.bf16.mxu0 0
  %7970 = vmatpush1.bf16.msra.mxu0 0
  %7971 = vmatprep.subr.bf16.mxu0 0
  %7972 = vmatpush1.bf16.msra.mxu0 0
  %7973 = vmatprep.subr.bf16.mxu0 0
  %7974 = vmatpush1.bf16.msra.mxu0 0
  %7975 = vmatprep.subr.bf16.mxu0 0
  %7976 = vmatpush1.bf16.msra.mxu0 0
  %7977 = vmatprep.subr.bf16.mxu0 0
  %7978 = vmatpush1.bf16.msra.mxu0 0
  %7979 = vmatprep.subr.bf16.mxu0 0
  %7980 = vmatpush1.bf16.msra.mxu0 0
  %7981 = vmatprep.subr.bf16.mxu0 0
  %7982 = vmatpush1.bf16.msra.mxu0 0
  %7983 = vmatprep.subr.bf16.mxu0 0
  %7984 = vmatpush1.bf16.msra.mxu0 0
  %7985 = vmatprep.subr.bf16.mxu0 0
  %7986 = vmatpush1.bf16.msra.mxu0 0
  %7987 = vmatprep.subr.bf16.mxu0 0
  %7988 = vmatpush1.bf16.msra.mxu0 0
  %7989 = vmatprep.subr.bf16.mxu0 0
  %7990 = vmatpush1.bf16.msra.mxu0 0
  %7991 = vmatprep.subr.bf16.mxu0 0
  %7992 = vmatpush1.bf16.msra.mxu0 0
  %7993 = vmatprep.mubr.bf16.mxu0 0
  %7994 = vmatmul.mubr.bf16.gmra.mrb[0].mxu0 %v2211
  %v7995 = vpop.f32.mrb[0].mxu0
  %v7996 = vadd.f32 %v7955, %v7995
  %v7997 = vpop.f32.mrb[0].mxu0
  %v7998 = vadd.f32 %v7957, %v7997
  %v7999 = vpop.f32.mrb[0].mxu0
  %v8000 = vpop.f32.mrb[0].mxu0
  %8001 = vdwg.mxu0
  %8002 = vmatprep.subr.bf16.mxu0 %v7155
  %8003 = vmatpush1.bf16.msra.mxu0 %v7154
  %8004 = vmatprep.subr.bf16.mxu0 %v7162
  %8005 = vmatpush1.bf16.msra.mxu0 %v7161
  %8006 = vmatprep.subr.bf16.mxu0 %v7169
  %8007 = vmatpush1.bf16.msra.mxu0 %v7168
  %8008 = vmatprep.subr.bf16.mxu0 %v7176
  %8009 = vmatpush1.bf16.msra.mxu0 %v7175
  %8010 = vmatprep.subr.bf16.mxu0 %v7183
  %8011 = vmatpush1.bf16.msra.mxu0 %v7182
  %8012 = vmatprep.subr.bf16.mxu0 %v7190
  %8013 = vmatpush1.bf16.msra.mxu0 %v7189
  %8014 = vmatprep.subr.bf16.mxu0 %v7197
  %8015 = vmatpush1.bf16.msra.mxu0 %v7196
  %8016 = vmatprep.subr.bf16.mxu0 %v7204
  %8017 = vmatpush1.bf16.msra.mxu0 %v7203
  %8018 = vmatprep.subr.bf16.mxu0 %v7211
  %8019 = vmatpush1.bf16.msra.mxu0 %v7210
  %8020 = vmatprep.subr.bf16.mxu0 %v7218
  %8021 = vmatpush1.bf16.msra.mxu0 %v7217
  %8022 = vmatprep.subr.bf16.mxu0 %v7225
  %8023 = vmatpush1.bf16.msra.mxu0 %v7224
  %8024 = vmatprep.subr.bf16.mxu0 %v7232
  %8025 = vmatpush1.bf16.msra.mxu0 %v7231
  %8026 = vmatprep.subr.bf16.mxu0 %v7239
  %8027 = vmatpush1.bf16.msra.mxu0 %v7238
  %8028 = vmatprep.subr.bf16.mxu0 %v7246
  %8029 = vmatpush1.bf16.msra.mxu0 %v7245
  %8030 = vmatprep.subr.bf16.mxu0 %v7253
  %8031 = vmatpush1.bf16.msra.mxu0 %v7252
  %8032 = vmatprep.subr.bf16.mxu0 %v7260
  %8033 = vmatpush1.bf16.msra.mxu0 %v7259
  %8034 = vmatprep.mubr.bf16.mxu0 %v47
  %8035 = vmatmul.mubr.bf16.gmra.mrb[0].mxu0 %v46
  %v8036 = vpop.f32.mrb[0].mxu0
  %v8037 = vadd.f32 0.0, %v8036
  %v8038 = vpop.f32.mrb[0].mxu0
  %v8039 = vadd.f32 0.0, %v8038
  %v8040 = vpop.f32.mrb[0].mxu0
  %v8041 = vpop.f32.mrb[0].mxu0
  %8042 = vdwg.mxu0
  %8043 = vmatprep.subr.bf16.mxu0 %v7267
  %8044 = vmatpush1.bf16.msra.mxu0 %v7266
  %8045 = vmatprep.subr.bf16.mxu0 %v7274
  %8046 = vmatpush1.bf16.msra.mxu0 %v7273
  %8047 = vmatprep.subr.bf16.mxu0 %v7281
  %8048 = vmatpush1.bf16.msra.mxu0 %v7280
  %8049 = vmatprep.subr.bf16.mxu0 %v7288
  %8050 = vmatpush1.bf16.msra.mxu0 %v7287
  %8051 = vmatprep.subr.bf16.mxu0 %v7295
  %8052 = vmatpush1.bf16.msra.mxu0 %v7294
  %8053 = vmatprep.subr.bf16.mxu0 %v7302
  %8054 = vmatpush1.bf16.msra.mxu0 %v7301
  %8055 = vmatprep.subr.bf16.mxu0 %v7309
  %8056 = vmatpush1.bf16.msra.mxu0 %v7308
  %8057 = vmatprep.subr.bf16.mxu0 %v7316
  %8058 = vmatpush1.bf16.msra.mxu0 %v7315
  %8059 = vmatprep.subr.bf16.mxu0 %v7323
  %8060 = vmatpush1.bf16.msra.mxu0 %v7322
  %8061 = vmatprep.subr.bf16.mxu0 %v7330
  %8062 = vmatpush1.bf16.msra.mxu0 %v7329
  %8063 = vmatprep.subr.bf16.mxu0 %v7337
  %8064 = vmatpush1.bf16.msra.mxu0 %v7336
  %8065 = vmatprep.subr.bf16.mxu0 %v7344
  %8066 = vmatpush1.bf16.msra.mxu0 %v7343
  %8067 = vmatprep.subr.bf16.mxu0 %v7351
  %8068 = vmatpush1.bf16.msra.mxu0 %v7350
  %8069 = vmatprep.subr.bf16.mxu0 %v7358
  %8070 = vmatpush1.bf16.msra.mxu0 %v7357
  %8071 = vmatprep.subr.bf16.mxu0 %v7365
  %8072 = vmatpush1.bf16.msra.mxu0 %v7364
  %8073 = vmatprep.subr.bf16.mxu0 %v7372
  %8074 = vmatpush1.bf16.msra.mxu0 %v7371
  %8075 = vmatprep.mubr.bf16.mxu0 %v49
  %8076 = vmatmul.mubr.bf16.gmra.mrb[0].mxu0 %v48
  %v8077 = vpop.f32.mrb[0].mxu0
  %v8078 = vadd.f32 %v8037, %v8077
  %v8079 = vpop.f32.mrb[0].mxu0
  %v8080 = vadd.f32 %v8039, %v8079
  %v8081 = vpop.f32.mrb[0].mxu0
  %v8082 = vpop.f32.mrb[0].mxu0
  %8083 = vdwg.mxu0
  %8084 = vmatprep.subr.bf16.mxu0 %v7379
  %8085 = vmatpush1.bf16.msra.mxu0 %v7378
  %8086 = vmatprep.subr.bf16.mxu0 %v7386
  %8087 = vmatpush1.bf16.msra.mxu0 %v7385
  %8088 = vmatprep.subr.bf16.mxu0 %v7393
  %8089 = vmatpush1.bf16.msra.mxu0 %v7392
  %8090 = vmatprep.subr.bf16.mxu0 %v7400
  %8091 = vmatpush1.bf16.msra.mxu0 %v7399
  %8092 = vmatprep.subr.bf16.mxu0 %v7407
  %8093 = vmatpush1.bf16.msra.mxu0 %v7406
  %8094 = vmatprep.subr.bf16.mxu0 %v7414
  %8095 = vmatpush1.bf16.msra.mxu0 %v7413
  %8096 = vmatprep.subr.bf16.mxu0 %v7421
  %8097 = vmatpush1.bf16.msra.mxu0 %v7420
  %8098 = vmatprep.subr.bf16.mxu0 %v7428
  %8099 = vmatpush1.bf16.msra.mxu0 %v7427
  %8100 = vmatprep.subr.bf16.mxu0 %v7435
  %8101 = vmatpush1.bf16.msra.mxu0 %v7434
  %8102 = vmatprep.subr.bf16.mxu0 %v7442
  %8103 = vmatpush1.bf16.msra.mxu0 %v7441
  %8104 = vmatprep.subr.bf16.mxu0 %v7449
  %8105 = vmatpush1.bf16.msra.mxu0 %v7448
  %8106 = vmatprep.subr.bf16.mxu0 %v7456
  %8107 = vmatpush1.bf16.msra.mxu0 %v7455
  %8108 = vmatprep.subr.bf16.mxu0 %v7463
  %8109 = vmatpush1.bf16.msra.mxu0 %v7462
  %8110 = vmatprep.subr.bf16.mxu0 %v7470
  %8111 = vmatpush1.bf16.msra.mxu0 %v7469
  %8112 = vmatprep.subr.bf16.mxu0 %v7477
  %8113 = vmatpush1.bf16.msra.mxu0 %v7476
  %8114 = vmatprep.subr.bf16.mxu0 %v7484
  %8115 = vmatpush1.bf16.msra.mxu0 %v7483
  %8116 = vmatprep.mubr.bf16.mxu0 %v51
  %8117 = vmatmul.mubr.bf16.gmra.mrb[0].mxu0 %v50
  %v8118 = vpop.f32.mrb[0].mxu0
  %v8119 = vadd.f32 %v8078, %v8118
  %v8120 = vpop.f32.mrb[0].mxu0
  %v8121 = vadd.f32 %v8080, %v8120
  %v8122 = vpop.f32.mrb[0].mxu0
  %v8123 = vpop.f32.mrb[0].mxu0
  %8124 = vdwg.mxu0
  %8125 = vmatprep.subr.bf16.mxu0 %v7491
  %8126 = vmatpush1.bf16.msra.mxu0 %v7490
  %8127 = vmatprep.subr.bf16.mxu0 0
  %8128 = vmatpush1.bf16.msra.mxu0 0
  %8129 = vmatprep.subr.bf16.mxu0 0
  %8130 = vmatpush1.bf16.msra.mxu0 0
  %8131 = vmatprep.subr.bf16.mxu0 0
  %8132 = vmatpush1.bf16.msra.mxu0 0
  %8133 = vmatprep.subr.bf16.mxu0 0
  %8134 = vmatpush1.bf16.msra.mxu0 0
  %8135 = vmatprep.subr.bf16.mxu0 0
  %8136 = vmatpush1.bf16.msra.mxu0 0
  %8137 = vmatprep.subr.bf16.mxu0 0
  %8138 = vmatpush1.bf16.msra.mxu0 0
  %8139 = vmatprep.subr.bf16.mxu0 0
  %8140 = vmatpush1.bf16.msra.mxu0 0
  %8141 = vmatprep.subr.bf16.mxu0 0
  %8142 = vmatpush1.bf16.msra.mxu0 0
  %8143 = vmatprep.subr.bf16.mxu0 0
  %8144 = vmatpush1.bf16.msra.mxu0 0
  %8145 = vmatprep.subr.bf16.mxu0 0
  %8146 = vmatpush1.bf16.msra.mxu0 0
  %8147 = vmatprep.subr.bf16.mxu0 0
  %8148 = vmatpush1.bf16.msra.mxu0 0
  %8149 = vmatprep.subr.bf16.mxu0 0
  %8150 = vmatpush1.bf16.msra.mxu0 0
  %8151 = vmatprep.subr.bf16.mxu0 0
  %8152 = vmatpush1.bf16.msra.mxu0 0
  %8153 = vmatprep.subr.bf16.mxu0 0
  %8154 = vmatpush1.bf16.msra.mxu0 0
  %8155 = vmatprep.subr.bf16.mxu0 0
  %8156 = vmatpush1.bf16.msra.mxu0 0
  %8157 = vmatprep.mubr.bf16.mxu0 0
  %8158 = vmatmul.mubr.bf16.gmra.mrb[0].mxu0 %v2211
  %v8159 = vpop.f32.mrb[0].mxu0
  %v8160 = vadd.f32 %v8119, %v8159
  %v8161 = vpop.f32.mrb[0].mxu0
  %v8162 = vadd.f32 %v8121, %v8161
  %v8163 = vpop.f32.mrb[0].mxu0
  %v8164 = vpop.f32.mrb[0].mxu0
  %8165 = vdwg.mxu0
  %8166 = vmatprep.subr.bf16.mxu0 %v7157
  %8167 = vmatpush1.bf16.msra.mxu0 %v7156
  %8168 = vmatprep.subr.bf16.mxu0 %v7164
  %8169 = vmatpush1.bf16.msra.mxu0 %v7163
  %8170 = vmatprep.subr.bf16.mxu0 %v7171
  %8171 = vmatpush1.bf16.msra.mxu0 %v7170
  %8172 = vmatprep.subr.bf16.mxu0 %v7178
  %8173 = vmatpush1.bf16.msra.mxu0 %v7177
  %8174 = vmatprep.subr.bf16.mxu0 %v7185
  %8175 = vmatpush1.bf16.msra.mxu0 %v7184
  %8176 = vmatprep.subr.bf16.mxu0 %v7192
  %8177 = vmatpush1.bf16.msra.mxu0 %v7191
  %8178 = vmatprep.subr.bf16.mxu0 %v7199
  %8179 = vmatpush1.bf16.msra.mxu0 %v7198
  %8180 = vmatprep.subr.bf16.mxu0 %v7206
  %8181 = vmatpush1.bf16.msra.mxu0 %v7205
  %8182 = vmatprep.subr.bf16.mxu0 %v7213
  %8183 = vmatpush1.bf16.msra.mxu0 %v7212
  %8184 = vmatprep.subr.bf16.mxu0 %v7220
  %8185 = vmatpush1.bf16.msra.mxu0 %v7219
  %8186 = vmatprep.subr.bf16.mxu0 %v7227
  %8187 = vmatpush1.bf16.msra.mxu0 %v7226
  %8188 = vmatprep.subr.bf16.mxu0 %v7234
  %8189 = vmatpush1.bf16.msra.mxu0 %v7233
  %8190 = vmatprep.subr.bf16.mxu0 %v7241
  %8191 = vmatpush1.bf16.msra.mxu0 %v7240
  %8192 = vmatprep.subr.bf16.mxu0 %v7248
  %8193 = vmatpush1.bf16.msra.mxu0 %v7247
  %8194 = vmatprep.subr.bf16.mxu0 %v7255
  %8195 = vmatpush1.bf16.msra.mxu0 %v7254
  %8196 = vmatprep.subr.bf16.mxu0 %v7262
  %8197 = vmatpush1.bf16.msra.mxu0 %v7261
  %8198 = vmatprep.mubr.bf16.mxu0 %v47
  %8199 = vmatmul.mubr.bf16.gmra.mrb[0].mxu0 %v46
  %v8200 = vpop.f32.mrb[0].mxu0
  %v8201 = vadd.f32 0.0, %v8200
  %v8202 = vpop.f32.mrb[0].mxu0
  %v8203 = vadd.f32 0.0, %v8202
  %v8204 = vpop.f32.mrb[0].mxu0
  %v8205 = vpop.f32.mrb[0].mxu0
  %8206 = vdwg.mxu0
  %8207 = vmatprep.subr.bf16.mxu0 %v7269
  %8208 = vmatpush1.bf16.msra.mxu0 %v7268
  %8209 = vmatprep.subr.bf16.mxu0 %v7276
  %8210 = vmatpush1.bf16.msra.mxu0 %v7275
  %8211 = vmatprep.subr.bf16.mxu0 %v7283
  %8212 = vmatpush1.bf16.msra.mxu0 %v7282
  %8213 = vmatprep.subr.bf16.mxu0 %v7290
  %8214 = vmatpush1.bf16.msra.mxu0 %v7289
  %8215 = vmatprep.subr.bf16.mxu0 %v7297
  %8216 = vmatpush1.bf16.msra.mxu0 %v7296
  %8217 = vmatprep.subr.bf16.mxu0 %v7304
  %8218 = vmatpush1.bf16.msra.mxu0 %v7303
  %8219 = vmatprep.subr.bf16.mxu0 %v7311
  %8220 = vmatpush1.bf16.msra.mxu0 %v7310
  %8221 = vmatprep.subr.bf16.mxu0 %v7318
  %8222 = vmatpush1.bf16.msra.mxu0 %v7317
  %8223 = vmatprep.subr.bf16.mxu0 %v7325
  %8224 = vmatpush1.bf16.msra.mxu0 %v7324
  %8225 = vmatprep.subr.bf16.mxu0 %v7332
  %8226 = vmatpush1.bf16.msra.mxu0 %v7331
  %8227 = vmatprep.subr.bf16.mxu0 %v7339
  %8228 = vmatpush1.bf16.msra.mxu0 %v7338
  %8229 = vmatprep.subr.bf16.mxu0 %v7346
  %8230 = vmatpush1.bf16.msra.mxu0 %v7345
  %8231 = vmatprep.subr.bf16.mxu0 %v7353
  %8232 = vmatpush1.bf16.msra.mxu0 %v7352
  %8233 = vmatprep.subr.bf16.mxu0 %v7360
  %8234 = vmatpush1.bf16.msra.mxu0 %v7359
  %8235 = vmatprep.subr.bf16.mxu0 %v7367
  %8236 = vmatpush1.bf16.msra.mxu0 %v7366
  %8237 = vmatprep.subr.bf16.mxu0 %v7374
  %8238 = vmatpush1.bf16.msra.mxu0 %v7373
  %8239 = vmatprep.mubr.bf16.mxu0 %v49
  %8240 = vmatmul.mubr.bf16.gmra.mrb[0].mxu0 %v48
  %v8241 = vpop.f32.mrb[0].mxu0
  %v8242 = vadd.f32 %v8201, %v8241
  %v8243 = vpop.f32.mrb[0].mxu0
  %v8244 = vadd.f32 %v8203, %v8243
  %v8245 = vpop.f32.mrb[0].mxu0
  %v8246 = vpop.f32.mrb[0].mxu0
  %8247 = vdwg.mxu0
  %8248 = vmatprep.subr.bf16.mxu0 %v7381
  %8249 = vmatpush1.bf16.msra.mxu0 %v7380
  %8250 = vmatprep.subr.bf16.mxu0 %v7388
  %8251 = vmatpush1.bf16.msra.mxu0 %v7387
  %8252 = vmatprep.subr.bf16.mxu0 %v7395
  %8253 = vmatpush1.bf16.msra.mxu0 %v7394
  %8254 = vmatprep.subr.bf16.mxu0 %v7402
  %8255 = vmatpush1.bf16.msra.mxu0 %v7401
  %8256 = vmatprep.subr.bf16.mxu0 %v7409
  %8257 = vmatpush1.bf16.msra.mxu0 %v7408
  %8258 = vmatprep.subr.bf16.mxu0 %v7416
  %8259 = vmatpush1.bf16.msra.mxu0 %v7415
  %8260 = vmatprep.subr.bf16.mxu0 %v7423
  %8261 = vmatpush1.bf16.msra.mxu0 %v7422
  %8262 = vmatprep.subr.bf16.mxu0 %v7430
  %8263 = vmatpush1.bf16.msra.mxu0 %v7429
  %8264 = vmatprep.subr.bf16.mxu0 %v7437
  %8265 = vmatpush1.bf16.msra.mxu0 %v7436
  %8266 = vmatprep.subr.bf16.mxu0 %v7444
  %8267 = vmatpush1.bf16.msra.mxu0 %v7443
  %8268 = vmatprep.subr.bf16.mxu0 %v7451
  %8269 = vmatpush1.bf16.msra.mxu0 %v7450
  %8270 = vmatprep.subr.bf16.mxu0 %v7458
  %8271 = vmatpush1.bf16.msra.mxu0 %v7457
  %8272 = vmatprep.subr.bf16.mxu0 %v7465
  %8273 = vmatpush1.bf16.msra.mxu0 %v7464
  %8274 = vmatprep.subr.bf16.mxu0 %v7472
  %8275 = vmatpush1.bf16.msra.mxu0 %v7471
  %8276 = vmatprep.subr.bf16.mxu0 %v7479
  %8277 = vmatpush1.bf16.msra.mxu0 %v7478
  %8278 = vmatprep.subr.bf16.mxu0 %v7486
  %8279 = vmatpush1.bf16.msra.mxu0 %v7485
  %8280 = vmatprep.mubr.bf16.mxu0 %v51
  %8281 = vmatmul.mubr.bf16.gmra.mrb[0].mxu0 %v50
  %v8282 = vpop.f32.mrb[0].mxu0
  %v8283 = vadd.f32 %v8242, %v8282
  %v8284 = vpop.f32.mrb[0].mxu0
  %v8285 = vadd.f32 %v8244, %v8284
  %v8286 = vpop.f32.mrb[0].mxu0
  %v8287 = vpop.f32.mrb[0].mxu0
  %8288 = vdwg.mxu0
  %8289 = vmatprep.subr.bf16.mxu0 %v7493
  %8290 = vmatpush1.bf16.msra.mxu0 %v7492
  %8291 = vmatprep.subr.bf16.mxu0 0
  %8292 = vmatpush1.bf16.msra.mxu0 0
  %8293 = vmatprep.subr.bf16.mxu0 0
  %8294 = vmatpush1.bf16.msra.mxu0 0
  %8295 = vmatprep.subr.bf16.mxu0 0
  %8296 = vmatpush1.bf16.msra.mxu0 0
  %8297 = vmatprep.subr.bf16.mxu0 0
  %8298 = vmatpush1.bf16.msra.mxu0 0
  %8299 = vmatprep.subr.bf16.mxu0 0
  %8300 = vmatpush1.bf16.msra.mxu0 0
  %8301 = vmatprep.subr.bf16.mxu0 0
  %8302 = vmatpush1.bf16.msra.mxu0 0
  %8303 = vmatprep.subr.bf16.mxu0 0
  %8304 = vmatpush1.bf16.msra.mxu0 0
  %8305 = vmatprep.subr.bf16.mxu0 0
  %8306 = vmatpush1.bf16.msra.mxu0 0
  %8307 = vmatprep.subr.bf16.mxu0 0
  %8308 = vmatpush1.bf16.msra.mxu0 0
  %8309 = vmatprep.subr.bf16.mxu0 0
  %8310 = vmatpush1.bf16.msra.mxu0 0
  %8311 = vmatprep.subr.bf16.mxu0 0
  %8312 = vmatpush1.bf16.msra.mxu0 0
  %8313 = vmatprep.subr.bf16.mxu0 0
  %8314 = vmatpush1.bf16.msra.mxu0 0
  %8315 = vmatprep.subr.bf16.mxu0 0
  %8316 = vmatpush1.bf16.msra.mxu0 0
  %8317 = vmatprep.subr.bf16.mxu0 0
  %8318 = vmatpush1.bf16.msra.mxu0 0
  %8319 = vmatprep.subr.bf16.mxu0 0
  %8320 = vmatpush1.bf16.msra.mxu0 0
  %8321 = vmatprep.mubr.bf16.mxu0 0
  %8322 = vmatmul.mubr.bf16.gmra.mrb[0].mxu0 %v2211
  %v8323 = vpop.f32.mrb[0].mxu0
  %v8324 = vadd.f32 %v8283, %v8323
  %v8325 = vpop.f32.mrb[0].mxu0
  %v8326 = vadd.f32 %v8285, %v8325
  %v8327 = vpop.f32.mrb[0].mxu0
  %v8328 = vpop.f32.mrb[0].mxu0
  %8329 = vdwg.mxu0
  %8330 = vmatprep.subr.bf16.mxu0 0
  %8331 = vmatpush1.bf16.msra.mxu0 %v7158
  %8332 = vmatprep.subr.bf16.mxu0 0
  %8333 = vmatpush1.bf16.msra.mxu0 %v7165
  %8334 = vmatprep.subr.bf16.mxu0 0
  %8335 = vmatpush1.bf16.msra.mxu0 %v7172
  %8336 = vmatprep.subr.bf16.mxu0 0
  %8337 = vmatpush1.bf16.msra.mxu0 %v7179
  %8338 = vmatprep.subr.bf16.mxu0 0
  %8339 = vmatpush1.bf16.msra.mxu0 %v7186
  %8340 = vmatprep.subr.bf16.mxu0 0
  %8341 = vmatpush1.bf16.msra.mxu0 %v7193
  %8342 = vmatprep.subr.bf16.mxu0 0
  %8343 = vmatpush1.bf16.msra.mxu0 %v7200
  %8344 = vmatprep.subr.bf16.mxu0 0
  %8345 = vmatpush1.bf16.msra.mxu0 %v7207
  %8346 = vmatprep.subr.bf16.mxu0 0
  %8347 = vmatpush1.bf16.msra.mxu0 %v7214
  %8348 = vmatprep.subr.bf16.mxu0 0
  %8349 = vmatpush1.bf16.msra.mxu0 %v7221
  %8350 = vmatprep.subr.bf16.mxu0 0
  %8351 = vmatpush1.bf16.msra.mxu0 %v7228
  %8352 = vmatprep.subr.bf16.mxu0 0
  %8353 = vmatpush1.bf16.msra.mxu0 %v7235
  %8354 = vmatprep.subr.bf16.mxu0 0
  %8355 = vmatpush1.bf16.msra.mxu0 %v7242
  %8356 = vmatprep.subr.bf16.mxu0 0
  %8357 = vmatpush1.bf16.msra.mxu0 %v7249
  %8358 = vmatprep.subr.bf16.mxu0 0
  %8359 = vmatpush1.bf16.msra.mxu0 %v7256
  %8360 = vmatprep.subr.bf16.mxu0 0
  %8361 = vmatpush1.bf16.msra.mxu0 %v7263
  %8362 = vmatprep.mubr.bf16.mxu0 %v47
  %8363 = vmatmul.mubr.bf16.gmra.mrb[0].mxu0 %v46
  %v8364 = vpop.f32.mrb[0].mxu0
  %v8365 = vadd.f32 0.0, %v8364
  %v8366 = vpop.f32.mrb[0].mxu0
  %v8367 = vpop.f32.mrb[0].mxu0
  %v8368 = vpop.f32.mrb[0].mxu0
  %8369 = vdwg.mxu0
  %8370 = vmatprep.subr.bf16.mxu0 0
  %8371 = vmatpush1.bf16.msra.mxu0 %v7270
  %8372 = vmatprep.subr.bf16.mxu0 0
  %8373 = vmatpush1.bf16.msra.mxu0 %v7277
  %8374 = vmatprep.subr.bf16.mxu0 0
  %8375 = vmatpush1.bf16.msra.mxu0 %v7284
  %8376 = vmatprep.subr.bf16.mxu0 0
  %8377 = vmatpush1.bf16.msra.mxu0 %v7291
  %8378 = vmatprep.subr.bf16.mxu0 0
  %8379 = vmatpush1.bf16.msra.mxu0 %v7298
  %8380 = vmatprep.subr.bf16.mxu0 0
  %8381 = vmatpush1.bf16.msra.mxu0 %v7305
  %8382 = vmatprep.subr.bf16.mxu0 0
  %8383 = vmatpush1.bf16.msra.mxu0 %v7312
  %8384 = vmatprep.subr.bf16.mxu0 0
  %8385 = vmatpush1.bf16.msra.mxu0 %v7319
  %8386 = vmatprep.subr.bf16.mxu0 0
  %8387 = vmatpush1.bf16.msra.mxu0 %v7326
  %8388 = vmatprep.subr.bf16.mxu0 0
  %8389 = vmatpush1.bf16.msra.mxu0 %v7333
  %8390 = vmatprep.subr.bf16.mxu0 0
  %8391 = vmatpush1.bf16.msra.mxu0 %v7340
  %8392 = vmatprep.subr.bf16.mxu0 0
  %8393 = vmatpush1.bf16.msra.mxu0 %v7347
  %8394 = vmatprep.subr.bf16.mxu0 0
  %8395 = vmatpush1.bf16.msra.mxu0 %v7354
  %8396 = vmatprep.subr.bf16.mxu0 0
  %8397 = vmatpush1.bf16.msra.mxu0 %v7361
  %8398 = vmatprep.subr.bf16.mxu0 0
  %8399 = vmatpush1.bf16.msra.mxu0 %v7368
  %8400 = vmatprep.subr.bf16.mxu0 0
  %8401 = vmatpush1.bf16.msra.mxu0 %v7375
  %8402 = vmatprep.mubr.bf16.mxu0 %v49
  %8403 = vmatmul.mubr.bf16.gmra.mrb[0].mxu0 %v48
  %v8404 = vpop.f32.mrb[0].mxu0
  %v8405 = vadd.f32 %v8365, %v8404
  %v8406 = vpop.f32.mrb[0].mxu0
  %v8407 = vpop.f32.mrb[0].mxu0
  %v8408 = vpop.f32.mrb[0].mxu0
  %8409 = vdwg.mxu0
  %8410 = vmatprep.subr.bf16.mxu0 0
  %8411 = vmatpush1.bf16.msra.mxu0 %v7382
  %8412 = vmatprep.subr.bf16.mxu0 0
  %8413 = vmatpush1.bf16.msra.mxu0 %v7389
  %8414 = vmatprep.subr.bf16.mxu0 0
  %8415 = vmatpush1.bf16.msra.mxu0 %v7396
  %8416 = vmatprep.subr.bf16.mxu0 0
  %8417 = vmatpush1.bf16.msra.mxu0 %v7403
  %8418 = vmatprep.subr.bf16.mxu0 0
  %8419 = vmatpush1.bf16.msra.mxu0 %v7410
  %8420 = vmatprep.subr.bf16.mxu0 0
  %8421 = vmatpush1.bf16.msra.mxu0 %v7417
  %8422 = vmatprep.subr.bf16.mxu0 0
  %8423 = vmatpush1.bf16.msra.mxu0 %v7424
  %8424 = vmatprep.subr.bf16.mxu0 0
  %8425 = vmatpush1.bf16.msra.mxu0 %v7431
  %8426 = vmatprep.subr.bf16.mxu0 0
  %8427 = vmatpush1.bf16.msra.mxu0 %v7438
  %8428 = vmatprep.subr.bf16.mxu0 0
  %8429 = vmatpush1.bf16.msra.mxu0 %v7445
  %8430 = vmatprep.subr.bf16.mxu0 0
  %8431 = vmatpush1.bf16.msra.mxu0 %v7452
  %8432 = vmatprep.subr.bf16.mxu0 0
  %8433 = vmatpush1.bf16.msra.mxu0 %v7459
  %8434 = vmatprep.subr.bf16.mxu0 0
  %8435 = vmatpush1.bf16.msra.mxu0 %v7466
  %8436 = vmatprep.subr.bf16.mxu0 0
  %8437 = vmatpush1.bf16.msra.mxu0 %v7473
  %8438 = vmatprep.subr.bf16.mxu0 0
  %8439 = vmatpush1.bf16.msra.mxu0 %v7480
  %8440 = vmatprep.subr.bf16.mxu0 0
  %8441 = vmatpush1.bf16.msra.mxu0 %v7487
  %8442 = vmatprep.mubr.bf16.mxu0 %v51
  %8443 = vmatmul.mubr.bf16.gmra.mrb[0].mxu0 %v50
  %v8444 = vpop.f32.mrb[0].mxu0
  %v8445 = vadd.f32 %v8405, %v8444
  %v8446 = vpop.f32.mrb[0].mxu0
  %v8447 = vpop.f32.mrb[0].mxu0
  %v8448 = vpop.f32.mrb[0].mxu0
  %8449 = vdwg.mxu0
  %8450 = vmatprep.subr.bf16.mxu0 0
  %8451 = vmatpush1.bf16.msra.mxu0 %v7494
  %8452 = vmatprep.subr.bf16.mxu0 0
  %8453 = vmatpush1.bf16.msra.mxu0 0
  %8454 = vmatprep.subr.bf16.mxu0 0
  %8455 = vmatpush1.bf16.msra.mxu0 0
  %8456 = vmatprep.subr.bf16.mxu0 0
  %8457 = vmatpush1.bf16.msra.mxu0 0
  %8458 = vmatprep.subr.bf16.mxu0 0
  %8459 = vmatpush1.bf16.msra.mxu0 0
  %8460 = vmatprep.subr.bf16.mxu0 0
  %8461 = vmatpush1.bf16.msra.mxu0 0
  %8462 = vmatprep.subr.bf16.mxu0 0
  %8463 = vmatpush1.bf16.msra.mxu0 0
  %8464 = vmatprep.subr.bf16.mxu0 0
  %8465 = vmatpush1.bf16.msra.mxu0 0
  %8466 = vmatprep.subr.bf16.mxu0 0
  %8467 = vmatpush1.bf16.msra.mxu0 0
  %8468 = vmatprep.subr.bf16.mxu0 0
  %8469 = vmatpush1.bf16.msra.mxu0 0
  %8470 = vmatprep.subr.bf16.mxu0 0
  %8471 = vmatpush1.bf16.msra.mxu0 0
  %8472 = vmatprep.subr.bf16.mxu0 0
  %8473 = vmatpush1.bf16.msra.mxu0 0
  %8474 = vmatprep.subr.bf16.mxu0 0
  %8475 = vmatpush1.bf16.msra.mxu0 0
  %8476 = vmatprep.subr.bf16.mxu0 0
  %8477 = vmatpush1.bf16.msra.mxu0 0
  %8478 = vmatprep.subr.bf16.mxu0 0
  %8479 = vmatpush1.bf16.msra.mxu0 0
  %8480 = vmatprep.subr.bf16.mxu0 0
  %8481 = vmatpush1.bf16.msra.mxu0 0
  %8482 = vmatprep.mubr.bf16.mxu0 0
  %8483 = vmatmul.mubr.bf16.gmra.mrb[0].mxu0 %v2211
  %v8484 = vpop.f32.mrb[0].mxu0
  %v8485 = vadd.f32 %v8445, %v8484
  %v8486 = vpop.f32.mrb[0].mxu0
  %v8487 = vpop.f32.mrb[0].mxu0
  %v8488 = vpop.f32.mrb[0].mxu0
  %8489 = vdwg.mxu0
  %v8490 = vmax.f32 %v5674, %v7996
  %v8491 = vmax.f32 %v5675, %v7998
  %v8492 = vmax.f32 %v5676, %v8160
  %v8493 = vmax.f32 %v5677, %v8162
  %v8494 = vmax.f32 %v5678, %v8324
  %v8495 = vmax.f32 %v5679, %v8326
  %v8496 = vmax.f32 %v5680, %v8485
  %s8497 = scalar_lea.vmem %s1, 8232
  %v8498 = vld [vmem:[%s8497] sm:$0xff]
  %v8499 = vld [vmem:[%s8497 + $0x8] sm:$0xff]
  %v8500 = vld [vmem:[%s8497 + $0x10] sm:$0xff]
  %v8501 = vld [vmem:[%s8497 + $0x18] sm:$0xf]
  %v8502 = vld [vmem:[%s8497 + $0x1c] sm:$0xff]
  %v8503 = vld [vmem:[%s8497 + $0x24] sm:$0xff]
  %v8504 = vld [vmem:[%s8497 + $0x2c] sm:$0xff]
  %v8505 = vld [vmem:[%s8497 + $0x34] sm:$0xf]
  %v8506 = vld [vmem:[%s8497 + $0x38] sm:$0xff]
  %v8507 = vld [vmem:[%s8497 + $0x40] sm:$0xff]
  %v8508 = vld [vmem:[%s8497 + $0x48] sm:$0xff]
  %v8509 = vld [vmem:[%s8497 + $0x50] sm:$0xf]
  %v8510 = vld [vmem:[%s8497 + $0x54] sm:$0xff]
  %v8511 = vld [vmem:[%s8497 + $0x5c] sm:$0xff]
  %v8512 = vld [vmem:[%s8497 + $0x64] sm:$0xff]
  %v8513 = vld [vmem:[%s8497 + $0x6c] sm:$0xf]
  %v8514 = vld [vmem:[%s8497 + $0x70] sm:$0xff]
  %v8515 = vld [vmem:[%s8497 + $0x78] sm:$0xff]
  %v8516 = vld [vmem:[%s8497 + $0x80] sm:$0xff]
  %v8517 = vld [vmem:[%s8497 + $0x88] sm:$0xf]
  %v8518 = vld [vmem:[%s8497 + $0x8c] sm:$0xff]
  %v8519 = vld [vmem:[%s8497 + $0x94] sm:$0xff]
  %v8520 = vld [vmem:[%s8497 + $0x9c] sm:$0xff]
  %v8521 = vld [vmem:[%s8497 + $0xa4] sm:$0xf]
  %v8522 = vld [vmem:[%s8497 + $0xa8] sm:$0xff]
  %v8523 = vld [vmem:[%s8497 + $0xb0] sm:$0xff]
  %v8524 = vld [vmem:[%s8497 + $0xb8] sm:$0xff]
  %v8525 = vld [vmem:[%s8497 + $0xc0] sm:$0xf]
  %v8526 = vld [vmem:[%s8497 + $0xc4] sm:$0xff]
  %v8527 = vld [vmem:[%s8497 + $0xcc] sm:$0xff]
  %v8528 = vld [vmem:[%s8497 + $0xd4] sm:$0xff]
  %v8529 = vld [vmem:[%s8497 + $0xdc] sm:$0xf]
  %v8530 = vld [vmem:[%s8497 + $0xe0] sm:$0xff]
  %v8531 = vld [vmem:[%s8497 + $0xe8] sm:$0xff]
  %v8532 = vld [vmem:[%s8497 + $0xf0] sm:$0xff]
  %v8533 = vld [vmem:[%s8497 + $0xf8] sm:$0xf]
  %v8534 = vld [vmem:[%s8497 + $0xfc] sm:$0xff]
  %v8535 = vld [vmem:[%s8497 + $0x104] sm:$0xff]
  %v8536 = vld [vmem:[%s8497 + $0x10c] sm:$0xff]
  %v8537 = vld [vmem:[%s8497 + $0x114] sm:$0xf]
  %v8538 = vld [vmem:[%s8497 + $0x118] sm:$0xff]
  %v8539 = vld [vmem:[%s8497 + $0x120] sm:$0xff]
  %v8540 = vld [vmem:[%s8497 + $0x128] sm:$0xff]
  %v8541 = vld [vmem:[%s8497 + $0x130] sm:$0xf]
  %v8542 = vld [vmem:[%s8497 + $0x134] sm:$0xff]
  %v8543 = vld [vmem:[%s8497 + $0x13c] sm:$0xff]
  %v8544 = vld [vmem:[%s8497 + $0x144] sm:$0xff]
  %v8545 = vld [vmem:[%s8497 + $0x14c] sm:$0xf]
  %v8546 = vld [vmem:[%s8497 + $0x150] sm:$0xff]
  %v8547 = vld [vmem:[%s8497 + $0x158] sm:$0xff]
  %v8548 = vld [vmem:[%s8497 + $0x160] sm:$0xff]
  %v8549 = vld [vmem:[%s8497 + $0x168] sm:$0xf]
  %v8550 = vld [vmem:[%s8497 + $0x16c] sm:$0xff]
  %v8551 = vld [vmem:[%s8497 + $0x174] sm:$0xff]
  %v8552 = vld [vmem:[%s8497 + $0x17c] sm:$0xff]
  %v8553 = vld [vmem:[%s8497 + $0x184] sm:$0xf]
  %v8554 = vld [vmem:[%s8497 + $0x188] sm:$0xff]
  %v8555 = vld [vmem:[%s8497 + $0x190] sm:$0xff]
  %v8556 = vld [vmem:[%s8497 + $0x198] sm:$0xff]
  %v8557 = vld [vmem:[%s8497 + $0x1a0] sm:$0xf]
  %v8558 = vld [vmem:[%s8497 + $0x1a4] sm:$0xff]
  %v8559 = vld [vmem:[%s8497 + $0x1ac] sm:$0xff]
  %v8560 = vld [vmem:[%s8497 + $0x1b4] sm:$0xff]
  %v8561 = vld [vmem:[%s8497 + $0x1bc] sm:$0xf]
  %v8562 = vld [vmem:[%s8497 + $0x1c0] sm:$0xff]
  %v8563 = vld [vmem:[%s8497 + $0x1c8] sm:$0xff]
  %v8564 = vld [vmem:[%s8497 + $0x1d0] sm:$0xff]
  %v8565 = vld [vmem:[%s8497 + $0x1d8] sm:$0xf]
  %v8566 = vld [vmem:[%s8497 + $0x1dc] sm:$0xff]
  %v8567 = vld [vmem:[%s8497 + $0x1e4] sm:$0xff]
  %v8568 = vld [vmem:[%s8497 + $0x1ec] sm:$0xff]
  %v8569 = vld [vmem:[%s8497 + $0x1f4] sm:$0xf]
  %v8570 = vld [vmem:[%s8497 + $0x1f8] sm:$0xff]
  %v8571 = vld [vmem:[%s8497 + $0x200] sm:$0xff]
  %v8572 = vld [vmem:[%s8497 + $0x208] sm:$0xff]
  %v8573 = vld [vmem:[%s8497 + $0x210] sm:$0xf]
  %v8574 = vld [vmem:[%s8497 + $0x214] sm:$0xff]
  %v8575 = vld [vmem:[%s8497 + $0x21c] sm:$0xff]
  %v8576 = vld [vmem:[%s8497 + $0x224] sm:$0xff]
  %v8577 = vld [vmem:[%s8497 + $0x22c] sm:$0xf]
  %v8578 = vld [vmem:[%s8497 + $0x230] sm:$0xff]
  %v8579 = vld [vmem:[%s8497 + $0x238] sm:$0xff]
  %v8580 = vld [vmem:[%s8497 + $0x240] sm:$0xff]
  %v8581 = vld [vmem:[%s8497 + $0x248] sm:$0xf]
  %v8582 = vld [vmem:[%s8497 + $0x24c] sm:$0xff]
  %v8583 = vld [vmem:[%s8497 + $0x254] sm:$0xff]
  %v8584 = vld [vmem:[%s8497 + $0x25c] sm:$0xff]
  %v8585 = vld [vmem:[%s8497 + $0x264] sm:$0xf]
  %v8586 = vld [vmem:[%s8497 + $0x268] sm:$0xff]
  %v8587 = vld [vmem:[%s8497 + $0x270] sm:$0xff]
  %v8588 = vld [vmem:[%s8497 + $0x278] sm:$0xff]
  %v8589 = vld [vmem:[%s8497 + $0x280] sm:$0xf]
  %v8590 = vld [vmem:[%s8497 + $0x284] sm:$0xff]
  %v8591 = vld [vmem:[%s8497 + $0x28c] sm:$0xff]
  %v8592 = vld [vmem:[%s8497 + $0x294] sm:$0xff]
  %v8593 = vld [vmem:[%s8497 + $0x29c] sm:$0xf]
  %v8594 = vld [vmem:[%s8497 + $0x2a0] sm:$0xff]
  %v8595 = vld [vmem:[%s8497 + $0x2a8] sm:$0xff]
  %v8596 = vld [vmem:[%s8497 + $0x2b0] sm:$0xff]
  %v8597 = vld [vmem:[%s8497 + $0x2b8] sm:$0xf]
  %v8598 = vld [vmem:[%s8497 + $0x2bc] sm:$0xff]
  %v8599 = vld [vmem:[%s8497 + $0x2c4] sm:$0xff]
  %v8600 = vld [vmem:[%s8497 + $0x2cc] sm:$0xff]
  %v8601 = vld [vmem:[%s8497 + $0x2d4] sm:$0xf]
  %v8602 = vld [vmem:[%s8497 + $0x2d8] sm:$0xff]
  %v8603 = vld [vmem:[%s8497 + $0x2e0] sm:$0xff]
  %v8604 = vld [vmem:[%s8497 + $0x2e8] sm:$0xff]
  %v8605 = vld [vmem:[%s8497 + $0x2f0] sm:$0xf]
  %v8606 = vld [vmem:[%s8497 + $0x2f4] sm:$0xff]
  %v8607 = vld [vmem:[%s8497 + $0x2fc] sm:$0xff]
  %v8608 = vld [vmem:[%s8497 + $0x304] sm:$0xff]
  %v8609 = vld [vmem:[%s8497 + $0x30c] sm:$0xf]
  %v8610 = vld [vmem:[%s8497 + $0x310] sm:$0xff]
  %v8611 = vld [vmem:[%s8497 + $0x318] sm:$0xff]
  %v8612 = vld [vmem:[%s8497 + $0x320] sm:$0xff]
  %v8613 = vld [vmem:[%s8497 + $0x328] sm:$0xf]
  %v8614 = vld [vmem:[%s8497 + $0x32c] sm:$0xff]
  %v8615 = vld [vmem:[%s8497 + $0x334] sm:$0xff]
  %v8616 = vld [vmem:[%s8497 + $0x33c] sm:$0xff]
  %v8617 = vld [vmem:[%s8497 + $0x344] sm:$0xf]
  %v8618 = vld [vmem:[%s8497 + $0x348] sm:$0xff]
  %v8619 = vld [vmem:[%s8497 + $0x350] sm:$0xff]
  %v8620 = vld [vmem:[%s8497 + $0x358] sm:$0xff]
  %v8621 = vld [vmem:[%s8497 + $0x360] sm:$0xf]
  %v8622 = vld [vmem:[%s8497 + $0x364] sm:$0xff]
  %v8623 = vld [vmem:[%s8497 + $0x36c] sm:$0xff]
  %v8624 = vld [vmem:[%s8497 + $0x374] sm:$0xff]
  %v8625 = vld [vmem:[%s8497 + $0x37c] sm:$0xf]
  %v8626 = vld [vmem:[%s8497 + $0x380] sm:$0xff]
  %v8627 = vld [vmem:[%s8497 + $0x388] sm:$0xff]
  %v8628 = vld [vmem:[%s8497 + $0x390] sm:$0xff]
  %v8629 = vld [vmem:[%s8497 + $0x398] sm:$0xf]
  %v8630 = vld [vmem:[%s8497 + $0x39c] sm:$0xff]
  %v8631 = vld [vmem:[%s8497 + $0x3a4] sm:$0xff]
  %v8632 = vld [vmem:[%s8497 + $0x3ac] sm:$0xff]
  %v8633 = vld [vmem:[%s8497 + $0x3b4] sm:$0xf]
  %v8634 = vld [vmem:[%s8497 + $0x3b8] sm:$0xff]
  %v8635 = vld [vmem:[%s8497 + $0x3c0] sm:$0xff]
  %v8636 = vld [vmem:[%s8497 + $0x3c8] sm:$0xff]
  %v8637 = vld [vmem:[%s8497 + $0x3d0] sm:$0xf]
  %v8638 = vld [vmem:[%s8497 + $0x3d4] sm:$0xff]
  %v8639 = vld [vmem:[%s8497 + $0x3dc] sm:$0xff]
  %v8640 = vld [vmem:[%s8497 + $0x3e4] sm:$0xff]
  %v8641 = vld [vmem:[%s8497 + $0x3ec] sm:$0xf]
  %v8642 = vld [vmem:[%s8497 + $0x3f0] sm:$0xff]
  %v8643 = vld [vmem:[%s8497 + $0x3f8] sm:$0xff]
  %v8644 = vld [vmem:[%s8497 + $0x400] sm:$0xff]
  %v8645 = vld [vmem:[%s8497 + $0x408] sm:$0xf]
  %v8646 = vld [vmem:[%s8497 + $0x40c] sm:$0xff]
  %v8647 = vld [vmem:[%s8497 + $0x414] sm:$0xff]
  %v8648 = vld [vmem:[%s8497 + $0x41c] sm:$0xff]
  %v8649 = vld [vmem:[%s8497 + $0x424] sm:$0xf]
  %v8650 = vld [vmem:[%s8497 + $0x428] sm:$0xff]
  %v8651 = vld [vmem:[%s8497 + $0x430] sm:$0xff]
  %v8652 = vld [vmem:[%s8497 + $0x438] sm:$0xff]
  %v8653 = vld [vmem:[%s8497 + $0x440] sm:$0xf]
  %v8654 = vld [vmem:[%s8497 + $0x444] sm:$0xff]
  %v8655 = vld [vmem:[%s8497 + $0x44c] sm:$0xff]
  %v8656 = vld [vmem:[%s8497 + $0x454] sm:$0xff]
  %v8657 = vld [vmem:[%s8497 + $0x45c] sm:$0xf]
  %v8658 = vld [vmem:[%s8497 + $0x460] sm:$0xff]
  %v8659 = vld [vmem:[%s8497 + $0x468] sm:$0xff]
  %v8660 = vld [vmem:[%s8497 + $0x470] sm:$0xff]
  %v8661 = vld [vmem:[%s8497 + $0x478] sm:$0xf]
  %v8662 = vld [vmem:[%s8497 + $0x47c] sm:$0xff]
  %v8663 = vld [vmem:[%s8497 + $0x484] sm:$0xff]
  %v8664 = vld [vmem:[%s8497 + $0x48c] sm:$0xff]
  %v8665 = vld [vmem:[%s8497 + $0x494] sm:$0xf]
  %v8666 = vld [vmem:[%s8497 + $0x498] sm:$0xff]
  %v8667 = vld [vmem:[%s8497 + $0x4a0] sm:$0xff]
  %v8668 = vld [vmem:[%s8497 + $0x4a8] sm:$0xff]
  %v8669 = vld [vmem:[%s8497 + $0x4b0] sm:$0xf]
  %v8670 = vld [vmem:[%s8497 + $0x4b4] sm:$0xff]
  %v8671 = vld [vmem:[%s8497 + $0x4bc] sm:$0xff]
  %v8672 = vld [vmem:[%s8497 + $0x4c4] sm:$0xff]
  %v8673 = vld [vmem:[%s8497 + $0x4cc] sm:$0xf]
  %v8674 = vld [vmem:[%s8497 + $0x4d0] sm:$0xff]
  %v8675 = vld [vmem:[%s8497 + $0x4d8] sm:$0xff]
  %v8676 = vld [vmem:[%s8497 + $0x4e0] sm:$0xff]
  %v8677 = vld [vmem:[%s8497 + $0x4e8] sm:$0xf]
  %v8678 = vld [vmem:[%s8497 + $0x4ec] sm:$0xff]
  %v8679 = vld [vmem:[%s8497 + $0x4f4] sm:$0xff]
  %v8680 = vld [vmem:[%s8497 + $0x4fc] sm:$0xff]
  %v8681 = vld [vmem:[%s8497 + $0x504] sm:$0xf]
  %v8682 = vld [vmem:[%s8497 + $0x508] sm:$0xff]
  %v8683 = vld [vmem:[%s8497 + $0x510] sm:$0xff]
  %v8684 = vld [vmem:[%s8497 + $0x518] sm:$0xff]
  %v8685 = vld [vmem:[%s8497 + $0x520] sm:$0xf]
  %v8686 = vld [vmem:[%s8497 + $0x524] sm:$0xff]
  %v8687 = vld [vmem:[%s8497 + $0x52c] sm:$0xff]
  %v8688 = vld [vmem:[%s8497 + $0x534] sm:$0xff]
  %v8689 = vld [vmem:[%s8497 + $0x53c] sm:$0xf]
  %v8690 = vld [vmem:[%s8497 + $0x540] sm:$0xff]
  %v8691 = vld [vmem:[%s8497 + $0x548] sm:$0xff]
  %v8692 = vld [vmem:[%s8497 + $0x550] sm:$0xff]
  %v8693 = vld [vmem:[%s8497 + $0x558] sm:$0xf]
  %v8694 = vld [vmem:[%s8497 + $0x55c] sm:$0xff]
  %v8695 = vld [vmem:[%s8497 + $0x564] sm:$0xff]
  %v8696 = vld [vmem:[%s8497 + $0x56c] sm:$0xff]
  %v8697 = vld [vmem:[%s8497 + $0x574] sm:$0xf]
  %v8698 = vld [vmem:[%s8497 + $0x578] sm:$0xff]
  %v8699 = vld [vmem:[%s8497 + $0x580] sm:$0xff]
  %v8700 = vld [vmem:[%s8497 + $0x588] sm:$0xff]
  %v8701 = vld [vmem:[%s8497 + $0x590] sm:$0xf]
  %v8702 = vld [vmem:[%s8497 + $0x594] sm:$0xff]
  %v8703 = vld [vmem:[%s8497 + $0x59c] sm:$0xff]
  %v8704 = vld [vmem:[%s8497 + $0x5a4] sm:$0xff]
  %v8705 = vld [vmem:[%s8497 + $0x5ac] sm:$0xf]
  %v8706 = vld [vmem:[%s8497 + $0x5b0] sm:$0xff]
  %v8707 = vld [vmem:[%s8497 + $0x5b8] sm:$0xff]
  %v8708 = vld [vmem:[%s8497 + $0x5c0] sm:$0xff]
  %v8709 = vld [vmem:[%s8497 + $0x5c8] sm:$0xf]
  %v8710 = vld [vmem:[%s8497 + $0x5cc] sm:$0xff]
  %v8711 = vld [vmem:[%s8497 + $0x5d4] sm:$0xff]
  %v8712 = vld [vmem:[%s8497 + $0x5dc] sm:$0xff]
  %v8713 = vld [vmem:[%s8497 + $0x5e4] sm:$0xf]
  %v8714 = vld [vmem:[%s8497 + $0x5e8] sm:$0xff]
  %v8715 = vld [vmem:[%s8497 + $0x5f0] sm:$0xff]
  %v8716 = vld [vmem:[%s8497 + $0x5f8] sm:$0xff]
  %v8717 = vld [vmem:[%s8497 + $0x600] sm:$0xf]
  %v8718 = vld [vmem:[%s8497 + $0x604] sm:$0xff]
  %v8719 = vld [vmem:[%s8497 + $0x60c] sm:$0xff]
  %v8720 = vld [vmem:[%s8497 + $0x614] sm:$0xff]
  %v8721 = vld [vmem:[%s8497 + $0x61c] sm:$0xf]
  %v8722 = vld [vmem:[%s8497 + $0x620] sm:$0xff]
  %v8723 = vld [vmem:[%s8497 + $0x628] sm:$0xff]
  %v8724 = vld [vmem:[%s8497 + $0x630] sm:$0xff]
  %v8725 = vld [vmem:[%s8497 + $0x638] sm:$0xf]
  %v8726 = vld [vmem:[%s8497 + $0x63c] sm:$0xff]
  %v8727 = vld [vmem:[%s8497 + $0x644] sm:$0xff]
  %v8728 = vld [vmem:[%s8497 + $0x64c] sm:$0xff]
  %v8729 = vld [vmem:[%s8497 + $0x654] sm:$0xf]
  %v8730 = vld [vmem:[%s8497 + $0x658] sm:$0xff]
  %v8731 = vld [vmem:[%s8497 + $0x660] sm:$0xff]
  %v8732 = vld [vmem:[%s8497 + $0x668] sm:$0xff]
  %v8733 = vld [vmem:[%s8497 + $0x670] sm:$0xf]
  %v8734 = vld [vmem:[%s8497 + $0x674] sm:$0xff]
  %v8735 = vld [vmem:[%s8497 + $0x67c] sm:$0xff]
  %v8736 = vld [vmem:[%s8497 + $0x684] sm:$0xff]
  %v8737 = vld [vmem:[%s8497 + $0x68c] sm:$0xf]
  %v8738 = vld [vmem:[%s8497 + $0x690] sm:$0xff]
  %v8739 = vld [vmem:[%s8497 + $0x698] sm:$0xff]
  %v8740 = vld [vmem:[%s8497 + $0x6a0] sm:$0xff]
  %v8741 = vld [vmem:[%s8497 + $0x6a8] sm:$0xf]
  %v8742 = vld [vmem:[%s8497 + $0x6ac] sm:$0xff]
  %v8743 = vld [vmem:[%s8497 + $0x6b4] sm:$0xff]
  %v8744 = vld [vmem:[%s8497 + $0x6bc] sm:$0xff]
  %v8745 = vld [vmem:[%s8497 + $0x6c4] sm:$0xf]
  %v8746 = vld [vmem:[%s8497 + $0x6c8] sm:$0xff]
  %v8747 = vld [vmem:[%s8497 + $0x6d0] sm:$0xff]
  %v8748 = vld [vmem:[%s8497 + $0x6d8] sm:$0xff]
  %v8749 = vld [vmem:[%s8497 + $0x6e0] sm:$0xf]
  %v8750 = vld [vmem:[%s8497 + $0x6e4] sm:$0xff]
  %v8751 = vld [vmem:[%s8497 + $0x6ec] sm:$0xff]
  %v8752 = vld [vmem:[%s8497 + $0x6f4] sm:$0xff]
  %v8753 = vld [vmem:[%s8497 + $0x6fc] sm:$0xf]
  %v8754 = vld [vmem:[%s8497 + $0x700] sm:$0xff]
  %v8755 = vld [vmem:[%s8497 + $0x708] sm:$0xff]
  %v8756 = vld [vmem:[%s8497 + $0x710] sm:$0xff]
  %v8757 = vld [vmem:[%s8497 + $0x718] sm:$0xf]
  %v8758 = vld [vmem:[%s8497 + $0x71c] sm:$0xff]
  %v8759 = vld [vmem:[%s8497 + $0x724] sm:$0xff]
  %v8760 = vld [vmem:[%s8497 + $0x72c] sm:$0xff]
  %v8761 = vld [vmem:[%s8497 + $0x734] sm:$0xf]
  %v8762 = vld [vmem:[%s8497 + $0x738] sm:$0xff]
  %v8763 = vld [vmem:[%s8497 + $0x740] sm:$0xff]
  %v8764 = vld [vmem:[%s8497 + $0x748] sm:$0xff]
  %v8765 = vld [vmem:[%s8497 + $0x750] sm:$0xf]
  %v8766 = vld [vmem:[%s8497 + $0x754] sm:$0xff]
  %v8767 = vld [vmem:[%s8497 + $0x75c] sm:$0xff]
  %v8768 = vld [vmem:[%s8497 + $0x764] sm:$0xff]
  %v8769 = vld [vmem:[%s8497 + $0x76c] sm:$0xf]
  %v8770 = vld [vmem:[%s8497 + $0x770] sm:$0xff]
  %v8771 = vld [vmem:[%s8497 + $0x778] sm:$0xff]
  %v8772 = vld [vmem:[%s8497 + $0x780] sm:$0xff]
  %v8773 = vld [vmem:[%s8497 + $0x788] sm:$0xf]
  %v8774 = vld [vmem:[%s8497 + $0x78c] sm:$0xff]
  %v8775 = vld [vmem:[%s8497 + $0x794] sm:$0xff]
  %v8776 = vld [vmem:[%s8497 + $0x79c] sm:$0xff]
  %v8777 = vld [vmem:[%s8497 + $0x7a4] sm:$0xf]
  %v8778 = vld [vmem:[%s8497 + $0x7a8] sm:$0xff]
  %v8779 = vld [vmem:[%s8497 + $0x7b0] sm:$0xff]
  %v8780 = vld [vmem:[%s8497 + $0x7b8] sm:$0xff]
  %v8781 = vld [vmem:[%s8497 + $0x7c0] sm:$0xf]
  %v8782 = vld [vmem:[%s8497 + $0x7c4] sm:$0xff]
  %v8783 = vld [vmem:[%s8497 + $0x7cc] sm:$0xff]
  %v8784 = vld [vmem:[%s8497 + $0x7d4] sm:$0xff]
  %v8785 = vld [vmem:[%s8497 + $0x7dc] sm:$0xf]
  %v8786 = vld [vmem:[%s8497 + $0x7e0] sm:$0xff]
  %v8787 = vld [vmem:[%s8497 + $0x7e8] sm:$0xff]
  %v8788 = vld [vmem:[%s8497 + $0x7f0] sm:$0xff]
  %v8789 = vld [vmem:[%s8497 + $0x7f8] sm:$0xf]
  %v8790 = vld [vmem:[%s8497 + $0x7fc] sm:$0xff]
  %v8791 = vld [vmem:[%s8497 + $0x804] sm:$0xff]
  %v8792 = vld [vmem:[%s8497 + $0x80c] sm:$0xff]
  %v8793 = vld [vmem:[%s8497 + $0x814] sm:$0xf]
  %v8794 = vld [vmem:[%s8497 + $0x818] sm:$0xff]
  %v8795 = vld [vmem:[%s8497 + $0x820] sm:$0xff]
  %v8796 = vld [vmem:[%s8497 + $0x828] sm:$0xff]
  %v8797 = vld [vmem:[%s8497 + $0x830] sm:$0xf]
  %v8798 = vld [vmem:[%s8497 + $0x834] sm:$0xff]
  %v8799 = vld [vmem:[%s8497 + $0x83c] sm:$0xff]
  %v8800 = vld [vmem:[%s8497 + $0x844] sm:$0xff]
  %v8801 = vld [vmem:[%s8497 + $0x84c] sm:$0xf]
  %v8802 = vld [vmem:[%s8497 + $0x850] sm:$0xff]
  %v8803 = vld [vmem:[%s8497 + $0x858] sm:$0xff]
  %v8804 = vld [vmem:[%s8497 + $0x860] sm:$0xff]
  %v8805 = vld [vmem:[%s8497 + $0x868] sm:$0xf]
  %v8806 = vld [vmem:[%s8497 + $0x86c] sm:$0xff]
  %v8807 = vld [vmem:[%s8497 + $0x874] sm:$0xff]
  %v8808 = vld [vmem:[%s8497 + $0x87c] sm:$0xff]
  %v8809 = vld [vmem:[%s8497 + $0x884] sm:$0xf]
  %v8810 = vld [vmem:[%s8497 + $0x888] sm:$0xff]
  %v8811 = vld [vmem:[%s8497 + $0x890] sm:$0xff]
  %v8812 = vld [vmem:[%s8497 + $0x898] sm:$0xff]
  %v8813 = vld [vmem:[%s8497 + $0x8a0] sm:$0xf]
  %v8814 = vld [vmem:[%s8497 + $0x8a4] sm:$0xff]
  %v8815 = vld [vmem:[%s8497 + $0x8ac] sm:$0xff]
  %v8816 = vld [vmem:[%s8497 + $0x8b4] sm:$0xff]
  %v8817 = vld [vmem:[%s8497 + $0x8bc] sm:$0xf]
  %v8818 = vld [vmem:[%s8497 + $0x8c0] sm:$0xff]
  %v8819 = vld [vmem:[%s8497 + $0x8c8] sm:$0xff]
  %v8820 = vld [vmem:[%s8497 + $0x8d0] sm:$0xff]
  %v8821 = vld [vmem:[%s8497 + $0x8d8] sm:$0xf]
  %v8822 = vld [vmem:[%s8497 + $0x8dc] sm:$0xff]
  %v8823 = vld [vmem:[%s8497 + $0x8e4] sm:$0xff]
  %v8824 = vld [vmem:[%s8497 + $0x8ec] sm:$0xff]
  %v8825 = vld [vmem:[%s8497 + $0x8f4] sm:$0xf]
  %v8826 = vld [vmem:[%s8497 + $0x8f8] sm:$0xff]
  %v8827 = vld [vmem:[%s8497 + $0x900] sm:$0xff]
  %v8828 = vld [vmem:[%s8497 + $0x908] sm:$0xff]
  %v8829 = vld [vmem:[%s8497 + $0x910] sm:$0xf]
  %v8830 = vld [vmem:[%s8497 + $0x914] sm:$0xff]
  %v8831 = vld [vmem:[%s8497 + $0x91c] sm:$0xff]
  %v8832 = vld [vmem:[%s8497 + $0x924] sm:$0xff]
  %v8833 = vld [vmem:[%s8497 + $0x92c] sm:$0xf]
  %v8834 = vld [vmem:[%s8497 + $0x930] sm:$0xff]
  %v8835 = vld [vmem:[%s8497 + $0x938] sm:$0xff]
  %v8836 = vld [vmem:[%s8497 + $0x940] sm:$0xff]
  %v8837 = vld [vmem:[%s8497 + $0x948] sm:$0xf]
  %v8838 = vld [vmem:[%s8497 + $0x94c] sm:$0xff]
  %v8839 = vld [vmem:[%s8497 + $0x954] sm:$0xff]
  %v8840 = vld [vmem:[%s8497 + $0x95c] sm:$0xff]
  %v8841 = vld [vmem:[%s8497 + $0x964] sm:$0xf]
  %v8842 = vld [vmem:[%s8497 + $0x968] sm:$0xff]
  %v8843 = vld [vmem:[%s8497 + $0x970] sm:$0xff]
  %v8844 = vld [vmem:[%s8497 + $0x978] sm:$0xff]
  %v8845 = vld [vmem:[%s8497 + $0x980] sm:$0xf]
  %v8846 = vld [vmem:[%s8497 + $0x984] sm:$0xff]
  %v8847 = vld [vmem:[%s8497 + $0x98c] sm:$0xff]
  %v8848 = vld [vmem:[%s8497 + $0x994] sm:$0xff]
  %v8849 = vld [vmem:[%s8497 + $0x99c] sm:$0xf]
  %v8850 = vld [vmem:[%s8497 + $0x9a0] sm:$0xff]
  %v8851 = vld [vmem:[%s8497 + $0x9a8] sm:$0xff]
  %v8852 = vld [vmem:[%s8497 + $0x9b0] sm:$0xff]
  %v8853 = vld [vmem:[%s8497 + $0x9b8] sm:$0xf]
  %v8854 = vld [vmem:[%s8497 + $0x9bc] sm:$0xff]
  %v8855 = vld [vmem:[%s8497 + $0x9c4] sm:$0xff]
  %v8856 = vld [vmem:[%s8497 + $0x9cc] sm:$0xff]
  %v8857 = vld [vmem:[%s8497 + $0x9d4] sm:$0xf]
  %v8858 = vld [vmem:[%s8497 + $0x9d8] sm:$0xff]
  %v8859 = vld [vmem:[%s8497 + $0x9e0] sm:$0xff]
  %v8860 = vld [vmem:[%s8497 + $0x9e8] sm:$0xff]
  %v8861 = vld [vmem:[%s8497 + $0x9f0] sm:$0xf]
  %v8862 = vld [vmem:[%s8497 + $0x9f4] sm:$0xff]
  %v8863 = vld [vmem:[%s8497 + $0x9fc] sm:$0xff]
  %v8864 = vld [vmem:[%s8497 + $0xa04] sm:$0xff]
  %v8865 = vld [vmem:[%s8497 + $0xa0c] sm:$0xf]
  %v8866 = vld [vmem:[%s8497 + $0xa10] sm:$0xff]
  %v8867 = vld [vmem:[%s8497 + $0xa18] sm:$0xff]
  %v8868 = vld [vmem:[%s8497 + $0xa20] sm:$0xff]
  %v8869 = vld [vmem:[%s8497 + $0xa28] sm:$0xf]
  %v8870 = vld [vmem:[%s8497 + $0xa2c] sm:$0xff]
  %v8871 = vld [vmem:[%s8497 + $0xa34] sm:$0xff]
  %v8872 = vld [vmem:[%s8497 + $0xa3c] sm:$0xff]
  %v8873 = vld [vmem:[%s8497 + $0xa44] sm:$0xf]
  %v8874 = vld [vmem:[%s8497 + $0xa48] sm:$0xff]
  %v8875 = vld [vmem:[%s8497 + $0xa50] sm:$0xff]
  %v8876 = vld [vmem:[%s8497 + $0xa58] sm:$0xff]
  %v8877 = vld [vmem:[%s8497 + $0xa60] sm:$0xf]
  %v8878 = vld [vmem:[%s8497 + $0xa64] sm:$0xff]
  %v8879 = vld [vmem:[%s8497 + $0xa6c] sm:$0xff]
  %v8880 = vld [vmem:[%s8497 + $0xa74] sm:$0xff]
  %v8881 = vld [vmem:[%s8497 + $0xa7c] sm:$0xf]
  %v8882 = vld [vmem:[%s8497 + $0xa80] sm:$0xff]
  %v8883 = vld [vmem:[%s8497 + $0xa88] sm:$0xff]
  %v8884 = vld [vmem:[%s8497 + $0xa90] sm:$0xff]
  %v8885 = vld [vmem:[%s8497 + $0xa98] sm:$0xf]
  %v8886 = vld [vmem:[%s8497 + $0xa9c] sm:$0xff]
  %v8887 = vld [vmem:[%s8497 + $0xaa4] sm:$0xff]
  %v8888 = vld [vmem:[%s8497 + $0xaac] sm:$0xff]
  %v8889 = vld [vmem:[%s8497 + $0xab4] sm:$0xf]
  %v9282 = vunpack.c.l.b16 %v8498
  %v9283 = vunpack.c.h.b16 %v8498
  %v9284 = vunpack.c.l.b16 %v8499
  %v9285 = vunpack.c.h.b16 %v8499
  %v9286 = vunpack.c.l.b16 %v8500
  %v9287 = vunpack.c.h.b16 %v8500
  %v9288 = vunpack.c.l.b16 %v8501
  %v9289 = vunpack.c.l.b16 %v8502
  %v9290 = vunpack.c.h.b16 %v8502
  %v9291 = vunpack.c.l.b16 %v8503
  %v9292 = vunpack.c.h.b16 %v8503
  %v9293 = vunpack.c.l.b16 %v8504
  %v9294 = vunpack.c.h.b16 %v8504
  %v9295 = vunpack.c.l.b16 %v8505
  %v9296 = vunpack.c.l.b16 %v8506
  %v9297 = vunpack.c.h.b16 %v8506
  %v9298 = vunpack.c.l.b16 %v8507
  %v9299 = vunpack.c.h.b16 %v8507
  %v9300 = vunpack.c.l.b16 %v8508
  %v9301 = vunpack.c.h.b16 %v8508
  %v9302 = vunpack.c.l.b16 %v8509
  %v9303 = vunpack.c.l.b16 %v8510
  %v9304 = vunpack.c.h.b16 %v8510
  %v9305 = vunpack.c.l.b16 %v8511
  %v9306 = vunpack.c.h.b16 %v8511
  %v9307 = vunpack.c.l.b16 %v8512
  %v9308 = vunpack.c.h.b16 %v8512
  %v9309 = vunpack.c.l.b16 %v8513
  %v9310 = vunpack.c.l.b16 %v8514
  %v9311 = vunpack.c.h.b16 %v8514
  %v9312 = vunpack.c.l.b16 %v8515
  %v9313 = vunpack.c.h.b16 %v8515
  %v9314 = vunpack.c.l.b16 %v8516
  %v9315 = vunpack.c.h.b16 %v8516
  %v9316 = vunpack.c.l.b16 %v8517
  %v9317 = vunpack.c.l.b16 %v8518
  %v9318 = vunpack.c.h.b16 %v8518
  %v9319 = vunpack.c.l.b16 %v8519
  %v9320 = vunpack.c.h.b16 %v8519
  %v9321 = vunpack.c.l.b16 %v8520
  %v9322 = vunpack.c.h.b16 %v8520
  %v9323 = vunpack.c.l.b16 %v8521
  %v9324 = vunpack.c.l.b16 %v8522
  %v9325 = vunpack.c.h.b16 %v8522
  %v9326 = vunpack.c.l.b16 %v8523
  %v9327 = vunpack.c.h.b16 %v8523
  %v9328 = vunpack.c.l.b16 %v8524
  %v9329 = vunpack.c.h.b16 %v8524
  %v9330 = vunpack.c.l.b16 %v8525
  %v9331 = vunpack.c.l.b16 %v8526
  %v9332 = vunpack.c.h.b16 %v8526
  %v9333 = vunpack.c.l.b16 %v8527
  %v9334 = vunpack.c.h.b16 %v8527
  %v9335 = vunpack.c.l.b16 %v8528
  %v9336 = vunpack.c.h.b16 %v8528
  %v9337 = vunpack.c.l.b16 %v8529
  %v9338 = vunpack.c.l.b16 %v8530
  %v9339 = vunpack.c.h.b16 %v8530
  %v9340 = vunpack.c.l.b16 %v8531
  %v9341 = vunpack.c.h.b16 %v8531
  %v9342 = vunpack.c.l.b16 %v8532
  %v9343 = vunpack.c.h.b16 %v8532
  %v9344 = vunpack.c.l.b16 %v8533
  %v9345 = vunpack.c.l.b16 %v8534
  %v9346 = vunpack.c.h.b16 %v8534
  %v9347 = vunpack.c.l.b16 %v8535
  %v9348 = vunpack.c.h.b16 %v8535
  %v9349 = vunpack.c.l.b16 %v8536
  %v9350 = vunpack.c.h.b16 %v8536
  %v9351 = vunpack.c.l.b16 %v8537
  %v9352 = vunpack.c.l.b16 %v8538
  %v9353 = vunpack.c.h.b16 %v8538
  %v9354 = vunpack.c.l.b16 %v8539
  %v9355 = vunpack.c.h.b16 %v8539
  %v9356 = vunpack.c.l.b16 %v8540
  %v9357 = vunpack.c.h.b16 %v8540
  %v9358 = vunpack.c.l.b16 %v8541
  %v9359 = vunpack.c.l.b16 %v8542
  %v9360 = vunpack.c.h.b16 %v8542
  %v9361 = vunpack.c.l.b16 %v8543
  %v9362 = vunpack.c.h.b16 %v8543
  %v9363 = vunpack.c.l.b16 %v8544
  %v9364 = vunpack.c.h.b16 %v8544
  %v9365 = vunpack.c.l.b16 %v8545
  %v9366 = vunpack.c.l.b16 %v8546
  %v9367 = vunpack.c.h.b16 %v8546
  %v9368 = vunpack.c.l.b16 %v8547
  %v9369 = vunpack.c.h.b16 %v8547
  %v9370 = vunpack.c.l.b16 %v8548
  %v9371 = vunpack.c.h.b16 %v8548
  %v9372 = vunpack.c.l.b16 %v8549
  %v9373 = vunpack.c.l.b16 %v8550
  %v9374 = vunpack.c.h.b16 %v8550
  %v9375 = vunpack.c.l.b16 %v8551
  %v9376 = vunpack.c.h.b16 %v8551
  %v9377 = vunpack.c.l.b16 %v8552
  %v9378 = vunpack.c.h.b16 %v8552
  %v9379 = vunpack.c.l.b16 %v8553
  %v9380 = vunpack.c.l.b16 %v8554
  %v9381 = vunpack.c.h.b16 %v8554
  %v9382 = vunpack.c.l.b16 %v8555
  %v9383 = vunpack.c.h.b16 %v8555
  %v9384 = vunpack.c.l.b16 %v8556
  %v9385 = vunpack.c.h.b16 %v8556
  %v9386 = vunpack.c.l.b16 %v8557
  %v9387 = vunpack.c.l.b16 %v8558
  %v9388 = vunpack.c.h.b16 %v8558
  %v9389 = vunpack.c.l.b16 %v8559
  %v9390 = vunpack.c.h.b16 %v8559
  %v9391 = vunpack.c.l.b16 %v8560
  %v9392 = vunpack.c.h.b16 %v8560
  %v9393 = vunpack.c.l.b16 %v8561
  %v9394 = vunpack.c.l.b16 %v8562
  %v9395 = vunpack.c.h.b16 %v8562
  %v9396 = vunpack.c.l.b16 %v8563
  %v9397 = vunpack.c.h.b16 %v8563
  %v9398 = vunpack.c.l.b16 %v8564
  %v9399 = vunpack.c.h.b16 %v8564
  %v9400 = vunpack.c.l.b16 %v8565
  %v9401 = vunpack.c.l.b16 %v8566
  %v9402 = vunpack.c.h.b16 %v8566
  %v9403 = vunpack.c.l.b16 %v8567
  %v9404 = vunpack.c.h.b16 %v8567
  %v9405 = vunpack.c.l.b16 %v8568
  %v9406 = vunpack.c.h.b16 %v8568
  %v9407 = vunpack.c.l.b16 %v8569
  %v9408 = vunpack.c.l.b16 %v8570
  %v9409 = vunpack.c.h.b16 %v8570
  %v9410 = vunpack.c.l.b16 %v8571
  %v9411 = vunpack.c.h.b16 %v8571
  %v9412 = vunpack.c.l.b16 %v8572
  %v9413 = vunpack.c.h.b16 %v8572
  %v9414 = vunpack.c.l.b16 %v8573
  %v9415 = vunpack.c.l.b16 %v8574
  %v9416 = vunpack.c.h.b16 %v8574
  %v9417 = vunpack.c.l.b16 %v8575
  %v9418 = vunpack.c.h.b16 %v8575
  %v9419 = vunpack.c.l.b16 %v8576
  %v9420 = vunpack.c.h.b16 %v8576
  %v9421 = vunpack.c.l.b16 %v8577
  %v9422 = vunpack.c.l.b16 %v8578
  %v9423 = vunpack.c.h.b16 %v8578
  %v9424 = vunpack.c.l.b16 %v8579
  %v9425 = vunpack.c.h.b16 %v8579
  %v9426 = vunpack.c.l.b16 %v8580
  %v9427 = vunpack.c.h.b16 %v8580
  %v9428 = vunpack.c.l.b16 %v8581
  %v9429 = vunpack.c.l.b16 %v8582
  %v9430 = vunpack.c.h.b16 %v8582
  %v9431 = vunpack.c.l.b16 %v8583
  %v9432 = vunpack.c.h.b16 %v8583
  %v9433 = vunpack.c.l.b16 %v8584
  %v9434 = vunpack.c.h.b16 %v8584
  %v9435 = vunpack.c.l.b16 %v8585
  %v9436 = vunpack.c.l.b16 %v8586
  %v9437 = vunpack.c.h.b16 %v8586
  %v9438 = vunpack.c.l.b16 %v8587
  %v9439 = vunpack.c.h.b16 %v8587
  %v9440 = vunpack.c.l.b16 %v8588
  %v9441 = vunpack.c.h.b16 %v8588
  %v9442 = vunpack.c.l.b16 %v8589
  %v9443 = vunpack.c.l.b16 %v8590
  %v9444 = vunpack.c.h.b16 %v8590
  %v9445 = vunpack.c.l.b16 %v8591
  %v9446 = vunpack.c.h.b16 %v8591
  %v9447 = vunpack.c.l.b16 %v8592
  %v9448 = vunpack.c.h.b16 %v8592
  %v9449 = vunpack.c.l.b16 %v8593
  %v9450 = vunpack.c.l.b16 %v8594
  %v9451 = vunpack.c.h.b16 %v8594
  %v9452 = vunpack.c.l.b16 %v8595
  %v9453 = vunpack.c.h.b16 %v8595
  %v9454 = vunpack.c.l.b16 %v8596
  %v9455 = vunpack.c.h.b16 %v8596
  %v9456 = vunpack.c.l.b16 %v8597
  %v9457 = vunpack.c.l.b16 %v8598
  %v9458 = vunpack.c.h.b16 %v8598
  %v9459 = vunpack.c.l.b16 %v8599
  %v9460 = vunpack.c.h.b16 %v8599
  %v9461 = vunpack.c.l.b16 %v8600
  %v9462 = vunpack.c.h.b16 %v8600
  %v9463 = vunpack.c.l.b16 %v8601
  %v9464 = vunpack.c.l.b16 %v8602
  %v9465 = vunpack.c.h.b16 %v8602
  %v9466 = vunpack.c.l.b16 %v8603
  %v9467 = vunpack.c.h.b16 %v8603
  %v9468 = vunpack.c.l.b16 %v8604
  %v9469 = vunpack.c.h.b16 %v8604
  %v9470 = vunpack.c.l.b16 %v8605
  %v9471 = vunpack.c.l.b16 %v8606
  %v9472 = vunpack.c.h.b16 %v8606
  %v9473 = vunpack.c.l.b16 %v8607
  %v9474 = vunpack.c.h.b16 %v8607
  %v9475 = vunpack.c.l.b16 %v8608
  %v9476 = vunpack.c.h.b16 %v8608
  %v9477 = vunpack.c.l.b16 %v8609
  %v9478 = vunpack.c.l.b16 %v8610
  %v9479 = vunpack.c.h.b16 %v8610
  %v9480 = vunpack.c.l.b16 %v8611
  %v9481 = vunpack.c.h.b16 %v8611
  %v9482 = vunpack.c.l.b16 %v8612
  %v9483 = vunpack.c.h.b16 %v8612
  %v9484 = vunpack.c.l.b16 %v8613
  %v9485 = vunpack.c.l.b16 %v8614
  %v9486 = vunpack.c.h.b16 %v8614
  %v9487 = vunpack.c.l.b16 %v8615
  %v9488 = vunpack.c.h.b16 %v8615
  %v9489 = vunpack.c.l.b16 %v8616
  %v9490 = vunpack.c.h.b16 %v8616
  %v9491 = vunpack.c.l.b16 %v8617
  %v9492 = vunpack.c.l.b16 %v8618
  %v9493 = vunpack.c.h.b16 %v8618
  %v9494 = vunpack.c.l.b16 %v8619
  %v9495 = vunpack.c.h.b16 %v8619
  %v9496 = vunpack.c.l.b16 %v8620
  %v9497 = vunpack.c.h.b16 %v8620
  %v9498 = vunpack.c.l.b16 %v8621
  %v9499 = vunpack.c.l.b16 %v8622
  %v9500 = vunpack.c.h.b16 %v8622
  %v9501 = vunpack.c.l.b16 %v8623
  %v9502 = vunpack.c.h.b16 %v8623
  %v9503 = vunpack.c.l.b16 %v8624
  %v9504 = vunpack.c.h.b16 %v8624
  %v9505 = vunpack.c.l.b16 %v8625
  %v9506 = vunpack.c.l.b16 %v8626
  %v9507 = vunpack.c.h.b16 %v8626
  %v9508 = vunpack.c.l.b16 %v8627
  %v9509 = vunpack.c.h.b16 %v8627
  %v9510 = vunpack.c.l.b16 %v8628
  %v9511 = vunpack.c.h.b16 %v8628
  %v9512 = vunpack.c.l.b16 %v8629
  %v9513 = vunpack.c.l.b16 %v8630
  %v9514 = vunpack.c.h.b16 %v8630
  %v9515 = vunpack.c.l.b16 %v8631
  %v9516 = vunpack.c.h.b16 %v8631
  %v9517 = vunpack.c.l.b16 %v8632
  %v9518 = vunpack.c.h.b16 %v8632
  %v9519 = vunpack.c.l.b16 %v8633
  %v9520 = vunpack.c.l.b16 %v8634
  %v9521 = vunpack.c.h.b16 %v8634
  %v9522 = vunpack.c.l.b16 %v8635
  %v9523 = vunpack.c.h.b16 %v8635
  %v9524 = vunpack.c.l.b16 %v8636
  %v9525 = vunpack.c.h.b16 %v8636
  %v9526 = vunpack.c.l.b16 %v8637
  %v9527 = vunpack.c.l.b16 %v8638
  %v9528 = vunpack.c.h.b16 %v8638
  %v9529 = vunpack.c.l.b16 %v8639
  %v9530 = vunpack.c.h.b16 %v8639
  %v9531 = vunpack.c.l.b16 %v8640
  %v9532 = vunpack.c.h.b16 %v8640
  %v9533 = vunpack.c.l.b16 %v8641
  %v9534 = vunpack.c.l.b16 %v8642
  %v9535 = vunpack.c.h.b16 %v8642
  %v9536 = vunpack.c.l.b16 %v8643
  %v9537 = vunpack.c.h.b16 %v8643
  %v9538 = vunpack.c.l.b16 %v8644
  %v9539 = vunpack.c.h.b16 %v8644
  %v9540 = vunpack.c.l.b16 %v8645
  %v9541 = vunpack.c.l.b16 %v8646
  %v9542 = vunpack.c.h.b16 %v8646
  %v9543 = vunpack.c.l.b16 %v8647
  %v9544 = vunpack.c.h.b16 %v8647
  %v9545 = vunpack.c.l.b16 %v8648
  %v9546 = vunpack.c.h.b16 %v8648
  %v9547 = vunpack.c.l.b16 %v8649
  %v9548 = vunpack.c.l.b16 %v8650
  %v9549 = vunpack.c.h.b16 %v8650
  %v9550 = vunpack.c.l.b16 %v8651
  %v9551 = vunpack.c.h.b16 %v8651
  %v9552 = vunpack.c.l.b16 %v8652
  %v9553 = vunpack.c.h.b16 %v8652
  %v9554 = vunpack.c.l.b16 %v8653
  %v9555 = vunpack.c.l.b16 %v8654
  %v9556 = vunpack.c.h.b16 %v8654
  %v9557 = vunpack.c.l.b16 %v8655
  %v9558 = vunpack.c.h.b16 %v8655
  %v9559 = vunpack.c.l.b16 %v8656
  %v9560 = vunpack.c.h.b16 %v8656
  %v9561 = vunpack.c.l.b16 %v8657
  %v9562 = vunpack.c.l.b16 %v8658
  %v9563 = vunpack.c.h.b16 %v8658
  %v9564 = vunpack.c.l.b16 %v8659
  %v9565 = vunpack.c.h.b16 %v8659
  %v9566 = vunpack.c.l.b16 %v8660
  %v9567 = vunpack.c.h.b16 %v8660
  %v9568 = vunpack.c.l.b16 %v8661
  %v9569 = vunpack.c.l.b16 %v8662
  %v9570 = vunpack.c.h.b16 %v8662
  %v9571 = vunpack.c.l.b16 %v8663
  %v9572 = vunpack.c.h.b16 %v8663
  %v9573 = vunpack.c.l.b16 %v8664
  %v9574 = vunpack.c.h.b16 %v8664
  %v9575 = vunpack.c.l.b16 %v8665
  %v9576 = vunpack.c.l.b16 %v8666
  %v9577 = vunpack.c.h.b16 %v8666
  %v9578 = vunpack.c.l.b16 %v8667
  %v9579 = vunpack.c.h.b16 %v8667
  %v9580 = vunpack.c.l.b16 %v8668
  %v9581 = vunpack.c.h.b16 %v8668
  %v9582 = vunpack.c.l.b16 %v8669
  %v9583 = vunpack.c.l.b16 %v8670
  %v9584 = vunpack.c.h.b16 %v8670
  %v9585 = vunpack.c.l.b16 %v8671
  %v9586 = vunpack.c.h.b16 %v8671
  %v9587 = vunpack.c.l.b16 %v8672
  %v9588 = vunpack.c.h.b16 %v8672
  %v9589 = vunpack.c.l.b16 %v8673
  %v9590 = vunpack.c.l.b16 %v8674
  %v9591 = vunpack.c.h.b16 %v8674
  %v9592 = vunpack.c.l.b16 %v8675
  %v9593 = vunpack.c.h.b16 %v8675
  %v9594 = vunpack.c.l.b16 %v8676
  %v9595 = vunpack.c.h.b16 %v8676
  %v9596 = vunpack.c.l.b16 %v8677
  %v9597 = vunpack.c.l.b16 %v8678
  %v9598 = vunpack.c.h.b16 %v8678
  %v9599 = vunpack.c.l.b16 %v8679
  %v9600 = vunpack.c.h.b16 %v8679
  %v9601 = vunpack.c.l.b16 %v8680
  %v9602 = vunpack.c.h.b16 %v8680
  %v9603 = vunpack.c.l.b16 %v8681
  %v9604 = vunpack.c.l.b16 %v8682
  %v9605 = vunpack.c.h.b16 %v8682
  %v9606 = vunpack.c.l.b16 %v8683
  %v9607 = vunpack.c.h.b16 %v8683
  %v9608 = vunpack.c.l.b16 %v8684
  %v9609 = vunpack.c.h.b16 %v8684
  %v9610 = vunpack.c.l.b16 %v8685
  %v9611 = vunpack.c.l.b16 %v8686
  %v9612 = vunpack.c.h.b16 %v8686
  %v9613 = vunpack.c.l.b16 %v8687
  %v9614 = vunpack.c.h.b16 %v8687
  %v9615 = vunpack.c.l.b16 %v8688
  %v9616 = vunpack.c.h.b16 %v8688
  %v9617 = vunpack.c.l.b16 %v8689
  %v9618 = vunpack.c.l.b16 %v8690
  %v9619 = vunpack.c.h.b16 %v8690
  %v9620 = vunpack.c.l.b16 %v8691
  %v9621 = vunpack.c.h.b16 %v8691
  %v9622 = vunpack.c.l.b16 %v8692
  %v9623 = vunpack.c.h.b16 %v8692
  %v9624 = vunpack.c.l.b16 %v8693
  %v9625 = vunpack.c.l.b16 %v8694
  %v9626 = vunpack.c.h.b16 %v8694
  %v9627 = vunpack.c.l.b16 %v8695
  %v9628 = vunpack.c.h.b16 %v8695
  %v9629 = vunpack.c.l.b16 %v8696
  %v9630 = vunpack.c.h.b16 %v8696
  %v9631 = vunpack.c.l.b16 %v8697
  %v9632 = vunpack.c.l.b16 %v8698
  %v9633 = vunpack.c.h.b16 %v8698
  %v9634 = vunpack.c.l.b16 %v8699
  %v9635 = vunpack.c.h.b16 %v8699
  %v9636 = vunpack.c.l.b16 %v8700
  %v9637 = vunpack.c.h.b16 %v8700
  %v9638 = vunpack.c.l.b16 %v8701
  %v9639 = vunpack.c.l.b16 %v8702
  %v9640 = vunpack.c.h.b16 %v8702
  %v9641 = vunpack.c.l.b16 %v8703
  %v9642 = vunpack.c.h.b16 %v8703
  %v9643 = vunpack.c.l.b16 %v8704
  %v9644 = vunpack.c.h.b16 %v8704
  %v9645 = vunpack.c.l.b16 %v8705
  %v9646 = vunpack.c.l.b16 %v8706
  %v9647 = vunpack.c.h.b16 %v8706
  %v9648 = vunpack.c.l.b16 %v8707
  %v9649 = vunpack.c.h.b16 %v8707
  %v9650 = vunpack.c.l.b16 %v8708
  %v9651 = vunpack.c.h.b16 %v8708
  %v9652 = vunpack.c.l.b16 %v8709
  %v9653 = vunpack.c.l.b16 %v8710
  %v9654 = vunpack.c.h.b16 %v8710
  %v9655 = vunpack.c.l.b16 %v8711
  %v9656 = vunpack.c.h.b16 %v8711
  %v9657 = vunpack.c.l.b16 %v8712
  %v9658 = vunpack.c.h.b16 %v8712
  %v9659 = vunpack.c.l.b16 %v8713
  %v9660 = vunpack.c.l.b16 %v8714
  %v9661 = vunpack.c.h.b16 %v8714
  %v9662 = vunpack.c.l.b16 %v8715
  %v9663 = vunpack.c.h.b16 %v8715
  %v9664 = vunpack.c.l.b16 %v8716
  %v9665 = vunpack.c.h.b16 %v8716
  %v9666 = vunpack.c.l.b16 %v8717
  %v9667 = vunpack.c.l.b16 %v8718
  %v9668 = vunpack.c.h.b16 %v8718
  %v9669 = vunpack.c.l.b16 %v8719
  %v9670 = vunpack.c.h.b16 %v8719
  %v9671 = vunpack.c.l.b16 %v8720
  %v9672 = vunpack.c.h.b16 %v8720
  %v9673 = vunpack.c.l.b16 %v8721
  %v9674 = vunpack.c.l.b16 %v8722
  %v9675 = vunpack.c.h.b16 %v8722
  %v9676 = vunpack.c.l.b16 %v8723
  %v9677 = vunpack.c.h.b16 %v8723
  %v9678 = vunpack.c.l.b16 %v8724
  %v9679 = vunpack.c.h.b16 %v8724
  %v9680 = vunpack.c.l.b16 %v8725
  %v9681 = vunpack.c.l.b16 %v8726
  %v9682 = vunpack.c.h.b16 %v8726
  %v9683 = vunpack.c.l.b16 %v8727
  %v9684 = vunpack.c.h.b16 %v8727
  %v9685 = vunpack.c.l.b16 %v8728
  %v9686 = vunpack.c.h.b16 %v8728
  %v9687 = vunpack.c.l.b16 %v8729
  %v9688 = vunpack.c.l.b16 %v8730
  %v9689 = vunpack.c.h.b16 %v8730
  %v9690 = vunpack.c.l.b16 %v8731
  %v9691 = vunpack.c.h.b16 %v8731
  %v9692 = vunpack.c.l.b16 %v8732
  %v9693 = vunpack.c.h.b16 %v8732
  %v9694 = vunpack.c.l.b16 %v8733
  %v9695 = vunpack.c.l.b16 %v8734
  %v9696 = vunpack.c.h.b16 %v8734
  %v9697 = vunpack.c.l.b16 %v8735
  %v9698 = vunpack.c.h.b16 %v8735
  %v9699 = vunpack.c.l.b16 %v8736
  %v9700 = vunpack.c.h.b16 %v8736
  %v9701 = vunpack.c.l.b16 %v8737
  %v9702 = vunpack.c.l.b16 %v8738
  %v9703 = vunpack.c.h.b16 %v8738
  %v9704 = vunpack.c.l.b16 %v8739
  %v9705 = vunpack.c.h.b16 %v8739
  %v9706 = vunpack.c.l.b16 %v8740
  %v9707 = vunpack.c.h.b16 %v8740
  %v9708 = vunpack.c.l.b16 %v8741
  %v9709 = vunpack.c.l.b16 %v8742
  %v9710 = vunpack.c.h.b16 %v8742
  %v9711 = vunpack.c.l.b16 %v8743
  %v9712 = vunpack.c.h.b16 %v8743
  %v9713 = vunpack.c.l.b16 %v8744
  %v9714 = vunpack.c.h.b16 %v8744
  %v9715 = vunpack.c.l.b16 %v8745
  %v9716 = vunpack.c.l.b16 %v8746
  %v9717 = vunpack.c.h.b16 %v8746
  %v9718 = vunpack.c.l.b16 %v8747
  %v9719 = vunpack.c.h.b16 %v8747
  %v9720 = vunpack.c.l.b16 %v8748
  %v9721 = vunpack.c.h.b16 %v8748
  %v9722 = vunpack.c.l.b16 %v8749
  %v9723 = vunpack.c.l.b16 %v8750
  %v9724 = vunpack.c.h.b16 %v8750
  %v9725 = vunpack.c.l.b16 %v8751
  %v9726 = vunpack.c.h.b16 %v8751
  %v9727 = vunpack.c.l.b16 %v8752
  %v9728 = vunpack.c.h.b16 %v8752
  %v9729 = vunpack.c.l.b16 %v8753
  %v9730 = vunpack.c.l.b16 %v8754
  %v9731 = vunpack.c.h.b16 %v8754
  %v9732 = vunpack.c.l.b16 %v8755
  %v9733 = vunpack.c.h.b16 %v8755
  %v9734 = vunpack.c.l.b16 %v8756
  %v9735 = vunpack.c.h.b16 %v8756
  %v9736 = vunpack.c.l.b16 %v8757
  %v9737 = vunpack.c.l.b16 %v8758
  %v9738 = vunpack.c.h.b16 %v8758
  %v9739 = vunpack.c.l.b16 %v8759
  %v9740 = vunpack.c.h.b16 %v8759
  %v9741 = vunpack.c.l.b16 %v8760
  %v9742 = vunpack.c.h.b16 %v8760
  %v9743 = vunpack.c.l.b16 %v8761
  %v9744 = vunpack.c.l.b16 %v8762
  %v9745 = vunpack.c.h.b16 %v8762
  %v9746 = vunpack.c.l.b16 %v8763
  %v9747 = vunpack.c.h.b16 %v8763
  %v9748 = vunpack.c.l.b16 %v8764
  %v9749 = vunpack.c.h.b16 %v8764
  %v9750 = vunpack.c.l.b16 %v8765
  %v9751 = vunpack.c.l.b16 %v8766
  %v9752 = vunpack.c.h.b16 %v8766
  %v9753 = vunpack.c.l.b16 %v8767
  %v9754 = vunpack.c.h.b16 %v8767
  %v9755 = vunpack.c.l.b16 %v8768
  %v9756 = vunpack.c.h.b16 %v8768
  %v9757 = vunpack.c.l.b16 %v8769
  %v9758 = vunpack.c.l.b16 %v8770
  %v9759 = vunpack.c.h.b16 %v8770
  %v9760 = vunpack.c.l.b16 %v8771
  %v9761 = vunpack.c.h.b16 %v8771
  %v9762 = vunpack.c.l.b16 %v8772
  %v9763 = vunpack.c.h.b16 %v8772
  %v9764 = vunpack.c.l.b16 %v8773
  %v9765 = vunpack.c.l.b16 %v8774
  %v9766 = vunpack.c.h.b16 %v8774
  %v9767 = vunpack.c.l.b16 %v8775
  %v9768 = vunpack.c.h.b16 %v8775
  %v9769 = vunpack.c.l.b16 %v8776
  %v9770 = vunpack.c.h.b16 %v8776
  %v9771 = vunpack.c.l.b16 %v8777
  %v9772 = vunpack.c.l.b16 %v8778
  %v9773 = vunpack.c.h.b16 %v8778
  %v9774 = vunpack.c.l.b16 %v8779
  %v9775 = vunpack.c.h.b16 %v8779
  %v9776 = vunpack.c.l.b16 %v8780
  %v9777 = vunpack.c.h.b16 %v8780
  %v9778 = vunpack.c.l.b16 %v8781
  %v9779 = vunpack.c.l.b16 %v8782
  %v9780 = vunpack.c.h.b16 %v8782
  %v9781 = vunpack.c.l.b16 %v8783
  %v9782 = vunpack.c.h.b16 %v8783
  %v9783 = vunpack.c.l.b16 %v8784
  %v9784 = vunpack.c.h.b16 %v8784
  %v9785 = vunpack.c.l.b16 %v8785
  %v9786 = vunpack.c.l.b16 %v8786
  %v9787 = vunpack.c.h.b16 %v8786
  %v9788 = vunpack.c.l.b16 %v8787
  %v9789 = vunpack.c.h.b16 %v8787
  %v9790 = vunpack.c.l.b16 %v8788
  %v9791 = vunpack.c.h.b16 %v8788
  %v9792 = vunpack.c.l.b16 %v8789
  %v9793 = vunpack.c.l.b16 %v8790
  %v9794 = vunpack.c.h.b16 %v8790
  %v9795 = vunpack.c.l.b16 %v8791
  %v9796 = vunpack.c.h.b16 %v8791
  %v9797 = vunpack.c.l.b16 %v8792
  %v9798 = vunpack.c.h.b16 %v8792
  %v9799 = vunpack.c.l.b16 %v8793
  %v9800 = vunpack.c.l.b16 %v8794
  %v9801 = vunpack.c.h.b16 %v8794
  %v9802 = vunpack.c.l.b16 %v8795
  %v9803 = vunpack.c.h.b16 %v8795
  %v9804 = vunpack.c.l.b16 %v8796
  %v9805 = vunpack.c.h.b16 %v8796
  %v9806 = vunpack.c.l.b16 %v8797
  %v9807 = vunpack.c.l.b16 %v8798
  %v9808 = vunpack.c.h.b16 %v8798
  %v9809 = vunpack.c.l.b16 %v8799
  %v9810 = vunpack.c.h.b16 %v8799
  %v9811 = vunpack.c.l.b16 %v8800
  %v9812 = vunpack.c.h.b16 %v8800
  %v9813 = vunpack.c.l.b16 %v8801
  %v9814 = vunpack.c.l.b16 %v8802
  %v9815 = vunpack.c.h.b16 %v8802
  %v9816 = vunpack.c.l.b16 %v8803
  %v9817 = vunpack.c.h.b16 %v8803
  %v9818 = vunpack.c.l.b16 %v8804
  %v9819 = vunpack.c.h.b16 %v8804
  %v9820 = vunpack.c.l.b16 %v8805
  %v9821 = vunpack.c.l.b16 %v8806
  %v9822 = vunpack.c.h.b16 %v8806
  %v9823 = vunpack.c.l.b16 %v8807
  %v9824 = vunpack.c.h.b16 %v8807
  %v9825 = vunpack.c.l.b16 %v8808
  %v9826 = vunpack.c.h.b16 %v8808
  %v9827 = vunpack.c.l.b16 %v8809
  %v9828 = vunpack.c.l.b16 %v8810
  %v9829 = vunpack.c.h.b16 %v8810
  %v9830 = vunpack.c.l.b16 %v8811
  %v9831 = vunpack.c.h.b16 %v8811
  %v9832 = vunpack.c.l.b16 %v8812
  %v9833 = vunpack.c.h.b16 %v8812
  %v9834 = vunpack.c.l.b16 %v8813
  %v9835 = vunpack.c.l.b16 %v8814
  %v9836 = vunpack.c.h.b16 %v8814
  %v9837 = vunpack.c.l.b16 %v8815
  %v9838 = vunpack.c.h.b16 %v8815
  %v9839 = vunpack.c.l.b16 %v8816
  %v9840 = vunpack.c.h.b16 %v8816
  %v9841 = vunpack.c.l.b16 %v8817
  %v9842 = vunpack.c.l.b16 %v8818
  %v9843 = vunpack.c.h.b16 %v8818
  %v9844 = vunpack.c.l.b16 %v8819
  %v9845 = vunpack.c.h.b16 %v8819
  %v9846 = vunpack.c.l.b16 %v8820
  %v9847 = vunpack.c.h.b16 %v8820
  %v9848 = vunpack.c.l.b16 %v8821
  %v9849 = vunpack.c.l.b16 %v8822
  %v9850 = vunpack.c.h.b16 %v8822
  %v9851 = vunpack.c.l.b16 %v8823
  %v9852 = vunpack.c.h.b16 %v8823
  %v9853 = vunpack.c.l.b16 %v8824
  %v9854 = vunpack.c.h.b16 %v8824
  %v9855 = vunpack.c.l.b16 %v8825
  %v9856 = vunpack.c.l.b16 %v8826
  %v9857 = vunpack.c.h.b16 %v8826
  %v9858 = vunpack.c.l.b16 %v8827
  %v9859 = vunpack.c.h.b16 %v8827
  %v9860 = vunpack.c.l.b16 %v8828
  %v9861 = vunpack.c.h.b16 %v8828
  %v9862 = vunpack.c.l.b16 %v8829
  %v9863 = vunpack.c.l.b16 %v8830
  %v9864 = vunpack.c.h.b16 %v8830
  %v9865 = vunpack.c.l.b16 %v8831
  %v9866 = vunpack.c.h.b16 %v8831
  %v9867 = vunpack.c.l.b16 %v8832
  %v9868 = vunpack.c.h.b16 %v8832
  %v9869 = vunpack.c.l.b16 %v8833
  %v9870 = vunpack.c.l.b16 %v8834
  %v9871 = vunpack.c.h.b16 %v8834
  %v9872 = vunpack.c.l.b16 %v8835
  %v9873 = vunpack.c.h.b16 %v8835
  %v9874 = vunpack.c.l.b16 %v8836
  %v9875 = vunpack.c.h.b16 %v8836
  %v9876 = vunpack.c.l.b16 %v8837
  %v9877 = vunpack.c.l.b16 %v8838
  %v9878 = vunpack.c.h.b16 %v8838
  %v9879 = vunpack.c.l.b16 %v8839
  %v9880 = vunpack.c.h.b16 %v8839
  %v9881 = vunpack.c.l.b16 %v8840
  %v9882 = vunpack.c.h.b16 %v8840
  %v9883 = vunpack.c.l.b16 %v8841
  %v9884 = vunpack.c.l.b16 %v8842
  %v9885 = vunpack.c.h.b16 %v8842
  %v9886 = vunpack.c.l.b16 %v8843
  %v9887 = vunpack.c.h.b16 %v8843
  %v9888 = vunpack.c.l.b16 %v8844
  %v9889 = vunpack.c.h.b16 %v8844
  %v9890 = vunpack.c.l.b16 %v8845
  %v9891 = vunpack.c.l.b16 %v8846
  %v9892 = vunpack.c.h.b16 %v8846
  %v9893 = vunpack.c.l.b16 %v8847
  %v9894 = vunpack.c.h.b16 %v8847
  %v9895 = vunpack.c.l.b16 %v8848
  %v9896 = vunpack.c.h.b16 %v8848
  %v9897 = vunpack.c.l.b16 %v8849
  %v9898 = vunpack.c.l.b16 %v8850
  %v9899 = vunpack.c.h.b16 %v8850
  %v9900 = vunpack.c.l.b16 %v8851
  %v9901 = vunpack.c.h.b16 %v8851
  %v9902 = vunpack.c.l.b16 %v8852
  %v9903 = vunpack.c.h.b16 %v8852
  %v9904 = vunpack.c.l.b16 %v8853
  %v9905 = vunpack.c.l.b16 %v8854
  %v9906 = vunpack.c.h.b16 %v8854
  %v9907 = vunpack.c.l.b16 %v8855
  %v9908 = vunpack.c.h.b16 %v8855
  %v9909 = vunpack.c.l.b16 %v8856
  %v9910 = vunpack.c.h.b16 %v8856
  %v9911 = vunpack.c.l.b16 %v8857
  %v9912 = vunpack.c.l.b16 %v8858
  %v9913 = vunpack.c.h.b16 %v8858
  %v9914 = vunpack.c.l.b16 %v8859
  %v9915 = vunpack.c.h.b16 %v8859
  %v9916 = vunpack.c.l.b16 %v8860
  %v9917 = vunpack.c.h.b16 %v8860
  %v9918 = vunpack.c.l.b16 %v8861
  %v9919 = vunpack.c.l.b16 %v8862
  %v9920 = vunpack.c.h.b16 %v8862
  %v9921 = vunpack.c.l.b16 %v8863
  %v9922 = vunpack.c.h.b16 %v8863
  %v9923 = vunpack.c.l.b16 %v8864
  %v9924 = vunpack.c.h.b16 %v8864
  %v9925 = vunpack.c.l.b16 %v8865
  %v9926 = vunpack.c.l.b16 %v8866
  %v9927 = vunpack.c.h.b16 %v8866
  %v9928 = vunpack.c.l.b16 %v8867
  %v9929 = vunpack.c.h.b16 %v8867
  %v9930 = vunpack.c.l.b16 %v8868
  %v9931 = vunpack.c.h.b16 %v8868
  %v9932 = vunpack.c.l.b16 %v8869
  %v9933 = vunpack.c.l.b16 %v8870
  %v9934 = vunpack.c.h.b16 %v8870
  %v9935 = vunpack.c.l.b16 %v8871
  %v9936 = vunpack.c.h.b16 %v8871
  %v9937 = vunpack.c.l.b16 %v8872
  %v9938 = vunpack.c.h.b16 %v8872
  %v9939 = vunpack.c.l.b16 %v8873
  %v9940 = vunpack.c.l.b16 %v8874
  %v9941 = vunpack.c.h.b16 %v8874
  %v9942 = vunpack.c.l.b16 %v8875
  %v9943 = vunpack.c.h.b16 %v8875
  %v9944 = vunpack.c.l.b16 %v8876
  %v9945 = vunpack.c.h.b16 %v8876
  %v9946 = vunpack.c.l.b16 %v8877
  %v9947 = vunpack.c.l.b16 %v8878
  %v9948 = vunpack.c.h.b16 %v8878
  %v9949 = vunpack.c.l.b16 %v8879
  %v9950 = vunpack.c.h.b16 %v8879
  %v9951 = vunpack.c.l.b16 %v8880
  %v9952 = vunpack.c.h.b16 %v8880
  %v9953 = vunpack.c.l.b16 %v8881
  %v9954 = vunpack.c.l.b16 %v8882
  %v9955 = vunpack.c.h.b16 %v8882
  %v9956 = vunpack.c.l.b16 %v8883
  %v9957 = vunpack.c.h.b16 %v8883
  %v9958 = vunpack.c.l.b16 %v8884
  %v9959 = vunpack.c.h.b16 %v8884
  %v9960 = vunpack.c.l.b16 %v8885
  %v9961 = vunpack.c.l.b16 %v8886
  %v9962 = vunpack.c.h.b16 %v8886
  %v9963 = vunpack.c.l.b16 %v8887
  %v9964 = vunpack.c.h.b16 %v8887
  %v9965 = vunpack.c.l.b16 %v8888
  %v9966 = vunpack.c.h.b16 %v8888
  %v9967 = vunpack.c.l.b16 %v8889
  %v9968 = vpack.c.b16 %v9289, %v9282
  %v9969 = vpack.c.b16 %v9290, %v9283
  %v9970 = vpack.c.b16 %v9291, %v9284
  %v9971 = vpack.c.b16 %v9292, %v9285
  %v9972 = vpack.c.b16 %v9293, %v9286
  %v9973 = vpack.c.b16 %v9294, %v9287
  %v9974 = vpack.c.b16 %v9295, %v9288
  %v9975 = vpack.c.b16 %v9303, %v9296
  %v9976 = vpack.c.b16 %v9304, %v9297
  %v9977 = vpack.c.b16 %v9305, %v9298
  %v9978 = vpack.c.b16 %v9306, %v9299
  %v9979 = vpack.c.b16 %v9307, %v9300
  %v9980 = vpack.c.b16 %v9308, %v9301
  %v9981 = vpack.c.b16 %v9309, %v9302
  %v9982 = vpack.c.b16 %v9317, %v9310
  %v9983 = vpack.c.b16 %v9318, %v9311
  %v9984 = vpack.c.b16 %v9319, %v9312
  %v9985 = vpack.c.b16 %v9320, %v9313
  %v9986 = vpack.c.b16 %v9321, %v9314
  %v9987 = vpack.c.b16 %v9322, %v9315
  %v9988 = vpack.c.b16 %v9323, %v9316
  %v9989 = vpack.c.b16 %v9331, %v9324
  %v9990 = vpack.c.b16 %v9332, %v9325
  %v9991 = vpack.c.b16 %v9333, %v9326
  %v9992 = vpack.c.b16 %v9334, %v9327
  %v9993 = vpack.c.b16 %v9335, %v9328
  %v9994 = vpack.c.b16 %v9336, %v9329
  %v9995 = vpack.c.b16 %v9337, %v9330
  %v9996 = vpack.c.b16 %v9345, %v9338
  %v9997 = vpack.c.b16 %v9346, %v9339
  %v9998 = vpack.c.b16 %v9347, %v9340
  %v9999 = vpack.c.b16 %v9348, %v9341
  %v10000 = vpack.c.b16 %v9349, %v9342
  %v10001 = vpack.c.b16 %v9350, %v9343
  %v10002 = vpack.c.b16 %v9351, %v9344
  %v10003 = vpack.c.b16 %v9359, %v9352
  %v10004 = vpack.c.b16 %v9360, %v9353
  %v10005 = vpack.c.b16 %v9361, %v9354
  %v10006 = vpack.c.b16 %v9362, %v9355
  %v10007 = vpack.c.b16 %v9363, %v9356
  %v10008 = vpack.c.b16 %v9364, %v9357
  %v10009 = vpack.c.b16 %v9365, %v9358
  %v10010 = vpack.c.b16 %v9373, %v9366
  %v10011 = vpack.c.b16 %v9374, %v9367
  %v10012 = vpack.c.b16 %v9375, %v9368
  %v10013 = vpack.c.b16 %v9376, %v9369
  %v10014 = vpack.c.b16 %v9377, %v9370
  %v10015 = vpack.c.b16 %v9378, %v9371
  %v10016 = vpack.c.b16 %v9379, %v9372
  %v10017 = vpack.c.b16 %v9387, %v9380
  %v10018 = vpack.c.b16 %v9388, %v9381
  %v10019 = vpack.c.b16 %v9389, %v9382
  %v10020 = vpack.c.b16 %v9390, %v9383
  %v10021 = vpack.c.b16 %v9391, %v9384
  %v10022 = vpack.c.b16 %v9392, %v9385
  %v10023 = vpack.c.b16 %v9393, %v9386
  %v10024 = vpack.c.b16 %v9401, %v9394
  %v10025 = vpack.c.b16 %v9402, %v9395
  %v10026 = vpack.c.b16 %v9403, %v9396
  %v10027 = vpack.c.b16 %v9404, %v9397
  %v10028 = vpack.c.b16 %v9405, %v9398
  %v10029 = vpack.c.b16 %v9406, %v9399
  %v10030 = vpack.c.b16 %v9407, %v9400
  %v10031 = vpack.c.b16 %v9415, %v9408
  %v10032 = vpack.c.b16 %v9416, %v9409
  %v10033 = vpack.c.b16 %v9417, %v9410
  %v10034 = vpack.c.b16 %v9418, %v9411
  %v10035 = vpack.c.b16 %v9419, %v9412
  %v10036 = vpack.c.b16 %v9420, %v9413
  %v10037 = vpack.c.b16 %v9421, %v9414
  %v10038 = vpack.c.b16 %v9429, %v9422
  %v10039 = vpack.c.b16 %v9430, %v9423
  %v10040 = vpack.c.b16 %v9431, %v9424
  %v10041 = vpack.c.b16 %v9432, %v9425
  %v10042 = vpack.c.b16 %v9433, %v9426
  %v10043 = vpack.c.b16 %v9434, %v9427
  %v10044 = vpack.c.b16 %v9435, %v9428
  %v10045 = vpack.c.b16 %v9443, %v9436
  %v10046 = vpack.c.b16 %v9444, %v9437
  %v10047 = vpack.c.b16 %v9445, %v9438
  %v10048 = vpack.c.b16 %v9446, %v9439
  %v10049 = vpack.c.b16 %v9447, %v9440
  %v10050 = vpack.c.b16 %v9448, %v9441
  %v10051 = vpack.c.b16 %v9449, %v9442
  %v10052 = vpack.c.b16 %v9457, %v9450
  %v10053 = vpack.c.b16 %v9458, %v9451
  %v10054 = vpack.c.b16 %v9459, %v9452
  %v10055 = vpack.c.b16 %v9460, %v9453
  %v10056 = vpack.c.b16 %v9461, %v9454
  %v10057 = vpack.c.b16 %v9462, %v9455
  %v10058 = vpack.c.b16 %v9463, %v9456
  %v10059 = vpack.c.b16 %v9471, %v9464
  %v10060 = vpack.c.b16 %v9472, %v9465
  %v10061 = vpack.c.b16 %v9473, %v9466
  %v10062 = vpack.c.b16 %v9474, %v9467
  %v10063 = vpack.c.b16 %v9475, %v9468
  %v10064 = vpack.c.b16 %v9476, %v9469
  %v10065 = vpack.c.b16 %v9477, %v9470
  %v10066 = vpack.c.b16 %v9485, %v9478
  %v10067 = vpack.c.b16 %v9486, %v9479
  %v10068 = vpack.c.b16 %v9487, %v9480
  %v10069 = vpack.c.b16 %v9488, %v9481
  %v10070 = vpack.c.b16 %v9489, %v9482
  %v10071 = vpack.c.b16 %v9490, %v9483
  %v10072 = vpack.c.b16 %v9491, %v9484
  %v10073 = vpack.c.b16 %v9499, %v9492
  %v10074 = vpack.c.b16 %v9500, %v9493
  %v10075 = vpack.c.b16 %v9501, %v9494
  %v10076 = vpack.c.b16 %v9502, %v9495
  %v10077 = vpack.c.b16 %v9503, %v9496
  %v10078 = vpack.c.b16 %v9504, %v9497
  %v10079 = vpack.c.b16 %v9505, %v9498
  %v10080 = vpack.c.b16 %v9513, %v9506
  %v10081 = vpack.c.b16 %v9514, %v9507
  %v10082 = vpack.c.b16 %v9515, %v9508
  %v10083 = vpack.c.b16 %v9516, %v9509
  %v10084 = vpack.c.b16 %v9517, %v9510
  %v10085 = vpack.c.b16 %v9518, %v9511
  %v10086 = vpack.c.b16 %v9519, %v9512
  %v10087 = vpack.c.b16 %v9527, %v9520
  %v10088 = vpack.c.b16 %v9528, %v9521
  %v10089 = vpack.c.b16 %v9529, %v9522
  %v10090 = vpack.c.b16 %v9530, %v9523
  %v10091 = vpack.c.b16 %v9531, %v9524
  %v10092 = vpack.c.b16 %v9532, %v9525
  %v10093 = vpack.c.b16 %v9533, %v9526
  %v10094 = vpack.c.b16 %v9541, %v9534
  %v10095 = vpack.c.b16 %v9542, %v9535
  %v10096 = vpack.c.b16 %v9543, %v9536
  %v10097 = vpack.c.b16 %v9544, %v9537
  %v10098 = vpack.c.b16 %v9545, %v9538
  %v10099 = vpack.c.b16 %v9546, %v9539
  %v10100 = vpack.c.b16 %v9547, %v9540
  %v10101 = vpack.c.b16 %v9555, %v9548
  %v10102 = vpack.c.b16 %v9556, %v9549
  %v10103 = vpack.c.b16 %v9557, %v9550
  %v10104 = vpack.c.b16 %v9558, %v9551
  %v10105 = vpack.c.b16 %v9559, %v9552
  %v10106 = vpack.c.b16 %v9560, %v9553
  %v10107 = vpack.c.b16 %v9561, %v9554
  %v10108 = vpack.c.b16 %v9569, %v9562
  %v10109 = vpack.c.b16 %v9570, %v9563
  %v10110 = vpack.c.b16 %v9571, %v9564
  %v10111 = vpack.c.b16 %v9572, %v9565
  %v10112 = vpack.c.b16 %v9573, %v9566
  %v10113 = vpack.c.b16 %v9574, %v9567
  %v10114 = vpack.c.b16 %v9575, %v9568
  %v10115 = vpack.c.b16 %v9583, %v9576
  %v10116 = vpack.c.b16 %v9584, %v9577
  %v10117 = vpack.c.b16 %v9585, %v9578
  %v10118 = vpack.c.b16 %v9586, %v9579
  %v10119 = vpack.c.b16 %v9587, %v9580
  %v10120 = vpack.c.b16 %v9588, %v9581
  %v10121 = vpack.c.b16 %v9589, %v9582
  %v10122 = vpack.c.b16 %v9597, %v9590
  %v10123 = vpack.c.b16 %v9598, %v9591
  %v10124 = vpack.c.b16 %v9599, %v9592
  %v10125 = vpack.c.b16 %v9600, %v9593
  %v10126 = vpack.c.b16 %v9601, %v9594
  %v10127 = vpack.c.b16 %v9602, %v9595
  %v10128 = vpack.c.b16 %v9603, %v9596
  %v10129 = vpack.c.b16 %v9611, %v9604
  %v10130 = vpack.c.b16 %v9612, %v9605
  %v10131 = vpack.c.b16 %v9613, %v9606
  %v10132 = vpack.c.b16 %v9614, %v9607
  %v10133 = vpack.c.b16 %v9615, %v9608
  %v10134 = vpack.c.b16 %v9616, %v9609
  %v10135 = vpack.c.b16 %v9617, %v9610
  %v10136 = vpack.c.b16 %v9625, %v9618
  %v10137 = vpack.c.b16 %v9626, %v9619
  %v10138 = vpack.c.b16 %v9627, %v9620
  %v10139 = vpack.c.b16 %v9628, %v9621
  %v10140 = vpack.c.b16 %v9629, %v9622
  %v10141 = vpack.c.b16 %v9630, %v9623
  %v10142 = vpack.c.b16 %v9631, %v9624
  %v10143 = vpack.c.b16 %v9639, %v9632
  %v10144 = vpack.c.b16 %v9640, %v9633
  %v10145 = vpack.c.b16 %v9641, %v9634
  %v10146 = vpack.c.b16 %v9642, %v9635
  %v10147 = vpack.c.b16 %v9643, %v9636
  %v10148 = vpack.c.b16 %v9644, %v9637
  %v10149 = vpack.c.b16 %v9645, %v9638
  %v10150 = vpack.c.b16 %v9653, %v9646
  %v10151 = vpack.c.b16 %v9654, %v9647
  %v10152 = vpack.c.b16 %v9655, %v9648
  %v10153 = vpack.c.b16 %v9656, %v9649
  %v10154 = vpack.c.b16 %v9657, %v9650
  %v10155 = vpack.c.b16 %v9658, %v9651
  %v10156 = vpack.c.b16 %v9659, %v9652
  %v10157 = vpack.c.b16 %v9667, %v9660
  %v10158 = vpack.c.b16 %v9668, %v9661
  %v10159 = vpack.c.b16 %v9669, %v9662
  %v10160 = vpack.c.b16 %v9670, %v9663
  %v10161 = vpack.c.b16 %v9671, %v9664
  %v10162 = vpack.c.b16 %v9672, %v9665
  %v10163 = vpack.c.b16 %v9673, %v9666
  %v10164 = vpack.c.b16 %v9681, %v9674
  %v10165 = vpack.c.b16 %v9682, %v9675
  %v10166 = vpack.c.b16 %v9683, %v9676
  %v10167 = vpack.c.b16 %v9684, %v9677
  %v10168 = vpack.c.b16 %v9685, %v9678
  %v10169 = vpack.c.b16 %v9686, %v9679
  %v10170 = vpack.c.b16 %v9687, %v9680
  %v10171 = vpack.c.b16 %v9695, %v9688
  %v10172 = vpack.c.b16 %v9696, %v9689
  %v10173 = vpack.c.b16 %v9697, %v9690
  %v10174 = vpack.c.b16 %v9698, %v9691
  %v10175 = vpack.c.b16 %v9699, %v9692
  %v10176 = vpack.c.b16 %v9700, %v9693
  %v10177 = vpack.c.b16 %v9701, %v9694
  %v10178 = vpack.c.b16 %v9709, %v9702
  %v10179 = vpack.c.b16 %v9710, %v9703
  %v10180 = vpack.c.b16 %v9711, %v9704
  %v10181 = vpack.c.b16 %v9712, %v9705
  %v10182 = vpack.c.b16 %v9713, %v9706
  %v10183 = vpack.c.b16 %v9714, %v9707
  %v10184 = vpack.c.b16 %v9715, %v9708
  %v10185 = vpack.c.b16 %v9723, %v9716
  %v10186 = vpack.c.b16 %v9724, %v9717
  %v10187 = vpack.c.b16 %v9725, %v9718
  %v10188 = vpack.c.b16 %v9726, %v9719
  %v10189 = vpack.c.b16 %v9727, %v9720
  %v10190 = vpack.c.b16 %v9728, %v9721
  %v10191 = vpack.c.b16 %v9729, %v9722
  %v10192 = vpack.c.b16 %v9737, %v9730
  %v10193 = vpack.c.b16 %v9738, %v9731
  %v10194 = vpack.c.b16 %v9739, %v9732
  %v10195 = vpack.c.b16 %v9740, %v9733
  %v10196 = vpack.c.b16 %v9741, %v9734
  %v10197 = vpack.c.b16 %v9742, %v9735
  %v10198 = vpack.c.b16 %v9743, %v9736
  %v10199 = vpack.c.b16 %v9751, %v9744
  %v10200 = vpack.c.b16 %v9752, %v9745
  %v10201 = vpack.c.b16 %v9753, %v9746
  %v10202 = vpack.c.b16 %v9754, %v9747
  %v10203 = vpack.c.b16 %v9755, %v9748
  %v10204 = vpack.c.b16 %v9756, %v9749
  %v10205 = vpack.c.b16 %v9757, %v9750
  %v10206 = vpack.c.b16 %v9765, %v9758
  %v10207 = vpack.c.b16 %v9766, %v9759
  %v10208 = vpack.c.b16 %v9767, %v9760
  %v10209 = vpack.c.b16 %v9768, %v9761
  %v10210 = vpack.c.b16 %v9769, %v9762
  %v10211 = vpack.c.b16 %v9770, %v9763
  %v10212 = vpack.c.b16 %v9771, %v9764
  %v10213 = vpack.c.b16 %v9779, %v9772
  %v10214 = vpack.c.b16 %v9780, %v9773
  %v10215 = vpack.c.b16 %v9781, %v9774
  %v10216 = vpack.c.b16 %v9782, %v9775
  %v10217 = vpack.c.b16 %v9783, %v9776
  %v10218 = vpack.c.b16 %v9784, %v9777
  %v10219 = vpack.c.b16 %v9785, %v9778
  %v10220 = vpack.c.b16 %v9793, %v9786
  %v10221 = vpack.c.b16 %v9794, %v9787
  %v10222 = vpack.c.b16 %v9795, %v9788
  %v10223 = vpack.c.b16 %v9796, %v9789
  %v10224 = vpack.c.b16 %v9797, %v9790
  %v10225 = vpack.c.b16 %v9798, %v9791
  %v10226 = vpack.c.b16 %v9799, %v9792
  %v10227 = vpack.c.b16 %v9807, %v9800
  %v10228 = vpack.c.b16 %v9808, %v9801
  %v10229 = vpack.c.b16 %v9809, %v9802
  %v10230 = vpack.c.b16 %v9810, %v9803
  %v10231 = vpack.c.b16 %v9811, %v9804
  %v10232 = vpack.c.b16 %v9812, %v9805
  %v10233 = vpack.c.b16 %v9813, %v9806
  %v10234 = vpack.c.b16 %v9821, %v9814
  %v10235 = vpack.c.b16 %v9822, %v9815
  %v10236 = vpack.c.b16 %v9823, %v9816
  %v10237 = vpack.c.b16 %v9824, %v9817
  %v10238 = vpack.c.b16 %v9825, %v9818
  %v10239 = vpack.c.b16 %v9826, %v9819
  %v10240 = vpack.c.b16 %v9827, %v9820
  %v10241 = vpack.c.b16 %v9835, %v9828
  %v10242 = vpack.c.b16 %v9836, %v9829
  %v10243 = vpack.c.b16 %v9837, %v9830
  %v10244 = vpack.c.b16 %v9838, %v9831
  %v10245 = vpack.c.b16 %v9839, %v9832
  %v10246 = vpack.c.b16 %v9840, %v9833
  %v10247 = vpack.c.b16 %v9841, %v9834
  %v10248 = vpack.c.b16 %v9849, %v9842
  %v10249 = vpack.c.b16 %v9850, %v9843
  %v10250 = vpack.c.b16 %v9851, %v9844
  %v10251 = vpack.c.b16 %v9852, %v9845
  %v10252 = vpack.c.b16 %v9853, %v9846
  %v10253 = vpack.c.b16 %v9854, %v9847
  %v10254 = vpack.c.b16 %v9855, %v9848
  %v10255 = vpack.c.b16 %v9863, %v9856
  %v10256 = vpack.c.b16 %v9864, %v9857
  %v10257 = vpack.c.b16 %v9865, %v9858
  %v10258 = vpack.c.b16 %v9866, %v9859
  %v10259 = vpack.c.b16 %v9867, %v9860
  %v10260 = vpack.c.b16 %v9868, %v9861
  %v10261 = vpack.c.b16 %v9869, %v9862
  %v10262 = vpack.c.b16 %v9877, %v9870
  %v10263 = vpack.c.b16 %v9878, %v9871
  %v10264 = vpack.c.b16 %v9879, %v9872
  %v10265 = vpack.c.b16 %v9880, %v9873
  %v10266 = vpack.c.b16 %v9881, %v9874
  %v10267 = vpack.c.b16 %v9882, %v9875
  %v10268 = vpack.c.b16 %v9883, %v9876
  %v10269 = vpack.c.b16 %v9891, %v9884
  %v10270 = vpack.c.b16 %v9892, %v9885
  %v10271 = vpack.c.b16 %v9893, %v9886
  %v10272 = vpack.c.b16 %v9894, %v9887
  %v10273 = vpack.c.b16 %v9895, %v9888
  %v10274 = vpack.c.b16 %v9896, %v9889
  %v10275 = vpack.c.b16 %v9897, %v9890
  %v10276 = vpack.c.b16 %v9905, %v9898
  %v10277 = vpack.c.b16 %v9906, %v9899
  %v10278 = vpack.c.b16 %v9907, %v9900
  %v10279 = vpack.c.b16 %v9908, %v9901
  %v10280 = vpack.c.b16 %v9909, %v9902
  %v10281 = vpack.c.b16 %v9910, %v9903
  %v10282 = vpack.c.b16 %v9911, %v9904
  %v10283 = vpack.c.b16 %v9919, %v9912
  %v10284 = vpack.c.b16 %v9920, %v9913
  %v10285 = vpack.c.b16 %v9921, %v9914
  %v10286 = vpack.c.b16 %v9922, %v9915
  %v10287 = vpack.c.b16 %v9923, %v9916
  %v10288 = vpack.c.b16 %v9924, %v9917
  %v10289 = vpack.c.b16 %v9925, %v9918
  %v10290 = vpack.c.b16 %v9933, %v9926
  %v10291 = vpack.c.b16 %v9934, %v9927
  %v10292 = vpack.c.b16 %v9935, %v9928
  %v10293 = vpack.c.b16 %v9936, %v9929
  %v10294 = vpack.c.b16 %v9937, %v9930
  %v10295 = vpack.c.b16 %v9938, %v9931
  %v10296 = vpack.c.b16 %v9939, %v9932
  %v10297 = vpack.c.b16 %v9947, %v9940
  %v10298 = vpack.c.b16 %v9948, %v9941
  %v10299 = vpack.c.b16 %v9949, %v9942
  %v10300 = vpack.c.b16 %v9950, %v9943
  %v10301 = vpack.c.b16 %v9951, %v9944
  %v10302 = vpack.c.b16 %v9952, %v9945
  %v10303 = vpack.c.b16 %v9953, %v9946
  %v10304 = vpack.c.b16 %v9961, %v9954
  %v10305 = vpack.c.b16 %v9962, %v9955
  %v10306 = vpack.c.b16 %v9963, %v9956
  %v10307 = vpack.c.b16 %v9964, %v9957
  %v10308 = vpack.c.b16 %v9965, %v9958
  %v10309 = vpack.c.b16 %v9966, %v9959
  %v10310 = vpack.c.b16 %v9967, %v9960
  %10654 = vmatprep.subr.bf16.mxu0 %v9969
  %10655 = vmatpush1.bf16.msra.mxu0 %v9968
  %10656 = vmatprep.subr.bf16.mxu0 %v9976
  %10657 = vmatpush1.bf16.msra.mxu0 %v9975
  %10658 = vmatprep.subr.bf16.mxu0 %v9983
  %10659 = vmatpush1.bf16.msra.mxu0 %v9982
  %10660 = vmatprep.subr.bf16.mxu0 %v9990
  %10661 = vmatpush1.bf16.msra.mxu0 %v9989
  %10662 = vmatprep.subr.bf16.mxu0 %v9997
  %10663 = vmatpush1.bf16.msra.mxu0 %v9996
  %10664 = vmatprep.subr.bf16.mxu0 %v10004
  %10665 = vmatpush1.bf16.msra.mxu0 %v10003
  %10666 = vmatprep.subr.bf16.mxu0 %v10011
  %10667 = vmatpush1.bf16.msra.mxu0 %v10010
  %10668 = vmatprep.subr.bf16.mxu0 %v10018
  %10669 = vmatpush1.bf16.msra.mxu0 %v10017
  %10670 = vmatprep.subr.bf16.mxu0 %v10025
  %10671 = vmatpush1.bf16.msra.mxu0 %v10024
  %10672 = vmatprep.subr.bf16.mxu0 %v10032
  %10673 = vmatpush1.bf16.msra.mxu0 %v10031
  %10674 = vmatprep.subr.bf16.mxu0 %v10039
  %10675 = vmatpush1.bf16.msra.mxu0 %v10038
  %10676 = vmatprep.subr.bf16.mxu0 %v10046
  %10677 = vmatpush1.bf16.msra.mxu0 %v10045
  %10678 = vmatprep.subr.bf16.mxu0 %v10053
  %10679 = vmatpush1.bf16.msra.mxu0 %v10052
  %10680 = vmatprep.subr.bf16.mxu0 %v10060
  %10681 = vmatpush1.bf16.msra.mxu0 %v10059
  %10682 = vmatprep.subr.bf16.mxu0 %v10067
  %10683 = vmatpush1.bf16.msra.mxu0 %v10066
  %10684 = vmatprep.subr.bf16.mxu0 %v10074
  %10685 = vmatpush1.bf16.msra.mxu0 %v10073
  %10686 = vmatprep.mubr.bf16.mxu0 %v47
  %10687 = vmatmul.mubr.bf16.gmra.mrb[0].mxu0 %v46
  %v10688 = vpop.f32.mrb[0].mxu0
  %v10689 = vadd.f32 0.0, %v10688
  %v10690 = vpop.f32.mrb[0].mxu0
  %v10691 = vadd.f32 0.0, %v10690
  %v10692 = vpop.f32.mrb[0].mxu0
  %v10693 = vpop.f32.mrb[0].mxu0
  %10694 = vdwg.mxu0
  %10695 = vmatprep.subr.bf16.mxu0 %v10081
  %10696 = vmatpush1.bf16.msra.mxu0 %v10080
  %10697 = vmatprep.subr.bf16.mxu0 %v10088
  %10698 = vmatpush1.bf16.msra.mxu0 %v10087
  %10699 = vmatprep.subr.bf16.mxu0 %v10095
  %10700 = vmatpush1.bf16.msra.mxu0 %v10094
  %10701 = vmatprep.subr.bf16.mxu0 %v10102
  %10702 = vmatpush1.bf16.msra.mxu0 %v10101
  %10703 = vmatprep.subr.bf16.mxu0 %v10109
  %10704 = vmatpush1.bf16.msra.mxu0 %v10108
  %10705 = vmatprep.subr.bf16.mxu0 %v10116
  %10706 = vmatpush1.bf16.msra.mxu0 %v10115
  %10707 = vmatprep.subr.bf16.mxu0 %v10123
  %10708 = vmatpush1.bf16.msra.mxu0 %v10122
  %10709 = vmatprep.subr.bf16.mxu0 %v10130
  %10710 = vmatpush1.bf16.msra.mxu0 %v10129
  %10711 = vmatprep.subr.bf16.mxu0 %v10137
  %10712 = vmatpush1.bf16.msra.mxu0 %v10136
  %10713 = vmatprep.subr.bf16.mxu0 %v10144
  %10714 = vmatpush1.bf16.msra.mxu0 %v10143
  %10715 = vmatprep.subr.bf16.mxu0 %v10151
  %10716 = vmatpush1.bf16.msra.mxu0 %v10150
  %10717 = vmatprep.subr.bf16.mxu0 %v10158
  %10718 = vmatpush1.bf16.msra.mxu0 %v10157
  %10719 = vmatprep.subr.bf16.mxu0 %v10165
  %10720 = vmatpush1.bf16.msra.mxu0 %v10164
  %10721 = vmatprep.subr.bf16.mxu0 %v10172
  %10722 = vmatpush1.bf16.msra.mxu0 %v10171
  %10723 = vmatprep.subr.bf16.mxu0 %v10179
  %10724 = vmatpush1.bf16.msra.mxu0 %v10178
  %10725 = vmatprep.subr.bf16.mxu0 %v10186
  %10726 = vmatpush1.bf16.msra.mxu0 %v10185
  %10727 = vmatprep.mubr.bf16.mxu0 %v49
  %10728 = vmatmul.mubr.bf16.gmra.mrb[0].mxu0 %v48
  %v10729 = vpop.f32.mrb[0].mxu0
  %v10730 = vadd.f32 %v10689, %v10729
  %v10731 = vpop.f32.mrb[0].mxu0
  %v10732 = vadd.f32 %v10691, %v10731
  %v10733 = vpop.f32.mrb[0].mxu0
  %v10734 = vpop.f32.mrb[0].mxu0
  %10735 = vdwg.mxu0
  %10736 = vmatprep.subr.bf16.mxu0 %v10193
  %10737 = vmatpush1.bf16.msra.mxu0 %v10192
  %10738 = vmatprep.subr.bf16.mxu0 %v10200
  %10739 = vmatpush1.bf16.msra.mxu0 %v10199
  %10740 = vmatprep.subr.bf16.mxu0 %v10207
  %10741 = vmatpush1.bf16.msra.mxu0 %v10206
  %10742 = vmatprep.subr.bf16.mxu0 %v10214
  %10743 = vmatpush1.bf16.msra.mxu0 %v10213
  %10744 = vmatprep.subr.bf16.mxu0 %v10221
  %10745 = vmatpush1.bf16.msra.mxu0 %v10220
  %10746 = vmatprep.subr.bf16.mxu0 %v10228
  %10747 = vmatpush1.bf16.msra.mxu0 %v10227
  %10748 = vmatprep.subr.bf16.mxu0 %v10235
  %10749 = vmatpush1.bf16.msra.mxu0 %v10234
  %10750 = vmatprep.subr.bf16.mxu0 %v10242
  %10751 = vmatpush1.bf16.msra.mxu0 %v10241
  %10752 = vmatprep.subr.bf16.mxu0 %v10249
  %10753 = vmatpush1.bf16.msra.mxu0 %v10248
  %10754 = vmatprep.subr.bf16.mxu0 %v10256
  %10755 = vmatpush1.bf16.msra.mxu0 %v10255
  %10756 = vmatprep.subr.bf16.mxu0 %v10263
  %10757 = vmatpush1.bf16.msra.mxu0 %v10262
  %10758 = vmatprep.subr.bf16.mxu0 %v10270
  %10759 = vmatpush1.bf16.msra.mxu0 %v10269
  %10760 = vmatprep.subr.bf16.mxu0 %v10277
  %10761 = vmatpush1.bf16.msra.mxu0 %v10276
  %10762 = vmatprep.subr.bf16.mxu0 %v10284
  %10763 = vmatpush1.bf16.msra.mxu0 %v10283
  %10764 = vmatprep.subr.bf16.mxu0 %v10291
  %10765 = vmatpush1.bf16.msra.mxu0 %v10290
  %10766 = vmatprep.subr.bf16.mxu0 %v10298
  %10767 = vmatpush1.bf16.msra.mxu0 %v10297
  %10768 = vmatprep.mubr.bf16.mxu0 %v51
  %10769 = vmatmul.mubr.bf16.gmra.mrb[0].mxu0 %v50
  %v10770 = vpop.f32.mrb[0].mxu0
  %v10771 = vadd.f32 %v10730, %v10770
  %v10772 = vpop.f32.mrb[0].mxu0
  %v10773 = vadd.f32 %v10732, %v10772
  %v10774 = vpop.f32.mrb[0].mxu0
  %v10775 = vpop.f32.mrb[0].mxu0
  %10776 = vdwg.mxu0
  %10777 = vmatprep.subr.bf16.mxu0 %v10305
  %10778 = vmatpush1.bf16.msra.mxu0 %v10304
  %10779 = vmatprep.subr.bf16.mxu0 0
  %10780 = vmatpush1.bf16.msra.mxu0 0
  %10781 = vmatprep.subr.bf16.mxu0 0
  %10782 = vmatpush1.bf16.msra.mxu0 0
  %10783 = vmatprep.subr.bf16.mxu0 0
  %10784 = vmatpush1.bf16.msra.mxu0 0
  %10785 = vmatprep.subr.bf16.mxu0 0
  %10786 = vmatpush1.bf16.msra.mxu0 0
  %10787 = vmatprep.subr.bf16.mxu0 0
  %10788 = vmatpush1.bf16.msra.mxu0 0
  %10789 = vmatprep.subr.bf16.mxu0 0
  %10790 = vmatpush1.bf16.msra.mxu0 0
  %10791 = vmatprep.subr.bf16.mxu0 0
  %10792 = vmatpush1.bf16.msra.mxu0 0
  %10793 = vmatprep.subr.bf16.mxu0 0
  %10794 = vmatpush1.bf16.msra.mxu0 0
  %10795 = vmatprep.subr.bf16.mxu0 0
  %10796 = vmatpush1.bf16.msra.mxu0 0
  %10797 = vmatprep.subr.bf16.mxu0 0
  %10798 = vmatpush1.bf16.msra.mxu0 0
  %10799 = vmatprep.subr.bf16.mxu0 0
  %10800 = vmatpush1.bf16.msra.mxu0 0
  %10801 = vmatprep.subr.bf16.mxu0 0
  %10802 = vmatpush1.bf16.msra.mxu0 0
  %10803 = vmatprep.subr.bf16.mxu0 0
  %10804 = vmatpush1.bf16.msra.mxu0 0
  %10805 = vmatprep.subr.bf16.mxu0 0
  %10806 = vmatpush1.bf16.msra.mxu0 0
  %10807 = vmatprep.subr.bf16.mxu0 0
  %10808 = vmatpush1.bf16.msra.mxu0 0
  %10809 = vmatprep.mubr.bf16.mxu0 0
  %10810 = vmatmul.mubr.bf16.gmra.mrb[0].mxu0 %v2211
  %v10811 = vpop.f32.mrb[0].mxu0
  %v10812 = vadd.f32 %v10771, %v10811
  %v10813 = vpop.f32.mrb[0].mxu0
  %v10814 = vadd.f32 %v10773, %v10813
  %v10815 = vpop.f32.mrb[0].mxu0
  %v10816 = vpop.f32.mrb[0].mxu0
  %10817 = vdwg.mxu0
  %10818 = vmatprep.subr.bf16.mxu0 %v9971
  %10819 = vmatpush1.bf16.msra.mxu0 %v9970
  %10820 = vmatprep.subr.bf16.mxu0 %v9978
  %10821 = vmatpush1.bf16.msra.mxu0 %v9977
  %10822 = vmatprep.subr.bf16.mxu0 %v9985
  %10823 = vmatpush1.bf16.msra.mxu0 %v9984
  %10824 = vmatprep.subr.bf16.mxu0 %v9992
  %10825 = vmatpush1.bf16.msra.mxu0 %v9991
  %10826 = vmatprep.subr.bf16.mxu0 %v9999
  %10827 = vmatpush1.bf16.msra.mxu0 %v9998
  %10828 = vmatprep.subr.bf16.mxu0 %v10006
  %10829 = vmatpush1.bf16.msra.mxu0 %v10005
  %10830 = vmatprep.subr.bf16.mxu0 %v10013
  %10831 = vmatpush1.bf16.msra.mxu0 %v10012
  %10832 = vmatprep.subr.bf16.mxu0 %v10020
  %10833 = vmatpush1.bf16.msra.mxu0 %v10019
  %10834 = vmatprep.subr.bf16.mxu0 %v10027
  %10835 = vmatpush1.bf16.msra.mxu0 %v10026
  %10836 = vmatprep.subr.bf16.mxu0 %v10034
  %10837 = vmatpush1.bf16.msra.mxu0 %v10033
  %10838 = vmatprep.subr.bf16.mxu0 %v10041
  %10839 = vmatpush1.bf16.msra.mxu0 %v10040
  %10840 = vmatprep.subr.bf16.mxu0 %v10048
  %10841 = vmatpush1.bf16.msra.mxu0 %v10047
  %10842 = vmatprep.subr.bf16.mxu0 %v10055
  %10843 = vmatpush1.bf16.msra.mxu0 %v10054
  %10844 = vmatprep.subr.bf16.mxu0 %v10062
  %10845 = vmatpush1.bf16.msra.mxu0 %v10061
  %10846 = vmatprep.subr.bf16.mxu0 %v10069
  %10847 = vmatpush1.bf16.msra.mxu0 %v10068
  %10848 = vmatprep.subr.bf16.mxu0 %v10076
  %10849 = vmatpush1.bf16.msra.mxu0 %v10075
  %10850 = vmatprep.mubr.bf16.mxu0 %v47
  %10851 = vmatmul.mubr.bf16.gmra.mrb[0].mxu0 %v46
  %v10852 = vpop.f32.mrb[0].mxu0
  %v10853 = vadd.f32 0.0, %v10852
  %v10854 = vpop.f32.mrb[0].mxu0
  %v10855 = vadd.f32 0.0, %v10854
  %v10856 = vpop.f32.mrb[0].mxu0
  %v10857 = vpop.f32.mrb[0].mxu0
  %10858 = vdwg.mxu0
  %10859 = vmatprep.subr.bf16.mxu0 %v10083
  %10860 = vmatpush1.bf16.msra.mxu0 %v10082
  %10861 = vmatprep.subr.bf16.mxu0 %v10090
  %10862 = vmatpush1.bf16.msra.mxu0 %v10089
  %10863 = vmatprep.subr.bf16.mxu0 %v10097
  %10864 = vmatpush1.bf16.msra.mxu0 %v10096
  %10865 = vmatprep.subr.bf16.mxu0 %v10104
  %10866 = vmatpush1.bf16.msra.mxu0 %v10103
  %10867 = vmatprep.subr.bf16.mxu0 %v10111
  %10868 = vmatpush1.bf16.msra.mxu0 %v10110
  %10869 = vmatprep.subr.bf16.mxu0 %v10118
  %10870 = vmatpush1.bf16.msra.mxu0 %v10117
  %10871 = vmatprep.subr.bf16.mxu0 %v10125
  %10872 = vmatpush1.bf16.msra.mxu0 %v10124
  %10873 = vmatprep.subr.bf16.mxu0 %v10132
  %10874 = vmatpush1.bf16.msra.mxu0 %v10131
  %10875 = vmatprep.subr.bf16.mxu0 %v10139
  %10876 = vmatpush1.bf16.msra.mxu0 %v10138
  %10877 = vmatprep.subr.bf16.mxu0 %v10146
  %10878 = vmatpush1.bf16.msra.mxu0 %v10145
  %10879 = vmatprep.subr.bf16.mxu0 %v10153
  %10880 = vmatpush1.bf16.msra.mxu0 %v10152
  %10881 = vmatprep.subr.bf16.mxu0 %v10160
  %10882 = vmatpush1.bf16.msra.mxu0 %v10159
  %10883 = vmatprep.subr.bf16.mxu0 %v10167
  %10884 = vmatpush1.bf16.msra.mxu0 %v10166
  %10885 = vmatprep.subr.bf16.mxu0 %v10174
  %10886 = vmatpush1.bf16.msra.mxu0 %v10173
  %10887 = vmatprep.subr.bf16.mxu0 %v10181
  %10888 = vmatpush1.bf16.msra.mxu0 %v10180
  %10889 = vmatprep.subr.bf16.mxu0 %v10188
  %10890 = vmatpush1.bf16.msra.mxu0 %v10187
  %10891 = vmatprep.mubr.bf16.mxu0 %v49
  %10892 = vmatmul.mubr.bf16.gmra.mrb[0].mxu0 %v48
  %v10893 = vpop.f32.mrb[0].mxu0
  %v10894 = vadd.f32 %v10853, %v10893
  %v10895 = vpop.f32.mrb[0].mxu0
  %v10896 = vadd.f32 %v10855, %v10895
  %v10897 = vpop.f32.mrb[0].mxu0
  %v10898 = vpop.f32.mrb[0].mxu0
  %10899 = vdwg.mxu0
  %10900 = vmatprep.subr.bf16.mxu0 %v10195
  %10901 = vmatpush1.bf16.msra.mxu0 %v10194
  %10902 = vmatprep.subr.bf16.mxu0 %v10202
  %10903 = vmatpush1.bf16.msra.mxu0 %v10201
  %10904 = vmatprep.subr.bf16.mxu0 %v10209
  %10905 = vmatpush1.bf16.msra.mxu0 %v10208
  %10906 = vmatprep.subr.bf16.mxu0 %v10216
  %10907 = vmatpush1.bf16.msra.mxu0 %v10215
  %10908 = vmatprep.subr.bf16.mxu0 %v10223
  %10909 = vmatpush1.bf16.msra.mxu0 %v10222
  %10910 = vmatprep.subr.bf16.mxu0 %v10230
  %10911 = vmatpush1.bf16.msra.mxu0 %v10229
  %10912 = vmatprep.subr.bf16.mxu0 %v10237
  %10913 = vmatpush1.bf16.msra.mxu0 %v10236
  %10914 = vmatprep.subr.bf16.mxu0 %v10244
  %10915 = vmatpush1.bf16.msra.mxu0 %v10243
  %10916 = vmatprep.subr.bf16.mxu0 %v10251
  %10917 = vmatpush1.bf16.msra.mxu0 %v10250
  %10918 = vmatprep.subr.bf16.mxu0 %v10258
  %10919 = vmatpush1.bf16.msra.mxu0 %v10257
  %10920 = vmatprep.subr.bf16.mxu0 %v10265
  %10921 = vmatpush1.bf16.msra.mxu0 %v10264
  %10922 = vmatprep.subr.bf16.mxu0 %v10272
  %10923 = vmatpush1.bf16.msra.mxu0 %v10271
  %10924 = vmatprep.subr.bf16.mxu0 %v10279
  %10925 = vmatpush1.bf16.msra.mxu0 %v10278
  %10926 = vmatprep.subr.bf16.mxu0 %v10286
  %10927 = vmatpush1.bf16.msra.mxu0 %v10285
  %10928 = vmatprep.subr.bf16.mxu0 %v10293
  %10929 = vmatpush1.bf16.msra.mxu0 %v10292
  %10930 = vmatprep.subr.bf16.mxu0 %v10300
  %10931 = vmatpush1.bf16.msra.mxu0 %v10299
  %10932 = vmatprep.mubr.bf16.mxu0 %v51
  %10933 = vmatmul.mubr.bf16.gmra.mrb[0].mxu0 %v50
  %v10934 = vpop.f32.mrb[0].mxu0
  %v10935 = vadd.f32 %v10894, %v10934
  %v10936 = vpop.f32.mrb[0].mxu0
  %v10937 = vadd.f32 %v10896, %v10936
  %v10938 = vpop.f32.mrb[0].mxu0
  %v10939 = vpop.f32.mrb[0].mxu0
  %10940 = vdwg.mxu0
  %10941 = vmatprep.subr.bf16.mxu0 %v10307
  %10942 = vmatpush1.bf16.msra.mxu0 %v10306
  %10943 = vmatprep.subr.bf16.mxu0 0
  %10944 = vmatpush1.bf16.msra.mxu0 0
  %10945 = vmatprep.subr.bf16.mxu0 0
  %10946 = vmatpush1.bf16.msra.mxu0 0
  %10947 = vmatprep.subr.bf16.mxu0 0
  %10948 = vmatpush1.bf16.msra.mxu0 0
  %10949 = vmatprep.subr.bf16.mxu0 0
  %10950 = vmatpush1.bf16.msra.mxu0 0
  %10951 = vmatprep.subr.bf16.mxu0 0
  %10952 = vmatpush1.bf16.msra.mxu0 0
  %10953 = vmatprep.subr.bf16.mxu0 0
  %10954 = vmatpush1.bf16.msra.mxu0 0
  %10955 = vmatprep.subr.bf16.mxu0 0
  %10956 = vmatpush1.bf16.msra.mxu0 0
  %10957 = vmatprep.subr.bf16.mxu0 0
  %10958 = vmatpush1.bf16.msra.mxu0 0
  %10959 = vmatprep.subr.bf16.mxu0 0
  %10960 = vmatpush1.bf16.msra.mxu0 0
  %10961 = vmatprep.subr.bf16.mxu0 0
  %10962 = vmatpush1.bf16.msra.mxu0 0
  %10963 = vmatprep.subr.bf16.mxu0 0
  %10964 = vmatpush1.bf16.msra.mxu0 0
  %10965 = vmatprep.subr.bf16.mxu0 0
  %10966 = vmatpush1.bf16.msra.mxu0 0
  %10967 = vmatprep.subr.bf16.mxu0 0
  %10968 = vmatpush1.bf16.msra.mxu0 0
  %10969 = vmatprep.subr.bf16.mxu0 0
  %10970 = vmatpush1.bf16.msra.mxu0 0
  %10971 = vmatprep.subr.bf16.mxu0 0
  %10972 = vmatpush1.bf16.msra.mxu0 0
  %10973 = vmatprep.mubr.bf16.mxu0 0
  %10974 = vmatmul.mubr.bf16.gmra.mrb[0].mxu0 %v2211
  %v10975 = vpop.f32.mrb[0].mxu0
  %v10976 = vadd.f32 %v10935, %v10975
  %v10977 = vpop.f32.mrb[0].mxu0
  %v10978 = vadd.f32 %v10937, %v10977
  %v10979 = vpop.f32.mrb[0].mxu0
  %v10980 = vpop.f32.mrb[0].mxu0
  %10981 = vdwg.mxu0
  %10982 = vmatprep.subr.bf16.mxu0 %v9973
  %10983 = vmatpush1.bf16.msra.mxu0 %v9972
  %10984 = vmatprep.subr.bf16.mxu0 %v9980
  %10985 = vmatpush1.bf16.msra.mxu0 %v9979
  %10986 = vmatprep.subr.bf16.mxu0 %v9987
  %10987 = vmatpush1.bf16.msra.mxu0 %v9986
  %10988 = vmatprep.subr.bf16.mxu0 %v9994
  %10989 = vmatpush1.bf16.msra.mxu0 %v9993
  %10990 = vmatprep.subr.bf16.mxu0 %v10001
  %10991 = vmatpush1.bf16.msra.mxu0 %v10000
  %10992 = vmatprep.subr.bf16.mxu0 %v10008
  %10993 = vmatpush1.bf16.msra.mxu0 %v10007
  %10994 = vmatprep.subr.bf16.mxu0 %v10015
  %10995 = vmatpush1.bf16.msra.mxu0 %v10014
  %10996 = vmatprep.subr.bf16.mxu0 %v10022
  %10997 = vmatpush1.bf16.msra.mxu0 %v10021
  %10998 = vmatprep.subr.bf16.mxu0 %v10029
  %10999 = vmatpush1.bf16.msra.mxu0 %v10028
  %11000 = vmatprep.subr.bf16.mxu0 %v10036
  %11001 = vmatpush1.bf16.msra.mxu0 %v10035
  %11002 = vmatprep.subr.bf16.mxu0 %v10043
  %11003 = vmatpush1.bf16.msra.mxu0 %v10042
  %11004 = vmatprep.subr.bf16.mxu0 %v10050
  %11005 = vmatpush1.bf16.msra.mxu0 %v10049
  %11006 = vmatprep.subr.bf16.mxu0 %v10057
  %11007 = vmatpush1.bf16.msra.mxu0 %v10056
  %11008 = vmatprep.subr.bf16.mxu0 %v10064
  %11009 = vmatpush1.bf16.msra.mxu0 %v10063
  %11010 = vmatprep.subr.bf16.mxu0 %v10071
  %11011 = vmatpush1.bf16.msra.mxu0 %v10070
  %11012 = vmatprep.subr.bf16.mxu0 %v10078
  %11013 = vmatpush1.bf16.msra.mxu0 %v10077
  %11014 = vmatprep.mubr.bf16.mxu0 %v47
  %11015 = vmatmul.mubr.bf16.gmra.mrb[0].mxu0 %v46
  %v11016 = vpop.f32.mrb[0].mxu0
  %v11017 = vadd.f32 0.0, %v11016
  %v11018 = vpop.f32.mrb[0].mxu0
  %v11019 = vadd.f32 0.0, %v11018
  %v11020 = vpop.f32.mrb[0].mxu0
  %v11021 = vpop.f32.mrb[0].mxu0
  %11022 = vdwg.mxu0
  %11023 = vmatprep.subr.bf16.mxu0 %v10085
  %11024 = vmatpush1.bf16.msra.mxu0 %v10084
  %11025 = vmatprep.subr.bf16.mxu0 %v10092
  %11026 = vmatpush1.bf16.msra.mxu0 %v10091
  %11027 = vmatprep.subr.bf16.mxu0 %v10099
  %11028 = vmatpush1.bf16.msra.mxu0 %v10098
  %11029 = vmatprep.subr.bf16.mxu0 %v10106
  %11030 = vmatpush1.bf16.msra.mxu0 %v10105
  %11031 = vmatprep.subr.bf16.mxu0 %v10113
  %11032 = vmatpush1.bf16.msra.mxu0 %v10112
  %11033 = vmatprep.subr.bf16.mxu0 %v10120
  %11034 = vmatpush1.bf16.msra.mxu0 %v10119
  %11035 = vmatprep.subr.bf16.mxu0 %v10127
  %11036 = vmatpush1.bf16.msra.mxu0 %v10126
  %11037 = vmatprep.subr.bf16.mxu0 %v10134
  %11038 = vmatpush1.bf16.msra.mxu0 %v10133
  %11039 = vmatprep.subr.bf16.mxu0 %v10141
  %11040 = vmatpush1.bf16.msra.mxu0 %v10140
  %11041 = vmatprep.subr.bf16.mxu0 %v10148
  %11042 = vmatpush1.bf16.msra.mxu0 %v10147
  %11043 = vmatprep.subr.bf16.mxu0 %v10155
  %11044 = vmatpush1.bf16.msra.mxu0 %v10154
  %11045 = vmatprep.subr.bf16.mxu0 %v10162
  %11046 = vmatpush1.bf16.msra.mxu0 %v10161
  %11047 = vmatprep.subr.bf16.mxu0 %v10169
  %11048 = vmatpush1.bf16.msra.mxu0 %v10168
  %11049 = vmatprep.subr.bf16.mxu0 %v10176
  %11050 = vmatpush1.bf16.msra.mxu0 %v10175
  %11051 = vmatprep.subr.bf16.mxu0 %v10183
  %11052 = vmatpush1.bf16.msra.mxu0 %v10182
  %11053 = vmatprep.subr.bf16.mxu0 %v10190
  %11054 = vmatpush1.bf16.msra.mxu0 %v10189
  %11055 = vmatprep.mubr.bf16.mxu0 %v49
  %11056 = vmatmul.mubr.bf16.gmra.mrb[0].mxu0 %v48
  %v11057 = vpop.f32.mrb[0].mxu0
  %v11058 = vadd.f32 %v11017, %v11057
  %v11059 = vpop.f32.mrb[0].mxu0
  %v11060 = vadd.f32 %v11019, %v11059
  %v11061 = vpop.f32.mrb[0].mxu0
  %v11062 = vpop.f32.mrb[0].mxu0
  %11063 = vdwg.mxu0
  %11064 = vmatprep.subr.bf16.mxu0 %v10197
  %11065 = vmatpush1.bf16.msra.mxu0 %v10196
  %11066 = vmatprep.subr.bf16.mxu0 %v10204
  %11067 = vmatpush1.bf16.msra.mxu0 %v10203
  %11068 = vmatprep.subr.bf16.mxu0 %v10211
  %11069 = vmatpush1.bf16.msra.mxu0 %v10210
  %11070 = vmatprep.subr.bf16.mxu0 %v10218
  %11071 = vmatpush1.bf16.msra.mxu0 %v10217
  %11072 = vmatprep.subr.bf16.mxu0 %v10225
  %11073 = vmatpush1.bf16.msra.mxu0 %v10224
  %11074 = vmatprep.subr.bf16.mxu0 %v10232
  %11075 = vmatpush1.bf16.msra.mxu0 %v10231
  %11076 = vmatprep.subr.bf16.mxu0 %v10239
  %11077 = vmatpush1.bf16.msra.mxu0 %v10238
  %11078 = vmatprep.subr.bf16.mxu0 %v10246
  %11079 = vmatpush1.bf16.msra.mxu0 %v10245
  %11080 = vmatprep.subr.bf16.mxu0 %v10253
  %11081 = vmatpush1.bf16.msra.mxu0 %v10252
  %11082 = vmatprep.subr.bf16.mxu0 %v10260
  %11083 = vmatpush1.bf16.msra.mxu0 %v10259
  %11084 = vmatprep.subr.bf16.mxu0 %v10267
  %11085 = vmatpush1.bf16.msra.mxu0 %v10266
  %11086 = vmatprep.subr.bf16.mxu0 %v10274
  %11087 = vmatpush1.bf16.msra.mxu0 %v10273
  %11088 = vmatprep.subr.bf16.mxu0 %v10281
  %11089 = vmatpush1.bf16.msra.mxu0 %v10280
  %11090 = vmatprep.subr.bf16.mxu0 %v10288
  %11091 = vmatpush1.bf16.msra.mxu0 %v10287
  %11092 = vmatprep.subr.bf16.mxu0 %v10295
  %11093 = vmatpush1.bf16.msra.mxu0 %v10294
  %11094 = vmatprep.subr.bf16.mxu0 %v10302
  %11095 = vmatpush1.bf16.msra.mxu0 %v10301
  %11096 = vmatprep.mubr.bf16.mxu0 %v51
  %11097 = vmatmul.mubr.bf16.gmra.mrb[0].mxu0 %v50
  %v11098 = vpop.f32.mrb[0].mxu0
  %v11099 = vadd.f32 %v11058, %v11098
  %v11100 = vpop.f32.mrb[0].mxu0
  %v11101 = vadd.f32 %v11060, %v11100
  %v11102 = vpop.f32.mrb[0].mxu0
  %v11103 = vpop.f32.mrb[0].mxu0
  %11104 = vdwg.mxu0
  %11105 = vmatprep.subr.bf16.mxu0 %v10309
  %11106 = vmatpush1.bf16.msra.mxu0 %v10308
  %11107 = vmatprep.subr.bf16.mxu0 0
  %11108 = vmatpush1.bf16.msra.mxu0 0
  %11109 = vmatprep.subr.bf16.mxu0 0
  %11110 = vmatpush1.bf16.msra.mxu0 0
  %11111 = vmatprep.subr.bf16.mxu0 0
  %11112 = vmatpush1.bf16.msra.mxu0 0
  %11113 = vmatprep.subr.bf16.mxu0 0
  %11114 = vmatpush1.bf16.msra.mxu0 0
  %11115 = vmatprep.subr.bf16.mxu0 0
  %11116 = vmatpush1.bf16.msra.mxu0 0
  %11117 = vmatprep.subr.bf16.mxu0 0
  %11118 = vmatpush1.bf16.msra.mxu0 0
  %11119 = vmatprep.subr.bf16.mxu0 0
  %11120 = vmatpush1.bf16.msra.mxu0 0
  %11121 = vmatprep.subr.bf16.mxu0 0
  %11122 = vmatpush1.bf16.msra.mxu0 0
  %11123 = vmatprep.subr.bf16.mxu0 0
  %11124 = vmatpush1.bf16.msra.mxu0 0
  %11125 = vmatprep.subr.bf16.mxu0 0
  %11126 = vmatpush1.bf16.msra.mxu0 0
  %11127 = vmatprep.subr.bf16.mxu0 0
  %11128 = vmatpush1.bf16.msra.mxu0 0
  %11129 = vmatprep.subr.bf16.mxu0 0
  %11130 = vmatpush1.bf16.msra.mxu0 0
  %11131 = vmatprep.subr.bf16.mxu0 0
  %11132 = vmatpush1.bf16.msra.mxu0 0
  %11133 = vmatprep.subr.bf16.mxu0 0
  %11134 = vmatpush1.bf16.msra.mxu0 0
  %11135 = vmatprep.subr.bf16.mxu0 0
  %11136 = vmatpush1.bf16.msra.mxu0 0
  %11137 = vmatprep.mubr.bf16.mxu0 0
  %11138 = vmatmul.mubr.bf16.gmra.mrb[0].mxu0 %v2211
  %v11139 = vpop.f32.mrb[0].mxu0
  %v11140 = vadd.f32 %v11099, %v11139
  %v11141 = vpop.f32.mrb[0].mxu0
  %v11142 = vadd.f32 %v11101, %v11141
  %v11143 = vpop.f32.mrb[0].mxu0
  %v11144 = vpop.f32.mrb[0].mxu0
  %11145 = vdwg.mxu0
  %11146 = vmatprep.subr.bf16.mxu0 0
  %11147 = vmatpush1.bf16.msra.mxu0 %v9974
  %11148 = vmatprep.subr.bf16.mxu0 0
  %11149 = vmatpush1.bf16.msra.mxu0 %v9981
  %11150 = vmatprep.subr.bf16.mxu0 0
  %11151 = vmatpush1.bf16.msra.mxu0 %v9988
  %11152 = vmatprep.subr.bf16.mxu0 0
  %11153 = vmatpush1.bf16.msra.mxu0 %v9995
  %11154 = vmatprep.subr.bf16.mxu0 0
  %11155 = vmatpush1.bf16.msra.mxu0 %v10002
  %11156 = vmatprep.subr.bf16.mxu0 0
  %11157 = vmatpush1.bf16.msra.mxu0 %v10009
  %11158 = vmatprep.subr.bf16.mxu0 0
  %11159 = vmatpush1.bf16.msra.mxu0 %v10016
  %11160 = vmatprep.subr.bf16.mxu0 0
  %11161 = vmatpush1.bf16.msra.mxu0 %v10023
  %11162 = vmatprep.subr.bf16.mxu0 0
  %11163 = vmatpush1.bf16.msra.mxu0 %v10030
  %11164 = vmatprep.subr.bf16.mxu0 0
  %11165 = vmatpush1.bf16.msra.mxu0 %v10037
  %11166 = vmatprep.subr.bf16.mxu0 0
  %11167 = vmatpush1.bf16.msra.mxu0 %v10044
  %11168 = vmatprep.subr.bf16.mxu0 0
  %11169 = vmatpush1.bf16.msra.mxu0 %v10051
  %11170 = vmatprep.subr.bf16.mxu0 0
  %11171 = vmatpush1.bf16.msra.mxu0 %v10058
  %11172 = vmatprep.subr.bf16.mxu0 0
  %11173 = vmatpush1.bf16.msra.mxu0 %v10065
  %11174 = vmatprep.subr.bf16.mxu0 0
  %11175 = vmatpush1.bf16.msra.mxu0 %v10072
  %11176 = vmatprep.subr.bf16.mxu0 0
  %11177 = vmatpush1.bf16.msra.mxu0 %v10079
  %11178 = vmatprep.mubr.bf16.mxu0 %v47
  %11179 = vmatmul.mubr.bf16.gmra.mrb[0].mxu0 %v46
  %v11180 = vpop.f32.mrb[0].mxu0
  %v11181 = vadd.f32 0.0, %v11180
  %v11182 = vpop.f32.mrb[0].mxu0
  %v11183 = vpop.f32.mrb[0].mxu0
  %v11184 = vpop.f32.mrb[0].mxu0
  %11185 = vdwg.mxu0
  %11186 = vmatprep.subr.bf16.mxu0 0
  %11187 = vmatpush1.bf16.msra.mxu0 %v10086
  %11188 = vmatprep.subr.bf16.mxu0 0
  %11189 = vmatpush1.bf16.msra.mxu0 %v10093
  %11190 = vmatprep.subr.bf16.mxu0 0
  %11191 = vmatpush1.bf16.msra.mxu0 %v10100
  %11192 = vmatprep.subr.bf16.mxu0 0
  %11193 = vmatpush1.bf16.msra.mxu0 %v10107
  %11194 = vmatprep.subr.bf16.mxu0 0
  %11195 = vmatpush1.bf16.msra.mxu0 %v10114
  %11196 = vmatprep.subr.bf16.mxu0 0
  %11197 = vmatpush1.bf16.msra.mxu0 %v10121
  %11198 = vmatprep.subr.bf16.mxu0 0
  %11199 = vmatpush1.bf16.msra.mxu0 %v10128
  %11200 = vmatprep.subr.bf16.mxu0 0
  %11201 = vmatpush1.bf16.msra.mxu0 %v10135
  %11202 = vmatprep.subr.bf16.mxu0 0
  %11203 = vmatpush1.bf16.msra.mxu0 %v10142
  %11204 = vmatprep.subr.bf16.mxu0 0
  %11205 = vmatpush1.bf16.msra.mxu0 %v10149
  %11206 = vmatprep.subr.bf16.mxu0 0
  %11207 = vmatpush1.bf16.msra.mxu0 %v10156
  %11208 = vmatprep.subr.bf16.mxu0 0
  %11209 = vmatpush1.bf16.msra.mxu0 %v10163
  %11210 = vmatprep.subr.bf16.mxu0 0
  %11211 = vmatpush1.bf16.msra.mxu0 %v10170
  %11212 = vmatprep.subr.bf16.mxu0 0
  %11213 = vmatpush1.bf16.msra.mxu0 %v10177
  %11214 = vmatprep.subr.bf16.mxu0 0
  %11215 = vmatpush1.bf16.msra.mxu0 %v10184
  %11216 = vmatprep.subr.bf16.mxu0 0
  %11217 = vmatpush1.bf16.msra.mxu0 %v10191
  %11218 = vmatprep.mubr.bf16.mxu0 %v49
  %11219 = vmatmul.mubr.bf16.gmra.mrb[0].mxu0 %v48
  %v11220 = vpop.f32.mrb[0].mxu0
  %v11221 = vadd.f32 %v11181, %v11220
  %v11222 = vpop.f32.mrb[0].mxu0
  %v11223 = vpop.f32.mrb[0].mxu0
  %v11224 = vpop.f32.mrb[0].mxu0
  %11225 = vdwg.mxu0
  %11226 = vmatprep.subr.bf16.mxu0 0
  %11227 = vmatpush1.bf16.msra.mxu0 %v10198
  %11228 = vmatprep.subr.bf16.mxu0 0
  %11229 = vmatpush1.bf16.msra.mxu0 %v10205
  %11230 = vmatprep.subr.bf16.mxu0 0
  %11231 = vmatpush1.bf16.msra.mxu0 %v10212
  %11232 = vmatprep.subr.bf16.mxu0 0
  %11233 = vmatpush1.bf16.msra.mxu0 %v10219
  %11234 = vmatprep.subr.bf16.mxu0 0
  %11235 = vmatpush1.bf16.msra.mxu0 %v10226
  %11236 = vmatprep.subr.bf16.mxu0 0
  %11237 = vmatpush1.bf16.msra.mxu0 %v10233
  %11238 = vmatprep.subr.bf16.mxu0 0
  %11239 = vmatpush1.bf16.msra.mxu0 %v10240
  %11240 = vmatprep.subr.bf16.mxu0 0
  %11241 = vmatpush1.bf16.msra.mxu0 %v10247
  %11242 = vmatprep.subr.bf16.mxu0 0
  %11243 = vmatpush1.bf16.msra.mxu0 %v10254
  %11244 = vmatprep.subr.bf16.mxu0 0
  %11245 = vmatpush1.bf16.msra.mxu0 %v10261
  %11246 = vmatprep.subr.bf16.mxu0 0
  %11247 = vmatpush1.bf16.msra.mxu0 %v10268
  %11248 = vmatprep.subr.bf16.mxu0 0
  %11249 = vmatpush1.bf16.msra.mxu0 %v10275
  %11250 = vmatprep.subr.bf16.mxu0 0
  %11251 = vmatpush1.bf16.msra.mxu0 %v10282
  %11252 = vmatprep.subr.bf16.mxu0 0
  %11253 = vmatpush1.bf16.msra.mxu0 %v10289
  %11254 = vmatprep.subr.bf16.mxu0 0
  %11255 = vmatpush1.bf16.msra.mxu0 %v10296
  %11256 = vmatprep.subr.bf16.mxu0 0
  %11257 = vmatpush1.bf16.msra.mxu0 %v10303
  %11258 = vmatprep.mubr.bf16.mxu0 %v51
  %11259 = vmatmul.mubr.bf16.gmra.mrb[0].mxu0 %v50
  %v11260 = vpop.f32.mrb[0].mxu0
  %v11261 = vadd.f32 %v11221, %v11260
  %v11262 = vpop.f32.mrb[0].mxu0
  %v11263 = vpop.f32.mrb[0].mxu0
  %v11264 = vpop.f32.mrb[0].mxu0
  %11265 = vdwg.mxu0
  %11266 = vmatprep.subr.bf16.mxu0 0
  %11267 = vmatpush1.bf16.msra.mxu0 %v10310
  %11268 = vmatprep.subr.bf16.mxu0 0
  %11269 = vmatpush1.bf16.msra.mxu0 0
  %11270 = vmatprep.subr.bf16.mxu0 0
  %11271 = vmatpush1.bf16.msra.mxu0 0
  %11272 = vmatprep.subr.bf16.mxu0 0
  %11273 = vmatpush1.bf16.msra.mxu0 0
  %11274 = vmatprep.subr.bf16.mxu0 0
  %11275 = vmatpush1.bf16.msra.mxu0 0
  %11276 = vmatprep.subr.bf16.mxu0 0
  %11277 = vmatpush1.bf16.msra.mxu0 0
  %11278 = vmatprep.subr.bf16.mxu0 0
  %11279 = vmatpush1.bf16.msra.mxu0 0
  %11280 = vmatprep.subr.bf16.mxu0 0
  %11281 = vmatpush1.bf16.msra.mxu0 0
  %11282 = vmatprep.subr.bf16.mxu0 0
  %11283 = vmatpush1.bf16.msra.mxu0 0
  %11284 = vmatprep.subr.bf16.mxu0 0
  %11285 = vmatpush1.bf16.msra.mxu0 0
  %11286 = vmatprep.subr.bf16.mxu0 0
  %11287 = vmatpush1.bf16.msra.mxu0 0
  %11288 = vmatprep.subr.bf16.mxu0 0
  %11289 = vmatpush1.bf16.msra.mxu0 0
  %11290 = vmatprep.subr.bf16.mxu0 0
  %11291 = vmatpush1.bf16.msra.mxu0 0
  %11292 = vmatprep.subr.bf16.mxu0 0
  %11293 = vmatpush1.bf16.msra.mxu0 0
  %11294 = vmatprep.subr.bf16.mxu0 0
  %11295 = vmatpush1.bf16.msra.mxu0 0
  %11296 = vmatprep.subr.bf16.mxu0 0
  %11297 = vmatpush1.bf16.msra.mxu0 0
  %11298 = vmatprep.mubr.bf16.mxu0 0
  %11299 = vmatmul.mubr.bf16.gmra.mrb[0].mxu0 %v2211
  %v11300 = vpop.f32.mrb[0].mxu0
  %v11301 = vadd.f32 %v11261, %v11300
  %v11302 = vpop.f32.mrb[0].mxu0
  %v11303 = vpop.f32.mrb[0].mxu0
  %v11304 = vpop.f32.mrb[0].mxu0
  %11305 = vdwg.mxu0
  %v11306 = vmax.f32 %v8490, %v10812
  %v11307 = vmax.f32 %v8491, %v10814
  %v11308 = vmax.f32 %v8492, %v10976
  %v11309 = vmax.f32 %v8493, %v10978
  %v11310 = vmax.f32 %v8494, %v11140
  %v11311 = vmax.f32 %v8495, %v11142
  %v11312 = vmax.f32 %v8496, %v11301
  %v11313 = vld [vmem:[%s2] sm:$0x7f]
  %v11315 = vlaneseq
  %v11316 = vshrl.u32 %v11315, 7
  %v11317 = vsub.s32 0, %v11316
  %v11318 = vrot.slane %v11313, %v11317
  %v11319 = vlaneseq
  %v11320 = vshrl.u32 %v11319, 7
  %v11321 = vsub.s32 1, %v11320
  %v11322 = vrot.slane %v11313, %v11321
  %v11323 = vlaneseq
  %v11324 = vshrl.u32 %v11323, 7
  %v11325 = vsub.s32 2, %v11324
  %v11326 = vrot.slane %v11313, %v11325
  %v11327 = vlaneseq
  %v11328 = vshrl.u32 %v11327, 7
  %v11329 = vsub.s32 3, %v11328
  %v11330 = vrot.slane %v11313, %v11329
  %v11331 = vlaneseq
  %v11332 = vshrl.u32 %v11331, 7
  %v11333 = vsub.s32 4, %v11332
  %v11334 = vrot.slane %v11313, %v11333
  %v11335 = vlaneseq
  %v11336 = vshrl.u32 %v11335, 7
  %v11337 = vsub.s32 5, %v11336
  %v11338 = vrot.slane %v11313, %v11337
  %v11339 = vlaneseq
  %v11340 = vshrl.u32 %v11339, 7
  %v11341 = vsub.s32 6, %v11340
  %v11342 = vrot.slane %v11313, %v11341
  %v11350 = vadd.f32 %v11306, %v11318
  %v11351 = vadd.f32 %v11307, %v11322
  %v11352 = vadd.f32 %v11308, %v11326
  %v11353 = vadd.f32 %v11309, %v11330
  %v11354 = vadd.f32 %v11310, %v11334
  %v11355 = vadd.f32 %v11311, %v11338
  %v11356 = vadd.f32 %v11312, %v11342
  %v11357 = vmax.f32 %v11350, 0.0
  %v11358 = vmax.f32 %v11351, 0.0
  %v11359 = vmax.f32 %v11352, 0.0
  %v11360 = vmax.f32 %v11353, 0.0
  %v11361 = vmax.f32 %v11354, 0.0
  %v11362 = vmax.f32 %v11355, 0.0
  %v11363 = vmax.f32 %v11356, 0.0
  %v11364 = vpack.c.bf16 %v11357, %v11357
  %v11365 = vpack.c.bf16 %v11358, %v11358
  %v11366 = vpack.c.bf16 %v11359, %v11359
  %v11367 = vpack.c.bf16 %v11360, %v11360
  %v11368 = vpack.c.bf16 %v11361, %v11361
  %v11369 = vpack.c.bf16 %v11362, %v11362
  %v11370 = vpack.c.bf16 %v11363, %v11363
  %v11371 = vld [vmem:[%s3] sm:$0xff]
  %v11372 = vld [vmem:[%s3 + $0x8] sm:$0xff]
  %v11373 = vld [vmem:[%s3 + $0x10] sm:$0xff]
  %v11374 = vld [vmem:[%s3 + $0x18] sm:$0xff]
  %v11375 = vld [vmem:[%s3 + $0x20] sm:$0xff]
  %v11376 = vld [vmem:[%s3 + $0x28] sm:$0xff]
  %v11377 = vld [vmem:[%s3 + $0x30] sm:$0xff]
  %v11378 = vld [vmem:[%s3 + $0x38] sm:$0xff]
  %v11379 = vld [vmem:[%s3 + $0x40] sm:$0xff]
  %v11380 = vld [vmem:[%s3 + $0x48] sm:$0xff]
  %v11381 = vld [vmem:[%s3 + $0x50] sm:$0xff]
  %v11382 = vld [vmem:[%s3 + $0x58] sm:$0xff]
  %v11383 = vld [vmem:[%s3 + $0x60] sm:$0xff]
  %v11384 = vld [vmem:[%s3 + $0x68] sm:$0xff]
  %v11385 = vld [vmem:[%s3 + $0x70] sm:$0xff]
  %v11386 = vld [vmem:[%s3 + $0x78] sm:$0xff]
  %v11387 = vld [vmem:[%s3 + $0x80] sm:$0xff]
  %v11388 = vld [vmem:[%s3 + $0x88] sm:$0xff]
  %v11389 = vld [vmem:[%s3 + $0x90] sm:$0xff]
  %v11390 = vld [vmem:[%s3 + $0x98] sm:$0xff]
  %v11391 = vld [vmem:[%s3 + $0xa0] sm:$0xff]
  %v11392 = vld [vmem:[%s3 + $0xa8] sm:$0xff]
  %v11393 = vld [vmem:[%s3 + $0xb0] sm:$0xff]
  %v11394 = vld [vmem:[%s3 + $0xb8] sm:$0xff]
  %v11395 = vld [vmem:[%s3 + $0xc0] sm:$0xff]
  %v11396 = vld [vmem:[%s3 + $0xc8] sm:$0xff]
  %v11397 = vld [vmem:[%s3 + $0xd0] sm:$0xff]
  %v11398 = vld [vmem:[%s3 + $0xd8] sm:$0xff]
  %v11399 = vld [vmem:[%s3 + $0xe0] sm:$0xff]
  %v11400 = vld [vmem:[%s3 + $0xe8] sm:$0xff]
  %v11401 = vld [vmem:[%s3 + $0xf0] sm:$0xff]
  %v11402 = vld [vmem:[%s3 + $0xf8] sm:$0xff]
  %v11403 = vld [vmem:[%s3 + $0x100] sm:$0xff]
  %v11404 = vld [vmem:[%s3 + $0x108] sm:$0xff]
  %v11405 = vld [vmem:[%s3 + $0x110] sm:$0xff]
  %v11406 = vld [vmem:[%s3 + $0x118] sm:$0xff]
  %v11407 = vld [vmem:[%s3 + $0x120] sm:$0xff]
  %v11408 = vld [vmem:[%s3 + $0x128] sm:$0xff]
  %v11409 = vld [vmem:[%s3 + $0x130] sm:$0xff]
  %v11410 = vld [vmem:[%s3 + $0x138] sm:$0xff]
  %v11411 = vld [vmem:[%s3 + $0x140] sm:$0xff]
  %v11412 = vld [vmem:[%s3 + $0x148] sm:$0xff]
  %v11413 = vld [vmem:[%s3 + $0x150] sm:$0xff]
  %v11414 = vld [vmem:[%s3 + $0x158] sm:$0xff]
  %v11415 = vld [vmem:[%s3 + $0x160] sm:$0xff]
  %v11416 = vld [vmem:[%s3 + $0x168] sm:$0xff]
  %v11417 = vld [vmem:[%s3 + $0x170] sm:$0xff]
  %v11418 = vld [vmem:[%s3 + $0x178] sm:$0xff]
  %v11419 = vld [vmem:[%s3 + $0x180] sm:$0xff]
  %v11420 = vld [vmem:[%s3 + $0x188] sm:$0xff]
  %v11421 = vld [vmem:[%s3 + $0x190] sm:$0xff]
  %v11422 = vld [vmem:[%s3 + $0x198] sm:$0xff]
  %v11423 = vld [vmem:[%s3 + $0x1a0] sm:$0xff]
  %v11424 = vld [vmem:[%s3 + $0x1a8] sm:$0xff]
  %v11425 = vld [vmem:[%s3 + $0x1b0] sm:$0xff]
  %v11426 = vld [vmem:[%s3 + $0x1b8] sm:$0xff]
  %v11427 = vld [vmem:[%s3 + $0x1c0] sm:$0xff]
  %v11428 = vld [vmem:[%s3 + $0x1c8] sm:$0xff]
  %v11429 = vld [vmem:[%s3 + $0x1d0] sm:$0xff]
  %v11430 = vld [vmem:[%s3 + $0x1d8] sm:$0xff]
  %v11431 = vld [vmem:[%s3 + $0x1e0] sm:$0xff]
  %v11432 = vld [vmem:[%s3 + $0x1e8] sm:$0xff]
  %v11433 = vld [vmem:[%s3 + $0x1f0] sm:$0xff]
  %v11434 = vld [vmem:[%s3 + $0x1f8] sm:$0xff]
  %v11435 = vld [vmem:[%s3 + $0x200] sm:$0xff]
  %v11436 = vld [vmem:[%s3 + $0x208] sm:$0xff]
  %v11437 = vld [vmem:[%s3 + $0x210] sm:$0xff]
  %v11438 = vld [vmem:[%s3 + $0x218] sm:$0xff]
  %v11439 = vld [vmem:[%s3 + $0x220] sm:$0xff]
  %v11440 = vld [vmem:[%s3 + $0x228] sm:$0xff]
  %v11441 = vld [vmem:[%s3 + $0x230] sm:$0xff]
  %v11442 = vld [vmem:[%s3 + $0x238] sm:$0xff]
  %v11443 = vld [vmem:[%s3 + $0x240] sm:$0xff]
  %v11444 = vld [vmem:[%s3 + $0x248] sm:$0xff]
  %v11445 = vld [vmem:[%s3 + $0x250] sm:$0xff]
  %v11446 = vld [vmem:[%s3 + $0x258] sm:$0xff]
  %v11447 = vld [vmem:[%s3 + $0x260] sm:$0xff]
  %v11448 = vld [vmem:[%s3 + $0x268] sm:$0xff]
  %v11449 = vld [vmem:[%s3 + $0x270] sm:$0xff]
  %v11450 = vld [vmem:[%s3 + $0x278] sm:$0xff]
  %v11451 = vld [vmem:[%s3 + $0x280] sm:$0xff]
  %v11452 = vld [vmem:[%s3 + $0x288] sm:$0xff]
  %v11453 = vld [vmem:[%s3 + $0x290] sm:$0xff]
  %v11454 = vld [vmem:[%s3 + $0x298] sm:$0xff]
  %v11455 = vld [vmem:[%s3 + $0x2a0] sm:$0xff]
  %v11456 = vld [vmem:[%s3 + $0x2a8] sm:$0xff]
  %v11457 = vld [vmem:[%s3 + $0x2b0] sm:$0xff]
  %v11458 = vld [vmem:[%s3 + $0x2b8] sm:$0xff]
  %v11459 = vld [vmem:[%s3 + $0x2c0] sm:$0xff]
  %v11460 = vld [vmem:[%s3 + $0x2c8] sm:$0xff]
  %v11461 = vld [vmem:[%s3 + $0x2d0] sm:$0xff]
  %v11462 = vld [vmem:[%s3 + $0x2d8] sm:$0xff]
  %v11463 = vld [vmem:[%s3 + $0x2e0] sm:$0xff]
  %v11464 = vld [vmem:[%s3 + $0x2e8] sm:$0xff]
  %v11465 = vld [vmem:[%s3 + $0x2f0] sm:$0xff]
  %v11466 = vld [vmem:[%s3 + $0x2f8] sm:$0xff]
  %v11467 = vld [vmem:[%s3 + $0x300] sm:$0xff]
  %v11468 = vld [vmem:[%s3 + $0x308] sm:$0xff]
  %v11469 = vld [vmem:[%s3 + $0x310] sm:$0xff]
  %v11470 = vld [vmem:[%s3 + $0x318] sm:$0xff]
  %v11471 = vld [vmem:[%s3 + $0x320] sm:$0xff]
  %v11472 = vld [vmem:[%s3 + $0x328] sm:$0xff]
  %v11473 = vld [vmem:[%s3 + $0x330] sm:$0xff]
  %v11474 = vld [vmem:[%s3 + $0x338] sm:$0xff]
  %v11475 = vld [vmem:[%s3 + $0x340] sm:$0xff]
  %v11476 = vld [vmem:[%s3 + $0x348] sm:$0xff]
  %v11477 = vld [vmem:[%s3 + $0x350] sm:$0xff]
  %v11478 = vld [vmem:[%s3 + $0x358] sm:$0xff]
  %v11587 = vunpack.c.l.b16 %v11371
  %v11588 = vunpack.c.h.b16 %v11371
  %v11589 = vunpack.c.l.b16 %v11372
  %v11590 = vunpack.c.h.b16 %v11372
  %v11591 = vunpack.c.l.b16 %v11373
  %v11592 = vunpack.c.h.b16 %v11373
  %v11593 = vunpack.c.l.b16 %v11374
  %v11594 = vunpack.c.h.b16 %v11374
  %v11595 = vunpack.c.l.b16 %v11375
  %v11596 = vunpack.c.h.b16 %v11375
  %v11597 = vunpack.c.l.b16 %v11376
  %v11598 = vunpack.c.h.b16 %v11376
  %v11599 = vunpack.c.l.b16 %v11377
  %v11600 = vunpack.c.h.b16 %v11377
  %v11601 = vunpack.c.l.b16 %v11378
  %v11602 = vunpack.c.h.b16 %v11378
  %v11603 = vunpack.c.l.b16 %v11379
  %v11604 = vunpack.c.h.b16 %v11379
  %v11605 = vunpack.c.l.b16 %v11380
  %v11606 = vunpack.c.h.b16 %v11380
  %v11607 = vunpack.c.l.b16 %v11381
  %v11608 = vunpack.c.h.b16 %v11381
  %v11609 = vunpack.c.l.b16 %v11382
  %v11610 = vunpack.c.h.b16 %v11382
  %v11611 = vunpack.c.l.b16 %v11383
  %v11612 = vunpack.c.h.b16 %v11383
  %v11613 = vunpack.c.l.b16 %v11384
  %v11614 = vunpack.c.h.b16 %v11384
  %v11615 = vunpack.c.l.b16 %v11385
  %v11616 = vunpack.c.h.b16 %v11385
  %v11617 = vunpack.c.l.b16 %v11386
  %v11618 = vunpack.c.h.b16 %v11386
  %v11619 = vunpack.c.l.b16 %v11387
  %v11620 = vunpack.c.h.b16 %v11387
  %v11621 = vunpack.c.l.b16 %v11388
  %v11622 = vunpack.c.h.b16 %v11388
  %v11623 = vunpack.c.l.b16 %v11389
  %v11624 = vunpack.c.h.b16 %v11389
  %v11625 = vunpack.c.l.b16 %v11390
  %v11626 = vunpack.c.h.b16 %v11390
  %v11627 = vunpack.c.l.b16 %v11391
  %v11628 = vunpack.c.h.b16 %v11391
  %v11629 = vunpack.c.l.b16 %v11392
  %v11630 = vunpack.c.h.b16 %v11392
  %v11631 = vunpack.c.l.b16 %v11393
  %v11632 = vunpack.c.h.b16 %v11393
  %v11633 = vunpack.c.l.b16 %v11394
  %v11634 = vunpack.c.h.b16 %v11394
  %v11635 = vunpack.c.l.b16 %v11395
  %v11636 = vunpack.c.h.b16 %v11395
  %v11637 = vunpack.c.l.b16 %v11396
  %v11638 = vunpack.c.h.b16 %v11396
  %v11639 = vunpack.c.l.b16 %v11397
  %v11640 = vunpack.c.h.b16 %v11397
  %v11641 = vunpack.c.l.b16 %v11398
  %v11642 = vunpack.c.h.b16 %v11398
  %v11643 = vunpack.c.l.b16 %v11399
  %v11644 = vunpack.c.h.b16 %v11399
  %v11645 = vunpack.c.l.b16 %v11400
  %v11646 = vunpack.c.h.b16 %v11400
  %v11647 = vunpack.c.l.b16 %v11401
  %v11648 = vunpack.c.h.b16 %v11401
  %v11649 = vunpack.c.l.b16 %v11402
  %v11650 = vunpack.c.h.b16 %v11402
  %v11651 = vunpack.c.l.b16 %v11403
  %v11652 = vunpack.c.h.b16 %v11403
  %v11653 = vunpack.c.l.b16 %v11404
  %v11654 = vunpack.c.h.b16 %v11404
  %v11655 = vunpack.c.l.b16 %v11405
  %v11656 = vunpack.c.h.b16 %v11405
  %v11657 = vunpack.c.l.b16 %v11406
  %v11658 = vunpack.c.h.b16 %v11406
  %v11659 = vunpack.c.l.b16 %v11407
  %v11660 = vunpack.c.h.b16 %v11407
  %v11661 = vunpack.c.l.b16 %v11408
  %v11662 = vunpack.c.h.b16 %v11408
  %v11663 = vunpack.c.l.b16 %v11409
  %v11664 = vunpack.c.h.b16 %v11409
  %v11665 = vunpack.c.l.b16 %v11410
  %v11666 = vunpack.c.h.b16 %v11410
  %v11667 = vunpack.c.l.b16 %v11411
  %v11668 = vunpack.c.h.b16 %v11411
  %v11669 = vunpack.c.l.b16 %v11412
  %v11670 = vunpack.c.h.b16 %v11412
  %v11671 = vunpack.c.l.b16 %v11413
  %v11672 = vunpack.c.h.b16 %v11413
  %v11673 = vunpack.c.l.b16 %v11414
  %v11674 = vunpack.c.h.b16 %v11414
  %v11675 = vunpack.c.l.b16 %v11415
  %v11676 = vunpack.c.h.b16 %v11415
  %v11677 = vunpack.c.l.b16 %v11416
  %v11678 = vunpack.c.h.b16 %v11416
  %v11679 = vunpack.c.l.b16 %v11417
  %v11680 = vunpack.c.h.b16 %v11417
  %v11681 = vunpack.c.l.b16 %v11418
  %v11682 = vunpack.c.h.b16 %v11418
  %v11683 = vunpack.c.l.b16 %v11419
  %v11684 = vunpack.c.h.b16 %v11419
  %v11685 = vunpack.c.l.b16 %v11420
  %v11686 = vunpack.c.h.b16 %v11420
  %v11687 = vunpack.c.l.b16 %v11421
  %v11688 = vunpack.c.h.b16 %v11421
  %v11689 = vunpack.c.l.b16 %v11422
  %v11690 = vunpack.c.h.b16 %v11422
  %v11691 = vunpack.c.l.b16 %v11423
  %v11692 = vunpack.c.h.b16 %v11423
  %v11693 = vunpack.c.l.b16 %v11424
  %v11694 = vunpack.c.h.b16 %v11424
  %v11695 = vunpack.c.l.b16 %v11425
  %v11696 = vunpack.c.h.b16 %v11425
  %v11697 = vunpack.c.l.b16 %v11426
  %v11698 = vunpack.c.h.b16 %v11426
  %v11699 = vunpack.c.l.b16 %v11427
  %v11700 = vunpack.c.h.b16 %v11427
  %v11701 = vunpack.c.l.b16 %v11428
  %v11702 = vunpack.c.h.b16 %v11428
  %v11703 = vunpack.c.l.b16 %v11429
  %v11704 = vunpack.c.h.b16 %v11429
  %v11705 = vunpack.c.l.b16 %v11430
  %v11706 = vunpack.c.h.b16 %v11430
  %v11707 = vunpack.c.l.b16 %v11431
  %v11708 = vunpack.c.h.b16 %v11431
  %v11709 = vunpack.c.l.b16 %v11432
  %v11710 = vunpack.c.h.b16 %v11432
  %v11711 = vunpack.c.l.b16 %v11433
  %v11712 = vunpack.c.h.b16 %v11433
  %v11713 = vunpack.c.l.b16 %v11434
  %v11714 = vunpack.c.h.b16 %v11434
  %v11715 = vunpack.c.l.b16 %v11435
  %v11716 = vunpack.c.h.b16 %v11435
  %v11717 = vunpack.c.l.b16 %v11436
  %v11718 = vunpack.c.h.b16 %v11436
  %v11719 = vunpack.c.l.b16 %v11437
  %v11720 = vunpack.c.h.b16 %v11437
  %v11721 = vunpack.c.l.b16 %v11438
  %v11722 = vunpack.c.h.b16 %v11438
  %v11723 = vunpack.c.l.b16 %v11439
  %v11724 = vunpack.c.h.b16 %v11439
  %v11725 = vunpack.c.l.b16 %v11440
  %v11726 = vunpack.c.h.b16 %v11440
  %v11727 = vunpack.c.l.b16 %v11441
  %v11728 = vunpack.c.h.b16 %v11441
  %v11729 = vunpack.c.l.b16 %v11442
  %v11730 = vunpack.c.h.b16 %v11442
  %v11731 = vunpack.c.l.b16 %v11443
  %v11732 = vunpack.c.h.b16 %v11443
  %v11733 = vunpack.c.l.b16 %v11444
  %v11734 = vunpack.c.h.b16 %v11444
  %v11735 = vunpack.c.l.b16 %v11445
  %v11736 = vunpack.c.h.b16 %v11445
  %v11737 = vunpack.c.l.b16 %v11446
  %v11738 = vunpack.c.h.b16 %v11446
  %v11739 = vunpack.c.l.b16 %v11447
  %v11740 = vunpack.c.h.b16 %v11447
  %v11741 = vunpack.c.l.b16 %v11448
  %v11742 = vunpack.c.h.b16 %v11448
  %v11743 = vunpack.c.l.b16 %v11449
  %v11744 = vunpack.c.h.b16 %v11449
  %v11745 = vunpack.c.l.b16 %v11450
  %v11746 = vunpack.c.h.b16 %v11450
  %v11747 = vunpack.c.l.b16 %v11451
  %v11748 = vunpack.c.h.b16 %v11451
  %v11749 = vunpack.c.l.b16 %v11452
  %v11750 = vunpack.c.h.b16 %v11452
  %v11751 = vunpack.c.l.b16 %v11453
  %v11752 = vunpack.c.h.b16 %v11453
  %v11753 = vunpack.c.l.b16 %v11454
  %v11754 = vunpack.c.h.b16 %v11454
  %v11755 = vunpack.c.l.b16 %v11455
  %v11756 = vunpack.c.h.b16 %v11455
  %v11757 = vunpack.c.l.b16 %v11456
  %v11758 = vunpack.c.h.b16 %v11456
  %v11759 = vunpack.c.l.b16 %v11457
  %v11760 = vunpack.c.h.b16 %v11457
  %v11761 = vunpack.c.l.b16 %v11458
  %v11762 = vunpack.c.h.b16 %v11458
  %v11763 = vunpack.c.l.b16 %v11459
  %v11764 = vunpack.c.h.b16 %v11459
  %v11765 = vunpack.c.l.b16 %v11460
  %v11766 = vunpack.c.h.b16 %v11460
  %v11767 = vunpack.c.l.b16 %v11461
  %v11768 = vunpack.c.h.b16 %v11461
  %v11769 = vunpack.c.l.b16 %v11462
  %v11770 = vunpack.c.h.b16 %v11462
  %v11771 = vunpack.c.l.b16 %v11463
  %v11772 = vunpack.c.h.b16 %v11463
  %v11773 = vunpack.c.l.b16 %v11464
  %v11774 = vunpack.c.h.b16 %v11464
  %v11775 = vunpack.c.l.b16 %v11465
  %v11776 = vunpack.c.h.b16 %v11465
  %v11777 = vunpack.c.l.b16 %v11466
  %v11778 = vunpack.c.h.b16 %v11466
  %v11779 = vunpack.c.l.b16 %v11467
  %v11780 = vunpack.c.h.b16 %v11467
  %v11781 = vunpack.c.l.b16 %v11468
  %v11782 = vunpack.c.h.b16 %v11468
  %v11783 = vunpack.c.l.b16 %v11469
  %v11784 = vunpack.c.h.b16 %v11469
  %v11785 = vunpack.c.l.b16 %v11470
  %v11786 = vunpack.c.h.b16 %v11470
  %v11787 = vunpack.c.l.b16 %v11471
  %v11788 = vunpack.c.h.b16 %v11471
  %v11789 = vunpack.c.l.b16 %v11472
  %v11790 = vunpack.c.h.b16 %v11472
  %v11791 = vunpack.c.l.b16 %v11473
  %v11792 = vunpack.c.h.b16 %v11473
  %v11793 = vunpack.c.l.b16 %v11474
  %v11794 = vunpack.c.h.b16 %v11474
  %v11795 = vunpack.c.l.b16 %v11475
  %v11796 = vunpack.c.h.b16 %v11475
  %v11797 = vunpack.c.l.b16 %v11476
  %v11798 = vunpack.c.h.b16 %v11476
  %v11799 = vunpack.c.l.b16 %v11477
  %v11800 = vunpack.c.h.b16 %v11477
  %v11801 = vunpack.c.l.b16 %v11478
  %v11802 = vunpack.c.h.b16 %v11478
  %v11803 = vpack.c.b16 %v11589, %v11587
  %v11804 = vpack.c.b16 %v11590, %v11588
  %v11805 = vpack.c.b16 %v11593, %v11591
  %v11806 = vpack.c.b16 %v11594, %v11592
  %v11807 = vpack.c.b16 %v11597, %v11595
  %v11808 = vpack.c.b16 %v11598, %v11596
  %v11809 = vpack.c.b16 %v11601, %v11599
  %v11810 = vpack.c.b16 %v11602, %v11600
  %v11811 = vpack.c.b16 %v11605, %v11603
  %v11812 = vpack.c.b16 %v11606, %v11604
  %v11813 = vpack.c.b16 %v11609, %v11607
  %v11814 = vpack.c.b16 %v11610, %v11608
  %v11815 = vpack.c.b16 %v11613, %v11611
  %v11816 = vpack.c.b16 %v11614, %v11612
  %v11817 = vpack.c.b16 %v11617, %v11615
  %v11818 = vpack.c.b16 %v11618, %v11616
  %v11819 = vpack.c.b16 %v11621, %v11619
  %v11820 = vpack.c.b16 %v11622, %v11620
  %v11821 = vpack.c.b16 %v11625, %v11623
  %v11822 = vpack.c.b16 %v11626, %v11624
  %v11823 = vpack.c.b16 %v11629, %v11627
  %v11824 = vpack.c.b16 %v11630, %v11628
  %v11825 = vpack.c.b16 %v11633, %v11631
  %v11826 = vpack.c.b16 %v11634, %v11632
  %v11827 = vpack.c.b16 %v11637, %v11635
  %v11828 = vpack.c.b16 %v11638, %v11636
  %v11829 = vpack.c.b16 %v11641, %v11639
  %v11830 = vpack.c.b16 %v11642, %v11640
  %v11831 = vpack.c.b16 %v11645, %v11643
  %v11832 = vpack.c.b16 %v11646, %v11644
  %v11833 = vpack.c.b16 %v11649, %v11647
  %v11834 = vpack.c.b16 %v11650, %v11648
  %v11835 = vpack.c.b16 %v11653, %v11651
  %v11836 = vpack.c.b16 %v11654, %v11652
  %v11837 = vpack.c.b16 %v11657, %v11655
  %v11838 = vpack.c.b16 %v11658, %v11656
  %v11839 = vpack.c.b16 %v11661, %v11659
  %v11840 = vpack.c.b16 %v11662, %v11660
  %v11841 = vpack.c.b16 %v11665, %v11663
  %v11842 = vpack.c.b16 %v11666, %v11664
  %v11843 = vpack.c.b16 %v11669, %v11667
  %v11844 = vpack.c.b16 %v11670, %v11668
  %v11845 = vpack.c.b16 %v11673, %v11671
  %v11846 = vpack.c.b16 %v11674, %v11672
  %v11847 = vpack.c.b16 %v11677, %v11675
  %v11848 = vpack.c.b16 %v11678, %v11676
  %v11849 = vpack.c.b16 %v11681, %v11679
  %v11850 = vpack.c.b16 %v11682, %v11680
  %v11851 = vpack.c.b16 %v11685, %v11683
  %v11852 = vpack.c.b16 %v11686, %v11684
  %v11853 = vpack.c.b16 %v11689, %v11687
  %v11854 = vpack.c.b16 %v11690, %v11688
  %v11855 = vpack.c.b16 %v11693, %v11691
  %v11856 = vpack.c.b16 %v11694, %v11692
  %v11857 = vpack.c.b16 %v11697, %v11695
  %v11858 = vpack.c.b16 %v11698, %v11696
  %v11859 = vpack.c.b16 %v11701, %v11699
  %v11860 = vpack.c.b16 %v11702, %v11700
  %v11861 = vpack.c.b16 %v11705, %v11703
  %v11862 = vpack.c.b16 %v11706, %v11704
  %v11863 = vpack.c.b16 %v11709, %v11707
  %v11864 = vpack.c.b16 %v11710, %v11708
  %v11865 = vpack.c.b16 %v11713, %v11711
  %v11866 = vpack.c.b16 %v11714, %v11712
  %v11867 = vpack.c.b16 %v11717, %v11715
  %v11868 = vpack.c.b16 %v11718, %v11716
  %v11869 = vpack.c.b16 %v11721, %v11719
  %v11870 = vpack.c.b16 %v11722, %v11720
  %v11871 = vpack.c.b16 %v11725, %v11723
  %v11872 = vpack.c.b16 %v11726, %v11724
  %v11873 = vpack.c.b16 %v11729, %v11727
  %v11874 = vpack.c.b16 %v11730, %v11728
  %v11875 = vpack.c.b16 %v11733, %v11731
  %v11876 = vpack.c.b16 %v11734, %v11732
  %v11877 = vpack.c.b16 %v11737, %v11735
  %v11878 = vpack.c.b16 %v11738, %v11736
  %v11879 = vpack.c.b16 %v11741, %v11739
  %v11880 = vpack.c.b16 %v11742, %v11740
  %v11881 = vpack.c.b16 %v11745, %v11743
  %v11882 = vpack.c.b16 %v11746, %v11744
  %v11883 = vpack.c.b16 %v11749, %v11747
  %v11884 = vpack.c.b16 %v11750, %v11748
  %v11885 = vpack.c.b16 %v11753, %v11751
  %v11886 = vpack.c.b16 %v11754, %v11752
  %v11887 = vpack.c.b16 %v11757, %v11755
  %v11888 = vpack.c.b16 %v11758, %v11756
  %v11889 = vpack.c.b16 %v11761, %v11759
  %v11890 = vpack.c.b16 %v11762, %v11760
  %v11891 = vpack.c.b16 %v11765, %v11763
  %v11892 = vpack.c.b16 %v11766, %v11764
  %v11893 = vpack.c.b16 %v11769, %v11767
  %v11894 = vpack.c.b16 %v11770, %v11768
  %v11895 = vpack.c.b16 %v11773, %v11771
  %v11896 = vpack.c.b16 %v11774, %v11772
  %v11897 = vpack.c.b16 %v11777, %v11775
  %v11898 = vpack.c.b16 %v11778, %v11776
  %v11899 = vpack.c.b16 %v11781, %v11779
  %v11900 = vpack.c.b16 %v11782, %v11780
  %v11901 = vpack.c.b16 %v11785, %v11783
  %v11902 = vpack.c.b16 %v11786, %v11784
  %v11903 = vpack.c.b16 %v11789, %v11787
  %v11904 = vpack.c.b16 %v11790, %v11788
  %v11905 = vpack.c.b16 %v11793, %v11791
  %v11906 = vpack.c.b16 %v11794, %v11792
  %v11907 = vpack.c.b16 %v11797, %v11795
  %v11908 = vpack.c.b16 %v11798, %v11796
  %v11909 = vpack.c.b16 %v11801, %v11799
  %v11910 = vpack.c.b16 %v11802, %v11800
  %vm12019 = vcmask 785408
  %v12021 = vsel %vm12019, %v11370, 0
  %12023 = vmatprep.subr.bf16.mxu0 %v11804
  %12024 = vmatpush1.bf16.msra.mxu0 %v11803
  %12025 = vmatprep.subr.bf16.mxu0 %v11806
  %12026 = vmatpush1.bf16.msra.mxu0 %v11805
  %12027 = vmatprep.subr.bf16.mxu0 %v11808
  %12028 = vmatpush1.bf16.msra.mxu0 %v11807
  %12029 = vmatprep.subr.bf16.mxu0 %v11810
  %12030 = vmatpush1.bf16.msra.mxu0 %v11809
  %12031 = vmatprep.subr.bf16.mxu0 %v11812
  %12032 = vmatpush1.bf16.msra.mxu0 %v11811
  %12033 = vmatprep.subr.bf16.mxu0 %v11814
  %12034 = vmatpush1.bf16.msra.mxu0 %v11813
  %12035 = vmatprep.subr.bf16.mxu0 %v11816
  %12036 = vmatpush1.bf16.msra.mxu0 %v11815
  %12037 = vmatprep.subr.bf16.mxu0 %v11818
  %12038 = vmatpush1.bf16.msra.mxu0 %v11817
  %12039 = vmatprep.subr.bf16.mxu0 %v11820
  %12040 = vmatpush1.bf16.msra.mxu0 %v11819
  %12041 = vmatprep.subr.bf16.mxu0 %v11822
  %12042 = vmatpush1.bf16.msra.mxu0 %v11821
  %12043 = vmatprep.subr.bf16.mxu0 %v11824
  %12044 = vmatpush1.bf16.msra.mxu0 %v11823
  %12045 = vmatprep.subr.bf16.mxu0 %v11826
  %12046 = vmatpush1.bf16.msra.mxu0 %v11825
  %12047 = vmatprep.subr.bf16.mxu0 %v11828
  %12048 = vmatpush1.bf16.msra.mxu0 %v11827
  %12049 = vmatprep.subr.bf16.mxu0 %v11830
  %12050 = vmatpush1.bf16.msra.mxu0 %v11829
  %12051 = vmatprep.subr.bf16.mxu0 %v11832
  %12052 = vmatpush1.bf16.msra.mxu0 %v11831
  %12053 = vmatprep.subr.bf16.mxu0 %v11834
  %12054 = vmatpush1.bf16.msra.mxu0 %v11833
  %12055 = vmatprep.mubr.bf16.mxu0 %v11365
  %12056 = vmatmul.mubr.bf16.gmra.mrb[0].mxu0 %v11364
  %v12057 = vpop.f32.mrb[0].mxu0
  %v12058 = vadd.f32 0.0, %v12057
  %v12059 = vpop.f32.mrb[0].mxu0
  %v12060 = vadd.f32 0.0, %v12059
  %v12061 = vpop.f32.mrb[0].mxu0
  %v12062 = vpop.f32.mrb[0].mxu0
  %12063 = vdwg.mxu0
  %12064 = vmatprep.subr.bf16.mxu0 %v11836
  %12065 = vmatpush1.bf16.msra.mxu0 %v11835
  %12066 = vmatprep.subr.bf16.mxu0 %v11838
  %12067 = vmatpush1.bf16.msra.mxu0 %v11837
  %12068 = vmatprep.subr.bf16.mxu0 %v11840
  %12069 = vmatpush1.bf16.msra.mxu0 %v11839
  %12070 = vmatprep.subr.bf16.mxu0 %v11842
  %12071 = vmatpush1.bf16.msra.mxu0 %v11841
  %12072 = vmatprep.subr.bf16.mxu0 %v11844
  %12073 = vmatpush1.bf16.msra.mxu0 %v11843
  %12074 = vmatprep.subr.bf16.mxu0 %v11846
  %12075 = vmatpush1.bf16.msra.mxu0 %v11845
  %12076 = vmatprep.subr.bf16.mxu0 %v11848
  %12077 = vmatpush1.bf16.msra.mxu0 %v11847
  %12078 = vmatprep.subr.bf16.mxu0 %v11850
  %12079 = vmatpush1.bf16.msra.mxu0 %v11849
  %12080 = vmatprep.subr.bf16.mxu0 %v11852
  %12081 = vmatpush1.bf16.msra.mxu0 %v11851
  %12082 = vmatprep.subr.bf16.mxu0 %v11854
  %12083 = vmatpush1.bf16.msra.mxu0 %v11853
  %12084 = vmatprep.subr.bf16.mxu0 %v11856
  %12085 = vmatpush1.bf16.msra.mxu0 %v11855
  %12086 = vmatprep.subr.bf16.mxu0 %v11858
  %12087 = vmatpush1.bf16.msra.mxu0 %v11857
  %12088 = vmatprep.subr.bf16.mxu0 %v11860
  %12089 = vmatpush1.bf16.msra.mxu0 %v11859
  %12090 = vmatprep.subr.bf16.mxu0 %v11862
  %12091 = vmatpush1.bf16.msra.mxu0 %v11861
  %12092 = vmatprep.subr.bf16.mxu0 %v11864
  %12093 = vmatpush1.bf16.msra.mxu0 %v11863
  %12094 = vmatprep.subr.bf16.mxu0 %v11866
  %12095 = vmatpush1.bf16.msra.mxu0 %v11865
  %12096 = vmatprep.mubr.bf16.mxu0 %v11367
  %12097 = vmatmul.mubr.bf16.gmra.mrb[0].mxu0 %v11366
  %v12098 = vpop.f32.mrb[0].mxu0
  %v12099 = vadd.f32 %v12058, %v12098
  %v12100 = vpop.f32.mrb[0].mxu0
  %v12101 = vadd.f32 %v12060, %v12100
  %v12102 = vpop.f32.mrb[0].mxu0
  %v12103 = vpop.f32.mrb[0].mxu0
  %12104 = vdwg.mxu0
  %12105 = vmatprep.subr.bf16.mxu0 %v11868
  %12106 = vmatpush1.bf16.msra.mxu0 %v11867
  %12107 = vmatprep.subr.bf16.mxu0 %v11870
  %12108 = vmatpush1.bf16.msra.mxu0 %v11869
  %12109 = vmatprep.subr.bf16.mxu0 %v11872
  %12110 = vmatpush1.bf16.msra.mxu0 %v11871
  %12111 = vmatprep.subr.bf16.mxu0 %v11874
  %12112 = vmatpush1.bf16.msra.mxu0 %v11873
  %12113 = vmatprep.subr.bf16.mxu0 %v11876
  %12114 = vmatpush1.bf16.msra.mxu0 %v11875
  %12115 = vmatprep.subr.bf16.mxu0 %v11878
  %12116 = vmatpush1.bf16.msra.mxu0 %v11877
  %12117 = vmatprep.subr.bf16.mxu0 %v11880
  %12118 = vmatpush1.bf16.msra.mxu0 %v11879
  %12119 = vmatprep.subr.bf16.mxu0 %v11882
  %12120 = vmatpush1.bf16.msra.mxu0 %v11881
  %12121 = vmatprep.subr.bf16.mxu0 %v11884
  %12122 = vmatpush1.bf16.msra.mxu0 %v11883
  %12123 = vmatprep.subr.bf16.mxu0 %v11886
  %12124 = vmatpush1.bf16.msra.mxu0 %v11885
  %12125 = vmatprep.subr.bf16.mxu0 %v11888
  %12126 = vmatpush1.bf16.msra.mxu0 %v11887
  %12127 = vmatprep.subr.bf16.mxu0 %v11890
  %12128 = vmatpush1.bf16.msra.mxu0 %v11889
  %12129 = vmatprep.subr.bf16.mxu0 %v11892
  %12130 = vmatpush1.bf16.msra.mxu0 %v11891
  %12131 = vmatprep.subr.bf16.mxu0 %v11894
  %12132 = vmatpush1.bf16.msra.mxu0 %v11893
  %12133 = vmatprep.subr.bf16.mxu0 %v11896
  %12134 = vmatpush1.bf16.msra.mxu0 %v11895
  %12135 = vmatprep.subr.bf16.mxu0 %v11898
  %12136 = vmatpush1.bf16.msra.mxu0 %v11897
  %12137 = vmatprep.mubr.bf16.mxu0 %v11369
  %12138 = vmatmul.mubr.bf16.gmra.mrb[0].mxu0 %v11368
  %v12139 = vpop.f32.mrb[0].mxu0
  %v12140 = vadd.f32 %v12099, %v12139
  %v12141 = vpop.f32.mrb[0].mxu0
  %v12142 = vadd.f32 %v12101, %v12141
  %v12143 = vpop.f32.mrb[0].mxu0
  %v12144 = vpop.f32.mrb[0].mxu0
  %12145 = vdwg.mxu0
  %12146 = vmatprep.subr.bf16.mxu0 %v11900
  %12147 = vmatpush1.bf16.msra.mxu0 %v11899
  %12148 = vmatprep.subr.bf16.mxu0 %v11902
  %12149 = vmatpush1.bf16.msra.mxu0 %v11901
  %12150 = vmatprep.subr.bf16.mxu0 %v11904
  %12151 = vmatpush1.bf16.msra.mxu0 %v11903
  %12152 = vmatprep.subr.bf16.mxu0 %v11906
  %12153 = vmatpush1.bf16.msra.mxu0 %v11905
  %12154 = vmatprep.subr.bf16.mxu0 %v11908
  %12155 = vmatpush1.bf16.msra.mxu0 %v11907
  %12156 = vmatprep.subr.bf16.mxu0 %v11910
  %12157 = vmatpush1.bf16.msra.mxu0 %v11909
  %12158 = vmatprep.subr.bf16.mxu0 0
  %12159 = vmatpush1.bf16.msra.mxu0 0
  %12160 = vmatprep.subr.bf16.mxu0 0
  %12161 = vmatpush1.bf16.msra.mxu0 0
  %12162 = vmatprep.subr.bf16.mxu0 0
  %12163 = vmatpush1.bf16.msra.mxu0 0
  %12164 = vmatprep.subr.bf16.mxu0 0
  %12165 = vmatpush1.bf16.msra.mxu0 0
  %12166 = vmatprep.subr.bf16.mxu0 0
  %12167 = vmatpush1.bf16.msra.mxu0 0
  %12168 = vmatprep.subr.bf16.mxu0 0
  %12169 = vmatpush1.bf16.msra.mxu0 0
  %12170 = vmatprep.subr.bf16.mxu0 0
  %12171 = vmatpush1.bf16.msra.mxu0 0
  %12172 = vmatprep.subr.bf16.mxu0 0
  %12173 = vmatpush1.bf16.msra.mxu0 0
  %12174 = vmatprep.subr.bf16.mxu0 0
  %12175 = vmatpush1.bf16.msra.mxu0 0
  %12176 = vmatprep.subr.bf16.mxu0 0
  %12177 = vmatpush1.bf16.msra.mxu0 0
  %12178 = vmatprep.mubr.bf16.mxu0 0
  %12179 = vmatmul.mubr.bf16.gmra.mrb[0].mxu0 %v12021
  %v12180 = vpop.f32.mrb[0].mxu0
  %v12181 = vadd.f32 %v12140, %v12180
  %v12182 = vpop.f32.mrb[0].mxu0
  %v12183 = vadd.f32 %v12142, %v12182
  %v12184 = vpop.f32.mrb[0].mxu0
  %v12185 = vpop.f32.mrb[0].mxu0
  %12186 = vdwg.mxu0
  %s12187 = scalar_lea.vmem %s3, 864
  %v12188 = vld [vmem:[%s12187] sm:$0xff]
  %v12189 = vld [vmem:[%s12187 + $0x8] sm:$0xff]
  %v12190 = vld [vmem:[%s12187 + $0x10] sm:$0xff]
  %v12191 = vld [vmem:[%s12187 + $0x18] sm:$0xff]
  %v12192 = vld [vmem:[%s12187 + $0x20] sm:$0xff]
  %v12193 = vld [vmem:[%s12187 + $0x28] sm:$0xff]
  %v12194 = vld [vmem:[%s12187 + $0x30] sm:$0xff]
  %v12195 = vld [vmem:[%s12187 + $0x38] sm:$0xff]
  %v12196 = vld [vmem:[%s12187 + $0x40] sm:$0xff]
  %v12197 = vld [vmem:[%s12187 + $0x48] sm:$0xff]
  %v12198 = vld [vmem:[%s12187 + $0x50] sm:$0xff]
  %v12199 = vld [vmem:[%s12187 + $0x58] sm:$0xff]
  %v12200 = vld [vmem:[%s12187 + $0x60] sm:$0xff]
  %v12201 = vld [vmem:[%s12187 + $0x68] sm:$0xff]
  %v12202 = vld [vmem:[%s12187 + $0x70] sm:$0xff]
  %v12203 = vld [vmem:[%s12187 + $0x78] sm:$0xff]
  %v12204 = vld [vmem:[%s12187 + $0x80] sm:$0xff]
  %v12205 = vld [vmem:[%s12187 + $0x88] sm:$0xff]
  %v12206 = vld [vmem:[%s12187 + $0x90] sm:$0xff]
  %v12207 = vld [vmem:[%s12187 + $0x98] sm:$0xff]
  %v12208 = vld [vmem:[%s12187 + $0xa0] sm:$0xff]
  %v12209 = vld [vmem:[%s12187 + $0xa8] sm:$0xff]
  %v12210 = vld [vmem:[%s12187 + $0xb0] sm:$0xff]
  %v12211 = vld [vmem:[%s12187 + $0xb8] sm:$0xff]
  %v12212 = vld [vmem:[%s12187 + $0xc0] sm:$0xff]
  %v12213 = vld [vmem:[%s12187 + $0xc8] sm:$0xff]
  %v12214 = vld [vmem:[%s12187 + $0xd0] sm:$0xff]
  %v12215 = vld [vmem:[%s12187 + $0xd8] sm:$0xff]
  %v12216 = vld [vmem:[%s12187 + $0xe0] sm:$0xff]
  %v12217 = vld [vmem:[%s12187 + $0xe8] sm:$0xff]
  %v12218 = vld [vmem:[%s12187 + $0xf0] sm:$0xff]
  %v12219 = vld [vmem:[%s12187 + $0xf8] sm:$0xff]
  %v12220 = vld [vmem:[%s12187 + $0x100] sm:$0xff]
  %v12221 = vld [vmem:[%s12187 + $0x108] sm:$0xff]
  %v12222 = vld [vmem:[%s12187 + $0x110] sm:$0xff]
  %v12223 = vld [vmem:[%s12187 + $0x118] sm:$0xff]
  %v12224 = vld [vmem:[%s12187 + $0x120] sm:$0xff]
  %v12225 = vld [vmem:[%s12187 + $0x128] sm:$0xff]
  %v12226 = vld [vmem:[%s12187 + $0x130] sm:$0xff]
  %v12227 = vld [vmem:[%s12187 + $0x138] sm:$0xff]
  %v12228 = vld [vmem:[%s12187 + $0x140] sm:$0xff]
  %v12229 = vld [vmem:[%s12187 + $0x148] sm:$0xff]
  %v12230 = vld [vmem:[%s12187 + $0x150] sm:$0xff]
  %v12231 = vld [vmem:[%s12187 + $0x158] sm:$0xff]
  %v12232 = vld [vmem:[%s12187 + $0x160] sm:$0xff]
  %v12233 = vld [vmem:[%s12187 + $0x168] sm:$0xff]
  %v12234 = vld [vmem:[%s12187 + $0x170] sm:$0xff]
  %v12235 = vld [vmem:[%s12187 + $0x178] sm:$0xff]
  %v12236 = vld [vmem:[%s12187 + $0x180] sm:$0xff]
  %v12237 = vld [vmem:[%s12187 + $0x188] sm:$0xff]
  %v12238 = vld [vmem:[%s12187 + $0x190] sm:$0xff]
  %v12239 = vld [vmem:[%s12187 + $0x198] sm:$0xff]
  %v12240 = vld [vmem:[%s12187 + $0x1a0] sm:$0xff]
  %v12241 = vld [vmem:[%s12187 + $0x1a8] sm:$0xff]
  %v12242 = vld [vmem:[%s12187 + $0x1b0] sm:$0xff]
  %v12243 = vld [vmem:[%s12187 + $0x1b8] sm:$0xff]
  %v12244 = vld [vmem:[%s12187 + $0x1c0] sm:$0xff]
  %v12245 = vld [vmem:[%s12187 + $0x1c8] sm:$0xff]
  %v12246 = vld [vmem:[%s12187 + $0x1d0] sm:$0xff]
  %v12247 = vld [vmem:[%s12187 + $0x1d8] sm:$0xff]
  %v12248 = vld [vmem:[%s12187 + $0x1e0] sm:$0xff]
  %v12249 = vld [vmem:[%s12187 + $0x1e8] sm:$0xff]
  %v12250 = vld [vmem:[%s12187 + $0x1f0] sm:$0xff]
  %v12251 = vld [vmem:[%s12187 + $0x1f8] sm:$0xff]
  %v12252 = vld [vmem:[%s12187 + $0x200] sm:$0xff]
  %v12253 = vld [vmem:[%s12187 + $0x208] sm:$0xff]
  %v12254 = vld [vmem:[%s12187 + $0x210] sm:$0xff]
  %v12255 = vld [vmem:[%s12187 + $0x218] sm:$0xff]
  %v12256 = vld [vmem:[%s12187 + $0x220] sm:$0xff]
  %v12257 = vld [vmem:[%s12187 + $0x228] sm:$0xff]
  %v12258 = vld [vmem:[%s12187 + $0x230] sm:$0xff]
  %v12259 = vld [vmem:[%s12187 + $0x238] sm:$0xff]
  %v12260 = vld [vmem:[%s12187 + $0x240] sm:$0xff]
  %v12261 = vld [vmem:[%s12187 + $0x248] sm:$0xff]
  %v12262 = vld [vmem:[%s12187 + $0x250] sm:$0xff]
  %v12263 = vld [vmem:[%s12187 + $0x258] sm:$0xff]
  %v12264 = vld [vmem:[%s12187 + $0x260] sm:$0xff]
  %v12265 = vld [vmem:[%s12187 + $0x268] sm:$0xff]
  %v12266 = vld [vmem:[%s12187 + $0x270] sm:$0xff]
  %v12267 = vld [vmem:[%s12187 + $0x278] sm:$0xff]
  %v12268 = vld [vmem:[%s12187 + $0x280] sm:$0xff]
  %v12269 = vld [vmem:[%s12187 + $0x288] sm:$0xff]
  %v12270 = vld [vmem:[%s12187 + $0x290] sm:$0xff]
  %v12271 = vld [vmem:[%s12187 + $0x298] sm:$0xff]
  %v12272 = vld [vmem:[%s12187 + $0x2a0] sm:$0xff]
  %v12273 = vld [vmem:[%s12187 + $0x2a8] sm:$0xff]
  %v12274 = vld [vmem:[%s12187 + $0x2b0] sm:$0xff]
  %v12275 = vld [vmem:[%s12187 + $0x2b8] sm:$0xff]
  %v12276 = vld [vmem:[%s12187 + $0x2c0] sm:$0xff]
  %v12277 = vld [vmem:[%s12187 + $0x2c8] sm:$0xff]
  %v12278 = vld [vmem:[%s12187 + $0x2d0] sm:$0xff]
  %v12279 = vld [vmem:[%s12187 + $0x2d8] sm:$0xff]
  %v12280 = vld [vmem:[%s12187 + $0x2e0] sm:$0xff]
  %v12281 = vld [vmem:[%s12187 + $0x2e8] sm:$0xff]
  %v12282 = vld [vmem:[%s12187 + $0x2f0] sm:$0xff]
  %v12283 = vld [vmem:[%s12187 + $0x2f8] sm:$0xff]
  %v12284 = vld [vmem:[%s12187 + $0x300] sm:$0xff]
  %v12285 = vld [vmem:[%s12187 + $0x308] sm:$0xff]
  %v12286 = vld [vmem:[%s12187 + $0x310] sm:$0xff]
  %v12287 = vld [vmem:[%s12187 + $0x318] sm:$0xff]
  %v12288 = vld [vmem:[%s12187 + $0x320] sm:$0xff]
  %v12289 = vld [vmem:[%s12187 + $0x328] sm:$0xff]
  %v12290 = vld [vmem:[%s12187 + $0x330] sm:$0xff]
  %v12291 = vld [vmem:[%s12187 + $0x338] sm:$0xff]
  %v12292 = vld [vmem:[%s12187 + $0x340] sm:$0xff]
  %v12293 = vld [vmem:[%s12187 + $0x348] sm:$0xff]
  %v12294 = vld [vmem:[%s12187 + $0x350] sm:$0xff]
  %v12295 = vld [vmem:[%s12187 + $0x358] sm:$0xff]
  %v12404 = vunpack.c.l.b16 %v12188
  %v12405 = vunpack.c.h.b16 %v12188
  %v12406 = vunpack.c.l.b16 %v12189
  %v12407 = vunpack.c.h.b16 %v12189
  %v12408 = vunpack.c.l.b16 %v12190
  %v12409 = vunpack.c.h.b16 %v12190
  %v12410 = vunpack.c.l.b16 %v12191
  %v12411 = vunpack.c.h.b16 %v12191
  %v12412 = vunpack.c.l.b16 %v12192
  %v12413 = vunpack.c.h.b16 %v12192
  %v12414 = vunpack.c.l.b16 %v12193
  %v12415 = vunpack.c.h.b16 %v12193
  %v12416 = vunpack.c.l.b16 %v12194
  %v12417 = vunpack.c.h.b16 %v12194
  %v12418 = vunpack.c.l.b16 %v12195
  %v12419 = vunpack.c.h.b16 %v12195
  %v12420 = vunpack.c.l.b16 %v12196
  %v12421 = vunpack.c.h.b16 %v12196
  %v12422 = vunpack.c.l.b16 %v12197
  %v12423 = vunpack.c.h.b16 %v12197
  %v12424 = vunpack.c.l.b16 %v12198
  %v12425 = vunpack.c.h.b16 %v12198
  %v12426 = vunpack.c.l.b16 %v12199
  %v12427 = vunpack.c.h.b16 %v12199
  %v12428 = vunpack.c.l.b16 %v12200
  %v12429 = vunpack.c.h.b16 %v12200
  %v12430 = vunpack.c.l.b16 %v12201
  %v12431 = vunpack.c.h.b16 %v12201
  %v12432 = vunpack.c.l.b16 %v12202
  %v12433 = vunpack.c.h.b16 %v12202
  %v12434 = vunpack.c.l.b16 %v12203
  %v12435 = vunpack.c.h.b16 %v12203
  %v12436 = vunpack.c.l.b16 %v12204
  %v12437 = vunpack.c.h.b16 %v12204
  %v12438 = vunpack.c.l.b16 %v12205
  %v12439 = vunpack.c.h.b16 %v12205
  %v12440 = vunpack.c.l.b16 %v12206
  %v12441 = vunpack.c.h.b16 %v12206
  %v12442 = vunpack.c.l.b16 %v12207
  %v12443 = vunpack.c.h.b16 %v12207
  %v12444 = vunpack.c.l.b16 %v12208
  %v12445 = vunpack.c.h.b16 %v12208
  %v12446 = vunpack.c.l.b16 %v12209
  %v12447 = vunpack.c.h.b16 %v12209
  %v12448 = vunpack.c.l.b16 %v12210
  %v12449 = vunpack.c.h.b16 %v12210
  %v12450 = vunpack.c.l.b16 %v12211
  %v12451 = vunpack.c.h.b16 %v12211
  %v12452 = vunpack.c.l.b16 %v12212
  %v12453 = vunpack.c.h.b16 %v12212
  %v12454 = vunpack.c.l.b16 %v12213
  %v12455 = vunpack.c.h.b16 %v12213
  %v12456 = vunpack.c.l.b16 %v12214
  %v12457 = vunpack.c.h.b16 %v12214
  %v12458 = vunpack.c.l.b16 %v12215
  %v12459 = vunpack.c.h.b16 %v12215
  %v12460 = vunpack.c.l.b16 %v12216
  %v12461 = vunpack.c.h.b16 %v12216
  %v12462 = vunpack.c.l.b16 %v12217
  %v12463 = vunpack.c.h.b16 %v12217
  %v12464 = vunpack.c.l.b16 %v12218
  %v12465 = vunpack.c.h.b16 %v12218
  %v12466 = vunpack.c.l.b16 %v12219
  %v12467 = vunpack.c.h.b16 %v12219
  %v12468 = vunpack.c.l.b16 %v12220
  %v12469 = vunpack.c.h.b16 %v12220
  %v12470 = vunpack.c.l.b16 %v12221
  %v12471 = vunpack.c.h.b16 %v12221
  %v12472 = vunpack.c.l.b16 %v12222
  %v12473 = vunpack.c.h.b16 %v12222
  %v12474 = vunpack.c.l.b16 %v12223
  %v12475 = vunpack.c.h.b16 %v12223
  %v12476 = vunpack.c.l.b16 %v12224
  %v12477 = vunpack.c.h.b16 %v12224
  %v12478 = vunpack.c.l.b16 %v12225
  %v12479 = vunpack.c.h.b16 %v12225
  %v12480 = vunpack.c.l.b16 %v12226
  %v12481 = vunpack.c.h.b16 %v12226
  %v12482 = vunpack.c.l.b16 %v12227
  %v12483 = vunpack.c.h.b16 %v12227
  %v12484 = vunpack.c.l.b16 %v12228
  %v12485 = vunpack.c.h.b16 %v12228
  %v12486 = vunpack.c.l.b16 %v12229
  %v12487 = vunpack.c.h.b16 %v12229
  %v12488 = vunpack.c.l.b16 %v12230
  %v12489 = vunpack.c.h.b16 %v12230
  %v12490 = vunpack.c.l.b16 %v12231
  %v12491 = vunpack.c.h.b16 %v12231
  %v12492 = vunpack.c.l.b16 %v12232
  %v12493 = vunpack.c.h.b16 %v12232
  %v12494 = vunpack.c.l.b16 %v12233
  %v12495 = vunpack.c.h.b16 %v12233
  %v12496 = vunpack.c.l.b16 %v12234
  %v12497 = vunpack.c.h.b16 %v12234
  %v12498 = vunpack.c.l.b16 %v12235
  %v12499 = vunpack.c.h.b16 %v12235
  %v12500 = vunpack.c.l.b16 %v12236
  %v12501 = vunpack.c.h.b16 %v12236
  %v12502 = vunpack.c.l.b16 %v12237
  %v12503 = vunpack.c.h.b16 %v12237
  %v12504 = vunpack.c.l.b16 %v12238
  %v12505 = vunpack.c.h.b16 %v12238
  %v12506 = vunpack.c.l.b16 %v12239
  %v12507 = vunpack.c.h.b16 %v12239
  %v12508 = vunpack.c.l.b16 %v12240
  %v12509 = vunpack.c.h.b16 %v12240
  %v12510 = vunpack.c.l.b16 %v12241
  %v12511 = vunpack.c.h.b16 %v12241
  %v12512 = vunpack.c.l.b16 %v12242
  %v12513 = vunpack.c.h.b16 %v12242
  %v12514 = vunpack.c.l.b16 %v12243
  %v12515 = vunpack.c.h.b16 %v12243
  %v12516 = vunpack.c.l.b16 %v12244
  %v12517 = vunpack.c.h.b16 %v12244
  %v12518 = vunpack.c.l.b16 %v12245
  %v12519 = vunpack.c.h.b16 %v12245
  %v12520 = vunpack.c.l.b16 %v12246
  %v12521 = vunpack.c.h.b16 %v12246
  %v12522 = vunpack.c.l.b16 %v12247
  %v12523 = vunpack.c.h.b16 %v12247
  %v12524 = vunpack.c.l.b16 %v12248
  %v12525 = vunpack.c.h.b16 %v12248
  %v12526 = vunpack.c.l.b16 %v12249
  %v12527 = vunpack.c.h.b16 %v12249
  %v12528 = vunpack.c.l.b16 %v12250
  %v12529 = vunpack.c.h.b16 %v12250
  %v12530 = vunpack.c.l.b16 %v12251
  %v12531 = vunpack.c.h.b16 %v12251
  %v12532 = vunpack.c.l.b16 %v12252
  %v12533 = vunpack.c.h.b16 %v12252
  %v12534 = vunpack.c.l.b16 %v12253
  %v12535 = vunpack.c.h.b16 %v12253
  %v12536 = vunpack.c.l.b16 %v12254
  %v12537 = vunpack.c.h.b16 %v12254
  %v12538 = vunpack.c.l.b16 %v12255
  %v12539 = vunpack.c.h.b16 %v12255
  %v12540 = vunpack.c.l.b16 %v12256
  %v12541 = vunpack.c.h.b16 %v12256
  %v12542 = vunpack.c.l.b16 %v12257
  %v12543 = vunpack.c.h.b16 %v12257
  %v12544 = vunpack.c.l.b16 %v12258
  %v12545 = vunpack.c.h.b16 %v12258
  %v12546 = vunpack.c.l.b16 %v12259
  %v12547 = vunpack.c.h.b16 %v12259
  %v12548 = vunpack.c.l.b16 %v12260
  %v12549 = vunpack.c.h.b16 %v12260
  %v12550 = vunpack.c.l.b16 %v12261
  %v12551 = vunpack.c.h.b16 %v12261
  %v12552 = vunpack.c.l.b16 %v12262
  %v12553 = vunpack.c.h.b16 %v12262
  %v12554 = vunpack.c.l.b16 %v12263
  %v12555 = vunpack.c.h.b16 %v12263
  %v12556 = vunpack.c.l.b16 %v12264
  %v12557 = vunpack.c.h.b16 %v12264
  %v12558 = vunpack.c.l.b16 %v12265
  %v12559 = vunpack.c.h.b16 %v12265
  %v12560 = vunpack.c.l.b16 %v12266
  %v12561 = vunpack.c.h.b16 %v12266
  %v12562 = vunpack.c.l.b16 %v12267
  %v12563 = vunpack.c.h.b16 %v12267
  %v12564 = vunpack.c.l.b16 %v12268
  %v12565 = vunpack.c.h.b16 %v12268
  %v12566 = vunpack.c.l.b16 %v12269
  %v12567 = vunpack.c.h.b16 %v12269
  %v12568 = vunpack.c.l.b16 %v12270
  %v12569 = vunpack.c.h.b16 %v12270
  %v12570 = vunpack.c.l.b16 %v12271
  %v12571 = vunpack.c.h.b16 %v12271
  %v12572 = vunpack.c.l.b16 %v12272
  %v12573 = vunpack.c.h.b16 %v12272
  %v12574 = vunpack.c.l.b16 %v12273
  %v12575 = vunpack.c.h.b16 %v12273
  %v12576 = vunpack.c.l.b16 %v12274
  %v12577 = vunpack.c.h.b16 %v12274
  %v12578 = vunpack.c.l.b16 %v12275
  %v12579 = vunpack.c.h.b16 %v12275
  %v12580 = vunpack.c.l.b16 %v12276
  %v12581 = vunpack.c.h.b16 %v12276
  %v12582 = vunpack.c.l.b16 %v12277
  %v12583 = vunpack.c.h.b16 %v12277
  %v12584 = vunpack.c.l.b16 %v12278
  %v12585 = vunpack.c.h.b16 %v12278
  %v12586 = vunpack.c.l.b16 %v12279
  %v12587 = vunpack.c.h.b16 %v12279
  %v12588 = vunpack.c.l.b16 %v12280
  %v12589 = vunpack.c.h.b16 %v12280
  %v12590 = vunpack.c.l.b16 %v12281
  %v12591 = vunpack.c.h.b16 %v12281
  %v12592 = vunpack.c.l.b16 %v12282
  %v12593 = vunpack.c.h.b16 %v12282
  %v12594 = vunpack.c.l.b16 %v12283
  %v12595 = vunpack.c.h.b16 %v12283
  %v12596 = vunpack.c.l.b16 %v12284
  %v12597 = vunpack.c.h.b16 %v12284
  %v12598 = vunpack.c.l.b16 %v12285
  %v12599 = vunpack.c.h.b16 %v12285
  %v12600 = vunpack.c.l.b16 %v12286
  %v12601 = vunpack.c.h.b16 %v12286
  %v12602 = vunpack.c.l.b16 %v12287
  %v12603 = vunpack.c.h.b16 %v12287
  %v12604 = vunpack.c.l.b16 %v12288
  %v12605 = vunpack.c.h.b16 %v12288
  %v12606 = vunpack.c.l.b16 %v12289
  %v12607 = vunpack.c.h.b16 %v12289
  %v12608 = vunpack.c.l.b16 %v12290
  %v12609 = vunpack.c.h.b16 %v12290
  %v12610 = vunpack.c.l.b16 %v12291
  %v12611 = vunpack.c.h.b16 %v12291
  %v12612 = vunpack.c.l.b16 %v12292
  %v12613 = vunpack.c.h.b16 %v12292
  %v12614 = vunpack.c.l.b16 %v12293
  %v12615 = vunpack.c.h.b16 %v12293
  %v12616 = vunpack.c.l.b16 %v12294
  %v12617 = vunpack.c.h.b16 %v12294
  %v12618 = vunpack.c.l.b16 %v12295
  %v12619 = vunpack.c.h.b16 %v12295
  %v12620 = vpack.c.b16 %v12406, %v12404
  %v12621 = vpack.c.b16 %v12407, %v12405
  %v12622 = vpack.c.b16 %v12410, %v12408
  %v12623 = vpack.c.b16 %v12411, %v12409
  %v12624 = vpack.c.b16 %v12414, %v12412
  %v12625 = vpack.c.b16 %v12415, %v12413
  %v12626 = vpack.c.b16 %v12418, %v12416
  %v12627 = vpack.c.b16 %v12419, %v12417
  %v12628 = vpack.c.b16 %v12422, %v12420
  %v12629 = vpack.c.b16 %v12423, %v12421
  %v12630 = vpack.c.b16 %v12426, %v12424
  %v12631 = vpack.c.b16 %v12427, %v12425
  %v12632 = vpack.c.b16 %v12430, %v12428
  %v12633 = vpack.c.b16 %v12431, %v12429
  %v12634 = vpack.c.b16 %v12434, %v12432
  %v12635 = vpack.c.b16 %v12435, %v12433
  %v12636 = vpack.c.b16 %v12438, %v12436
  %v12637 = vpack.c.b16 %v12439, %v12437
  %v12638 = vpack.c.b16 %v12442, %v12440
  %v12639 = vpack.c.b16 %v12443, %v12441
  %v12640 = vpack.c.b16 %v12446, %v12444
  %v12641 = vpack.c.b16 %v12447, %v12445
  %v12642 = vpack.c.b16 %v12450, %v12448
  %v12643 = vpack.c.b16 %v12451, %v12449
  %v12644 = vpack.c.b16 %v12454, %v12452
  %v12645 = vpack.c.b16 %v12455, %v12453
  %v12646 = vpack.c.b16 %v12458, %v12456
  %v12647 = vpack.c.b16 %v12459, %v12457
  %v12648 = vpack.c.b16 %v12462, %v12460
  %v12649 = vpack.c.b16 %v12463, %v12461
  %v12650 = vpack.c.b16 %v12466, %v12464
  %v12651 = vpack.c.b16 %v12467, %v12465
  %v12652 = vpack.c.b16 %v12470, %v12468
  %v12653 = vpack.c.b16 %v12471, %v12469
  %v12654 = vpack.c.b16 %v12474, %v12472
  %v12655 = vpack.c.b16 %v12475, %v12473
  %v12656 = vpack.c.b16 %v12478, %v12476
  %v12657 = vpack.c.b16 %v12479, %v12477
  %v12658 = vpack.c.b16 %v12482, %v12480
  %v12659 = vpack.c.b16 %v12483, %v12481
  %v12660 = vpack.c.b16 %v12486, %v12484
  %v12661 = vpack.c.b16 %v12487, %v12485
  %v12662 = vpack.c.b16 %v12490, %v12488
  %v12663 = vpack.c.b16 %v12491, %v12489
  %v12664 = vpack.c.b16 %v12494, %v12492
  %v12665 = vpack.c.b16 %v12495, %v12493
  %v12666 = vpack.c.b16 %v12498, %v12496
  %v12667 = vpack.c.b16 %v12499, %v12497
  %v12668 = vpack.c.b16 %v12502, %v12500
  %v12669 = vpack.c.b16 %v12503, %v12501
  %v12670 = vpack.c.b16 %v12506, %v12504
  %v12671 = vpack.c.b16 %v12507, %v12505
  %v12672 = vpack.c.b16 %v12510, %v12508
  %v12673 = vpack.c.b16 %v12511, %v12509
  %v12674 = vpack.c.b16 %v12514, %v12512
  %v12675 = vpack.c.b16 %v12515, %v12513
  %v12676 = vpack.c.b16 %v12518, %v12516
  %v12677 = vpack.c.b16 %v12519, %v12517
  %v12678 = vpack.c.b16 %v12522, %v12520
  %v12679 = vpack.c.b16 %v12523, %v12521
  %v12680 = vpack.c.b16 %v12526, %v12524
  %v12681 = vpack.c.b16 %v12527, %v12525
  %v12682 = vpack.c.b16 %v12530, %v12528
  %v12683 = vpack.c.b16 %v12531, %v12529
  %v12684 = vpack.c.b16 %v12534, %v12532
  %v12685 = vpack.c.b16 %v12535, %v12533
  %v12686 = vpack.c.b16 %v12538, %v12536
  %v12687 = vpack.c.b16 %v12539, %v12537
  %v12688 = vpack.c.b16 %v12542, %v12540
  %v12689 = vpack.c.b16 %v12543, %v12541
  %v12690 = vpack.c.b16 %v12546, %v12544
  %v12691 = vpack.c.b16 %v12547, %v12545
  %v12692 = vpack.c.b16 %v12550, %v12548
  %v12693 = vpack.c.b16 %v12551, %v12549
  %v12694 = vpack.c.b16 %v12554, %v12552
  %v12695 = vpack.c.b16 %v12555, %v12553
  %v12696 = vpack.c.b16 %v12558, %v12556
  %v12697 = vpack.c.b16 %v12559, %v12557
  %v12698 = vpack.c.b16 %v12562, %v12560
  %v12699 = vpack.c.b16 %v12563, %v12561
  %v12700 = vpack.c.b16 %v12566, %v12564
  %v12701 = vpack.c.b16 %v12567, %v12565
  %v12702 = vpack.c.b16 %v12570, %v12568
  %v12703 = vpack.c.b16 %v12571, %v12569
  %v12704 = vpack.c.b16 %v12574, %v12572
  %v12705 = vpack.c.b16 %v12575, %v12573
  %v12706 = vpack.c.b16 %v12578, %v12576
  %v12707 = vpack.c.b16 %v12579, %v12577
  %v12708 = vpack.c.b16 %v12582, %v12580
  %v12709 = vpack.c.b16 %v12583, %v12581
  %v12710 = vpack.c.b16 %v12586, %v12584
  %v12711 = vpack.c.b16 %v12587, %v12585
  %v12712 = vpack.c.b16 %v12590, %v12588
  %v12713 = vpack.c.b16 %v12591, %v12589
  %v12714 = vpack.c.b16 %v12594, %v12592
  %v12715 = vpack.c.b16 %v12595, %v12593
  %v12716 = vpack.c.b16 %v12598, %v12596
  %v12717 = vpack.c.b16 %v12599, %v12597
  %v12718 = vpack.c.b16 %v12602, %v12600
  %v12719 = vpack.c.b16 %v12603, %v12601
  %v12720 = vpack.c.b16 %v12606, %v12604
  %v12721 = vpack.c.b16 %v12607, %v12605
  %v12722 = vpack.c.b16 %v12610, %v12608
  %v12723 = vpack.c.b16 %v12611, %v12609
  %v12724 = vpack.c.b16 %v12614, %v12612
  %v12725 = vpack.c.b16 %v12615, %v12613
  %v12726 = vpack.c.b16 %v12618, %v12616
  %v12727 = vpack.c.b16 %v12619, %v12617
  %12836 = vmatprep.subr.bf16.mxu0 %v12621
  %12837 = vmatpush1.bf16.msra.mxu0 %v12620
  %12838 = vmatprep.subr.bf16.mxu0 %v12623
  %12839 = vmatpush1.bf16.msra.mxu0 %v12622
  %12840 = vmatprep.subr.bf16.mxu0 %v12625
  %12841 = vmatpush1.bf16.msra.mxu0 %v12624
  %12842 = vmatprep.subr.bf16.mxu0 %v12627
  %12843 = vmatpush1.bf16.msra.mxu0 %v12626
  %12844 = vmatprep.subr.bf16.mxu0 %v12629
  %12845 = vmatpush1.bf16.msra.mxu0 %v12628
  %12846 = vmatprep.subr.bf16.mxu0 %v12631
  %12847 = vmatpush1.bf16.msra.mxu0 %v12630
  %12848 = vmatprep.subr.bf16.mxu0 %v12633
  %12849 = vmatpush1.bf16.msra.mxu0 %v12632
  %12850 = vmatprep.subr.bf16.mxu0 %v12635
  %12851 = vmatpush1.bf16.msra.mxu0 %v12634
  %12852 = vmatprep.subr.bf16.mxu0 %v12637
  %12853 = vmatpush1.bf16.msra.mxu0 %v12636
  %12854 = vmatprep.subr.bf16.mxu0 %v12639
  %12855 = vmatpush1.bf16.msra.mxu0 %v12638
  %12856 = vmatprep.subr.bf16.mxu0 %v12641
  %12857 = vmatpush1.bf16.msra.mxu0 %v12640
  %12858 = vmatprep.subr.bf16.mxu0 %v12643
  %12859 = vmatpush1.bf16.msra.mxu0 %v12642
  %12860 = vmatprep.subr.bf16.mxu0 %v12645
  %12861 = vmatpush1.bf16.msra.mxu0 %v12644
  %12862 = vmatprep.subr.bf16.mxu0 %v12647
  %12863 = vmatpush1.bf16.msra.mxu0 %v12646
  %12864 = vmatprep.subr.bf16.mxu0 %v12649
  %12865 = vmatpush1.bf16.msra.mxu0 %v12648
  %12866 = vmatprep.subr.bf16.mxu0 %v12651
  %12867 = vmatpush1.bf16.msra.mxu0 %v12650
  %12868 = vmatprep.mubr.bf16.mxu0 %v11365
  %12869 = vmatmul.mubr.bf16.gmra.mrb[0].mxu0 %v11364
  %v12870 = vpop.f32.mrb[0].mxu0
  %v12871 = vadd.f32 0.0, %v12870
  %v12872 = vpop.f32.mrb[0].mxu0
  %v12873 = vadd.f32 0.0, %v12872
  %v12874 = vpop.f32.mrb[0].mxu0
  %v12875 = vpop.f32.mrb[0].mxu0
  %12876 = vdwg.mxu0
  %12877 = vmatprep.subr.bf16.mxu0 %v12653
  %12878 = vmatpush1.bf16.msra.mxu0 %v12652
  %12879 = vmatprep.subr.bf16.mxu0 %v12655
  %12880 = vmatpush1.bf16.msra.mxu0 %v12654
  %12881 = vmatprep.subr.bf16.mxu0 %v12657
  %12882 = vmatpush1.bf16.msra.mxu0 %v12656
  %12883 = vmatprep.subr.bf16.mxu0 %v12659
  %12884 = vmatpush1.bf16.msra.mxu0 %v12658
  %12885 = vmatprep.subr.bf16.mxu0 %v12661
  %12886 = vmatpush1.bf16.msra.mxu0 %v12660
  %12887 = vmatprep.subr.bf16.mxu0 %v12663
  %12888 = vmatpush1.bf16.msra.mxu0 %v12662
  %12889 = vmatprep.subr.bf16.mxu0 %v12665
  %12890 = vmatpush1.bf16.msra.mxu0 %v12664
  %12891 = vmatprep.subr.bf16.mxu0 %v12667
  %12892 = vmatpush1.bf16.msra.mxu0 %v12666
  %12893 = vmatprep.subr.bf16.mxu0 %v12669
  %12894 = vmatpush1.bf16.msra.mxu0 %v12668
  %12895 = vmatprep.subr.bf16.mxu0 %v12671
  %12896 = vmatpush1.bf16.msra.mxu0 %v12670
  %12897 = vmatprep.subr.bf16.mxu0 %v12673
  %12898 = vmatpush1.bf16.msra.mxu0 %v12672
  %12899 = vmatprep.subr.bf16.mxu0 %v12675
  %12900 = vmatpush1.bf16.msra.mxu0 %v12674
  %12901 = vmatprep.subr.bf16.mxu0 %v12677
  %12902 = vmatpush1.bf16.msra.mxu0 %v12676
  %12903 = vmatprep.subr.bf16.mxu0 %v12679
  %12904 = vmatpush1.bf16.msra.mxu0 %v12678
  %12905 = vmatprep.subr.bf16.mxu0 %v12681
  %12906 = vmatpush1.bf16.msra.mxu0 %v12680
  %12907 = vmatprep.subr.bf16.mxu0 %v12683
  %12908 = vmatpush1.bf16.msra.mxu0 %v12682
  %12909 = vmatprep.mubr.bf16.mxu0 %v11367
  %12910 = vmatmul.mubr.bf16.gmra.mrb[0].mxu0 %v11366
  %v12911 = vpop.f32.mrb[0].mxu0
  %v12912 = vadd.f32 %v12871, %v12911
  %v12913 = vpop.f32.mrb[0].mxu0
  %v12914 = vadd.f32 %v12873, %v12913
  %v12915 = vpop.f32.mrb[0].mxu0
  %v12916 = vpop.f32.mrb[0].mxu0
  %12917 = vdwg.mxu0
  %12918 = vmatprep.subr.bf16.mxu0 %v12685
  %12919 = vmatpush1.bf16.msra.mxu0 %v12684
  %12920 = vmatprep.subr.bf16.mxu0 %v12687
  %12921 = vmatpush1.bf16.msra.mxu0 %v12686
  %12922 = vmatprep.subr.bf16.mxu0 %v12689
  %12923 = vmatpush1.bf16.msra.mxu0 %v12688
  %12924 = vmatprep.subr.bf16.mxu0 %v12691
  %12925 = vmatpush1.bf16.msra.mxu0 %v12690
  %12926 = vmatprep.subr.bf16.mxu0 %v12693
  %12927 = vmatpush1.bf16.msra.mxu0 %v12692
  %12928 = vmatprep.subr.bf16.mxu0 %v12695
  %12929 = vmatpush1.bf16.msra.mxu0 %v12694
  %12930 = vmatprep.subr.bf16.mxu0 %v12697
  %12931 = vmatpush1.bf16.msra.mxu0 %v12696
  %12932 = vmatprep.subr.bf16.mxu0 %v12699
  %12933 = vmatpush1.bf16.msra.mxu0 %v12698
  %12934 = vmatprep.subr.bf16.mxu0 %v12701
  %12935 = vmatpush1.bf16.msra.mxu0 %v12700
  %12936 = vmatprep.subr.bf16.mxu0 %v12703
  %12937 = vmatpush1.bf16.msra.mxu0 %v12702
  %12938 = vmatprep.subr.bf16.mxu0 %v12705
  %12939 = vmatpush1.bf16.msra.mxu0 %v12704
  %12940 = vmatprep.subr.bf16.mxu0 %v12707
  %12941 = vmatpush1.bf16.msra.mxu0 %v12706
  %12942 = vmatprep.subr.bf16.mxu0 %v12709
  %12943 = vmatpush1.bf16.msra.mxu0 %v12708
  %12944 = vmatprep.subr.bf16.mxu0 %v12711
  %12945 = vmatpush1.bf16.msra.mxu0 %v12710
  %12946 = vmatprep.subr.bf16.mxu0 %v12713
  %12947 = vmatpush1.bf16.msra.mxu0 %v12712
  %12948 = vmatprep.subr.bf16.mxu0 %v12715
  %12949 = vmatpush1.bf16.msra.mxu0 %v12714
  %12950 = vmatprep.mubr.bf16.mxu0 %v11369
  %12951 = vmatmul.mubr.bf16.gmra.mrb[0].mxu0 %v11368
  %v12952 = vpop.f32.mrb[0].mxu0
  %v12953 = vadd.f32 %v12912, %v12952
  %v12954 = vpop.f32.mrb[0].mxu0
  %v12955 = vadd.f32 %v12914, %v12954
  %v12956 = vpop.f32.mrb[0].mxu0
  %v12957 = vpop.f32.mrb[0].mxu0
  %12958 = vdwg.mxu0
  %12959 = vmatprep.subr.bf16.mxu0 %v12717
  %12960 = vmatpush1.bf16.msra.mxu0 %v12716
  %12961 = vmatprep.subr.bf16.mxu0 %v12719
  %12962 = vmatpush1.bf16.msra.mxu0 %v12718
  %12963 = vmatprep.subr.bf16.mxu0 %v12721
  %12964 = vmatpush1.bf16.msra.mxu0 %v12720
  %12965 = vmatprep.subr.bf16.mxu0 %v12723
  %12966 = vmatpush1.bf16.msra.mxu0 %v12722
  %12967 = vmatprep.subr.bf16.mxu0 %v12725
  %12968 = vmatpush1.bf16.msra.mxu0 %v12724
  %12969 = vmatprep.subr.bf16.mxu0 %v12727
  %12970 = vmatpush1.bf16.msra.mxu0 %v12726
  %12971 = vmatprep.subr.bf16.mxu0 0
  %12972 = vmatpush1.bf16.msra.mxu0 0
  %12973 = vmatprep.subr.bf16.mxu0 0
  %12974 = vmatpush1.bf16.msra.mxu0 0
  %12975 = vmatprep.subr.bf16.mxu0 0
  %12976 = vmatpush1.bf16.msra.mxu0 0
  %12977 = vmatprep.subr.bf16.mxu0 0
  %12978 = vmatpush1.bf16.msra.mxu0 0
  %12979 = vmatprep.subr.bf16.mxu0 0
  %12980 = vmatpush1.bf16.msra.mxu0 0
  %12981 = vmatprep.subr.bf16.mxu0 0
  %12982 = vmatpush1.bf16.msra.mxu0 0
  %12983 = vmatprep.subr.bf16.mxu0 0
  %12984 = vmatpush1.bf16.msra.mxu0 0
  %12985 = vmatprep.subr.bf16.mxu0 0
  %12986 = vmatpush1.bf16.msra.mxu0 0
  %12987 = vmatprep.subr.bf16.mxu0 0
  %12988 = vmatpush1.bf16.msra.mxu0 0
  %12989 = vmatprep.subr.bf16.mxu0 0
  %12990 = vmatpush1.bf16.msra.mxu0 0
  %12991 = vmatprep.mubr.bf16.mxu0 0
  %12992 = vmatmul.mubr.bf16.gmra.mrb[0].mxu0 %v12021
  %v12993 = vpop.f32.mrb[0].mxu0
  %v12994 = vadd.f32 %v12953, %v12993
  %v12995 = vpop.f32.mrb[0].mxu0
  %v12996 = vadd.f32 %v12955, %v12995
  %v12997 = vpop.f32.mrb[0].mxu0
  %v12998 = vpop.f32.mrb[0].mxu0
  %12999 = vdwg.mxu0
  %v13000 = vmax.f32 %v12181, %v12994
  %v13001 = vmax.f32 %v12183, %v12996
  %s13002 = scalar_lea.vmem %s3, 1728
  %v13003 = vld [vmem:[%s13002] sm:$0xff]
  %v13004 = vld [vmem:[%s13002 + $0x8] sm:$0xff]
  %v13005 = vld [vmem:[%s13002 + $0x10] sm:$0xff]
  %v13006 = vld [vmem:[%s13002 + $0x18] sm:$0xff]
  %v13007 = vld [vmem:[%s13002 + $0x20] sm:$0xff]
  %v13008 = vld [vmem:[%s13002 + $0x28] sm:$0xff]
  %v13009 = vld [vmem:[%s13002 + $0x30] sm:$0xff]
  %v13010 = vld [vmem:[%s13002 + $0x38] sm:$0xff]
  %v13011 = vld [vmem:[%s13002 + $0x40] sm:$0xff]
  %v13012 = vld [vmem:[%s13002 + $0x48] sm:$0xff]
  %v13013 = vld [vmem:[%s13002 + $0x50] sm:$0xff]
  %v13014 = vld [vmem:[%s13002 + $0x58] sm:$0xff]
  %v13015 = vld [vmem:[%s13002 + $0x60] sm:$0xff]
  %v13016 = vld [vmem:[%s13002 + $0x68] sm:$0xff]
  %v13017 = vld [vmem:[%s13002 + $0x70] sm:$0xff]
  %v13018 = vld [vmem:[%s13002 + $0x78] sm:$0xff]
  %v13019 = vld [vmem:[%s13002 + $0x80] sm:$0xff]
  %v13020 = vld [vmem:[%s13002 + $0x88] sm:$0xff]
  %v13021 = vld [vmem:[%s13002 + $0x90] sm:$0xff]
  %v13022 = vld [vmem:[%s13002 + $0x98] sm:$0xff]
  %v13023 = vld [vmem:[%s13002 + $0xa0] sm:$0xff]
  %v13024 = vld [vmem:[%s13002 + $0xa8] sm:$0xff]
  %v13025 = vld [vmem:[%s13002 + $0xb0] sm:$0xff]
  %v13026 = vld [vmem:[%s13002 + $0xb8] sm:$0xff]
  %v13027 = vld [vmem:[%s13002 + $0xc0] sm:$0xff]
  %v13028 = vld [vmem:[%s13002 + $0xc8] sm:$0xff]
  %v13029 = vld [vmem:[%s13002 + $0xd0] sm:$0xff]
  %v13030 = vld [vmem:[%s13002 + $0xd8] sm:$0xff]
  %v13031 = vld [vmem:[%s13002 + $0xe0] sm:$0xff]
  %v13032 = vld [vmem:[%s13002 + $0xe8] sm:$0xff]
  %v13033 = vld [vmem:[%s13002 + $0xf0] sm:$0xff]
  %v13034 = vld [vmem:[%s13002 + $0xf8] sm:$0xff]
  %v13035 = vld [vmem:[%s13002 + $0x100] sm:$0xff]
  %v13036 = vld [vmem:[%s13002 + $0x108] sm:$0xff]
  %v13037 = vld [vmem:[%s13002 + $0x110] sm:$0xff]
  %v13038 = vld [vmem:[%s13002 + $0x118] sm:$0xff]
  %v13039 = vld [vmem:[%s13002 + $0x120] sm:$0xff]
  %v13040 = vld [vmem:[%s13002 + $0x128] sm:$0xff]
  %v13041 = vld [vmem:[%s13002 + $0x130] sm:$0xff]
  %v13042 = vld [vmem:[%s13002 + $0x138] sm:$0xff]
  %v13043 = vld [vmem:[%s13002 + $0x140] sm:$0xff]
  %v13044 = vld [vmem:[%s13002 + $0x148] sm:$0xff]
  %v13045 = vld [vmem:[%s13002 + $0x150] sm:$0xff]
  %v13046 = vld [vmem:[%s13002 + $0x158] sm:$0xff]
  %v13047 = vld [vmem:[%s13002 + $0x160] sm:$0xff]
  %v13048 = vld [vmem:[%s13002 + $0x168] sm:$0xff]
  %v13049 = vld [vmem:[%s13002 + $0x170] sm:$0xff]
  %v13050 = vld [vmem:[%s13002 + $0x178] sm:$0xff]
  %v13051 = vld [vmem:[%s13002 + $0x180] sm:$0xff]
  %v13052 = vld [vmem:[%s13002 + $0x188] sm:$0xff]
  %v13053 = vld [vmem:[%s13002 + $0x190] sm:$0xff]
  %v13054 = vld [vmem:[%s13002 + $0x198] sm:$0xff]
  %v13055 = vld [vmem:[%s13002 + $0x1a0] sm:$0xff]
  %v13056 = vld [vmem:[%s13002 + $0x1a8] sm:$0xff]
  %v13057 = vld [vmem:[%s13002 + $0x1b0] sm:$0xff]
  %v13058 = vld [vmem:[%s13002 + $0x1b8] sm:$0xff]
  %v13059 = vld [vmem:[%s13002 + $0x1c0] sm:$0xff]
  %v13060 = vld [vmem:[%s13002 + $0x1c8] sm:$0xff]
  %v13061 = vld [vmem:[%s13002 + $0x1d0] sm:$0xff]
  %v13062 = vld [vmem:[%s13002 + $0x1d8] sm:$0xff]
  %v13063 = vld [vmem:[%s13002 + $0x1e0] sm:$0xff]
  %v13064 = vld [vmem:[%s13002 + $0x1e8] sm:$0xff]
  %v13065 = vld [vmem:[%s13002 + $0x1f0] sm:$0xff]
  %v13066 = vld [vmem:[%s13002 + $0x1f8] sm:$0xff]
  %v13067 = vld [vmem:[%s13002 + $0x200] sm:$0xff]
  %v13068 = vld [vmem:[%s13002 + $0x208] sm:$0xff]
  %v13069 = vld [vmem:[%s13002 + $0x210] sm:$0xff]
  %v13070 = vld [vmem:[%s13002 + $0x218] sm:$0xff]
  %v13071 = vld [vmem:[%s13002 + $0x220] sm:$0xff]
  %v13072 = vld [vmem:[%s13002 + $0x228] sm:$0xff]
  %v13073 = vld [vmem:[%s13002 + $0x230] sm:$0xff]
  %v13074 = vld [vmem:[%s13002 + $0x238] sm:$0xff]
  %v13075 = vld [vmem:[%s13002 + $0x240] sm:$0xff]
  %v13076 = vld [vmem:[%s13002 + $0x248] sm:$0xff]
  %v13077 = vld [vmem:[%s13002 + $0x250] sm:$0xff]
  %v13078 = vld [vmem:[%s13002 + $0x258] sm:$0xff]
  %v13079 = vld [vmem:[%s13002 + $0x260] sm:$0xff]
  %v13080 = vld [vmem:[%s13002 + $0x268] sm:$0xff]
  %v13081 = vld [vmem:[%s13002 + $0x270] sm:$0xff]
  %v13082 = vld [vmem:[%s13002 + $0x278] sm:$0xff]
  %v13083 = vld [vmem:[%s13002 + $0x280] sm:$0xff]
  %v13084 = vld [vmem:[%s13002 + $0x288] sm:$0xff]
  %v13085 = vld [vmem:[%s13002 + $0x290] sm:$0xff]
  %v13086 = vld [vmem:[%s13002 + $0x298] sm:$0xff]
  %v13087 = vld [vmem:[%s13002 + $0x2a0] sm:$0xff]
  %v13088 = vld [vmem:[%s13002 + $0x2a8] sm:$0xff]
  %v13089 = vld [vmem:[%s13002 + $0x2b0] sm:$0xff]
  %v13090 = vld [vmem:[%s13002 + $0x2b8] sm:$0xff]
  %v13091 = vld [vmem:[%s13002 + $0x2c0] sm:$0xff]
  %v13092 = vld [vmem:[%s13002 + $0x2c8] sm:$0xff]
  %v13093 = vld [vmem:[%s13002 + $0x2d0] sm:$0xff]
  %v13094 = vld [vmem:[%s13002 + $0x2d8] sm:$0xff]
  %v13095 = vld [vmem:[%s13002 + $0x2e0] sm:$0xff]
  %v13096 = vld [vmem:[%s13002 + $0x2e8] sm:$0xff]
  %v13097 = vld [vmem:[%s13002 + $0x2f0] sm:$0xff]
  %v13098 = vld [vmem:[%s13002 + $0x2f8] sm:$0xff]
  %v13099 = vld [vmem:[%s13002 + $0x300] sm:$0xff]
  %v13100 = vld [vmem:[%s13002 + $0x308] sm:$0xff]
  %v13101 = vld [vmem:[%s13002 + $0x310] sm:$0xff]
  %v13102 = vld [vmem:[%s13002 + $0x318] sm:$0xff]
  %v13103 = vld [vmem:[%s13002 + $0x320] sm:$0xff]
  %v13104 = vld [vmem:[%s13002 + $0x328] sm:$0xff]
  %v13105 = vld [vmem:[%s13002 + $0x330] sm:$0xff]
  %v13106 = vld [vmem:[%s13002 + $0x338] sm:$0xff]
  %v13107 = vld [vmem:[%s13002 + $0x340] sm:$0xff]
  %v13108 = vld [vmem:[%s13002 + $0x348] sm:$0xff]
  %v13109 = vld [vmem:[%s13002 + $0x350] sm:$0xff]
  %v13110 = vld [vmem:[%s13002 + $0x358] sm:$0xff]
  %v13219 = vunpack.c.l.b16 %v13003
  %v13220 = vunpack.c.h.b16 %v13003
  %v13221 = vunpack.c.l.b16 %v13004
  %v13222 = vunpack.c.h.b16 %v13004
  %v13223 = vunpack.c.l.b16 %v13005
  %v13224 = vunpack.c.h.b16 %v13005
  %v13225 = vunpack.c.l.b16 %v13006
  %v13226 = vunpack.c.h.b16 %v13006
  %v13227 = vunpack.c.l.b16 %v13007
  %v13228 = vunpack.c.h.b16 %v13007
  %v13229 = vunpack.c.l.b16 %v13008
  %v13230 = vunpack.c.h.b16 %v13008
  %v13231 = vunpack.c.l.b16 %v13009
  %v13232 = vunpack.c.h.b16 %v13009
  %v13233 = vunpack.c.l.b16 %v13010
  %v13234 = vunpack.c.h.b16 %v13010
  %v13235 = vunpack.c.l.b16 %v13011
  %v13236 = vunpack.c.h.b16 %v13011
  %v13237 = vunpack.c.l.b16 %v13012
  %v13238 = vunpack.c.h.b16 %v13012
  %v13239 = vunpack.c.l.b16 %v13013
  %v13240 = vunpack.c.h.b16 %v13013
  %v13241 = vunpack.c.l.b16 %v13014
  %v13242 = vunpack.c.h.b16 %v13014
  %v13243 = vunpack.c.l.b16 %v13015
  %v13244 = vunpack.c.h.b16 %v13015
  %v13245 = vunpack.c.l.b16 %v13016
  %v13246 = vunpack.c.h.b16 %v13016
  %v13247 = vunpack.c.l.b16 %v13017
  %v13248 = vunpack.c.h.b16 %v13017
  %v13249 = vunpack.c.l.b16 %v13018
  %v13250 = vunpack.c.h.b16 %v13018
  %v13251 = vunpack.c.l.b16 %v13019
  %v13252 = vunpack.c.h.b16 %v13019
  %v13253 = vunpack.c.l.b16 %v13020
  %v13254 = vunpack.c.h.b16 %v13020
  %v13255 = vunpack.c.l.b16 %v13021
  %v13256 = vunpack.c.h.b16 %v13021
  %v13257 = vunpack.c.l.b16 %v13022
  %v13258 = vunpack.c.h.b16 %v13022
  %v13259 = vunpack.c.l.b16 %v13023
  %v13260 = vunpack.c.h.b16 %v13023
  %v13261 = vunpack.c.l.b16 %v13024
  %v13262 = vunpack.c.h.b16 %v13024
  %v13263 = vunpack.c.l.b16 %v13025
  %v13264 = vunpack.c.h.b16 %v13025
  %v13265 = vunpack.c.l.b16 %v13026
  %v13266 = vunpack.c.h.b16 %v13026
  %v13267 = vunpack.c.l.b16 %v13027
  %v13268 = vunpack.c.h.b16 %v13027
  %v13269 = vunpack.c.l.b16 %v13028
  %v13270 = vunpack.c.h.b16 %v13028
  %v13271 = vunpack.c.l.b16 %v13029
  %v13272 = vunpack.c.h.b16 %v13029
  %v13273 = vunpack.c.l.b16 %v13030
  %v13274 = vunpack.c.h.b16 %v13030
  %v13275 = vunpack.c.l.b16 %v13031
  %v13276 = vunpack.c.h.b16 %v13031
  %v13277 = vunpack.c.l.b16 %v13032
  %v13278 = vunpack.c.h.b16 %v13032
  %v13279 = vunpack.c.l.b16 %v13033
  %v13280 = vunpack.c.h.b16 %v13033
  %v13281 = vunpack.c.l.b16 %v13034
  %v13282 = vunpack.c.h.b16 %v13034
  %v13283 = vunpack.c.l.b16 %v13035
  %v13284 = vunpack.c.h.b16 %v13035
  %v13285 = vunpack.c.l.b16 %v13036
  %v13286 = vunpack.c.h.b16 %v13036
  %v13287 = vunpack.c.l.b16 %v13037
  %v13288 = vunpack.c.h.b16 %v13037
  %v13289 = vunpack.c.l.b16 %v13038
  %v13290 = vunpack.c.h.b16 %v13038
  %v13291 = vunpack.c.l.b16 %v13039
  %v13292 = vunpack.c.h.b16 %v13039
  %v13293 = vunpack.c.l.b16 %v13040
  %v13294 = vunpack.c.h.b16 %v13040
  %v13295 = vunpack.c.l.b16 %v13041
  %v13296 = vunpack.c.h.b16 %v13041
  %v13297 = vunpack.c.l.b16 %v13042
  %v13298 = vunpack.c.h.b16 %v13042
  %v13299 = vunpack.c.l.b16 %v13043
  %v13300 = vunpack.c.h.b16 %v13043
  %v13301 = vunpack.c.l.b16 %v13044
  %v13302 = vunpack.c.h.b16 %v13044
  %v13303 = vunpack.c.l.b16 %v13045
  %v13304 = vunpack.c.h.b16 %v13045
  %v13305 = vunpack.c.l.b16 %v13046
  %v13306 = vunpack.c.h.b16 %v13046
  %v13307 = vunpack.c.l.b16 %v13047
  %v13308 = vunpack.c.h.b16 %v13047
  %v13309 = vunpack.c.l.b16 %v13048
  %v13310 = vunpack.c.h.b16 %v13048
  %v13311 = vunpack.c.l.b16 %v13049
  %v13312 = vunpack.c.h.b16 %v13049
  %v13313 = vunpack.c.l.b16 %v13050
  %v13314 = vunpack.c.h.b16 %v13050
  %v13315 = vunpack.c.l.b16 %v13051
  %v13316 = vunpack.c.h.b16 %v13051
  %v13317 = vunpack.c.l.b16 %v13052
  %v13318 = vunpack.c.h.b16 %v13052
  %v13319 = vunpack.c.l.b16 %v13053
  %v13320 = vunpack.c.h.b16 %v13053
  %v13321 = vunpack.c.l.b16 %v13054
  %v13322 = vunpack.c.h.b16 %v13054
  %v13323 = vunpack.c.l.b16 %v13055
  %v13324 = vunpack.c.h.b16 %v13055
  %v13325 = vunpack.c.l.b16 %v13056
  %v13326 = vunpack.c.h.b16 %v13056
  %v13327 = vunpack.c.l.b16 %v13057
  %v13328 = vunpack.c.h.b16 %v13057
  %v13329 = vunpack.c.l.b16 %v13058
  %v13330 = vunpack.c.h.b16 %v13058
  %v13331 = vunpack.c.l.b16 %v13059
  %v13332 = vunpack.c.h.b16 %v13059
  %v13333 = vunpack.c.l.b16 %v13060
  %v13334 = vunpack.c.h.b16 %v13060
  %v13335 = vunpack.c.l.b16 %v13061
  %v13336 = vunpack.c.h.b16 %v13061
  %v13337 = vunpack.c.l.b16 %v13062
  %v13338 = vunpack.c.h.b16 %v13062
  %v13339 = vunpack.c.l.b16 %v13063
  %v13340 = vunpack.c.h.b16 %v13063
  %v13341 = vunpack.c.l.b16 %v13064
  %v13342 = vunpack.c.h.b16 %v13064
  %v13343 = vunpack.c.l.b16 %v13065
  %v13344 = vunpack.c.h.b16 %v13065
  %v13345 = vunpack.c.l.b16 %v13066
  %v13346 = vunpack.c.h.b16 %v13066
  %v13347 = vunpack.c.l.b16 %v13067
  %v13348 = vunpack.c.h.b16 %v13067
  %v13349 = vunpack.c.l.b16 %v13068
  %v13350 = vunpack.c.h.b16 %v13068
  %v13351 = vunpack.c.l.b16 %v13069
  %v13352 = vunpack.c.h.b16 %v13069
  %v13353 = vunpack.c.l.b16 %v13070
  %v13354 = vunpack.c.h.b16 %v13070
  %v13355 = vunpack.c.l.b16 %v13071
  %v13356 = vunpack.c.h.b16 %v13071
  %v13357 = vunpack.c.l.b16 %v13072
  %v13358 = vunpack.c.h.b16 %v13072
  %v13359 = vunpack.c.l.b16 %v13073
  %v13360 = vunpack.c.h.b16 %v13073
  %v13361 = vunpack.c.l.b16 %v13074
  %v13362 = vunpack.c.h.b16 %v13074
  %v13363 = vunpack.c.l.b16 %v13075
  %v13364 = vunpack.c.h.b16 %v13075
  %v13365 = vunpack.c.l.b16 %v13076
  %v13366 = vunpack.c.h.b16 %v13076
  %v13367 = vunpack.c.l.b16 %v13077
  %v13368 = vunpack.c.h.b16 %v13077
  %v13369 = vunpack.c.l.b16 %v13078
  %v13370 = vunpack.c.h.b16 %v13078
  %v13371 = vunpack.c.l.b16 %v13079
  %v13372 = vunpack.c.h.b16 %v13079
  %v13373 = vunpack.c.l.b16 %v13080
  %v13374 = vunpack.c.h.b16 %v13080
  %v13375 = vunpack.c.l.b16 %v13081
  %v13376 = vunpack.c.h.b16 %v13081
  %v13377 = vunpack.c.l.b16 %v13082
  %v13378 = vunpack.c.h.b16 %v13082
  %v13379 = vunpack.c.l.b16 %v13083
  %v13380 = vunpack.c.h.b16 %v13083
  %v13381 = vunpack.c.l.b16 %v13084
  %v13382 = vunpack.c.h.b16 %v13084
  %v13383 = vunpack.c.l.b16 %v13085
  %v13384 = vunpack.c.h.b16 %v13085
  %v13385 = vunpack.c.l.b16 %v13086
  %v13386 = vunpack.c.h.b16 %v13086
  %v13387 = vunpack.c.l.b16 %v13087
  %v13388 = vunpack.c.h.b16 %v13087
  %v13389 = vunpack.c.l.b16 %v13088
  %v13390 = vunpack.c.h.b16 %v13088
  %v13391 = vunpack.c.l.b16 %v13089
  %v13392 = vunpack.c.h.b16 %v13089
  %v13393 = vunpack.c.l.b16 %v13090
  %v13394 = vunpack.c.h.b16 %v13090
  %v13395 = vunpack.c.l.b16 %v13091
  %v13396 = vunpack.c.h.b16 %v13091
  %v13397 = vunpack.c.l.b16 %v13092
  %v13398 = vunpack.c.h.b16 %v13092
  %v13399 = vunpack.c.l.b16 %v13093
  %v13400 = vunpack.c.h.b16 %v13093
  %v13401 = vunpack.c.l.b16 %v13094
  %v13402 = vunpack.c.h.b16 %v13094
  %v13403 = vunpack.c.l.b16 %v13095
  %v13404 = vunpack.c.h.b16 %v13095
  %v13405 = vunpack.c.l.b16 %v13096
  %v13406 = vunpack.c.h.b16 %v13096
  %v13407 = vunpack.c.l.b16 %v13097
  %v13408 = vunpack.c.h.b16 %v13097
  %v13409 = vunpack.c.l.b16 %v13098
  %v13410 = vunpack.c.h.b16 %v13098
  %v13411 = vunpack.c.l.b16 %v13099
  %v13412 = vunpack.c.h.b16 %v13099
  %v13413 = vunpack.c.l.b16 %v13100
  %v13414 = vunpack.c.h.b16 %v13100
  %v13415 = vunpack.c.l.b16 %v13101
  %v13416 = vunpack.c.h.b16 %v13101
  %v13417 = vunpack.c.l.b16 %v13102
  %v13418 = vunpack.c.h.b16 %v13102
  %v13419 = vunpack.c.l.b16 %v13103
  %v13420 = vunpack.c.h.b16 %v13103
  %v13421 = vunpack.c.l.b16 %v13104
  %v13422 = vunpack.c.h.b16 %v13104
  %v13423 = vunpack.c.l.b16 %v13105
  %v13424 = vunpack.c.h.b16 %v13105
  %v13425 = vunpack.c.l.b16 %v13106
  %v13426 = vunpack.c.h.b16 %v13106
  %v13427 = vunpack.c.l.b16 %v13107
  %v13428 = vunpack.c.h.b16 %v13107
  %v13429 = vunpack.c.l.b16 %v13108
  %v13430 = vunpack.c.h.b16 %v13108
  %v13431 = vunpack.c.l.b16 %v13109
  %v13432 = vunpack.c.h.b16 %v13109
  %v13433 = vunpack.c.l.b16 %v13110
  %v13434 = vunpack.c.h.b16 %v13110
  %v13435 = vpack.c.b16 %v13221, %v13219
  %v13436 = vpack.c.b16 %v13222, %v13220
  %v13437 = vpack.c.b16 %v13225, %v13223
  %v13438 = vpack.c.b16 %v13226, %v13224
  %v13439 = vpack.c.b16 %v13229, %v13227
  %v13440 = vpack.c.b16 %v13230, %v13228
  %v13441 = vpack.c.b16 %v13233, %v13231
  %v13442 = vpack.c.b16 %v13234, %v13232
  %v13443 = vpack.c.b16 %v13237, %v13235
  %v13444 = vpack.c.b16 %v13238, %v13236
  %v13445 = vpack.c.b16 %v13241, %v13239
  %v13446 = vpack.c.b16 %v13242, %v13240
  %v13447 = vpack.c.b16 %v13245, %v13243
  %v13448 = vpack.c.b16 %v13246, %v13244
  %v13449 = vpack.c.b16 %v13249, %v13247
  %v13450 = vpack.c.b16 %v13250, %v13248
  %v13451 = vpack.c.b16 %v13253, %v13251
  %v13452 = vpack.c.b16 %v13254, %v13252
  %v13453 = vpack.c.b16 %v13257, %v13255
  %v13454 = vpack.c.b16 %v13258, %v13256
  %v13455 = vpack.c.b16 %v13261, %v13259
  %v13456 = vpack.c.b16 %v13262, %v13260
  %v13457 = vpack.c.b16 %v13265, %v13263
  %v13458 = vpack.c.b16 %v13266, %v13264
  %v13459 = vpack.c.b16 %v13269, %v13267
  %v13460 = vpack.c.b16 %v13270, %v13268
  %v13461 = vpack.c.b16 %v13273, %v13271
  %v13462 = vpack.c.b16 %v13274, %v13272
  %v13463 = vpack.c.b16 %v13277, %v13275
  %v13464 = vpack.c.b16 %v13278, %v13276
  %v13465 = vpack.c.b16 %v13281, %v13279
  %v13466 = vpack.c.b16 %v13282, %v13280
  %v13467 = vpack.c.b16 %v13285, %v13283
  %v13468 = vpack.c.b16 %v13286, %v13284
  %v13469 = vpack.c.b16 %v13289, %v13287
  %v13470 = vpack.c.b16 %v13290, %v13288
  %v13471 = vpack.c.b16 %v13293, %v13291
  %v13472 = vpack.c.b16 %v13294, %v13292
  %v13473 = vpack.c.b16 %v13297, %v13295
  %v13474 = vpack.c.b16 %v13298, %v13296
  %v13475 = vpack.c.b16 %v13301, %v13299
  %v13476 = vpack.c.b16 %v13302, %v13300
  %v13477 = vpack.c.b16 %v13305, %v13303
  %v13478 = vpack.c.b16 %v13306, %v13304
  %v13479 = vpack.c.b16 %v13309, %v13307
  %v13480 = vpack.c.b16 %v13310, %v13308
  %v13481 = vpack.c.b16 %v13313, %v13311
  %v13482 = vpack.c.b16 %v13314, %v13312
  %v13483 = vpack.c.b16 %v13317, %v13315
  %v13484 = vpack.c.b16 %v13318, %v13316
  %v13485 = vpack.c.b16 %v13321, %v13319
  %v13486 = vpack.c.b16 %v13322, %v13320
  %v13487 = vpack.c.b16 %v13325, %v13323
  %v13488 = vpack.c.b16 %v13326, %v13324
  %v13489 = vpack.c.b16 %v13329, %v13327
  %v13490 = vpack.c.b16 %v13330, %v13328
  %v13491 = vpack.c.b16 %v13333, %v13331
  %v13492 = vpack.c.b16 %v13334, %v13332
  %v13493 = vpack.c.b16 %v13337, %v13335
  %v13494 = vpack.c.b16 %v13338, %v13336
  %v13495 = vpack.c.b16 %v13341, %v13339
  %v13496 = vpack.c.b16 %v13342, %v13340
  %v13497 = vpack.c.b16 %v13345, %v13343
  %v13498 = vpack.c.b16 %v13346, %v13344
  %v13499 = vpack.c.b16 %v13349, %v13347
  %v13500 = vpack.c.b16 %v13350, %v13348
  %v13501 = vpack.c.b16 %v13353, %v13351
  %v13502 = vpack.c.b16 %v13354, %v13352
  %v13503 = vpack.c.b16 %v13357, %v13355
  %v13504 = vpack.c.b16 %v13358, %v13356
  %v13505 = vpack.c.b16 %v13361, %v13359
  %v13506 = vpack.c.b16 %v13362, %v13360
  %v13507 = vpack.c.b16 %v13365, %v13363
  %v13508 = vpack.c.b16 %v13366, %v13364
  %v13509 = vpack.c.b16 %v13369, %v13367
  %v13510 = vpack.c.b16 %v13370, %v13368
  %v13511 = vpack.c.b16 %v13373, %v13371
  %v13512 = vpack.c.b16 %v13374, %v13372
  %v13513 = vpack.c.b16 %v13377, %v13375
  %v13514 = vpack.c.b16 %v13378, %v13376
  %v13515 = vpack.c.b16 %v13381, %v13379
  %v13516 = vpack.c.b16 %v13382, %v13380
  %v13517 = vpack.c.b16 %v13385, %v13383
  %v13518 = vpack.c.b16 %v13386, %v13384
  %v13519 = vpack.c.b16 %v13389, %v13387
  %v13520 = vpack.c.b16 %v13390, %v13388
  %v13521 = vpack.c.b16 %v13393, %v13391
  %v13522 = vpack.c.b16 %v13394, %v13392
  %v13523 = vpack.c.b16 %v13397, %v13395
  %v13524 = vpack.c.b16 %v13398, %v13396
  %v13525 = vpack.c.b16 %v13401, %v13399
  %v13526 = vpack.c.b16 %v13402, %v13400
  %v13527 = vpack.c.b16 %v13405, %v13403
  %v13528 = vpack.c.b16 %v13406, %v13404
  %v13529 = vpack.c.b16 %v13409, %v13407
  %v13530 = vpack.c.b16 %v13410, %v13408
  %v13531 = vpack.c.b16 %v13413, %v13411
  %v13532 = vpack.c.b16 %v13414, %v13412
  %v13533 = vpack.c.b16 %v13417, %v13415
  %v13534 = vpack.c.b16 %v13418, %v13416
  %v13535 = vpack.c.b16 %v13421, %v13419
  %v13536 = vpack.c.b16 %v13422, %v13420
  %v13537 = vpack.c.b16 %v13425, %v13423
  %v13538 = vpack.c.b16 %v13426, %v13424
  %v13539 = vpack.c.b16 %v13429, %v13427
  %v13540 = vpack.c.b16 %v13430, %v13428
  %v13541 = vpack.c.b16 %v13433, %v13431
  %v13542 = vpack.c.b16 %v13434, %v13432
  %13651 = vmatprep.subr.bf16.mxu0 %v13436
  %13652 = vmatpush1.bf16.msra.mxu0 %v13435
  %13653 = vmatprep.subr.bf16.mxu0 %v13438
  %13654 = vmatpush1.bf16.msra.mxu0 %v13437
  %13655 = vmatprep.subr.bf16.mxu0 %v13440
  %13656 = vmatpush1.bf16.msra.mxu0 %v13439
  %13657 = vmatprep.subr.bf16.mxu0 %v13442
  %13658 = vmatpush1.bf16.msra.mxu0 %v13441
  %13659 = vmatprep.subr.bf16.mxu0 %v13444
  %13660 = vmatpush1.bf16.msra.mxu0 %v13443
  %13661 = vmatprep.subr.bf16.mxu0 %v13446
  %13662 = vmatpush1.bf16.msra.mxu0 %v13445
  %13663 = vmatprep.subr.bf16.mxu0 %v13448
  %13664 = vmatpush1.bf16.msra.mxu0 %v13447
  %13665 = vmatprep.subr.bf16.mxu0 %v13450
  %13666 = vmatpush1.bf16.msra.mxu0 %v13449
  %13667 = vmatprep.subr.bf16.mxu0 %v13452
  %13668 = vmatpush1.bf16.msra.mxu0 %v13451
  %13669 = vmatprep.subr.bf16.mxu0 %v13454
  %13670 = vmatpush1.bf16.msra.mxu0 %v13453
  %13671 = vmatprep.subr.bf16.mxu0 %v13456
  %13672 = vmatpush1.bf16.msra.mxu0 %v13455
  %13673 = vmatprep.subr.bf16.mxu0 %v13458
  %13674 = vmatpush1.bf16.msra.mxu0 %v13457
  %13675 = vmatprep.subr.bf16.mxu0 %v13460
  %13676 = vmatpush1.bf16.msra.mxu0 %v13459
  %13677 = vmatprep.subr.bf16.mxu0 %v13462
  %13678 = vmatpush1.bf16.msra.mxu0 %v13461
  %13679 = vmatprep.subr.bf16.mxu0 %v13464
  %13680 = vmatpush1.bf16.msra.mxu0 %v13463
  %13681 = vmatprep.subr.bf16.mxu0 %v13466
  %13682 = vmatpush1.bf16.msra.mxu0 %v13465
  %13683 = vmatprep.mubr.bf16.mxu0 %v11365
  %13684 = vmatmul.mubr.bf16.gmra.mrb[0].mxu0 %v11364
  %v13685 = vpop.f32.mrb[0].mxu0
  %v13686 = vadd.f32 0.0, %v13685
  %v13687 = vpop.f32.mrb[0].mxu0
  %v13688 = vadd.f32 0.0, %v13687
  %v13689 = vpop.f32.mrb[0].mxu0
  %v13690 = vpop.f32.mrb[0].mxu0
  %13691 = vdwg.mxu0
  %13692 = vmatprep.subr.bf16.mxu0 %v13468
  %13693 = vmatpush1.bf16.msra.mxu0 %v13467
  %13694 = vmatprep.subr.bf16.mxu0 %v13470
  %13695 = vmatpush1.bf16.msra.mxu0 %v13469
  %13696 = vmatprep.subr.bf16.mxu0 %v13472
  %13697 = vmatpush1.bf16.msra.mxu0 %v13471
  %13698 = vmatprep.subr.bf16.mxu0 %v13474
  %13699 = vmatpush1.bf16.msra.mxu0 %v13473
  %13700 = vmatprep.subr.bf16.mxu0 %v13476
  %13701 = vmatpush1.bf16.msra.mxu0 %v13475
  %13702 = vmatprep.subr.bf16.mxu0 %v13478
  %13703 = vmatpush1.bf16.msra.mxu0 %v13477
  %13704 = vmatprep.subr.bf16.mxu0 %v13480
  %13705 = vmatpush1.bf16.msra.mxu0 %v13479
  %13706 = vmatprep.subr.bf16.mxu0 %v13482
  %13707 = vmatpush1.bf16.msra.mxu0 %v13481
  %13708 = vmatprep.subr.bf16.mxu0 %v13484
  %13709 = vmatpush1.bf16.msra.mxu0 %v13483
  %13710 = vmatprep.subr.bf16.mxu0 %v13486
  %13711 = vmatpush1.bf16.msra.mxu0 %v13485
  %13712 = vmatprep.subr.bf16.mxu0 %v13488
  %13713 = vmatpush1.bf16.msra.mxu0 %v13487
  %13714 = vmatprep.subr.bf16.mxu0 %v13490
  %13715 = vmatpush1.bf16.msra.mxu0 %v13489
  %13716 = vmatprep.subr.bf16.mxu0 %v13492
  %13717 = vmatpush1.bf16.msra.mxu0 %v13491
  %13718 = vmatprep.subr.bf16.mxu0 %v13494
  %13719 = vmatpush1.bf16.msra.mxu0 %v13493
  %13720 = vmatprep.subr.bf16.mxu0 %v13496
  %13721 = vmatpush1.bf16.msra.mxu0 %v13495
  %13722 = vmatprep.subr.bf16.mxu0 %v13498
  %13723 = vmatpush1.bf16.msra.mxu0 %v13497
  %13724 = vmatprep.mubr.bf16.mxu0 %v11367
  %13725 = vmatmul.mubr.bf16.gmra.mrb[0].mxu0 %v11366
  %v13726 = vpop.f32.mrb[0].mxu0
  %v13727 = vadd.f32 %v13686, %v13726
  %v13728 = vpop.f32.mrb[0].mxu0
  %v13729 = vadd.f32 %v13688, %v13728
  %v13730 = vpop.f32.mrb[0].mxu0
  %v13731 = vpop.f32.mrb[0].mxu0
  %13732 = vdwg.mxu0
  %13733 = vmatprep.subr.bf16.mxu0 %v13500
  %13734 = vmatpush1.bf16.msra.mxu0 %v13499
  %13735 = vmatprep.subr.bf16.mxu0 %v13502
  %13736 = vmatpush1.bf16.msra.mxu0 %v13501
  %13737 = vmatprep.subr.bf16.mxu0 %v13504
  %13738 = vmatpush1.bf16.msra.mxu0 %v13503
  %13739 = vmatprep.subr.bf16.mxu0 %v13506
  %13740 = vmatpush1.bf16.msra.mxu0 %v13505
  %13741 = vmatprep.subr.bf16.mxu0 %v13508
  %13742 = vmatpush1.bf16.msra.mxu0 %v13507
  %13743 = vmatprep.subr.bf16.mxu0 %v13510
  %13744 = vmatpush1.bf16.msra.mxu0 %v13509
  %13745 = vmatprep.subr.bf16.mxu0 %v13512
  %13746 = vmatpush1.bf16.msra.mxu0 %v13511
  %13747 = vmatprep.subr.bf16.mxu0 %v13514
  %13748 = vmatpush1.bf16.msra.mxu0 %v13513
  %13749 = vmatprep.subr.bf16.mxu0 %v13516
  %13750 = vmatpush1.bf16.msra.mxu0 %v13515
  %13751 = vmatprep.subr.bf16.mxu0 %v13518
  %13752 = vmatpush1.bf16.msra.mxu0 %v13517
  %13753 = vmatprep.subr.bf16.mxu0 %v13520
  %13754 = vmatpush1.bf16.msra.mxu0 %v13519
  %13755 = vmatprep.subr.bf16.mxu0 %v13522
  %13756 = vmatpush1.bf16.msra.mxu0 %v13521
  %13757 = vmatprep.subr.bf16.mxu0 %v13524
  %13758 = vmatpush1.bf16.msra.mxu0 %v13523
  %13759 = vmatprep.subr.bf16.mxu0 %v13526
  %13760 = vmatpush1.bf16.msra.mxu0 %v13525
  %13761 = vmatprep.subr.bf16.mxu0 %v13528
  %13762 = vmatpush1.bf16.msra.mxu0 %v13527
  %13763 = vmatprep.subr.bf16.mxu0 %v13530
  %13764 = vmatpush1.bf16.msra.mxu0 %v13529
  %13765 = vmatprep.mubr.bf16.mxu0 %v11369
  %13766 = vmatmul.mubr.bf16.gmra.mrb[0].mxu0 %v11368
  %v13767 = vpop.f32.mrb[0].mxu0
  %v13768 = vadd.f32 %v13727, %v13767
  %v13769 = vpop.f32.mrb[0].mxu0
  %v13770 = vadd.f32 %v13729, %v13769
  %v13771 = vpop.f32.mrb[0].mxu0
  %v13772 = vpop.f32.mrb[0].mxu0
  %13773 = vdwg.mxu0
  %13774 = vmatprep.subr.bf16.mxu0 %v13532
  %13775 = vmatpush1.bf16.msra.mxu0 %v13531
  %13776 = vmatprep.subr.bf16.mxu0 %v13534
  %13777 = vmatpush1.bf16.msra.mxu0 %v13533
  %13778 = vmatprep.subr.bf16.mxu0 %v13536
  %13779 = vmatpush1.bf16.msra.mxu0 %v13535
  %13780 = vmatprep.subr.bf16.mxu0 %v13538
  %13781 = vmatpush1.bf16.msra.mxu0 %v13537
  %13782 = vmatprep.subr.bf16.mxu0 %v13540
  %13783 = vmatpush1.bf16.msra.mxu0 %v13539
  %13784 = vmatprep.subr.bf16.mxu0 %v13542
  %13785 = vmatpush1.bf16.msra.mxu0 %v13541
  %13786 = vmatprep.subr.bf16.mxu0 0
  %13787 = vmatpush1.bf16.msra.mxu0 0
  %13788 = vmatprep.subr.bf16.mxu0 0
  %13789 = vmatpush1.bf16.msra.mxu0 0
  %13790 = vmatprep.subr.bf16.mxu0 0
  %13791 = vmatpush1.bf16.msra.mxu0 0
  %13792 = vmatprep.subr.bf16.mxu0 0
  %13793 = vmatpush1.bf16.msra.mxu0 0
  %13794 = vmatprep.subr.bf16.mxu0 0
  %13795 = vmatpush1.bf16.msra.mxu0 0
  %13796 = vmatprep.subr.bf16.mxu0 0
  %13797 = vmatpush1.bf16.msra.mxu0 0
  %13798 = vmatprep.subr.bf16.mxu0 0
  %13799 = vmatpush1.bf16.msra.mxu0 0
  %13800 = vmatprep.subr.bf16.mxu0 0
  %13801 = vmatpush1.bf16.msra.mxu0 0
  %13802 = vmatprep.subr.bf16.mxu0 0
  %13803 = vmatpush1.bf16.msra.mxu0 0
  %13804 = vmatprep.subr.bf16.mxu0 0
  %13805 = vmatpush1.bf16.msra.mxu0 0
  %13806 = vmatprep.mubr.bf16.mxu0 0
  %13807 = vmatmul.mubr.bf16.gmra.mrb[0].mxu0 %v12021
  %v13808 = vpop.f32.mrb[0].mxu0
  %v13809 = vadd.f32 %v13768, %v13808
  %v13810 = vpop.f32.mrb[0].mxu0
  %v13811 = vadd.f32 %v13770, %v13810
  %v13812 = vpop.f32.mrb[0].mxu0
  %v13813 = vpop.f32.mrb[0].mxu0
  %13814 = vdwg.mxu0
  %v13815 = vmax.f32 %v13000, %v13809
  %v13816 = vmax.f32 %v13001, %v13811
  %s13817 = scalar_lea.vmem %s3, 2592
  %v13818 = vld [vmem:[%s13817] sm:$0xff]
  %v13819 = vld [vmem:[%s13817 + $0x8] sm:$0xff]
  %v13820 = vld [vmem:[%s13817 + $0x10] sm:$0xff]
  %v13821 = vld [vmem:[%s13817 + $0x18] sm:$0xff]
  %v13822 = vld [vmem:[%s13817 + $0x20] sm:$0xff]
  %v13823 = vld [vmem:[%s13817 + $0x28] sm:$0xff]
  %v13824 = vld [vmem:[%s13817 + $0x30] sm:$0xff]
  %v13825 = vld [vmem:[%s13817 + $0x38] sm:$0xff]
  %v13826 = vld [vmem:[%s13817 + $0x40] sm:$0xff]
  %v13827 = vld [vmem:[%s13817 + $0x48] sm:$0xff]
  %v13828 = vld [vmem:[%s13817 + $0x50] sm:$0xff]
  %v13829 = vld [vmem:[%s13817 + $0x58] sm:$0xff]
  %v13830 = vld [vmem:[%s13817 + $0x60] sm:$0xff]
  %v13831 = vld [vmem:[%s13817 + $0x68] sm:$0xff]
  %v13832 = vld [vmem:[%s13817 + $0x70] sm:$0xff]
  %v13833 = vld [vmem:[%s13817 + $0x78] sm:$0xff]
  %v13834 = vld [vmem:[%s13817 + $0x80] sm:$0xff]
  %v13835 = vld [vmem:[%s13817 + $0x88] sm:$0xff]
  %v13836 = vld [vmem:[%s13817 + $0x90] sm:$0xff]
  %v13837 = vld [vmem:[%s13817 + $0x98] sm:$0xff]
  %v13838 = vld [vmem:[%s13817 + $0xa0] sm:$0xff]
  %v13839 = vld [vmem:[%s13817 + $0xa8] sm:$0xff]
  %v13840 = vld [vmem:[%s13817 + $0xb0] sm:$0xff]
  %v13841 = vld [vmem:[%s13817 + $0xb8] sm:$0xff]
  %v13842 = vld [vmem:[%s13817 + $0xc0] sm:$0xff]
  %v13843 = vld [vmem:[%s13817 + $0xc8] sm:$0xff]
  %v13844 = vld [vmem:[%s13817 + $0xd0] sm:$0xff]
  %v13845 = vld [vmem:[%s13817 + $0xd8] sm:$0xff]
  %v13846 = vld [vmem:[%s13817 + $0xe0] sm:$0xff]
  %v13847 = vld [vmem:[%s13817 + $0xe8] sm:$0xff]
  %v13848 = vld [vmem:[%s13817 + $0xf0] sm:$0xff]
  %v13849 = vld [vmem:[%s13817 + $0xf8] sm:$0xff]
  %v13850 = vld [vmem:[%s13817 + $0x100] sm:$0xff]
  %v13851 = vld [vmem:[%s13817 + $0x108] sm:$0xff]
  %v13852 = vld [vmem:[%s13817 + $0x110] sm:$0xff]
  %v13853 = vld [vmem:[%s13817 + $0x118] sm:$0xff]
  %v13854 = vld [vmem:[%s13817 + $0x120] sm:$0xff]
  %v13855 = vld [vmem:[%s13817 + $0x128] sm:$0xff]
  %v13856 = vld [vmem:[%s13817 + $0x130] sm:$0xff]
  %v13857 = vld [vmem:[%s13817 + $0x138] sm:$0xff]
  %v13858 = vld [vmem:[%s13817 + $0x140] sm:$0xff]
  %v13859 = vld [vmem:[%s13817 + $0x148] sm:$0xff]
  %v13860 = vld [vmem:[%s13817 + $0x150] sm:$0xff]
  %v13861 = vld [vmem:[%s13817 + $0x158] sm:$0xff]
  %v13862 = vld [vmem:[%s13817 + $0x160] sm:$0xff]
  %v13863 = vld [vmem:[%s13817 + $0x168] sm:$0xff]
  %v13864 = vld [vmem:[%s13817 + $0x170] sm:$0xff]
  %v13865 = vld [vmem:[%s13817 + $0x178] sm:$0xff]
  %v13866 = vld [vmem:[%s13817 + $0x180] sm:$0xff]
  %v13867 = vld [vmem:[%s13817 + $0x188] sm:$0xff]
  %v13868 = vld [vmem:[%s13817 + $0x190] sm:$0xff]
  %v13869 = vld [vmem:[%s13817 + $0x198] sm:$0xff]
  %v13870 = vld [vmem:[%s13817 + $0x1a0] sm:$0xff]
  %v13871 = vld [vmem:[%s13817 + $0x1a8] sm:$0xff]
  %v13872 = vld [vmem:[%s13817 + $0x1b0] sm:$0xff]
  %v13873 = vld [vmem:[%s13817 + $0x1b8] sm:$0xff]
  %v13874 = vld [vmem:[%s13817 + $0x1c0] sm:$0xff]
  %v13875 = vld [vmem:[%s13817 + $0x1c8] sm:$0xff]
  %v13876 = vld [vmem:[%s13817 + $0x1d0] sm:$0xff]
  %v13877 = vld [vmem:[%s13817 + $0x1d8] sm:$0xff]
  %v13878 = vld [vmem:[%s13817 + $0x1e0] sm:$0xff]
  %v13879 = vld [vmem:[%s13817 + $0x1e8] sm:$0xff]
  %v13880 = vld [vmem:[%s13817 + $0x1f0] sm:$0xff]
  %v13881 = vld [vmem:[%s13817 + $0x1f8] sm:$0xff]
  %v13882 = vld [vmem:[%s13817 + $0x200] sm:$0xff]
  %v13883 = vld [vmem:[%s13817 + $0x208] sm:$0xff]
  %v13884 = vld [vmem:[%s13817 + $0x210] sm:$0xff]
  %v13885 = vld [vmem:[%s13817 + $0x218] sm:$0xff]
  %v13886 = vld [vmem:[%s13817 + $0x220] sm:$0xff]
  %v13887 = vld [vmem:[%s13817 + $0x228] sm:$0xff]
  %v13888 = vld [vmem:[%s13817 + $0x230] sm:$0xff]
  %v13889 = vld [vmem:[%s13817 + $0x238] sm:$0xff]
  %v13890 = vld [vmem:[%s13817 + $0x240] sm:$0xff]
  %v13891 = vld [vmem:[%s13817 + $0x248] sm:$0xff]
  %v13892 = vld [vmem:[%s13817 + $0x250] sm:$0xff]
  %v13893 = vld [vmem:[%s13817 + $0x258] sm:$0xff]
  %v13894 = vld [vmem:[%s13817 + $0x260] sm:$0xff]
  %v13895 = vld [vmem:[%s13817 + $0x268] sm:$0xff]
  %v13896 = vld [vmem:[%s13817 + $0x270] sm:$0xff]
  %v13897 = vld [vmem:[%s13817 + $0x278] sm:$0xff]
  %v13898 = vld [vmem:[%s13817 + $0x280] sm:$0xff]
  %v13899 = vld [vmem:[%s13817 + $0x288] sm:$0xff]
  %v13900 = vld [vmem:[%s13817 + $0x290] sm:$0xff]
  %v13901 = vld [vmem:[%s13817 + $0x298] sm:$0xff]
  %v13902 = vld [vmem:[%s13817 + $0x2a0] sm:$0xff]
  %v13903 = vld [vmem:[%s13817 + $0x2a8] sm:$0xff]
  %v13904 = vld [vmem:[%s13817 + $0x2b0] sm:$0xff]
  %v13905 = vld [vmem:[%s13817 + $0x2b8] sm:$0xff]
  %v13906 = vld [vmem:[%s13817 + $0x2c0] sm:$0xff]
  %v13907 = vld [vmem:[%s13817 + $0x2c8] sm:$0xff]
  %v13908 = vld [vmem:[%s13817 + $0x2d0] sm:$0xff]
  %v13909 = vld [vmem:[%s13817 + $0x2d8] sm:$0xff]
  %v13910 = vld [vmem:[%s13817 + $0x2e0] sm:$0xff]
  %v13911 = vld [vmem:[%s13817 + $0x2e8] sm:$0xff]
  %v13912 = vld [vmem:[%s13817 + $0x2f0] sm:$0xff]
  %v13913 = vld [vmem:[%s13817 + $0x2f8] sm:$0xff]
  %v13914 = vld [vmem:[%s13817 + $0x300] sm:$0xff]
  %v13915 = vld [vmem:[%s13817 + $0x308] sm:$0xff]
  %v13916 = vld [vmem:[%s13817 + $0x310] sm:$0xff]
  %v13917 = vld [vmem:[%s13817 + $0x318] sm:$0xff]
  %v13918 = vld [vmem:[%s13817 + $0x320] sm:$0xff]
  %v13919 = vld [vmem:[%s13817 + $0x328] sm:$0xff]
  %v13920 = vld [vmem:[%s13817 + $0x330] sm:$0xff]
  %v13921 = vld [vmem:[%s13817 + $0x338] sm:$0xff]
  %v13922 = vld [vmem:[%s13817 + $0x340] sm:$0xff]
  %v13923 = vld [vmem:[%s13817 + $0x348] sm:$0xff]
  %v13924 = vld [vmem:[%s13817 + $0x350] sm:$0xff]
  %v13925 = vld [vmem:[%s13817 + $0x358] sm:$0xff]
  %v14034 = vunpack.c.l.b16 %v13818
  %v14035 = vunpack.c.h.b16 %v13818
  %v14036 = vunpack.c.l.b16 %v13819
  %v14037 = vunpack.c.h.b16 %v13819
  %v14038 = vunpack.c.l.b16 %v13820
  %v14039 = vunpack.c.h.b16 %v13820
  %v14040 = vunpack.c.l.b16 %v13821
  %v14041 = vunpack.c.h.b16 %v13821
  %v14042 = vunpack.c.l.b16 %v13822
  %v14043 = vunpack.c.h.b16 %v13822
  %v14044 = vunpack.c.l.b16 %v13823
  %v14045 = vunpack.c.h.b16 %v13823
  %v14046 = vunpack.c.l.b16 %v13824
  %v14047 = vunpack.c.h.b16 %v13824
  %v14048 = vunpack.c.l.b16 %v13825
  %v14049 = vunpack.c.h.b16 %v13825
  %v14050 = vunpack.c.l.b16 %v13826
  %v14051 = vunpack.c.h.b16 %v13826
  %v14052 = vunpack.c.l.b16 %v13827
  %v14053 = vunpack.c.h.b16 %v13827
  %v14054 = vunpack.c.l.b16 %v13828
  %v14055 = vunpack.c.h.b16 %v13828
  %v14056 = vunpack.c.l.b16 %v13829
  %v14057 = vunpack.c.h.b16 %v13829
  %v14058 = vunpack.c.l.b16 %v13830
  %v14059 = vunpack.c.h.b16 %v13830
  %v14060 = vunpack.c.l.b16 %v13831
  %v14061 = vunpack.c.h.b16 %v13831
  %v14062 = vunpack.c.l.b16 %v13832
  %v14063 = vunpack.c.h.b16 %v13832
  %v14064 = vunpack.c.l.b16 %v13833
  %v14065 = vunpack.c.h.b16 %v13833
  %v14066 = vunpack.c.l.b16 %v13834
  %v14067 = vunpack.c.h.b16 %v13834
  %v14068 = vunpack.c.l.b16 %v13835
  %v14069 = vunpack.c.h.b16 %v13835
  %v14070 = vunpack.c.l.b16 %v13836
  %v14071 = vunpack.c.h.b16 %v13836
  %v14072 = vunpack.c.l.b16 %v13837
  %v14073 = vunpack.c.h.b16 %v13837
  %v14074 = vunpack.c.l.b16 %v13838
  %v14075 = vunpack.c.h.b16 %v13838
  %v14076 = vunpack.c.l.b16 %v13839
  %v14077 = vunpack.c.h.b16 %v13839
  %v14078 = vunpack.c.l.b16 %v13840
  %v14079 = vunpack.c.h.b16 %v13840
  %v14080 = vunpack.c.l.b16 %v13841
  %v14081 = vunpack.c.h.b16 %v13841
  %v14082 = vunpack.c.l.b16 %v13842
  %v14083 = vunpack.c.h.b16 %v13842
  %v14084 = vunpack.c.l.b16 %v13843
  %v14085 = vunpack.c.h.b16 %v13843
  %v14086 = vunpack.c.l.b16 %v13844
  %v14087 = vunpack.c.h.b16 %v13844
  %v14088 = vunpack.c.l.b16 %v13845
  %v14089 = vunpack.c.h.b16 %v13845
  %v14090 = vunpack.c.l.b16 %v13846
  %v14091 = vunpack.c.h.b16 %v13846
  %v14092 = vunpack.c.l.b16 %v13847
  %v14093 = vunpack.c.h.b16 %v13847
  %v14094 = vunpack.c.l.b16 %v13848
  %v14095 = vunpack.c.h.b16 %v13848
  %v14096 = vunpack.c.l.b16 %v13849
  %v14097 = vunpack.c.h.b16 %v13849
  %v14098 = vunpack.c.l.b16 %v13850
  %v14099 = vunpack.c.h.b16 %v13850
  %v14100 = vunpack.c.l.b16 %v13851
  %v14101 = vunpack.c.h.b16 %v13851
  %v14102 = vunpack.c.l.b16 %v13852
  %v14103 = vunpack.c.h.b16 %v13852
  %v14104 = vunpack.c.l.b16 %v13853
  %v14105 = vunpack.c.h.b16 %v13853
  %v14106 = vunpack.c.l.b16 %v13854
  %v14107 = vunpack.c.h.b16 %v13854
  %v14108 = vunpack.c.l.b16 %v13855
  %v14109 = vunpack.c.h.b16 %v13855
  %v14110 = vunpack.c.l.b16 %v13856
  %v14111 = vunpack.c.h.b16 %v13856
  %v14112 = vunpack.c.l.b16 %v13857
  %v14113 = vunpack.c.h.b16 %v13857
  %v14114 = vunpack.c.l.b16 %v13858
  %v14115 = vunpack.c.h.b16 %v13858
  %v14116 = vunpack.c.l.b16 %v13859
  %v14117 = vunpack.c.h.b16 %v13859
  %v14118 = vunpack.c.l.b16 %v13860
  %v14119 = vunpack.c.h.b16 %v13860
  %v14120 = vunpack.c.l.b16 %v13861
  %v14121 = vunpack.c.h.b16 %v13861
  %v14122 = vunpack.c.l.b16 %v13862
  %v14123 = vunpack.c.h.b16 %v13862
  %v14124 = vunpack.c.l.b16 %v13863
  %v14125 = vunpack.c.h.b16 %v13863
  %v14126 = vunpack.c.l.b16 %v13864
  %v14127 = vunpack.c.h.b16 %v13864
  %v14128 = vunpack.c.l.b16 %v13865
  %v14129 = vunpack.c.h.b16 %v13865
  %v14130 = vunpack.c.l.b16 %v13866
  %v14131 = vunpack.c.h.b16 %v13866
  %v14132 = vunpack.c.l.b16 %v13867
  %v14133 = vunpack.c.h.b16 %v13867
  %v14134 = vunpack.c.l.b16 %v13868
  %v14135 = vunpack.c.h.b16 %v13868
  %v14136 = vunpack.c.l.b16 %v13869
  %v14137 = vunpack.c.h.b16 %v13869
  %v14138 = vunpack.c.l.b16 %v13870
  %v14139 = vunpack.c.h.b16 %v13870
  %v14140 = vunpack.c.l.b16 %v13871
  %v14141 = vunpack.c.h.b16 %v13871
  %v14142 = vunpack.c.l.b16 %v13872
  %v14143 = vunpack.c.h.b16 %v13872
  %v14144 = vunpack.c.l.b16 %v13873
  %v14145 = vunpack.c.h.b16 %v13873
  %v14146 = vunpack.c.l.b16 %v13874
  %v14147 = vunpack.c.h.b16 %v13874
  %v14148 = vunpack.c.l.b16 %v13875
  %v14149 = vunpack.c.h.b16 %v13875
  %v14150 = vunpack.c.l.b16 %v13876
  %v14151 = vunpack.c.h.b16 %v13876
  %v14152 = vunpack.c.l.b16 %v13877
  %v14153 = vunpack.c.h.b16 %v13877
  %v14154 = vunpack.c.l.b16 %v13878
  %v14155 = vunpack.c.h.b16 %v13878
  %v14156 = vunpack.c.l.b16 %v13879
  %v14157 = vunpack.c.h.b16 %v13879
  %v14158 = vunpack.c.l.b16 %v13880
  %v14159 = vunpack.c.h.b16 %v13880
  %v14160 = vunpack.c.l.b16 %v13881
  %v14161 = vunpack.c.h.b16 %v13881
  %v14162 = vunpack.c.l.b16 %v13882
  %v14163 = vunpack.c.h.b16 %v13882
  %v14164 = vunpack.c.l.b16 %v13883
  %v14165 = vunpack.c.h.b16 %v13883
  %v14166 = vunpack.c.l.b16 %v13884
  %v14167 = vunpack.c.h.b16 %v13884
  %v14168 = vunpack.c.l.b16 %v13885
  %v14169 = vunpack.c.h.b16 %v13885
  %v14170 = vunpack.c.l.b16 %v13886
  %v14171 = vunpack.c.h.b16 %v13886
  %v14172 = vunpack.c.l.b16 %v13887
  %v14173 = vunpack.c.h.b16 %v13887
  %v14174 = vunpack.c.l.b16 %v13888
  %v14175 = vunpack.c.h.b16 %v13888
  %v14176 = vunpack.c.l.b16 %v13889
  %v14177 = vunpack.c.h.b16 %v13889
  %v14178 = vunpack.c.l.b16 %v13890
  %v14179 = vunpack.c.h.b16 %v13890
  %v14180 = vunpack.c.l.b16 %v13891
  %v14181 = vunpack.c.h.b16 %v13891
  %v14182 = vunpack.c.l.b16 %v13892
  %v14183 = vunpack.c.h.b16 %v13892
  %v14184 = vunpack.c.l.b16 %v13893
  %v14185 = vunpack.c.h.b16 %v13893
  %v14186 = vunpack.c.l.b16 %v13894
  %v14187 = vunpack.c.h.b16 %v13894
  %v14188 = vunpack.c.l.b16 %v13895
  %v14189 = vunpack.c.h.b16 %v13895
  %v14190 = vunpack.c.l.b16 %v13896
  %v14191 = vunpack.c.h.b16 %v13896
  %v14192 = vunpack.c.l.b16 %v13897
  %v14193 = vunpack.c.h.b16 %v13897
  %v14194 = vunpack.c.l.b16 %v13898
  %v14195 = vunpack.c.h.b16 %v13898
  %v14196 = vunpack.c.l.b16 %v13899
  %v14197 = vunpack.c.h.b16 %v13899
  %v14198 = vunpack.c.l.b16 %v13900
  %v14199 = vunpack.c.h.b16 %v13900
  %v14200 = vunpack.c.l.b16 %v13901
  %v14201 = vunpack.c.h.b16 %v13901
  %v14202 = vunpack.c.l.b16 %v13902
  %v14203 = vunpack.c.h.b16 %v13902
  %v14204 = vunpack.c.l.b16 %v13903
  %v14205 = vunpack.c.h.b16 %v13903
  %v14206 = vunpack.c.l.b16 %v13904
  %v14207 = vunpack.c.h.b16 %v13904
  %v14208 = vunpack.c.l.b16 %v13905
  %v14209 = vunpack.c.h.b16 %v13905
  %v14210 = vunpack.c.l.b16 %v13906
  %v14211 = vunpack.c.h.b16 %v13906
  %v14212 = vunpack.c.l.b16 %v13907
  %v14213 = vunpack.c.h.b16 %v13907
  %v14214 = vunpack.c.l.b16 %v13908
  %v14215 = vunpack.c.h.b16 %v13908
  %v14216 = vunpack.c.l.b16 %v13909
  %v14217 = vunpack.c.h.b16 %v13909
  %v14218 = vunpack.c.l.b16 %v13910
  %v14219 = vunpack.c.h.b16 %v13910
  %v14220 = vunpack.c.l.b16 %v13911
  %v14221 = vunpack.c.h.b16 %v13911
  %v14222 = vunpack.c.l.b16 %v13912
  %v14223 = vunpack.c.h.b16 %v13912
  %v14224 = vunpack.c.l.b16 %v13913
  %v14225 = vunpack.c.h.b16 %v13913
  %v14226 = vunpack.c.l.b16 %v13914
  %v14227 = vunpack.c.h.b16 %v13914
  %v14228 = vunpack.c.l.b16 %v13915
  %v14229 = vunpack.c.h.b16 %v13915
  %v14230 = vunpack.c.l.b16 %v13916
  %v14231 = vunpack.c.h.b16 %v13916
  %v14232 = vunpack.c.l.b16 %v13917
  %v14233 = vunpack.c.h.b16 %v13917
  %v14234 = vunpack.c.l.b16 %v13918
  %v14235 = vunpack.c.h.b16 %v13918
  %v14236 = vunpack.c.l.b16 %v13919
  %v14237 = vunpack.c.h.b16 %v13919
  %v14238 = vunpack.c.l.b16 %v13920
  %v14239 = vunpack.c.h.b16 %v13920
  %v14240 = vunpack.c.l.b16 %v13921
  %v14241 = vunpack.c.h.b16 %v13921
  %v14242 = vunpack.c.l.b16 %v13922
  %v14243 = vunpack.c.h.b16 %v13922
  %v14244 = vunpack.c.l.b16 %v13923
  %v14245 = vunpack.c.h.b16 %v13923
  %v14246 = vunpack.c.l.b16 %v13924
  %v14247 = vunpack.c.h.b16 %v13924
  %v14248 = vunpack.c.l.b16 %v13925
  %v14249 = vunpack.c.h.b16 %v13925
  %v14250 = vpack.c.b16 %v14036, %v14034
  %v14251 = vpack.c.b16 %v14037, %v14035
  %v14252 = vpack.c.b16 %v14040, %v14038
  %v14253 = vpack.c.b16 %v14041, %v14039
  %v14254 = vpack.c.b16 %v14044, %v14042
  %v14255 = vpack.c.b16 %v14045, %v14043
  %v14256 = vpack.c.b16 %v14048, %v14046
  %v14257 = vpack.c.b16 %v14049, %v14047
  %v14258 = vpack.c.b16 %v14052, %v14050
  %v14259 = vpack.c.b16 %v14053, %v14051
  %v14260 = vpack.c.b16 %v14056, %v14054
  %v14261 = vpack.c.b16 %v14057, %v14055
  %v14262 = vpack.c.b16 %v14060, %v14058
  %v14263 = vpack.c.b16 %v14061, %v14059
  %v14264 = vpack.c.b16 %v14064, %v14062
  %v14265 = vpack.c.b16 %v14065, %v14063
  %v14266 = vpack.c.b16 %v14068, %v14066
  %v14267 = vpack.c.b16 %v14069, %v14067
  %v14268 = vpack.c.b16 %v14072, %v14070
  %v14269 = vpack.c.b16 %v14073, %v14071
  %v14270 = vpack.c.b16 %v14076, %v14074
  %v14271 = vpack.c.b16 %v14077, %v14075
  %v14272 = vpack.c.b16 %v14080, %v14078
  %v14273 = vpack.c.b16 %v14081, %v14079
  %v14274 = vpack.c.b16 %v14084, %v14082
  %v14275 = vpack.c.b16 %v14085, %v14083
  %v14276 = vpack.c.b16 %v14088, %v14086
  %v14277 = vpack.c.b16 %v14089, %v14087
  %v14278 = vpack.c.b16 %v14092, %v14090
  %v14279 = vpack.c.b16 %v14093, %v14091
  %v14280 = vpack.c.b16 %v14096, %v14094
  %v14281 = vpack.c.b16 %v14097, %v14095
  %v14282 = vpack.c.b16 %v14100, %v14098
  %v14283 = vpack.c.b16 %v14101, %v14099
  %v14284 = vpack.c.b16 %v14104, %v14102
  %v14285 = vpack.c.b16 %v14105, %v14103
  %v14286 = vpack.c.b16 %v14108, %v14106
  %v14287 = vpack.c.b16 %v14109, %v14107
  %v14288 = vpack.c.b16 %v14112, %v14110
  %v14289 = vpack.c.b16 %v14113, %v14111
  %v14290 = vpack.c.b16 %v14116, %v14114
  %v14291 = vpack.c.b16 %v14117, %v14115
  %v14292 = vpack.c.b16 %v14120, %v14118
  %v14293 = vpack.c.b16 %v14121, %v14119
  %v14294 = vpack.c.b16 %v14124, %v14122
  %v14295 = vpack.c.b16 %v14125, %v14123
  %v14296 = vpack.c.b16 %v14128, %v14126
  %v14297 = vpack.c.b16 %v14129, %v14127
  %v14298 = vpack.c.b16 %v14132, %v14130
  %v14299 = vpack.c.b16 %v14133, %v14131
  %v14300 = vpack.c.b16 %v14136, %v14134
  %v14301 = vpack.c.b16 %v14137, %v14135
  %v14302 = vpack.c.b16 %v14140, %v14138
  %v14303 = vpack.c.b16 %v14141, %v14139
  %v14304 = vpack.c.b16 %v14144, %v14142
  %v14305 = vpack.c.b16 %v14145, %v14143
  %v14306 = vpack.c.b16 %v14148, %v14146
  %v14307 = vpack.c.b16 %v14149, %v14147
  %v14308 = vpack.c.b16 %v14152, %v14150
  %v14309 = vpack.c.b16 %v14153, %v14151
  %v14310 = vpack.c.b16 %v14156, %v14154
  %v14311 = vpack.c.b16 %v14157, %v14155
  %v14312 = vpack.c.b16 %v14160, %v14158
  %v14313 = vpack.c.b16 %v14161, %v14159
  %v14314 = vpack.c.b16 %v14164, %v14162
  %v14315 = vpack.c.b16 %v14165, %v14163
  %v14316 = vpack.c.b16 %v14168, %v14166
  %v14317 = vpack.c.b16 %v14169, %v14167
  %v14318 = vpack.c.b16 %v14172, %v14170
  %v14319 = vpack.c.b16 %v14173, %v14171
  %v14320 = vpack.c.b16 %v14176, %v14174
  %v14321 = vpack.c.b16 %v14177, %v14175
  %v14322 = vpack.c.b16 %v14180, %v14178
  %v14323 = vpack.c.b16 %v14181, %v14179
  %v14324 = vpack.c.b16 %v14184, %v14182
  %v14325 = vpack.c.b16 %v14185, %v14183
  %v14326 = vpack.c.b16 %v14188, %v14186
  %v14327 = vpack.c.b16 %v14189, %v14187
  %v14328 = vpack.c.b16 %v14192, %v14190
  %v14329 = vpack.c.b16 %v14193, %v14191
  %v14330 = vpack.c.b16 %v14196, %v14194
  %v14331 = vpack.c.b16 %v14197, %v14195
  %v14332 = vpack.c.b16 %v14200, %v14198
  %v14333 = vpack.c.b16 %v14201, %v14199
  %v14334 = vpack.c.b16 %v14204, %v14202
  %v14335 = vpack.c.b16 %v14205, %v14203
  %v14336 = vpack.c.b16 %v14208, %v14206
  %v14337 = vpack.c.b16 %v14209, %v14207
  %v14338 = vpack.c.b16 %v14212, %v14210
  %v14339 = vpack.c.b16 %v14213, %v14211
  %v14340 = vpack.c.b16 %v14216, %v14214
  %v14341 = vpack.c.b16 %v14217, %v14215
  %v14342 = vpack.c.b16 %v14220, %v14218
  %v14343 = vpack.c.b16 %v14221, %v14219
  %v14344 = vpack.c.b16 %v14224, %v14222
  %v14345 = vpack.c.b16 %v14225, %v14223
  %v14346 = vpack.c.b16 %v14228, %v14226
  %v14347 = vpack.c.b16 %v14229, %v14227
  %v14348 = vpack.c.b16 %v14232, %v14230
  %v14349 = vpack.c.b16 %v14233, %v14231
  %v14350 = vpack.c.b16 %v14236, %v14234
  %v14351 = vpack.c.b16 %v14237, %v14235
  %v14352 = vpack.c.b16 %v14240, %v14238
  %v14353 = vpack.c.b16 %v14241, %v14239
  %v14354 = vpack.c.b16 %v14244, %v14242
  %v14355 = vpack.c.b16 %v14245, %v14243
  %v14356 = vpack.c.b16 %v14248, %v14246
  %v14357 = vpack.c.b16 %v14249, %v14247
  %14466 = vmatprep.subr.bf16.mxu0 %v14251
  %14467 = vmatpush1.bf16.msra.mxu0 %v14250
  %14468 = vmatprep.subr.bf16.mxu0 %v14253
  %14469 = vmatpush1.bf16.msra.mxu0 %v14252
  %14470 = vmatprep.subr.bf16.mxu0 %v14255
  %14471 = vmatpush1.bf16.msra.mxu0 %v14254
  %14472 = vmatprep.subr.bf16.mxu0 %v14257
  %14473 = vmatpush1.bf16.msra.mxu0 %v14256
  %14474 = vmatprep.subr.bf16.mxu0 %v14259
  %14475 = vmatpush1.bf16.msra.mxu0 %v14258
  %14476 = vmatprep.subr.bf16.mxu0 %v14261
  %14477 = vmatpush1.bf16.msra.mxu0 %v14260
  %14478 = vmatprep.subr.bf16.mxu0 %v14263
  %14479 = vmatpush1.bf16.msra.mxu0 %v14262
  %14480 = vmatprep.subr.bf16.mxu0 %v14265
  %14481 = vmatpush1.bf16.msra.mxu0 %v14264
  %14482 = vmatprep.subr.bf16.mxu0 %v14267
  %14483 = vmatpush1.bf16.msra.mxu0 %v14266
  %14484 = vmatprep.subr.bf16.mxu0 %v14269
  %14485 = vmatpush1.bf16.msra.mxu0 %v14268
  %14486 = vmatprep.subr.bf16.mxu0 %v14271
  %14487 = vmatpush1.bf16.msra.mxu0 %v14270
  %14488 = vmatprep.subr.bf16.mxu0 %v14273
  %14489 = vmatpush1.bf16.msra.mxu0 %v14272
  %14490 = vmatprep.subr.bf16.mxu0 %v14275
  %14491 = vmatpush1.bf16.msra.mxu0 %v14274
  %14492 = vmatprep.subr.bf16.mxu0 %v14277
  %14493 = vmatpush1.bf16.msra.mxu0 %v14276
  %14494 = vmatprep.subr.bf16.mxu0 %v14279
  %14495 = vmatpush1.bf16.msra.mxu0 %v14278
  %14496 = vmatprep.subr.bf16.mxu0 %v14281
  %14497 = vmatpush1.bf16.msra.mxu0 %v14280
  %14498 = vmatprep.mubr.bf16.mxu0 %v11365
  %14499 = vmatmul.mubr.bf16.gmra.mrb[0].mxu0 %v11364
  %v14500 = vpop.f32.mrb[0].mxu0
  %v14501 = vadd.f32 0.0, %v14500
  %v14502 = vpop.f32.mrb[0].mxu0
  %v14503 = vadd.f32 0.0, %v14502
  %v14504 = vpop.f32.mrb[0].mxu0
  %v14505 = vpop.f32.mrb[0].mxu0
  %14506 = vdwg.mxu0
  %14507 = vmatprep.subr.bf16.mxu0 %v14283
  %14508 = vmatpush1.bf16.msra.mxu0 %v14282
  %14509 = vmatprep.subr.bf16.mxu0 %v14285
  %14510 = vmatpush1.bf16.msra.mxu0 %v14284
  %14511 = vmatprep.subr.bf16.mxu0 %v14287
  %14512 = vmatpush1.bf16.msra.mxu0 %v14286
  %14513 = vmatprep.subr.bf16.mxu0 %v14289
  %14514 = vmatpush1.bf16.msra.mxu0 %v14288
  %14515 = vmatprep.subr.bf16.mxu0 %v14291
  %14516 = vmatpush1.bf16.msra.mxu0 %v14290
  %14517 = vmatprep.subr.bf16.mxu0 %v14293
  %14518 = vmatpush1.bf16.msra.mxu0 %v14292
  %14519 = vmatprep.subr.bf16.mxu0 %v14295
  %14520 = vmatpush1.bf16.msra.mxu0 %v14294
  %14521 = vmatprep.subr.bf16.mxu0 %v14297
  %14522 = vmatpush1.bf16.msra.mxu0 %v14296
  %14523 = vmatprep.subr.bf16.mxu0 %v14299
  %14524 = vmatpush1.bf16.msra.mxu0 %v14298
  %14525 = vmatprep.subr.bf16.mxu0 %v14301
  %14526 = vmatpush1.bf16.msra.mxu0 %v14300
  %14527 = vmatprep.subr.bf16.mxu0 %v14303
  %14528 = vmatpush1.bf16.msra.mxu0 %v14302
  %14529 = vmatprep.subr.bf16.mxu0 %v14305
  %14530 = vmatpush1.bf16.msra.mxu0 %v14304
  %14531 = vmatprep.subr.bf16.mxu0 %v14307
  %14532 = vmatpush1.bf16.msra.mxu0 %v14306
  %14533 = vmatprep.subr.bf16.mxu0 %v14309
  %14534 = vmatpush1.bf16.msra.mxu0 %v14308
  %14535 = vmatprep.subr.bf16.mxu0 %v14311
  %14536 = vmatpush1.bf16.msra.mxu0 %v14310
  %14537 = vmatprep.subr.bf16.mxu0 %v14313
  %14538 = vmatpush1.bf16.msra.mxu0 %v14312
  %14539 = vmatprep.mubr.bf16.mxu0 %v11367
  %14540 = vmatmul.mubr.bf16.gmra.mrb[0].mxu0 %v11366
  %v14541 = vpop.f32.mrb[0].mxu0
  %v14542 = vadd.f32 %v14501, %v14541
  %v14543 = vpop.f32.mrb[0].mxu0
  %v14544 = vadd.f32 %v14503, %v14543
  %v14545 = vpop.f32.mrb[0].mxu0
  %v14546 = vpop.f32.mrb[0].mxu0
  %14547 = vdwg.mxu0
  %14548 = vmatprep.subr.bf16.mxu0 %v14315
  %14549 = vmatpush1.bf16.msra.mxu0 %v14314
  %14550 = vmatprep.subr.bf16.mxu0 %v14317
  %14551 = vmatpush1.bf16.msra.mxu0 %v14316
  %14552 = vmatprep.subr.bf16.mxu0 %v14319
  %14553 = vmatpush1.bf16.msra.mxu0 %v14318
  %14554 = vmatprep.subr.bf16.mxu0 %v14321
  %14555 = vmatpush1.bf16.msra.mxu0 %v14320
  %14556 = vmatprep.subr.bf16.mxu0 %v14323
  %14557 = vmatpush1.bf16.msra.mxu0 %v14322
  %14558 = vmatprep.subr.bf16.mxu0 %v14325
  %14559 = vmatpush1.bf16.msra.mxu0 %v14324
  %14560 = vmatprep.subr.bf16.mxu0 %v14327
  %14561 = vmatpush1.bf16.msra.mxu0 %v14326
  %14562 = vmatprep.subr.bf16.mxu0 %v14329
  %14563 = vmatpush1.bf16.msra.mxu0 %v14328
  %14564 = vmatprep.subr.bf16.mxu0 %v14331
  %14565 = vmatpush1.bf16.msra.mxu0 %v14330
  %14566 = vmatprep.subr.bf16.mxu0 %v14333
  %14567 = vmatpush1.bf16.msra.mxu0 %v14332
  %14568 = vmatprep.subr.bf16.mxu0 %v14335
  %14569 = vmatpush1.bf16.msra.mxu0 %v14334
  %14570 = vmatprep.subr.bf16.mxu0 %v14337
  %14571 = vmatpush1.bf16.msra.mxu0 %v14336
  %14572 = vmatprep.subr.bf16.mxu0 %v14339
  %14573 = vmatpush1.bf16.msra.mxu0 %v14338
  %14574 = vmatprep.subr.bf16.mxu0 %v14341
  %14575 = vmatpush1.bf16.msra.mxu0 %v14340
  %14576 = vmatprep.subr.bf16.mxu0 %v14343
  %14577 = vmatpush1.bf16.msra.mxu0 %v14342
  %14578 = vmatprep.subr.bf16.mxu0 %v14345
  %14579 = vmatpush1.bf16.msra.mxu0 %v14344
  %14580 = vmatprep.mubr.bf16.mxu0 %v11369
  %14581 = vmatmul.mubr.bf16.gmra.mrb[0].mxu0 %v11368
  %v14582 = vpop.f32.mrb[0].mxu0
  %v14583 = vadd.f32 %v14542, %v14582
  %v14584 = vpop.f32.mrb[0].mxu0
  %v14585 = vadd.f32 %v14544, %v14584
  %v14586 = vpop.f32.mrb[0].mxu0
  %v14587 = vpop.f32.mrb[0].mxu0
  %14588 = vdwg.mxu0
  %14589 = vmatprep.subr.bf16.mxu0 %v14347
  %14590 = vmatpush1.bf16.msra.mxu0 %v14346
  %14591 = vmatprep.subr.bf16.mxu0 %v14349
  %14592 = vmatpush1.bf16.msra.mxu0 %v14348
  %14593 = vmatprep.subr.bf16.mxu0 %v14351
  %14594 = vmatpush1.bf16.msra.mxu0 %v14350
  %14595 = vmatprep.subr.bf16.mxu0 %v14353
  %14596 = vmatpush1.bf16.msra.mxu0 %v14352
  %14597 = vmatprep.subr.bf16.mxu0 %v14355
  %14598 = vmatpush1.bf16.msra.mxu0 %v14354
  %14599 = vmatprep.subr.bf16.mxu0 %v14357
  %14600 = vmatpush1.bf16.msra.mxu0 %v14356
  %14601 = vmatprep.subr.bf16.mxu0 0
  %14602 = vmatpush1.bf16.msra.mxu0 0
  %14603 = vmatprep.subr.bf16.mxu0 0
  %14604 = vmatpush1.bf16.msra.mxu0 0
  %14605 = vmatprep.subr.bf16.mxu0 0
  %14606 = vmatpush1.bf16.msra.mxu0 0
  %14607 = vmatprep.subr.bf16.mxu0 0
  %14608 = vmatpush1.bf16.msra.mxu0 0
  %14609 = vmatprep.subr.bf16.mxu0 0
  %14610 = vmatpush1.bf16.msra.mxu0 0
  %14611 = vmatprep.subr.bf16.mxu0 0
  %14612 = vmatpush1.bf16.msra.mxu0 0
  %14613 = vmatprep.subr.bf16.mxu0 0
  %14614 = vmatpush1.bf16.msra.mxu0 0
  %14615 = vmatprep.subr.bf16.mxu0 0
  %14616 = vmatpush1.bf16.msra.mxu0 0
  %14617 = vmatprep.subr.bf16.mxu0 0
  %14618 = vmatpush1.bf16.msra.mxu0 0
  %14619 = vmatprep.subr.bf16.mxu0 0
  %14620 = vmatpush1.bf16.msra.mxu0 0
  %14621 = vmatprep.mubr.bf16.mxu0 0
  %14622 = vmatmul.mubr.bf16.gmra.mrb[0].mxu0 %v12021
  %v14623 = vpop.f32.mrb[0].mxu0
  %v14624 = vadd.f32 %v14583, %v14623
  %v14625 = vpop.f32.mrb[0].mxu0
  %v14626 = vadd.f32 %v14585, %v14625
  %v14627 = vpop.f32.mrb[0].mxu0
  %v14628 = vpop.f32.mrb[0].mxu0
  %14629 = vdwg.mxu0
  %v14630 = vmax.f32 %v13815, %v14624
  %v14631 = vmax.f32 %v13816, %v14626
  %v14632 = vld [vmem:[%s4] sm:$0x3]
  %v14634 = vlaneseq
  %v14635 = vshrl.u32 %v14634, 7
  %v14636 = vsub.s32 0, %v14635
  %v14637 = vrot.slane %v14632, %v14636
  %v14638 = vlaneseq
  %v14639 = vshrl.u32 %v14638, 7
  %v14640 = vsub.s32 1, %v14639
  %v14641 = vrot.slane %v14632, %v14640
  %v14644 = vadd.f32 %v14630, %v14637
  %v14645 = vadd.f32 %v14631, %v14641
  %v14646 = vmax.f32 %v14644, 0.0
  %v14647 = vmax.f32 %v14645, 0.0
  %v14648 = vpack.c.bf16 %v14646, %v14646
  %v14649 = vpack.c.bf16 %v14647, %v14647
  %v14650 = vld [vmem:[%s5] sm:$0xf]
  %v14651 = vld [vmem:[%s5 + $0x4] sm:$0xf]
  %v14652 = vld [vmem:[%s5 + $0x8] sm:$0xf]
  %v14653 = vld [vmem:[%s5 + $0xc] sm:$0xf]
  %v14654 = vld [vmem:[%s5 + $0x10] sm:$0xf]
  %v14655 = vld [vmem:[%s5 + $0x14] sm:$0xf]
  %v14656 = vld [vmem:[%s5 + $0x18] sm:$0xf]
  %v14657 = vld [vmem:[%s5 + $0x1c] sm:$0xf]
  %v14658 = vld [vmem:[%s5 + $0x20] sm:$0xf]
  %v14659 = vld [vmem:[%s5 + $0x24] sm:$0xf]
  %v14660 = vld [vmem:[%s5 + $0x28] sm:$0xf]
  %v14661 = vld [vmem:[%s5 + $0x2c] sm:$0xf]
  %v14662 = vld [vmem:[%s5 + $0x30] sm:$0xf]
  %v14663 = vld [vmem:[%s5 + $0x34] sm:$0xf]
  %v14664 = vld [vmem:[%s5 + $0x38] sm:$0xf]
  %v14665 = vld [vmem:[%s5 + $0x3c] sm:$0xf]
  %v14666 = vld [vmem:[%s5 + $0x40] sm:$0xf]
  %v14667 = vld [vmem:[%s5 + $0x44] sm:$0xf]
  %v14668 = vld [vmem:[%s5 + $0x48] sm:$0xf]
  %v14669 = vld [vmem:[%s5 + $0x4c] sm:$0xf]
  %v14670 = vld [vmem:[%s5 + $0x50] sm:$0xf]
  %v14671 = vld [vmem:[%s5 + $0x54] sm:$0xf]
  %v14672 = vld [vmem:[%s5 + $0x58] sm:$0xf]
  %v14673 = vld [vmem:[%s5 + $0x5c] sm:$0xf]
  %v14674 = vld [vmem:[%s5 + $0x60] sm:$0xf]
  %v14675 = vld [vmem:[%s5 + $0x64] sm:$0xf]
  %v14676 = vld [vmem:[%s5 + $0x68] sm:$0xf]
  %v14677 = vld [vmem:[%s5 + $0x6c] sm:$0xf]
  %v14678 = vld [vmem:[%s5 + $0x70] sm:$0xf]
  %v14679 = vld [vmem:[%s5 + $0x74] sm:$0xf]
  %v14680 = vld [vmem:[%s5 + $0x78] sm:$0xf]
  %v14681 = vld [vmem:[%s5 + $0x7c] sm:$0xf]
  %v14682 = vld [vmem:[%s6] sm:$0x1]
  %v14684 = vlaneseq
  %v14685 = vshrl.u32 %v14684, 7
  %v14686 = vsub.s32 0, %v14685
  %v14687 = vrot.slane %v14682, %v14686
  %v14721 = vunpack.c.l.b16 %v14650
  %v14722 = vunpack.c.l.b16 %v14651
  %v14723 = vunpack.c.l.b16 %v14652
  %v14724 = vunpack.c.l.b16 %v14653
  %v14725 = vunpack.c.l.b16 %v14654
  %v14726 = vunpack.c.l.b16 %v14655
  %v14727 = vunpack.c.l.b16 %v14656
  %v14728 = vunpack.c.l.b16 %v14657
  %v14729 = vunpack.c.l.b16 %v14658
  %v14730 = vunpack.c.l.b16 %v14659
  %v14731 = vunpack.c.l.b16 %v14660
  %v14732 = vunpack.c.l.b16 %v14661
  %v14733 = vunpack.c.l.b16 %v14662
  %v14734 = vunpack.c.l.b16 %v14663
  %v14735 = vunpack.c.l.b16 %v14664
  %v14736 = vunpack.c.l.b16 %v14665
  %v14737 = vunpack.c.l.b16 %v14666
  %v14738 = vunpack.c.l.b16 %v14667
  %v14739 = vunpack.c.l.b16 %v14668
  %v14740 = vunpack.c.l.b16 %v14669
  %v14741 = vunpack.c.l.b16 %v14670
  %v14742 = vunpack.c.l.b16 %v14671
  %v14743 = vunpack.c.l.b16 %v14672
  %v14744 = vunpack.c.l.b16 %v14673
  %v14745 = vunpack.c.l.b16 %v14674
  %v14746 = vunpack.c.l.b16 %v14675
  %v14747 = vunpack.c.l.b16 %v14676
  %v14748 = vunpack.c.l.b16 %v14677
  %v14749 = vunpack.c.l.b16 %v14678
  %v14750 = vunpack.c.l.b16 %v14679
  %v14751 = vunpack.c.l.b16 %v14680
  %v14752 = vunpack.c.l.b16 %v14681
  %v14753 = vpack.c.b16 %v14722, %v14721
  %v14754 = vpack.c.b16 %v14724, %v14723
  %v14755 = vpack.c.b16 %v14726, %v14725
  %v14756 = vpack.c.b16 %v14728, %v14727
  %v14757 = vpack.c.b16 %v14730, %v14729
  %v14758 = vpack.c.b16 %v14732, %v14731
  %v14759 = vpack.c.b16 %v14734, %v14733
  %v14760 = vpack.c.b16 %v14736, %v14735
  %v14761 = vpack.c.b16 %v14738, %v14737
  %v14762 = vpack.c.b16 %v14740, %v14739
  %v14763 = vpack.c.b16 %v14742, %v14741
  %v14764 = vpack.c.b16 %v14744, %v14743
  %v14765 = vpack.c.b16 %v14746, %v14745
  %v14766 = vpack.c.b16 %v14748, %v14747
  %v14767 = vpack.c.b16 %v14750, %v14749
  %v14768 = vpack.c.b16 %v14752, %v14751
  %14785 = vmatprep.subr.bf16.mxu0 0
  %14786 = vmatpush1.bf16.msra.mxu0 %v14753
  %14787 = vmatprep.subr.bf16.mxu0 0
  %14788 = vmatpush1.bf16.msra.mxu0 %v14754
  %14789 = vmatprep.subr.bf16.mxu0 0
  %14790 = vmatpush1.bf16.msra.mxu0 %v14755
  %14791 = vmatprep.subr.bf16.mxu0 0
  %14792 = vmatpush1.bf16.msra.mxu0 %v14756
  %14793 = vmatprep.subr.bf16.mxu0 0
  %14794 = vmatpush1.bf16.msra.mxu0 %v14757
  %14795 = vmatprep.subr.bf16.mxu0 0
  %14796 = vmatpush1.bf16.msra.mxu0 %v14758
  %14797 = vmatprep.subr.bf16.mxu0 0
  %14798 = vmatpush1.bf16.msra.mxu0 %v14759
  %14799 = vmatprep.subr.bf16.mxu0 0
  %14800 = vmatpush1.bf16.msra.mxu0 %v14760
  %14801 = vmatprep.subr.bf16.mxu0 0
  %14802 = vmatpush1.bf16.msra.mxu0 %v14761
  %14803 = vmatprep.subr.bf16.mxu0 0
  %14804 = vmatpush1.bf16.msra.mxu0 %v14762
  %14805 = vmatprep.subr.bf16.mxu0 0
  %14806 = vmatpush1.bf16.msra.mxu0 %v14763
  %14807 = vmatprep.subr.bf16.mxu0 0
  %14808 = vmatpush1.bf16.msra.mxu0 %v14764
  %14809 = vmatprep.subr.bf16.mxu0 0
  %14810 = vmatpush1.bf16.msra.mxu0 %v14765
  %14811 = vmatprep.subr.bf16.mxu0 0
  %14812 = vmatpush1.bf16.msra.mxu0 %v14766
  %14813 = vmatprep.subr.bf16.mxu0 0
  %14814 = vmatpush1.bf16.msra.mxu0 %v14767
  %14815 = vmatprep.subr.bf16.mxu0 0
  %14816 = vmatpush1.bf16.msra.mxu0 %v14768
  %14817 = vmatprep.mubr.bf16.mxu0 %v14649
  %14818 = vmatmul.mubr.bf16.gmra.mrb[0].mxu0 %v14648
  %v14819 = vpop.f32.mrb[0].mxu0
  %v14820 = vadd.f32 %v14687, %v14819
  %v14821 = vpop.f32.mrb[0].mxu0
  %v14822 = vpop.f32.mrb[0].mxu0
  %v14823 = vpop.f32.mrb[0].mxu0
  %14824 = vdwg.mxu0
  %v14825 = vmax.f32 %v14820, 0.0
  %v14826 = vpack.c.bf16 %v14825, %v14825
  %v14827 = vld [vmem:[%s7] sm:$0xf]
  %v14828 = vld [vmem:[%s7 + $0x4] sm:$0xf]
  %v14829 = vld [vmem:[%s7 + $0x8] sm:$0xf]
  %v14830 = vld [vmem:[%s7 + $0xc] sm:$0xf]
  %v14831 = vld [vmem:[%s7 + $0x10] sm:$0xf]
  %v14832 = vld [vmem:[%s7 + $0x14] sm:$0xf]
  %v14833 = vld [vmem:[%s7 + $0x18] sm:$0xf]
  %v14834 = vld [vmem:[%s7 + $0x1c] sm:$0xf]
  %v14835 = vld [vmem:[%s7 + $0x20] sm:$0xf]
  %v14836 = vld [vmem:[%s7 + $0x24] sm:$0xf]
  %v14837 = vld [vmem:[%s7 + $0x28] sm:$0xf]
  %v14838 = vld [vmem:[%s7 + $0x2c] sm:$0xf]
  %v14839 = vld [vmem:[%s7 + $0x30] sm:$0xf]
  %v14840 = vld [vmem:[%s7 + $0x34] sm:$0xf]
  %v14841 = vld [vmem:[%s7 + $0x38] sm:$0xf]
  %v14842 = vld [vmem:[%s8] sm:$0x1]
  %v14844 = vlaneseq
  %v14845 = vshrl.u32 %v14844, 7
  %v14846 = vsub.s32 0, %v14845
  %v14847 = vrot.slane %v14842, %v14846
  %v14864 = vunpack.c.l.b16 %v14827
  %v14865 = vunpack.c.l.b16 %v14828
  %v14866 = vunpack.c.l.b16 %v14829
  %v14867 = vunpack.c.l.b16 %v14830
  %v14868 = vunpack.c.l.b16 %v14831
  %v14869 = vunpack.c.l.b16 %v14832
  %v14870 = vunpack.c.l.b16 %v14833
  %v14871 = vunpack.c.l.b16 %v14834
  %v14872 = vunpack.c.l.b16 %v14835
  %v14873 = vunpack.c.l.b16 %v14836
  %v14874 = vunpack.c.l.b16 %v14837
  %v14875 = vunpack.c.l.b16 %v14838
  %v14876 = vunpack.c.l.b16 %v14839
  %v14877 = vunpack.c.l.b16 %v14840
  %v14878 = vunpack.c.l.b16 %v14841
  %v14879 = vpack.c.b16 %v14865, %v14864
  %v14880 = vpack.c.b16 %v14867, %v14866
  %v14881 = vpack.c.b16 %v14869, %v14868
  %v14882 = vpack.c.b16 %v14871, %v14870
  %v14883 = vpack.c.b16 %v14873, %v14872
  %v14884 = vpack.c.b16 %v14875, %v14874
  %v14885 = vpack.c.b16 %v14877, %v14876
  %v14886 = vpack.c.b16 %v14878, %v14878
  %vm14894 = vcmask 982016
  %v14896 = vsel %vm14894, %v14826, 0
  %vm14898 = vcmask 1043456
  %v14900 = vsel %vm14898, %v14886, 0
  %14902 = vmatprep.subr.bf16.mxu0 0
  %14903 = vmatpush1.bf16.msra.mxu0 %v14879
  %14904 = vmatprep.subr.bf16.mxu0 0
  %14905 = vmatpush1.bf16.msra.mxu0 %v14880
  %14906 = vmatprep.subr.bf16.mxu0 0
  %14907 = vmatpush1.bf16.msra.mxu0 %v14881
  %14908 = vmatprep.subr.bf16.mxu0 0
  %14909 = vmatpush1.bf16.msra.mxu0 %v14882
  %14910 = vmatprep.subr.bf16.mxu0 0
  %14911 = vmatpush1.bf16.msra.mxu0 %v14883
  %14912 = vmatprep.subr.bf16.mxu0 0
  %14913 = vmatpush1.bf16.msra.mxu0 %v14884
  %14914 = vmatprep.subr.bf16.mxu0 0
  %14915 = vmatpush1.bf16.msra.mxu0 %v14885
  %14916 = vmatprep.subr.bf16.mxu0 0
  %14917 = vmatpush1.bf16.msra.mxu0 %v14900
  %14918 = vmatprep.subr.bf16.mxu0 0
  %14919 = vmatpush1.bf16.msra.mxu0 0
  %14920 = vmatprep.subr.bf16.mxu0 0
  %14921 = vmatpush1.bf16.msra.mxu0 0
  %14922 = vmatprep.subr.bf16.mxu0 0
  %14923 = vmatpush1.bf16.msra.mxu0 0
  %14924 = vmatprep.subr.bf16.mxu0 0
  %14925 = vmatpush1.bf16.msra.mxu0 0
  %14926 = vmatprep.subr.bf16.mxu0 0
  %14927 = vmatpush1.bf16.msra.mxu0 0
  %14928 = vmatprep.subr.bf16.mxu0 0
  %14929 = vmatpush1.bf16.msra.mxu0 0
  %14930 = vmatprep.subr.bf16.mxu0 0
  %14931 = vmatpush1.bf16.msra.mxu0 0
  %14932 = vmatprep.subr.bf16.mxu0 0
  %14933 = vmatpush1.bf16.msra.mxu0 0
  %14934 = vmatprep.mubr.bf16.mxu0 0
  %14935 = vmatmul.mubr.bf16.gmra.mrb[0].mxu0 %v14896
  %v14936 = vpop.f32.mrb[0].mxu0
  %v14937 = vadd.f32 %v14847, %v14936
  %v14938 = vpop.f32.mrb[0].mxu0
  %v14939 = vpop.f32.mrb[0].mxu0
  %v14940 = vpop.f32.mrb[0].mxu0
  %14941 = vdwg.mxu0
  %v14942 = vmax.f32 %v14937, 0.0
  %v14943 = vpack.c.bf16 %v14942, %v14942
  %v14944 = vld [vmem:[%s9] sm:$0xf]
  %v14945 = vld [vmem:[%s9 + $0x4] sm:$0xf]
  %v14946 = vld [vmem:[%s9 + $0x8] sm:$0xf]
  %v14947 = vld [vmem:[%s9 + $0xc] sm:$0xf]
  %v14948 = vld [vmem:[%s9 + $0x10] sm:$0xf]
  %v14949 = vld [vmem:[%s9 + $0x14] sm:$0xf]
  %v14950 = vld [vmem:[%s9 + $0x18] sm:$0xf]
  %v14951 = vld [vmem:[%s9 + $0x1c] sm:$0xf]
  %v14952 = vld [vmem:[%s9 + $0x20] sm:$0xf]
  %v14953 = vld [vmem:[%s9 + $0x24] sm:$0xf]
  %v14954 = vld [vmem:[%s9 + $0x28] sm:$0x3]
  %v14955 = vld [vmem:[%s10] sm:$0x1]
  %v14957 = vlaneseq
  %v14958 = vshrl.u32 %v14957, 7
  %v14959 = vsub.s32 0, %v14958
  %v14960 = vrot.slane %v14955, %v14959
  %v14973 = vunpack.c.l.b16 %v14944
  %v14974 = vunpack.c.l.b16 %v14945
  %v14975 = vunpack.c.l.b16 %v14946
  %v14976 = vunpack.c.l.b16 %v14947
  %v14977 = vunpack.c.l.b16 %v14948
  %v14978 = vunpack.c.l.b16 %v14949
  %v14979 = vunpack.c.l.b16 %v14950
  %v14980 = vunpack.c.l.b16 %v14951
  %v14981 = vunpack.c.l.b16 %v14952
  %v14982 = vunpack.c.l.b16 %v14953
  %v14983 = vunpack.c.l.b16 %v14954
  %v14984 = vpack.c.b16 %v14974, %v14973
  %v14985 = vpack.c.b16 %v14976, %v14975
  %v14986 = vpack.c.b16 %v14978, %v14977
  %v14987 = vpack.c.b16 %v14980, %v14979
  %v14988 = vpack.c.b16 %v14982, %v14981
  %v14989 = vpack.c.b16 %v14983, %v14983
  %vm14995 = vcmask 687104
  %v14997 = vsel %vm14995, %v14943, 0
  %vm14999 = vcmask 1041408
  %v15001 = vsel %vm14999, %v14989, 0
  %15003 = vmatprep.subr.bf16.mxu0 0
  %15004 = vmatpush1.bf16.msra.mxu0 %v14984
  %15005 = vmatprep.subr.bf16.mxu0 0
  %15006 = vmatpush1.bf16.msra.mxu0 %v14985
  %15007 = vmatprep.subr.bf16.mxu0 0
  %15008 = vmatpush1.bf16.msra.mxu0 %v14986
  %15009 = vmatprep.subr.bf16.mxu0 0
  %15010 = vmatpush1.bf16.msra.mxu0 %v14987
  %15011 = vmatprep.subr.bf16.mxu0 0
  %15012 = vmatpush1.bf16.msra.mxu0 %v14988
  %15013 = vmatprep.subr.bf16.mxu0 0
  %15014 = vmatpush1.bf16.msra.mxu0 %v15001
  %15015 = vmatprep.subr.bf16.mxu0 0
  %15016 = vmatpush1.bf16.msra.mxu0 0
  %15017 = vmatprep.subr.bf16.mxu0 0
  %15018 = vmatpush1.bf16.msra.mxu0 0
  %15019 = vmatprep.subr.bf16.mxu0 0
  %15020 = vmatpush1.bf16.msra.mxu0 0
  %15021 = vmatprep.subr.bf16.mxu0 0
  %15022 = vmatpush1.bf16.msra.mxu0 0
  %15023 = vmatprep.subr.bf16.mxu0 0
  %15024 = vmatpush1.bf16.msra.mxu0 0
  %15025 = vmatprep.subr.bf16.mxu0 0
  %15026 = vmatpush1.bf16.msra.mxu0 0
  %15027 = vmatprep.subr.bf16.mxu0 0
  %15028 = vmatpush1.bf16.msra.mxu0 0
  %15029 = vmatprep.subr.bf16.mxu0 0
  %15030 = vmatpush1.bf16.msra.mxu0 0
  %15031 = vmatprep.subr.bf16.mxu0 0
  %15032 = vmatpush1.bf16.msra.mxu0 0
  %15033 = vmatprep.subr.bf16.mxu0 0
  %15034 = vmatpush1.bf16.msra.mxu0 0
  %15035 = vmatprep.mubr.bf16.mxu0 0
  %15036 = vmatmul.mubr.bf16.gmra.mrb[0].mxu0 %v14997
  %v15037 = vpop.f32.mrb[0].mxu0
  %v15038 = vadd.f32 %v14960, %v15037
  %v15039 = vpop.f32.mrb[0].mxu0
  %v15040 = vpop.f32.mrb[0].mxu0
  %v15041 = vpop.f32.mrb[0].mxu0
  %15042 = vdwg.mxu0
  %15043 = vmax.xlane.f32.xlu0 %v15038
  %v15044 = vpop.xlane.xlu0 %15043
  %v15045 = vsub.f32 %v15038, %v15044
  %v15046 = vmul.f32 %v15045, 1.442695
  %v15047 = vpow.pop %v15046
  %15048 = vadd.xlane.f32.xlu0 %v15047
  %v15049 = vpop.xlane.xlu0 %15048
  %v15050 = vrcp.pop %v15049
  %v15051 = vmul.f32 %v15047, %v15050
  %15052 = vst [vmem:[%s11] sm:$0xff] %v15051
  // Predicated region
  $region46: #{cnn_forward.1} parent=0 // pred_check
    _
  $region47: #{cnn_forward.1} parent=0 // pred_check_branch
    %15054 = sbr.rel (0) target = $region49
  $region48: #{cnn_forward.1} parent=0 // pred_region
    _
  $region49: #{cnn_forward.1} parent=0 // pred_fallthru
    _
  // Predicated region
  $region50: #{cnn_forward.1} parent=0 // pred_check
    _
  $region51: #{cnn_forward.1} parent=0 // pred_check_branch
    %15056 = sbr.rel (0) target = $region53
  $region52: #{cnn_forward.1} parent=0 // pred_region
    _
  $region53: #{cnn_forward.1} parent=0 // pred_fallthru
    _

</llo_original>
